<compile_context>
chip_gen: v6e
topology: v6e:2x2x1
jax: 0.10.0
libtpu: 0.0.40
codegen_flags: <defaults>
</compile_context>

<pallas_src>
import jax
import jax.numpy as jnp
from jax.experimental import pallas as pl
from jax.experimental.pallas import tpu as pltpu

BN_EPS = 1e-5

# (dy, dx) tap offsets, dy-major — must match the weight column layout below.
_TAPS = {K: [(dy, dx) for dy in range(-(K // 2), K // 2 + 1)
             for dx in range(-(K // 2), K // 2 + 1)] for K in (3, 5, 7)}


# ----------------------------------------------------------------------------
# Fused whole-network kernel (grid = (N,), one image per program)
# ----------------------------------------------------------------------------
def _make_fused_kernel(H, W, C, Cr):
    HW = H * W

    def kernel(x_ref, masks_ref,
               sw1_ref, sb1_ref, sw2_ref, sb2_ref,
               w3a_ref, b3a_ref, w3b_ref, b3b_ref,
               w57_ref, b57_ref, w5b_ref, b5b_ref, w7b_ref, b7b_ref,
               wfa_ref, wfb_ref,
               out_ref, patches_ref):
        x = x_ref[0]                       # (C, HW) f32 channel-major activation
        masks = masks_ref[...]             # (49, HW) f32 zero-pad border masks

        # --- SEBlock: pool first, tiny FCs as unrolled VPU MACs --------------
        pooled = jnp.mean(x, axis=1, keepdims=True)            # (C, 1)
        sw1 = sw1_ref[...]                                     # (Cr, C)
        h = sb1_ref[...]                                       # (Cr, 1)
        for c in range(C):
            h = h + sw1[:, c:c + 1] * pooled[c:c + 1, :]
        h = jnp.maximum(h, 0.0)
        sw2 = sw2_ref[...]                                     # (C, Cr)
        se = sb2_ref[...]                                      # (C, 1)
        for j in range(Cr):
            se = se + sw2[:, j:j + 1] * h[j:j + 1, :]
        feat0 = x * jax.nn.sigmoid(se)                         # (C, HW) f32

        def build_patches(act, offsets):
            """roll + mask im2col into the shared bf16 scratch; returns rows."""
            for t, (dy, dx) in enumerate(offsets):
                off = dy * W + dx
                sh = act if off == 0 else pltpu.roll(act, (-off) % HW, axis=1)
                mi = (dy + 3) * 7 + (dx + 3)                   # row in 7x7 mask set
                patches_ref[t * C:(t + 1) * C, :] = (
                    sh * masks[mi:mi + 1, :]).astype(jnp.bfloat16)
            return len(offsets) * C

        def conv_from_patches(w_ref, rows, b_ref):
            return jnp.dot(w_ref[...], patches_ref[:rows, :],
                           preferred_element_type=jnp.float32) + b_ref[...]

        # --- 3x3 DoubleConv2 (conv1 + 1x1 identity stacked in one matmul) ----
        rows = build_patches(feat0, _TAPS[3])
        y = conv_from_patches(w3a_ref, rows, b3a_ref)          # (2C, HW)
        t = jnp.maximum(y[:C], 0.0)
        idn3 = y[C:]
        rows = build_patches(t, _TAPS[3])
        feat = jnp.maximum(conv_from_patches(w3b_ref, rows, b3b_ref), 0.0) + idn3

        # --- dc5.conv1 + dc7.conv1 + both identities: ONE shared 7x7 build ---
        rows = build_patches(feat, _TAPS[7])
        y = conv_from_patches(w57_ref, rows, b57_ref)          # (4C, HW)
        t5 = jnp.maximum(y[:C], 0.0)
        t7 = jnp.maximum(y[C:2 * C], 0.0)
        idn5 = y[2 * C:3 * C]
        idn7 = y[3 * C:]

        rows = build_patches(t5, _TAPS[5])
        f5 = jnp.maximum(conv_from_patches(w5b_ref, rows, b5b_ref), 0.0) + idn5
        rows = build_patches(t7, _TAPS[7])
        f7 = jnp.maximum(conv_from_patches(w7b_ref, rows, b7b_ref), 0.0) + idn7

        # --- 1x1 head over concat([f5+x, f7+x]) as VPU MAC + sublane reduce --
        acc = wfa_ref[...] * (f5 + x) + wfb_ref[...] * (f7 + x)   # (C, HW) f32
        logit = jnp.sum(acc, axis=0, keepdims=True)                # (1, HW)
        out_ref[0] = jax.nn.sigmoid(logit).astype(out_ref.dtype)

    return kernel


# ----------------------------------------------------------------------------
# Host-side weight layout conversion (PyTorch OIHW -> channel-major matmul)
# ----------------------------------------------------------------------------
def _oihw_to_cm(w):
    """(Cout, Cin, KH, KW) -> (Cout, KH*KW*Cin), matching in-kernel tap order."""
    Cout, Cin, KH, KW = w.shape
    return jnp.transpose(w, (0, 2, 3, 1)).reshape(Cout, KH * KW * Cin)


def _embed_1x1(wa, K):
    """Embed a 1x1 conv at the center tap of a KxK layout (exact)."""
    p = K // 2
    return jnp.pad(wa, ((0, 0), (0, 0), (p, p), (p, p)))


def _col(b):
    return b.reshape(-1, 1).astype(jnp.float32)


def _kernel_weight_args(params):
    bf16 = jnp.bfloat16
    se, dc3, dc5, dc7 = params["se"], params["dc3"], params["dc5"], params["dc7"]
    C = se["w2"].shape[0]

    # dc3.conv1 stacked with its 1x1 identity (both read the SE output).
    w3a = jnp.concatenate(
        [_oihw_to_cm(dc3["w1"]), _oihw_to_cm(_embed_1x1(dc3["wa"], 3))], axis=0)
    b3a = jnp.concatenate([_col(dc3["b1"]), _col(dc3["ba"])], axis=0)

    # dc5.conv1 (5x5 padded to 7x7) + dc7.conv1 + both 1x1 identities stacked
    # over one shared 7x7 patch build of the dc3 output.
    w57 = jnp.concatenate(
        [_oihw_to_cm(jnp.pad(dc5["w1"], ((0, 0), (0, 0), (1, 1), (1, 1)))),
         _oihw_to_cm(dc7["w1"]),
         _oihw_to_cm(_embed_1x1(dc5["wa"], 7)),
         _oihw_to_cm(_embed_1x1(dc7["wa"], 7))], axis=0)
    b57 = jnp.concatenate([_col(dc5["b1"]), _col(dc7["b1"]),
                           _col(dc5["ba"]), _col(dc7["ba"])], axis=0)

    wfc = params["fc_w"][:, :, 0, 0]                      # (1, 2C), bias-free head
    return [
        se["w1"].astype(jnp.float32), _col(se["b1"]),
        se["w2"].astype(jnp.float32), _col(se["b2"]),
        w3a.astype(bf16), b3a,
        _oihw_to_cm(dc3["w2"]).astype(bf16), _col(dc3["b2"]),
        w57.astype(bf16), b57,
        _oihw_to_cm(dc5["w2"]).astype(bf16), _col(dc5["b2"]),
        _oihw_to_cm(dc7["w2"]).astype(bf16), _col(dc7["b2"]),
        wfc[:, :C].reshape(C, 1).astype(jnp.float32),
        wfc[:, C:].reshape(C, 1).astype(jnp.float32),
    ]


def _border_masks(H, W):
    """(49, H*W) zero-padding masks for every (dy, dx) in [-3, 3]^2."""
    pos = jnp.arange(H * W, dtype=jnp.int32)[None, :]
    hh, ww = pos // W, pos % W
    rows = []
    for dy in range(-3, 4):
        for dx in range(-3, 4):
            rows.append(((hh >= -dy) & (hh < H - dy) &
                         (ww >= -dx) & (ww < W - dx)).astype(jnp.float32))
    return jnp.concatenate(rows, axis=0)


@jax.jit
def ddsm_atternet(x, params):
    """x: (N, C, H, W) float32 (NCHW, as in PyTorch) -> (N, 1, H, W)."""
    N, C, H, W = x.shape
    HW = H * W
    Cr = params["se"]["w1"].shape[0]

    x_cm = x.reshape(N, C, HW)
    masks = _border_masks(H, W)
    wargs = _kernel_weight_args(params)

    in_specs = [pl.BlockSpec((1, C, HW), lambda n: (n, 0, 0)),
                pl.BlockSpec(masks.shape, lambda n: (0, 0))]
    in_specs += [pl.BlockSpec(a.shape, lambda n: (0, 0)) for a in wargs]

    out = pl.pallas_call(
        _make_fused_kernel(H, W, C, Cr),
        out_shape=jax.ShapeDtypeStruct((N, 1, HW), jnp.float32),
        grid=(N,),
        in_specs=in_specs,
        out_specs=pl.BlockSpec((1, 1, HW), lambda n: (n, 0, 0)),
        scratch_shapes=[pltpu.VMEM((49 * C, HW), jnp.bfloat16)],
        compiler_params=pltpu.CompilerParams(
            dimension_semantics=("parallel",)),
    )(x_cm, masks, *wargs)
    return out.reshape(N, 1, H, W)


# ----------------------------------------------------------------------------
# Deterministic synthetic parameters (PyTorch layouts, BN pre-folded)
# ----------------------------------------------------------------------------
def _fold_bn(w, key):
    """Fold inference-mode BatchNorm2d into a bias-free conv (OIHW weights)."""
    C = w.shape[0]
    kg, kb, km, kv = jax.random.split(key, 4)
    gamma = 1.0 + 0.1 * jax.random.normal(kg, (C,), jnp.float32)
    beta = 0.1 * jax.random.normal(kb, (C,), jnp.float32)
    mean = 0.1 * jax.random.normal(km, (C,), jnp.float32)
    var = jax.random.uniform(kv, (C,), jnp.float32, minval=0.5, maxval=1.5)
    scale = gamma / jnp.sqrt(var + BN_EPS)
    return w * scale[:, None, None, None], beta - mean * scale


def _init_double_conv(key, C, K):
    k = jax.random.split(key, 6)
    std = 1.0 / float(C * K * K) ** 0.5
    w1, b1 = _fold_bn(std * jax.random.normal(k[0], (C, C, K, K), jnp.float32), k[1])
    w2, b2 = _fold_bn(std * jax.random.normal(k[2], (C, C, K, K), jnp.float32), k[3])
    wa = (1.0 / float(C) ** 0.5) * jax.random.normal(k[4], (C, C, 1, 1), jnp.float32)
    ba = 0.1 * jax.random.normal(k[5], (C,), jnp.float32)
    return dict(w1=w1, b1=b1, w2=w2, b2=b2, wa=wa, ba=ba)


def init_params(key, C, reduction=8):
    Cr = max(C // reduction, 1)
    k = jax.random.split(key, 8)
    se = dict(
        w1=(1.0 / float(C) ** 0.5) * jax.random.normal(k[0], (Cr, C), jnp.float32),
        b1=0.1 * jax.random.normal(k[1], (Cr,), jnp.float32),
        w2=(1.0 / float(Cr) ** 0.5) * jax.random.normal(k[2], (C, Cr), jnp.float32),
        b2=0.1 * jax.random.normal(k[3], (C,), jnp.float32),
    )
    return dict(
        se=se,
        dc3=_init_double_conv(k[4], C, 3),
        dc5=_init_double_conv(k[5], C, 5),
        dc7=_init_double_conv(k[6], C, 7),
        fc_w=(1.0 / float(2 * C) ** 0.5) *
             jax.random.normal(k[7], (1, 2 * C, 1, 1), jnp.float32),
    )


# ----------------------------------------------------------------------------
# Pure-JAX reference (NCHW), mirrors the PyTorch forward — correctness check
# ----------------------------------------------------------------------------
def _conv_ref(x, w, b, pad):
    out = jax.lax.conv_general_dilated(
        x, w, window_strides=(1, 1), padding=((pad, pad), (pad, pad)),
        dimension_numbers=("NCHW", "OIHW", "NCHW"),
        precision=jax.lax.Precision.HIGHEST)
    if b is not None:
        out = out + b[None, :, None, None]
    return out


def _double_conv_ref(x, p):
    K = p["w1"].shape[-1]
    idn = _conv_ref(x, p["wa"], p["ba"], 0)
    t = jax.nn.relu(_conv_ref(x, p["w1"], p["b1"], K // 2))
    t = jax.nn.relu(_conv_ref(t, p["w2"], p["b2"], K // 2))
    return t + idn


def ddsm_atternet_ref(x, params):
    se = params["se"]
    pooled = x.mean(axis=(2, 3))                                         # (N, C)
    h = jax.nn.relu(jnp.dot(pooled, se["w1"].T,
                            precision=jax.lax.Precision.HIGHEST) + se["b1"])
    s = jax.nn.sigmoid(jnp.dot(h, se["w2"].T,
                               precision=jax.lax.Precision.HIGHEST) + se["b2"])
    feat = x * s[:, :, None, None]
    feat = _double_conv_ref(feat, params["dc3"])
    f5 = _double_conv_ref(feat, params["dc5"])
    f7 = _double_conv_ref(feat, params["dc7"])
    cat = jnp.concatenate([f5 + x, f7 + x], axis=1)
    return jax.nn.sigmoid(_conv_ref(cat, params["fc_w"], None, 0))


if __name__ == "__main__":
    N, C, H, W = 2, 16, 16, 16          # in_dim=16 (reduction_ratio=8 -> Cr=2)
    kx, kp = jax.random.split(jax.random.PRNGKey(0))
    x = jax.random.normal(kx, (N, C, H, W), jnp.float32)   # NCHW, like PyTorch
    params = init_params(kp, C)

    out = jax.block_until_ready(ddsm_atternet(x, params))
    assert out.shape == (N, 1, H, W), out.shape

    ref = jax.block_until_ready(ddsm_atternet_ref(x, params))
    max_err = float(jnp.max(jnp.abs(out - ref)))
    assert max_err < 5e-2, f"max abs err vs reference: {max_err}"

    print("KERNEL_OK")
</pallas_src>

<mosaic_0001>
module attributes {stable_mosaic.version = 11 : i64} {
  func.func @kernel(%arg0: i32, %arg1: memref<1x16x256xf32, #tpu.memory_space<vmem>>, %arg2: memref<49x256xf32, #tpu.memory_space<vmem>>, %arg3: memref<2x16xf32, #tpu.memory_space<vmem>>, %arg4: memref<2x1xf32, #tpu.memory_space<vmem>>, %arg5: memref<16x2xf32, #tpu.memory_space<vmem>>, %arg6: memref<16x1xf32, #tpu.memory_space<vmem>>, %arg7: memref<32x144xbf16, #tpu.memory_space<vmem>>, %arg8: memref<32x1xf32, #tpu.memory_space<vmem>>, %arg9: memref<16x144xbf16, #tpu.memory_space<vmem>>, %arg10: memref<16x1xf32, #tpu.memory_space<vmem>>, %arg11: memref<64x784xbf16, #tpu.memory_space<vmem>>, %arg12: memref<64x1xf32, #tpu.memory_space<vmem>>, %arg13: memref<16x400xbf16, #tpu.memory_space<vmem>>, %arg14: memref<16x1xf32, #tpu.memory_space<vmem>>, %arg15: memref<16x784xbf16, #tpu.memory_space<vmem>>, %arg16: memref<16x1xf32, #tpu.memory_space<vmem>>, %arg17: memref<16x1xf32, #tpu.memory_space<vmem>>, %arg18: memref<16x1xf32, #tpu.memory_space<vmem>>, %arg19: memref<1x1x256xf32, #tpu.memory_space<vmem>>, %arg20: memref<784x256xbf16, #tpu.memory_space<vmem>>) attributes {dimension_semantics = [#tpu.dimension_semantics<parallel>], iteration_bounds = array<i64: 2>, scalar_prefetch = 0 : i64, scratch_operands = 1 : i64, tpu.core_type = #tpu.core_type<tc>, window_params = [{transform_indices = @transform_0, window_bounds = array<i64: 1, 16, 256>}, {pipeline_mode = #tpu.pipeline_mode<synchronous>, transform_indices = @transform_1, window_bounds = array<i64: 49, 256>}, {pipeline_mode = #tpu.pipeline_mode<synchronous>, transform_indices = @transform_2, window_bounds = array<i64: 2, 16>}, {pipeline_mode = #tpu.pipeline_mode<synchronous>, transform_indices = @transform_3, window_bounds = array<i64: 2, 1>}, {pipeline_mode = #tpu.pipeline_mode<synchronous>, transform_indices = @transform_4, window_bounds = array<i64: 16, 2>}, {pipeline_mode = #tpu.pipeline_mode<synchronous>, transform_indices = @transform_5, window_bounds = array<i64: 16, 1>}, {pipeline_mode = #tpu.pipeline_mode<synchronous>, transform_indices = @transform_6, window_bounds = array<i64: 32, 144>}, {pipeline_mode = #tpu.pipeline_mode<synchronous>, transform_indices = @transform_7, window_bounds = array<i64: 32, 1>}, {pipeline_mode = #tpu.pipeline_mode<synchronous>, transform_indices = @transform_8, window_bounds = array<i64: 16, 144>}, {pipeline_mode = #tpu.pipeline_mode<synchronous>, transform_indices = @transform_9, window_bounds = array<i64: 16, 1>}, {pipeline_mode = #tpu.pipeline_mode<synchronous>, transform_indices = @transform_10, window_bounds = array<i64: 64, 784>}, {pipeline_mode = #tpu.pipeline_mode<synchronous>, transform_indices = @transform_11, window_bounds = array<i64: 64, 1>}, {pipeline_mode = #tpu.pipeline_mode<synchronous>, transform_indices = @transform_12, window_bounds = array<i64: 16, 400>}, {pipeline_mode = #tpu.pipeline_mode<synchronous>, transform_indices = @transform_13, window_bounds = array<i64: 16, 1>}, {pipeline_mode = #tpu.pipeline_mode<synchronous>, transform_indices = @transform_14, window_bounds = array<i64: 16, 784>}, {pipeline_mode = #tpu.pipeline_mode<synchronous>, transform_indices = @transform_15, window_bounds = array<i64: 16, 1>}, {pipeline_mode = #tpu.pipeline_mode<synchronous>, transform_indices = @transform_16, window_bounds = array<i64: 16, 1>}, {pipeline_mode = #tpu.pipeline_mode<synchronous>, transform_indices = @transform_17, window_bounds = array<i64: 16, 1>}, {transform_indices = @transform_18, window_bounds = array<i64: 1, 1, 256>}]} {
    %c0 = arith.constant 0 : index
    %c0_0 = arith.constant 0 : index
    %c0_1 = arith.constant 0 : index
    %0 = vector.load %arg1[%c0, %c0_0, %c0_1] : memref<1x16x256xf32, #tpu.memory_space<vmem>>, vector<1x16x256xf32>
    %1 = vector.shape_cast %0 : vector<1x16x256xf32> to vector<16x256xf32>
    %c0_2 = arith.constant 0 : index
    %c0_3 = arith.constant 0 : index
    %2 = vector.load %arg2[%c0_2, %c0_3] : memref<49x256xf32, #tpu.memory_space<vmem>>, vector<49x256xf32>
    %cst = arith.constant dense<0.000000e+00> : vector<16xf32>
    %3 = vector.multi_reduction <add>, %1, %cst [1] : vector<16x256xf32> to vector<16xf32>
    %4 = vector.shape_cast %3 : vector<16xf32> to vector<16x1xf32>
    %cst_4 = arith.constant 2.560000e+02 : f32
    %5 = vector.broadcast %cst_4 : f32 to vector<16x1xf32>
    %6 = arith.divf %4, %5 : vector<16x1xf32>
    %c0_5 = arith.constant 0 : index
    %c0_6 = arith.constant 0 : index
    %7 = vector.load %arg3[%c0_5, %c0_6] : memref<2x16xf32, #tpu.memory_space<vmem>>, vector<2x16xf32>
    %c0_7 = arith.constant 0 : index
    %c0_8 = arith.constant 0 : index
    %8 = vector.load %arg4[%c0_7, %c0_8] : memref<2x1xf32, #tpu.memory_space<vmem>>, vector<2x1xf32>
    %9 = vector.extract_strided_slice %7 {offsets = [0, 0], sizes = [2, 1], strides = [1, 1]} : vector<2x16xf32> to vector<2x1xf32>
    %10 = vector.extract_strided_slice %6 {offsets = [0, 0], sizes = [1, 1], strides = [1, 1]} : vector<16x1xf32> to vector<1x1xf32>
    %11 = vector.broadcast %10 : vector<1x1xf32> to vector<2x1xf32>
    %12 = arith.mulf %9, %11 : vector<2x1xf32>
    %13 = arith.addf %8, %12 : vector<2x1xf32>
    %14 = vector.extract_strided_slice %7 {offsets = [0, 1], sizes = [2, 1], strides = [1, 1]} : vector<2x16xf32> to vector<2x1xf32>
    %15 = vector.extract_strided_slice %6 {offsets = [1, 0], sizes = [1, 1], strides = [1, 1]} : vector<16x1xf32> to vector<1x1xf32>
    %16 = vector.broadcast %15 : vector<1x1xf32> to vector<2x1xf32>
    %17 = arith.mulf %14, %16 : vector<2x1xf32>
    %18 = arith.addf %13, %17 : vector<2x1xf32>
    %19 = vector.extract_strided_slice %7 {offsets = [0, 2], sizes = [2, 1], strides = [1, 1]} : vector<2x16xf32> to vector<2x1xf32>
    %20 = vector.extract_strided_slice %6 {offsets = [2, 0], sizes = [1, 1], strides = [1, 1]} : vector<16x1xf32> to vector<1x1xf32>
    %21 = vector.broadcast %20 : vector<1x1xf32> to vector<2x1xf32>
    %22 = arith.mulf %19, %21 : vector<2x1xf32>
    %23 = arith.addf %18, %22 : vector<2x1xf32>
    %24 = vector.extract_strided_slice %7 {offsets = [0, 3], sizes = [2, 1], strides = [1, 1]} : vector<2x16xf32> to vector<2x1xf32>
    %25 = vector.extract_strided_slice %6 {offsets = [3, 0], sizes = [1, 1], strides = [1, 1]} : vector<16x1xf32> to vector<1x1xf32>
    %26 = vector.broadcast %25 : vector<1x1xf32> to vector<2x1xf32>
    %27 = arith.mulf %24, %26 : vector<2x1xf32>
    %28 = arith.addf %23, %27 : vector<2x1xf32>
    %29 = vector.extract_strided_slice %7 {offsets = [0, 4], sizes = [2, 1], strides = [1, 1]} : vector<2x16xf32> to vector<2x1xf32>
    %30 = vector.extract_strided_slice %6 {offsets = [4, 0], sizes = [1, 1], strides = [1, 1]} : vector<16x1xf32> to vector<1x1xf32>
    %31 = vector.broadcast %30 : vector<1x1xf32> to vector<2x1xf32>
    %32 = arith.mulf %29, %31 : vector<2x1xf32>
    %33 = arith.addf %28, %32 : vector<2x1xf32>
    %34 = vector.extract_strided_slice %7 {offsets = [0, 5], sizes = [2, 1], strides = [1, 1]} : vector<2x16xf32> to vector<2x1xf32>
    %35 = vector.extract_strided_slice %6 {offsets = [5, 0], sizes = [1, 1], strides = [1, 1]} : vector<16x1xf32> to vector<1x1xf32>
    %36 = vector.broadcast %35 : vector<1x1xf32> to vector<2x1xf32>
    %37 = arith.mulf %34, %36 : vector<2x1xf32>
    %38 = arith.addf %33, %37 : vector<2x1xf32>
    %39 = vector.extract_strided_slice %7 {offsets = [0, 6], sizes = [2, 1], strides = [1, 1]} : vector<2x16xf32> to vector<2x1xf32>
    %40 = vector.extract_strided_slice %6 {offsets = [6, 0], sizes = [1, 1], strides = [1, 1]} : vector<16x1xf32> to vector<1x1xf32>
    %41 = vector.broadcast %40 : vector<1x1xf32> to vector<2x1xf32>
    %42 = arith.mulf %39, %41 : vector<2x1xf32>
    %43 = arith.addf %38, %42 : vector<2x1xf32>
    %44 = vector.extract_strided_slice %7 {offsets = [0, 7], sizes = [2, 1], strides = [1, 1]} : vector<2x16xf32> to vector<2x1xf32>
    %45 = vector.extract_strided_slice %6 {offsets = [7, 0], sizes = [1, 1], strides = [1, 1]} : vector<16x1xf32> to vector<1x1xf32>
    %46 = vector.broadcast %45 : vector<1x1xf32> to vector<2x1xf32>
    %47 = arith.mulf %44, %46 : vector<2x1xf32>
    %48 = arith.addf %43, %47 : vector<2x1xf32>
    %49 = vector.extract_strided_slice %7 {offsets = [0, 8], sizes = [2, 1], strides = [1, 1]} : vector<2x16xf32> to vector<2x1xf32>
    %50 = vector.extract_strided_slice %6 {offsets = [8, 0], sizes = [1, 1], strides = [1, 1]} : vector<16x1xf32> to vector<1x1xf32>
    %51 = vector.broadcast %50 : vector<1x1xf32> to vector<2x1xf32>
    %52 = arith.mulf %49, %51 : vector<2x1xf32>
    %53 = arith.addf %48, %52 : vector<2x1xf32>
    %54 = vector.extract_strided_slice %7 {offsets = [0, 9], sizes = [2, 1], strides = [1, 1]} : vector<2x16xf32> to vector<2x1xf32>
    %55 = vector.extract_strided_slice %6 {offsets = [9, 0], sizes = [1, 1], strides = [1, 1]} : vector<16x1xf32> to vector<1x1xf32>
    %56 = vector.broadcast %55 : vector<1x1xf32> to vector<2x1xf32>
    %57 = arith.mulf %54, %56 : vector<2x1xf32>
    %58 = arith.addf %53, %57 : vector<2x1xf32>
    %59 = vector.extract_strided_slice %7 {offsets = [0, 10], sizes = [2, 1], strides = [1, 1]} : vector<2x16xf32> to vector<2x1xf32>
    %60 = vector.extract_strided_slice %6 {offsets = [10, 0], sizes = [1, 1], strides = [1, 1]} : vector<16x1xf32> to vector<1x1xf32>
    %61 = vector.broadcast %60 : vector<1x1xf32> to vector<2x1xf32>
    %62 = arith.mulf %59, %61 : vector<2x1xf32>
    %63 = arith.addf %58, %62 : vector<2x1xf32>
    %64 = vector.extract_strided_slice %7 {offsets = [0, 11], sizes = [2, 1], strides = [1, 1]} : vector<2x16xf32> to vector<2x1xf32>
    %65 = vector.extract_strided_slice %6 {offsets = [11, 0], sizes = [1, 1], strides = [1, 1]} : vector<16x1xf32> to vector<1x1xf32>
    %66 = vector.broadcast %65 : vector<1x1xf32> to vector<2x1xf32>
    %67 = arith.mulf %64, %66 : vector<2x1xf32>
    %68 = arith.addf %63, %67 : vector<2x1xf32>
    %69 = vector.extract_strided_slice %7 {offsets = [0, 12], sizes = [2, 1], strides = [1, 1]} : vector<2x16xf32> to vector<2x1xf32>
    %70 = vector.extract_strided_slice %6 {offsets = [12, 0], sizes = [1, 1], strides = [1, 1]} : vector<16x1xf32> to vector<1x1xf32>
    %71 = vector.broadcast %70 : vector<1x1xf32> to vector<2x1xf32>
    %72 = arith.mulf %69, %71 : vector<2x1xf32>
    %73 = arith.addf %68, %72 : vector<2x1xf32>
    %74 = vector.extract_strided_slice %7 {offsets = [0, 13], sizes = [2, 1], strides = [1, 1]} : vector<2x16xf32> to vector<2x1xf32>
    %75 = vector.extract_strided_slice %6 {offsets = [13, 0], sizes = [1, 1], strides = [1, 1]} : vector<16x1xf32> to vector<1x1xf32>
    %76 = vector.broadcast %75 : vector<1x1xf32> to vector<2x1xf32>
    %77 = arith.mulf %74, %76 : vector<2x1xf32>
    %78 = arith.addf %73, %77 : vector<2x1xf32>
    %79 = vector.extract_strided_slice %7 {offsets = [0, 14], sizes = [2, 1], strides = [1, 1]} : vector<2x16xf32> to vector<2x1xf32>
    %80 = vector.extract_strided_slice %6 {offsets = [14, 0], sizes = [1, 1], strides = [1, 1]} : vector<16x1xf32> to vector<1x1xf32>
    %81 = vector.broadcast %80 : vector<1x1xf32> to vector<2x1xf32>
    %82 = arith.mulf %79, %81 : vector<2x1xf32>
    %83 = arith.addf %78, %82 : vector<2x1xf32>
    %84 = vector.extract_strided_slice %7 {offsets = [0, 15], sizes = [2, 1], strides = [1, 1]} : vector<2x16xf32> to vector<2x1xf32>
    %85 = vector.extract_strided_slice %6 {offsets = [15, 0], sizes = [1, 1], strides = [1, 1]} : vector<16x1xf32> to vector<1x1xf32>
    %86 = vector.broadcast %85 : vector<1x1xf32> to vector<2x1xf32>
    %87 = arith.mulf %84, %86 : vector<2x1xf32>
    %88 = arith.addf %83, %87 : vector<2x1xf32>
    %cst_9 = arith.constant 0.000000e+00 : f32
    %89 = vector.broadcast %cst_9 : f32 to vector<2x1xf32>
    %90 = arith.maximumf %88, %89 : vector<2x1xf32>
    %c0_10 = arith.constant 0 : index
    %c0_11 = arith.constant 0 : index
    %91 = vector.load %arg5[%c0_10, %c0_11] : memref<16x2xf32, #tpu.memory_space<vmem>>, vector<16x2xf32>
    %c0_12 = arith.constant 0 : index
    %c0_13 = arith.constant 0 : index
    %92 = vector.load %arg6[%c0_12, %c0_13] : memref<16x1xf32, #tpu.memory_space<vmem>>, vector<16x1xf32>
    %93 = vector.extract_strided_slice %91 {offsets = [0, 0], sizes = [16, 1], strides = [1, 1]} : vector<16x2xf32> to vector<16x1xf32>
    %94 = vector.extract_strided_slice %90 {offsets = [0, 0], sizes = [1, 1], strides = [1, 1]} : vector<2x1xf32> to vector<1x1xf32>
    %95 = vector.broadcast %94 : vector<1x1xf32> to vector<16x1xf32>
    %96 = arith.mulf %93, %95 : vector<16x1xf32>
    %97 = arith.addf %92, %96 : vector<16x1xf32>
    %98 = vector.extract_strided_slice %91 {offsets = [0, 1], sizes = [16, 1], strides = [1, 1]} : vector<16x2xf32> to vector<16x1xf32>
    %99 = vector.extract_strided_slice %90 {offsets = [1, 0], sizes = [1, 1], strides = [1, 1]} : vector<2x1xf32> to vector<1x1xf32>
    %100 = vector.broadcast %99 : vector<1x1xf32> to vector<16x1xf32>
    %101 = arith.mulf %98, %100 : vector<16x1xf32>
    %102 = arith.addf %97, %101 : vector<16x1xf32>
    %103 = arith.negf %102 : vector<16x1xf32>
    %104 = math.exp %103 : vector<16x1xf32>
    %cst_14 = arith.constant 1.000000e+00 : f32
    %105 = vector.broadcast %cst_14 : f32 to vector<16x1xf32>
    %106 = arith.addf %105, %104 : vector<16x1xf32>
    %107 = arith.divf %105, %106 : vector<16x1xf32>
    %108 = vector.broadcast %107 : vector<16x1xf32> to vector<16x256xf32>
    %109 = arith.mulf %1, %108 : vector<16x256xf32>
    %c17_i32 = arith.constant 17 : i32
    %110 = tpu.dynamic_rotate %109 by %c17_i32 dim 1 : vector<16x256xf32>, i32 -> vector<16x256xf32>
    %111 = vector.extract_strided_slice %2 {offsets = [16, 0], sizes = [1, 256], strides = [1, 1]} : vector<49x256xf32> to vector<1x256xf32>
    %112 = vector.broadcast %111 : vector<1x256xf32> to vector<16x256xf32>
    %113 = arith.mulf %110, %112 : vector<16x256xf32>
    %114 = arith.truncf %113 : vector<16x256xf32> to vector<16x256xbf16>
    %c0_15 = arith.constant 0 : index
    %c0_16 = arith.constant 0 : index
    %115 = vector.load %arg20[%c0_15, %c0_16] : memref<784x256xbf16, #tpu.memory_space<vmem>>, vector<16x256xbf16>
    tpu.vector_store %arg20[%c0_15, %c0_16], %114 {strides = array<i32>} : memref<784x256xbf16, #tpu.memory_space<vmem>>, vector<16x256xbf16>,
    %c16_i32 = arith.constant 16 : i32
    %116 = tpu.dynamic_rotate %109 by %c16_i32 dim 1 : vector<16x256xf32>, i32 -> vector<16x256xf32>
    %117 = vector.extract_strided_slice %2 {offsets = [17, 0], sizes = [1, 256], strides = [1, 1]} : vector<49x256xf32> to vector<1x256xf32>
    %118 = vector.broadcast %117 : vector<1x256xf32> to vector<16x256xf32>
    %119 = arith.mulf %116, %118 : vector<16x256xf32>
    %120 = arith.truncf %119 : vector<16x256xf32> to vector<16x256xbf16>
    %c16 = arith.constant 16 : index
    %c0_17 = arith.constant 0 : index
    %121 = vector.load %arg20[%c16, %c0_17] : memref<784x256xbf16, #tpu.memory_space<vmem>>, vector<16x256xbf16>
    tpu.vector_store %arg20[%c16, %c0_17], %120 {strides = array<i32>} : memref<784x256xbf16, #tpu.memory_space<vmem>>, vector<16x256xbf16>,
    %c15_i32 = arith.constant 15 : i32
    %122 = tpu.dynamic_rotate %109 by %c15_i32 dim 1 : vector<16x256xf32>, i32 -> vector<16x256xf32>
    %123 = vector.extract_strided_slice %2 {offsets = [18, 0], sizes = [1, 256], strides = [1, 1]} : vector<49x256xf32> to vector<1x256xf32>
    %124 = vector.broadcast %123 : vector<1x256xf32> to vector<16x256xf32>
    %125 = arith.mulf %122, %124 : vector<16x256xf32>
    %126 = arith.truncf %125 : vector<16x256xf32> to vector<16x256xbf16>
    %c32 = arith.constant 32 : index
    %c0_18 = arith.constant 0 : index
    %127 = vector.load %arg20[%c32, %c0_18] : memref<784x256xbf16, #tpu.memory_space<vmem>>, vector<16x256xbf16>
    tpu.vector_store %arg20[%c32, %c0_18], %126 {strides = array<i32>} : memref<784x256xbf16, #tpu.memory_space<vmem>>, vector<16x256xbf16>,
    %c1_i32 = arith.constant 1 : i32
    %128 = tpu.dynamic_rotate %109 by %c1_i32 dim 1 : vector<16x256xf32>, i32 -> vector<16x256xf32>
    %129 = vector.extract_strided_slice %2 {offsets = [23, 0], sizes = [1, 256], strides = [1, 1]} : vector<49x256xf32> to vector<1x256xf32>
    %130 = vector.broadcast %129 : vector<1x256xf32> to vector<16x256xf32>
    %131 = arith.mulf %128, %130 : vector<16x256xf32>
    %132 = arith.truncf %131 : vector<16x256xf32> to vector<16x256xbf16>
    %c48 = arith.constant 48 : index
    %c0_19 = arith.constant 0 : index
    %133 = vector.load %arg20[%c48, %c0_19] : memref<784x256xbf16, #tpu.memory_space<vmem>>, vector<16x256xbf16>
    tpu.vector_store %arg20[%c48, %c0_19], %132 {strides = array<i32>} : memref<784x256xbf16, #tpu.memory_space<vmem>>, vector<16x256xbf16>,
    %134 = vector.extract_strided_slice %2 {offsets = [24, 0], sizes = [1, 256], strides = [1, 1]} : vector<49x256xf32> to vector<1x256xf32>
    %135 = vector.broadcast %134 : vector<1x256xf32> to vector<16x256xf32>
    %136 = arith.mulf %109, %135 : vector<16x256xf32>
    %137 = arith.truncf %136 : vector<16x256xf32> to vector<16x256xbf16>
    %c64 = arith.constant 64 : index
    %c0_20 = arith.constant 0 : index
    %138 = vector.load %arg20[%c64, %c0_20] : memref<784x256xbf16, #tpu.memory_space<vmem>>, vector<16x256xbf16>
    tpu.vector_store %arg20[%c64, %c0_20], %137 {strides = array<i32>} : memref<784x256xbf16, #tpu.memory_space<vmem>>, vector<16x256xbf16>,
    %c255_i32 = arith.constant 255 : i32
    %139 = tpu.dynamic_rotate %109 by %c255_i32 dim 1 : vector<16x256xf32>, i32 -> vector<16x256xf32>
    %140 = vector.extract_strided_slice %2 {offsets = [25, 0], sizes = [1, 256], strides = [1, 1]} : vector<49x256xf32> to vector<1x256xf32>
    %141 = vector.broadcast %140 : vector<1x256xf32> to vector<16x256xf32>
    %142 = arith.mulf %139, %141 : vector<16x256xf32>
    %143 = arith.truncf %142 : vector<16x256xf32> to vector<16x256xbf16>
    %c80 = arith.constant 80 : index
    %c0_21 = arith.constant 0 : index
    %144 = vector.load %arg20[%c80, %c0_21] : memref<784x256xbf16, #tpu.memory_space<vmem>>, vector<16x256xbf16>
    tpu.vector_store %arg20[%c80, %c0_21], %143 {strides = array<i32>} : memref<784x256xbf16, #tpu.memory_space<vmem>>, vector<16x256xbf16>,
    %c241_i32 = arith.constant 241 : i32
    %145 = tpu.dynamic_rotate %109 by %c241_i32 dim 1 : vector<16x256xf32>, i32 -> vector<16x256xf32>
    %146 = vector.extract_strided_slice %2 {offsets = [30, 0], sizes = [1, 256], strides = [1, 1]} : vector<49x256xf32> to vector<1x256xf32>
    %147 = vector.broadcast %146 : vector<1x256xf32> to vector<16x256xf32>
    %148 = arith.mulf %145, %147 : vector<16x256xf32>
    %149 = arith.truncf %148 : vector<16x256xf32> to vector<16x256xbf16>
    %c96 = arith.constant 96 : index
    %c0_22 = arith.constant 0 : index
    %150 = vector.load %arg20[%c96, %c0_22] : memref<784x256xbf16, #tpu.memory_space<vmem>>, vector<16x256xbf16>
    tpu.vector_store %arg20[%c96, %c0_22], %149 {strides = array<i32>} : memref<784x256xbf16, #tpu.memory_space<vmem>>, vector<16x256xbf16>,
    %c240_i32 = arith.constant 240 : i32
    %151 = tpu.dynamic_rotate %109 by %c240_i32 dim 1 : vector<16x256xf32>, i32 -> vector<16x256xf32>
    %152 = vector.extract_strided_slice %2 {offsets = [31, 0], sizes = [1, 256], strides = [1, 1]} : vector<49x256xf32> to vector<1x256xf32>
    %153 = vector.broadcast %152 : vector<1x256xf32> to vector<16x256xf32>
    %154 = arith.mulf %151, %153 : vector<16x256xf32>
    %155 = arith.truncf %154 : vector<16x256xf32> to vector<16x256xbf16>
    %c112 = arith.constant 112 : index
    %c0_23 = arith.constant 0 : index
    %156 = vector.load %arg20[%c112, %c0_23] : memref<784x256xbf16, #tpu.memory_space<vmem>>, vector<16x256xbf16>
    tpu.vector_store %arg20[%c112, %c0_23], %155 {strides = array<i32>} : memref<784x256xbf16, #tpu.memory_space<vmem>>, vector<16x256xbf16>,
    %c239_i32 = arith.constant 239 : i32
    %157 = tpu.dynamic_rotate %109 by %c239_i32 dim 1 : vector<16x256xf32>, i32 -> vector<16x256xf32>
    %158 = vector.extract_strided_slice %2 {offsets = [32, 0], sizes = [1, 256], strides = [1, 1]} : vector<49x256xf32> to vector<1x256xf32>
    %159 = vector.broadcast %158 : vector<1x256xf32> to vector<16x256xf32>
    %160 = arith.mulf %157, %159 : vector<16x256xf32>
    %161 = arith.truncf %160 : vector<16x256xf32> to vector<16x256xbf16>
    %c128 = arith.constant 128 : index
    %c0_24 = arith.constant 0 : index
    %162 = vector.load %arg20[%c128, %c0_24] : memref<784x256xbf16, #tpu.memory_space<vmem>>, vector<16x256xbf16>
    tpu.vector_store %arg20[%c128, %c0_24], %161 {strides = array<i32>} : memref<784x256xbf16, #tpu.memory_space<vmem>>, vector<16x256xbf16>,
    %c0_25 = arith.constant 0 : index
    %c0_26 = arith.constant 0 : index
    %163 = vector.load %arg7[%c0_25, %c0_26] : memref<32x144xbf16, #tpu.memory_space<vmem>>, vector<32x144xbf16>
    %c0_27 = arith.constant 0 : index
    %c0_28 = arith.constant 0 : index
    %164 = vector.load %arg20[%c0_27, %c0_28] : memref<784x256xbf16, #tpu.memory_space<vmem>>, vector<144x256xbf16>
    %cst_29 = arith.constant dense<0.000000e+00> : vector<32x256xf32>
    %165 = tpu.matmul %163, %164, %cst_29 {dimension_numbers = #tpu.dot_dimension_numbers<[1], [0], [0], [1], [0, 0, 1, 1], [], []>} : vector<32x144xbf16>, vector<144x256xbf16>, vector<32x256xf32> -> vector<32x256xf32>
    %c0_30 = arith.constant 0 : index
    %c0_31 = arith.constant 0 : index
    %166 = vector.load %arg8[%c0_30, %c0_31] : memref<32x1xf32, #tpu.memory_space<vmem>>, vector<32x1xf32>
    %167 = vector.broadcast %166 : vector<32x1xf32> to vector<32x256xf32>
    %168 = arith.addf %165, %167 : vector<32x256xf32>
    %169 = vector.extract_strided_slice %168 {offsets = [0, 0], sizes = [16, 256], strides = [1, 1]} : vector<32x256xf32> to vector<16x256xf32>
    %cst_32 = arith.constant 0.000000e+00 : f32
    %170 = vector.broadcast %cst_32 : f32 to vector<16x256xf32>
    %171 = arith.maximumf %169, %170 : vector<16x256xf32>
    %172 = vector.extract_strided_slice %168 {offsets = [16, 0], sizes = [16, 256], strides = [1, 1]} : vector<32x256xf32> to vector<16x256xf32>
    %c17_i32_33 = arith.constant 17 : i32
    %173 = tpu.dynamic_rotate %171 by %c17_i32_33 dim 1 : vector<16x256xf32>, i32 -> vector<16x256xf32>
    %174 = vector.extract_strided_slice %2 {offsets = [16, 0], sizes = [1, 256], strides = [1, 1]} : vector<49x256xf32> to vector<1x256xf32>
    %175 = vector.broadcast %174 : vector<1x256xf32> to vector<16x256xf32>
    %176 = arith.mulf %173, %175 : vector<16x256xf32>
    %177 = arith.truncf %176 : vector<16x256xf32> to vector<16x256xbf16>
    %c0_34 = arith.constant 0 : index
    %c0_35 = arith.constant 0 : index
    %178 = vector.load %arg20[%c0_34, %c0_35] : memref<784x256xbf16, #tpu.memory_space<vmem>>, vector<16x256xbf16>
    tpu.vector_store %arg20[%c0_34, %c0_35], %177 {strides = array<i32>} : memref<784x256xbf16, #tpu.memory_space<vmem>>, vector<16x256xbf16>,
    %c16_i32_36 = arith.constant 16 : i32
    %179 = tpu.dynamic_rotate %171 by %c16_i32_36 dim 1 : vector<16x256xf32>, i32 -> vector<16x256xf32>
    %180 = vector.extract_strided_slice %2 {offsets = [17, 0], sizes = [1, 256], strides = [1, 1]} : vector<49x256xf32> to vector<1x256xf32>
    %181 = vector.broadcast %180 : vector<1x256xf32> to vector<16x256xf32>
    %182 = arith.mulf %179, %181 : vector<16x256xf32>
    %183 = arith.truncf %182 : vector<16x256xf32> to vector<16x256xbf16>
    %c16_37 = arith.constant 16 : index
    %c0_38 = arith.constant 0 : index
    %184 = vector.load %arg20[%c16_37, %c0_38] : memref<784x256xbf16, #tpu.memory_space<vmem>>, vector<16x256xbf16>
    tpu.vector_store %arg20[%c16_37, %c0_38], %183 {strides = array<i32>} : memref<784x256xbf16, #tpu.memory_space<vmem>>, vector<16x256xbf16>,
    %c15_i32_39 = arith.constant 15 : i32
    %185 = tpu.dynamic_rotate %171 by %c15_i32_39 dim 1 : vector<16x256xf32>, i32 -> vector<16x256xf32>
    %186 = vector.extract_strided_slice %2 {offsets = [18, 0], sizes = [1, 256], strides = [1, 1]} : vector<49x256xf32> to vector<1x256xf32>
    %187 = vector.broadcast %186 : vector<1x256xf32> to vector<16x256xf32>
    %188 = arith.mulf %185, %187 : vector<16x256xf32>
    %189 = arith.truncf %188 : vector<16x256xf32> to vector<16x256xbf16>
    %c32_40 = arith.constant 32 : index
    %c0_41 = arith.constant 0 : index
    %190 = vector.load %arg20[%c32_40, %c0_41] : memref<784x256xbf16, #tpu.memory_space<vmem>>, vector<16x256xbf16>
    tpu.vector_store %arg20[%c32_40, %c0_41], %189 {strides = array<i32>} : memref<784x256xbf16, #tpu.memory_space<vmem>>, vector<16x256xbf16>,
    %c1_i32_42 = arith.constant 1 : i32
    %191 = tpu.dynamic_rotate %171 by %c1_i32_42 dim 1 : vector<16x256xf32>, i32 -> vector<16x256xf32>
    %192 = vector.extract_strided_slice %2 {offsets = [23, 0], sizes = [1, 256], strides = [1, 1]} : vector<49x256xf32> to vector<1x256xf32>
    %193 = vector.broadcast %192 : vector<1x256xf32> to vector<16x256xf32>
    %194 = arith.mulf %191, %193 : vector<16x256xf32>
    %195 = arith.truncf %194 : vector<16x256xf32> to vector<16x256xbf16>
    %c48_43 = arith.constant 48 : index
    %c0_44 = arith.constant 0 : index
    %196 = vector.load %arg20[%c48_43, %c0_44] : memref<784x256xbf16, #tpu.memory_space<vmem>>, vector<16x256xbf16>
    tpu.vector_store %arg20[%c48_43, %c0_44], %195 {strides = array<i32>} : memref<784x256xbf16, #tpu.memory_space<vmem>>, vector<16x256xbf16>,
    %197 = vector.extract_strided_slice %2 {offsets = [24, 0], sizes = [1, 256], strides = [1, 1]} : vector<49x256xf32> to vector<1x256xf32>
    %198 = vector.broadcast %197 : vector<1x256xf32> to vector<16x256xf32>
    %199 = arith.mulf %171, %198 : vector<16x256xf32>
    %200 = arith.truncf %199 : vector<16x256xf32> to vector<16x256xbf16>
    %c64_45 = arith.constant 64 : index
    %c0_46 = arith.constant 0 : index
    %201 = vector.load %arg20[%c64_45, %c0_46] : memref<784x256xbf16, #tpu.memory_space<vmem>>, vector<16x256xbf16>
    tpu.vector_store %arg20[%c64_45, %c0_46], %200 {strides = array<i32>} : memref<784x256xbf16, #tpu.memory_space<vmem>>, vector<16x256xbf16>,
    %c255_i32_47 = arith.constant 255 : i32
    %202 = tpu.dynamic_rotate %171 by %c255_i32_47 dim 1 : vector<16x256xf32>, i32 -> vector<16x256xf32>
    %203 = vector.extract_strided_slice %2 {offsets = [25, 0], sizes = [1, 256], strides = [1, 1]} : vector<49x256xf32> to vector<1x256xf32>
    %204 = vector.broadcast %203 : vector<1x256xf32> to vector<16x256xf32>
    %205 = arith.mulf %202, %204 : vector<16x256xf32>
    %206 = arith.truncf %205 : vector<16x256xf32> to vector<16x256xbf16>
    %c80_48 = arith.constant 80 : index
    %c0_49 = arith.constant 0 : index
    %207 = vector.load %arg20[%c80_48, %c0_49] : memref<784x256xbf16, #tpu.memory_space<vmem>>, vector<16x256xbf16>
    tpu.vector_store %arg20[%c80_48, %c0_49], %206 {strides = array<i32>} : memref<784x256xbf16, #tpu.memory_space<vmem>>, vector<16x256xbf16>,
    %c241_i32_50 = arith.constant 241 : i32
    %208 = tpu.dynamic_rotate %171 by %c241_i32_50 dim 1 : vector<16x256xf32>, i32 -> vector<16x256xf32>
    %209 = vector.extract_strided_slice %2 {offsets = [30, 0], sizes = [1, 256], strides = [1, 1]} : vector<49x256xf32> to vector<1x256xf32>
    %210 = vector.broadcast %209 : vector<1x256xf32> to vector<16x256xf32>
    %211 = arith.mulf %208, %210 : vector<16x256xf32>
    %212 = arith.truncf %211 : vector<16x256xf32> to vector<16x256xbf16>
    %c96_51 = arith.constant 96 : index
    %c0_52 = arith.constant 0 : index
    %213 = vector.load %arg20[%c96_51, %c0_52] : memref<784x256xbf16, #tpu.memory_space<vmem>>, vector<16x256xbf16>
    tpu.vector_store %arg20[%c96_51, %c0_52], %212 {strides = array<i32>} : memref<784x256xbf16, #tpu.memory_space<vmem>>, vector<16x256xbf16>,
    %c240_i32_53 = arith.constant 240 : i32
    %214 = tpu.dynamic_rotate %171 by %c240_i32_53 dim 1 : vector<16x256xf32>, i32 -> vector<16x256xf32>
    %215 = vector.extract_strided_slice %2 {offsets = [31, 0], sizes = [1, 256], strides = [1, 1]} : vector<49x256xf32> to vector<1x256xf32>
    %216 = vector.broadcast %215 : vector<1x256xf32> to vector<16x256xf32>
    %217 = arith.mulf %214, %216 : vector<16x256xf32>
    %218 = arith.truncf %217 : vector<16x256xf32> to vector<16x256xbf16>
    %c112_54 = arith.constant 112 : index
    %c0_55 = arith.constant 0 : index
    %219 = vector.load %arg20[%c112_54, %c0_55] : memref<784x256xbf16, #tpu.memory_space<vmem>>, vector<16x256xbf16>
    tpu.vector_store %arg20[%c112_54, %c0_55], %218 {strides = array<i32>} : memref<784x256xbf16, #tpu.memory_space<vmem>>, vector<16x256xbf16>,
    %c239_i32_56 = arith.constant 239 : i32
    %220 = tpu.dynamic_rotate %171 by %c239_i32_56 dim 1 : vector<16x256xf32>, i32 -> vector<16x256xf32>
    %221 = vector.extract_strided_slice %2 {offsets = [32, 0], sizes = [1, 256], strides = [1, 1]} : vector<49x256xf32> to vector<1x256xf32>
    %222 = vector.broadcast %221 : vector<1x256xf32> to vector<16x256xf32>
    %223 = arith.mulf %220, %222 : vector<16x256xf32>
    %224 = arith.truncf %223 : vector<16x256xf32> to vector<16x256xbf16>
    %c128_57 = arith.constant 128 : index
    %c0_58 = arith.constant 0 : index
    %225 = vector.load %arg20[%c128_57, %c0_58] : memref<784x256xbf16, #tpu.memory_space<vmem>>, vector<16x256xbf16>
    tpu.vector_store %arg20[%c128_57, %c0_58], %224 {strides = array<i32>} : memref<784x256xbf16, #tpu.memory_space<vmem>>, vector<16x256xbf16>,
    %c0_59 = arith.constant 0 : index
    %c0_60 = arith.constant 0 : index
    %226 = vector.load %arg9[%c0_59, %c0_60] : memref<16x144xbf16, #tpu.memory_space<vmem>>, vector<16x144xbf16>
    %c0_61 = arith.constant 0 : index
    %c0_62 = arith.constant 0 : index
    %227 = vector.load %arg20[%c0_61, %c0_62] : memref<784x256xbf16, #tpu.memory_space<vmem>>, vector<144x256xbf16>
    %cst_63 = arith.constant dense<0.000000e+00> : vector<16x256xf32>
    %228 = tpu.matmul %226, %227, %cst_63 {dimension_numbers = #tpu.dot_dimension_numbers<[1], [0], [0], [1], [0, 0, 1, 1], [], []>} : vector<16x144xbf16>, vector<144x256xbf16>, vector<16x256xf32> -> vector<16x256xf32>
    %c0_64 = arith.constant 0 : index
    %c0_65 = arith.constant 0 : index
    %229 = vector.load %arg10[%c0_64, %c0_65] : memref<16x1xf32, #tpu.memory_space<vmem>>, vector<16x1xf32>
    %230 = vector.broadcast %229 : vector<16x1xf32> to vector<16x256xf32>
    %231 = arith.addf %228, %230 : vector<16x256xf32>
    %cst_66 = arith.constant 0.000000e+00 : f32
    %232 = vector.broadcast %cst_66 : f32 to vector<16x256xf32>
    %233 = arith.maximumf %231, %232 : vector<16x256xf32>
    %234 = arith.addf %233, %172 : vector<16x256xf32>
    %c51_i32 = arith.constant 51 : i32
    %235 = tpu.dynamic_rotate %234 by %c51_i32 dim 1 : vector<16x256xf32>, i32 -> vector<16x256xf32>
    %236 = vector.extract_strided_slice %2 {offsets = [0, 0], sizes = [1, 256], strides = [1, 1]} : vector<49x256xf32> to vector<1x256xf32>
    %237 = vector.broadcast %236 : vector<1x256xf32> to vector<16x256xf32>
    %238 = arith.mulf %235, %237 : vector<16x256xf32>
    %239 = arith.truncf %238 : vector<16x256xf32> to vector<16x256xbf16>
    %c0_67 = arith.constant 0 : index
    %c0_68 = arith.constant 0 : index
    %240 = vector.load %arg20[%c0_67, %c0_68] : memref<784x256xbf16, #tpu.memory_space<vmem>>, vector<16x256xbf16>
    tpu.vector_store %arg20[%c0_67, %c0_68], %239 {strides = array<i32>} : memref<784x256xbf16, #tpu.memory_space<vmem>>, vector<16x256xbf16>,
    %c50_i32 = arith.constant 50 : i32
    %241 = tpu.dynamic_rotate %234 by %c50_i32 dim 1 : vector<16x256xf32>, i32 -> vector<16x256xf32>
    %242 = vector.extract_strided_slice %2 {offsets = [1, 0], sizes = [1, 256], strides = [1, 1]} : vector<49x256xf32> to vector<1x256xf32>
    %243 = vector.broadcast %242 : vector<1x256xf32> to vector<16x256xf32>
    %244 = arith.mulf %241, %243 : vector<16x256xf32>
    %245 = arith.truncf %244 : vector<16x256xf32> to vector<16x256xbf16>
    %c16_69 = arith.constant 16 : index
    %c0_70 = arith.constant 0 : index
    %246 = vector.load %arg20[%c16_69, %c0_70] : memref<784x256xbf16, #tpu.memory_space<vmem>>, vector<16x256xbf16>
    tpu.vector_store %arg20[%c16_69, %c0_70], %245 {strides = array<i32>} : memref<784x256xbf16, #tpu.memory_space<vmem>>, vector<16x256xbf16>,
    %c49_i32 = arith.constant 49 : i32
    %247 = tpu.dynamic_rotate %234 by %c49_i32 dim 1 : vector<16x256xf32>, i32 -> vector<16x256xf32>
    %248 = vector.extract_strided_slice %2 {offsets = [2, 0], sizes = [1, 256], strides = [1, 1]} : vector<49x256xf32> to vector<1x256xf32>
    %249 = vector.broadcast %248 : vector<1x256xf32> to vector<16x256xf32>
    %250 = arith.mulf %247, %249 : vector<16x256xf32>
    %251 = arith.truncf %250 : vector<16x256xf32> to vector<16x256xbf16>
    %c32_71 = arith.constant 32 : index
    %c0_72 = arith.constant 0 : index
    %252 = vector.load %arg20[%c32_71, %c0_72] : memref<784x256xbf16, #tpu.memory_space<vmem>>, vector<16x256xbf16>
    tpu.vector_store %arg20[%c32_71, %c0_72], %251 {strides = array<i32>} : memref<784x256xbf16, #tpu.memory_space<vmem>>, vector<16x256xbf16>,
    %c48_i32 = arith.constant 48 : i32
    %253 = tpu.dynamic_rotate %234 by %c48_i32 dim 1 : vector<16x256xf32>, i32 -> vector<16x256xf32>
    %254 = vector.extract_strided_slice %2 {offsets = [3, 0], sizes = [1, 256], strides = [1, 1]} : vector<49x256xf32> to vector<1x256xf32>
    %255 = vector.broadcast %254 : vector<1x256xf32> to vector<16x256xf32>
    %256 = arith.mulf %253, %255 : vector<16x256xf32>
    %257 = arith.truncf %256 : vector<16x256xf32> to vector<16x256xbf16>
    %c48_73 = arith.constant 48 : index
    %c0_74 = arith.constant 0 : index
    %258 = vector.load %arg20[%c48_73, %c0_74] : memref<784x256xbf16, #tpu.memory_space<vmem>>, vector<16x256xbf16>
    tpu.vector_store %arg20[%c48_73, %c0_74], %257 {strides = array<i32>} : memref<784x256xbf16, #tpu.memory_space<vmem>>, vector<16x256xbf16>,
    %c47_i32 = arith.constant 47 : i32
    %259 = tpu.dynamic_rotate %234 by %c47_i32 dim 1 : vector<16x256xf32>, i32 -> vector<16x256xf32>
    %260 = vector.extract_strided_slice %2 {offsets = [4, 0], sizes = [1, 256], strides = [1, 1]} : vector<49x256xf32> to vector<1x256xf32>
    %261 = vector.broadcast %260 : vector<1x256xf32> to vector<16x256xf32>
    %262 = arith.mulf %259, %261 : vector<16x256xf32>
    %263 = arith.truncf %262 : vector<16x256xf32> to vector<16x256xbf16>
    %c64_75 = arith.constant 64 : index
    %c0_76 = arith.constant 0 : index
    %264 = vector.load %arg20[%c64_75, %c0_76] : memref<784x256xbf16, #tpu.memory_space<vmem>>, vector<16x256xbf16>
    tpu.vector_store %arg20[%c64_75, %c0_76], %263 {strides = array<i32>} : memref<784x256xbf16, #tpu.memory_space<vmem>>, vector<16x256xbf16>,
    %c46_i32 = arith.constant 46 : i32
    %265 = tpu.dynamic_rotate %234 by %c46_i32 dim 1 : vector<16x256xf32>, i32 -> vector<16x256xf32>
    %266 = vector.extract_strided_slice %2 {offsets = [5, 0], sizes = [1, 256], strides = [1, 1]} : vector<49x256xf32> to vector<1x256xf32>
    %267 = vector.broadcast %266 : vector<1x256xf32> to vector<16x256xf32>
    %268 = arith.mulf %265, %267 : vector<16x256xf32>
    %269 = arith.truncf %268 : vector<16x256xf32> to vector<16x256xbf16>
    %c80_77 = arith.constant 80 : index
    %c0_78 = arith.constant 0 : index
    %270 = vector.load %arg20[%c80_77, %c0_78] : memref<784x256xbf16, #tpu.memory_space<vmem>>, vector<16x256xbf16>
    tpu.vector_store %arg20[%c80_77, %c0_78], %269 {strides = array<i32>} : memref<784x256xbf16, #tpu.memory_space<vmem>>, vector<16x256xbf16>,
    %c45_i32 = arith.constant 45 : i32
    %271 = tpu.dynamic_rotate %234 by %c45_i32 dim 1 : vector<16x256xf32>, i32 -> vector<16x256xf32>
    %272 = vector.extract_strided_slice %2 {offsets = [6, 0], sizes = [1, 256], strides = [1, 1]} : vector<49x256xf32> to vector<1x256xf32>
    %273 = vector.broadcast %272 : vector<1x256xf32> to vector<16x256xf32>
    %274 = arith.mulf %271, %273 : vector<16x256xf32>
    %275 = arith.truncf %274 : vector<16x256xf32> to vector<16x256xbf16>
    %c96_79 = arith.constant 96 : index
    %c0_80 = arith.constant 0 : index
    %276 = vector.load %arg20[%c96_79, %c0_80] : memref<784x256xbf16, #tpu.memory_space<vmem>>, vector<16x256xbf16>
    tpu.vector_store %arg20[%c96_79, %c0_80], %275 {strides = array<i32>} : memref<784x256xbf16, #tpu.memory_space<vmem>>, vector<16x256xbf16>,
    %c35_i32 = arith.constant 35 : i32
    %277 = tpu.dynamic_rotate %234 by %c35_i32 dim 1 : vector<16x256xf32>, i32 -> vector<16x256xf32>
    %278 = vector.extract_strided_slice %2 {offsets = [7, 0], sizes = [1, 256], strides = [1, 1]} : vector<49x256xf32> to vector<1x256xf32>
    %279 = vector.broadcast %278 : vector<1x256xf32> to vector<16x256xf32>
    %280 = arith.mulf %277, %279 : vector<16x256xf32>
    %281 = arith.truncf %280 : vector<16x256xf32> to vector<16x256xbf16>
    %c112_81 = arith.constant 112 : index
    %c0_82 = arith.constant 0 : index
    %282 = vector.load %arg20[%c112_81, %c0_82] : memref<784x256xbf16, #tpu.memory_space<vmem>>, vector<16x256xbf16>
    tpu.vector_store %arg20[%c112_81, %c0_82], %281 {strides = array<i32>} : memref<784x256xbf16, #tpu.memory_space<vmem>>, vector<16x256xbf16>,
    %c34_i32 = arith.constant 34 : i32
    %283 = tpu.dynamic_rotate %234 by %c34_i32 dim 1 : vector<16x256xf32>, i32 -> vector<16x256xf32>
    %284 = vector.extract_strided_slice %2 {offsets = [8, 0], sizes = [1, 256], strides = [1, 1]} : vector<49x256xf32> to vector<1x256xf32>
    %285 = vector.broadcast %284 : vector<1x256xf32> to vector<16x256xf32>
    %286 = arith.mulf %283, %285 : vector<16x256xf32>
    %287 = arith.truncf %286 : vector<16x256xf32> to vector<16x256xbf16>
    %c128_83 = arith.constant 128 : index
    %c0_84 = arith.constant 0 : index
    %288 = vector.load %arg20[%c128_83, %c0_84] : memref<784x256xbf16, #tpu.memory_space<vmem>>, vector<16x256xbf16>
    tpu.vector_store %arg20[%c128_83, %c0_84], %287 {strides = array<i32>} : memref<784x256xbf16, #tpu.memory_space<vmem>>, vector<16x256xbf16>,
    %c33_i32 = arith.constant 33 : i32
    %289 = tpu.dynamic_rotate %234 by %c33_i32 dim 1 : vector<16x256xf32>, i32 -> vector<16x256xf32>
    %290 = vector.extract_strided_slice %2 {offsets = [9, 0], sizes = [1, 256], strides = [1, 1]} : vector<49x256xf32> to vector<1x256xf32>
    %291 = vector.broadcast %290 : vector<1x256xf32> to vector<16x256xf32>
    %292 = arith.mulf %289, %291 : vector<16x256xf32>
    %293 = arith.truncf %292 : vector<16x256xf32> to vector<16x256xbf16>
    %c144 = arith.constant 144 : index
    %c0_85 = arith.constant 0 : index
    %294 = vector.load %arg20[%c144, %c0_85] : memref<784x256xbf16, #tpu.memory_space<vmem>>, vector<16x256xbf16>
    tpu.vector_store %arg20[%c144, %c0_85], %293 {strides = array<i32>} : memref<784x256xbf16, #tpu.memory_space<vmem>>, vector<16x256xbf16>,
    %c32_i32 = arith.constant 32 : i32
    %295 = tpu.dynamic_rotate %234 by %c32_i32 dim 1 : vector<16x256xf32>, i32 -> vector<16x256xf32>
    %296 = vector.extract_strided_slice %2 {offsets = [10, 0], sizes = [1, 256], strides = [1, 1]} : vector<49x256xf32> to vector<1x256xf32>
    %297 = vector.broadcast %296 : vector<1x256xf32> to vector<16x256xf32>
    %298 = arith.mulf %295, %297 : vector<16x256xf32>
    %299 = arith.truncf %298 : vector<16x256xf32> to vector<16x256xbf16>
    %c160 = arith.constant 160 : index
    %c0_86 = arith.constant 0 : index
    %300 = vector.load %arg20[%c160, %c0_86] : memref<784x256xbf16, #tpu.memory_space<vmem>>, vector<16x256xbf16>
    tpu.vector_store %arg20[%c160, %c0_86], %299 {strides = array<i32>} : memref<784x256xbf16, #tpu.memory_space<vmem>>, vector<16x256xbf16>,
    %c31_i32 = arith.constant 31 : i32
    %301 = tpu.dynamic_rotate %234 by %c31_i32 dim 1 : vector<16x256xf32>, i32 -> vector<16x256xf32>
    %302 = vector.extract_strided_slice %2 {offsets = [11, 0], sizes = [1, 256], strides = [1, 1]} : vector<49x256xf32> to vector<1x256xf32>
    %303 = vector.broadcast %302 : vector<1x256xf32> to vector<16x256xf32>
    %304 = arith.mulf %301, %303 : vector<16x256xf32>
    %305 = arith.truncf %304 : vector<16x256xf32> to vector<16x256xbf16>
    %c176 = arith.constant 176 : index
    %c0_87 = arith.constant 0 : index
    %306 = vector.load %arg20[%c176, %c0_87] : memref<784x256xbf16, #tpu.memory_space<vmem>>, vector<16x256xbf16>
    tpu.vector_store %arg20[%c176, %c0_87], %305 {strides = array<i32>} : memref<784x256xbf16, #tpu.memory_space<vmem>>, vector<16x256xbf16>,
    %c30_i32 = arith.constant 30 : i32
    %307 = tpu.dynamic_rotate %234 by %c30_i32 dim 1 : vector<16x256xf32>, i32 -> vector<16x256xf32>
    %308 = vector.extract_strided_slice %2 {offsets = [12, 0], sizes = [1, 256], strides = [1, 1]} : vector<49x256xf32> to vector<1x256xf32>
    %309 = vector.broadcast %308 : vector<1x256xf32> to vector<16x256xf32>
    %310 = arith.mulf %307, %309 : vector<16x256xf32>
    %311 = arith.truncf %310 : vector<16x256xf32> to vector<16x256xbf16>
    %c192 = arith.constant 192 : index
    %c0_88 = arith.constant 0 : index
    %312 = vector.load %arg20[%c192, %c0_88] : memref<784x256xbf16, #tpu.memory_space<vmem>>, vector<16x256xbf16>
    tpu.vector_store %arg20[%c192, %c0_88], %311 {strides = array<i32>} : memref<784x256xbf16, #tpu.memory_space<vmem>>, vector<16x256xbf16>,
    %c29_i32 = arith.constant 29 : i32
    %313 = tpu.dynamic_rotate %234 by %c29_i32 dim 1 : vector<16x256xf32>, i32 -> vector<16x256xf32>
    %314 = vector.extract_strided_slice %2 {offsets = [13, 0], sizes = [1, 256], strides = [1, 1]} : vector<49x256xf32> to vector<1x256xf32>
    %315 = vector.broadcast %314 : vector<1x256xf32> to vector<16x256xf32>
    %316 = arith.mulf %313, %315 : vector<16x256xf32>
    %317 = arith.truncf %316 : vector<16x256xf32> to vector<16x256xbf16>
    %c208 = arith.constant 208 : index
    %c0_89 = arith.constant 0 : index
    %318 = vector.load %arg20[%c208, %c0_89] : memref<784x256xbf16, #tpu.memory_space<vmem>>, vector<16x256xbf16>
    tpu.vector_store %arg20[%c208, %c0_89], %317 {strides = array<i32>} : memref<784x256xbf16, #tpu.memory_space<vmem>>, vector<16x256xbf16>,
    %c19_i32 = arith.constant 19 : i32
    %319 = tpu.dynamic_rotate %234 by %c19_i32 dim 1 : vector<16x256xf32>, i32 -> vector<16x256xf32>
    %320 = vector.extract_strided_slice %2 {offsets = [14, 0], sizes = [1, 256], strides = [1, 1]} : vector<49x256xf32> to vector<1x256xf32>
    %321 = vector.broadcast %320 : vector<1x256xf32> to vector<16x256xf32>
    %322 = arith.mulf %319, %321 : vector<16x256xf32>
    %323 = arith.truncf %322 : vector<16x256xf32> to vector<16x256xbf16>
    %c224 = arith.constant 224 : index
    %c0_90 = arith.constant 0 : index
    %324 = vector.load %arg20[%c224, %c0_90] : memref<784x256xbf16, #tpu.memory_space<vmem>>, vector<16x256xbf16>
    tpu.vector_store %arg20[%c224, %c0_90], %323 {strides = array<i32>} : memref<784x256xbf16, #tpu.memory_space<vmem>>, vector<16x256xbf16>,
    %c18_i32 = arith.constant 18 : i32
    %325 = tpu.dynamic_rotate %234 by %c18_i32 dim 1 : vector<16x256xf32>, i32 -> vector<16x256xf32>
    %326 = vector.extract_strided_slice %2 {offsets = [15, 0], sizes = [1, 256], strides = [1, 1]} : vector<49x256xf32> to vector<1x256xf32>
    %327 = vector.broadcast %326 : vector<1x256xf32> to vector<16x256xf32>
    %328 = arith.mulf %325, %327 : vector<16x256xf32>
    %329 = arith.truncf %328 : vector<16x256xf32> to vector<16x256xbf16>
    %c240 = arith.constant 240 : index
    %c0_91 = arith.constant 0 : index
    %330 = vector.load %arg20[%c240, %c0_91] : memref<784x256xbf16, #tpu.memory_space<vmem>>, vector<16x256xbf16>
    tpu.vector_store %arg20[%c240, %c0_91], %329 {strides = array<i32>} : memref<784x256xbf16, #tpu.memory_space<vmem>>, vector<16x256xbf16>,
    %c17_i32_92 = arith.constant 17 : i32
    %331 = tpu.dynamic_rotate %234 by %c17_i32_92 dim 1 : vector<16x256xf32>, i32 -> vector<16x256xf32>
    %332 = vector.extract_strided_slice %2 {offsets = [16, 0], sizes = [1, 256], strides = [1, 1]} : vector<49x256xf32> to vector<1x256xf32>
    %333 = vector.broadcast %332 : vector<1x256xf32> to vector<16x256xf32>
    %334 = arith.mulf %331, %333 : vector<16x256xf32>
    %335 = arith.truncf %334 : vector<16x256xf32> to vector<16x256xbf16>
    %c256 = arith.constant 256 : index
    %c0_93 = arith.constant 0 : index
    %336 = vector.load %arg20[%c256, %c0_93] : memref<784x256xbf16, #tpu.memory_space<vmem>>, vector<16x256xbf16>
    tpu.vector_store %arg20[%c256, %c0_93], %335 {strides = array<i32>} : memref<784x256xbf16, #tpu.memory_space<vmem>>, vector<16x256xbf16>,
    %c16_i32_94 = arith.constant 16 : i32
    %337 = tpu.dynamic_rotate %234 by %c16_i32_94 dim 1 : vector<16x256xf32>, i32 -> vector<16x256xf32>
    %338 = vector.extract_strided_slice %2 {offsets = [17, 0], sizes = [1, 256], strides = [1, 1]} : vector<49x256xf32> to vector<1x256xf32>
    %339 = vector.broadcast %338 : vector<1x256xf32> to vector<16x256xf32>
    %340 = arith.mulf %337, %339 : vector<16x256xf32>
    %341 = arith.truncf %340 : vector<16x256xf32> to vector<16x256xbf16>
    %c272 = arith.constant 272 : index
    %c0_95 = arith.constant 0 : index
    %342 = vector.load %arg20[%c272, %c0_95] : memref<784x256xbf16, #tpu.memory_space<vmem>>, vector<16x256xbf16>
    tpu.vector_store %arg20[%c272, %c0_95], %341 {strides = array<i32>} : memref<784x256xbf16, #tpu.memory_space<vmem>>, vector<16x256xbf16>,
    %c15_i32_96 = arith.constant 15 : i32
    %343 = tpu.dynamic_rotate %234 by %c15_i32_96 dim 1 : vector<16x256xf32>, i32 -> vector<16x256xf32>
    %344 = vector.extract_strided_slice %2 {offsets = [18, 0], sizes = [1, 256], strides = [1, 1]} : vector<49x256xf32> to vector<1x256xf32>
    %345 = vector.broadcast %344 : vector<1x256xf32> to vector<16x256xf32>
    %346 = arith.mulf %343, %345 : vector<16x256xf32>
    %347 = arith.truncf %346 : vector<16x256xf32> to vector<16x256xbf16>
    %c288 = arith.constant 288 : index
    %c0_97 = arith.constant 0 : index
    %348 = vector.load %arg20[%c288, %c0_97] : memref<784x256xbf16, #tpu.memory_space<vmem>>, vector<16x256xbf16>
    tpu.vector_store %arg20[%c288, %c0_97], %347 {strides = array<i32>} : memref<784x256xbf16, #tpu.memory_space<vmem>>, vector<16x256xbf16>,
    %c14_i32 = arith.constant 14 : i32
    %349 = tpu.dynamic_rotate %234 by %c14_i32 dim 1 : vector<16x256xf32>, i32 -> vector<16x256xf32>
    %350 = vector.extract_strided_slice %2 {offsets = [19, 0], sizes = [1, 256], strides = [1, 1]} : vector<49x256xf32> to vector<1x256xf32>
    %351 = vector.broadcast %350 : vector<1x256xf32> to vector<16x256xf32>
    %352 = arith.mulf %349, %351 : vector<16x256xf32>
    %353 = arith.truncf %352 : vector<16x256xf32> to vector<16x256xbf16>
    %c304 = arith.constant 304 : index
    %c0_98 = arith.constant 0 : index
    %354 = vector.load %arg20[%c304, %c0_98] : memref<784x256xbf16, #tpu.memory_space<vmem>>, vector<16x256xbf16>
    tpu.vector_store %arg20[%c304, %c0_98], %353 {strides = array<i32>} : memref<784x256xbf16, #tpu.memory_space<vmem>>, vector<16x256xbf16>,
    %c13_i32 = arith.constant 13 : i32
    %355 = tpu.dynamic_rotate %234 by %c13_i32 dim 1 : vector<16x256xf32>, i32 -> vector<16x256xf32>
    %356 = vector.extract_strided_slice %2 {offsets = [20, 0], sizes = [1, 256], strides = [1, 1]} : vector<49x256xf32> to vector<1x256xf32>
    %357 = vector.broadcast %356 : vector<1x256xf32> to vector<16x256xf32>
    %358 = arith.mulf %355, %357 : vector<16x256xf32>
    %359 = arith.truncf %358 : vector<16x256xf32> to vector<16x256xbf16>
    %c320 = arith.constant 320 : index
    %c0_99 = arith.constant 0 : index
    %360 = vector.load %arg20[%c320, %c0_99] : memref<784x256xbf16, #tpu.memory_space<vmem>>, vector<16x256xbf16>
    tpu.vector_store %arg20[%c320, %c0_99], %359 {strides = array<i32>} : memref<784x256xbf16, #tpu.memory_space<vmem>>, vector<16x256xbf16>,
    %c3_i32 = arith.constant 3 : i32
    %361 = tpu.dynamic_rotate %234 by %c3_i32 dim 1 : vector<16x256xf32>, i32 -> vector<16x256xf32>
    %362 = vector.extract_strided_slice %2 {offsets = [21, 0], sizes = [1, 256], strides = [1, 1]} : vector<49x256xf32> to vector<1x256xf32>
    %363 = vector.broadcast %362 : vector<1x256xf32> to vector<16x256xf32>
    %364 = arith.mulf %361, %363 : vector<16x256xf32>
    %365 = arith.truncf %364 : vector<16x256xf32> to vector<16x256xbf16>
    %c336 = arith.constant 336 : index
    %c0_100 = arith.constant 0 : index
    %366 = vector.load %arg20[%c336, %c0_100] : memref<784x256xbf16, #tpu.memory_space<vmem>>, vector<16x256xbf16>
    tpu.vector_store %arg20[%c336, %c0_100], %365 {strides = array<i32>} : memref<784x256xbf16, #tpu.memory_space<vmem>>, vector<16x256xbf16>,
    %c2_i32 = arith.constant 2 : i32
    %367 = tpu.dynamic_rotate %234 by %c2_i32 dim 1 : vector<16x256xf32>, i32 -> vector<16x256xf32>
    %368 = vector.extract_strided_slice %2 {offsets = [22, 0], sizes = [1, 256], strides = [1, 1]} : vector<49x256xf32> to vector<1x256xf32>
    %369 = vector.broadcast %368 : vector<1x256xf32> to vector<16x256xf32>
    %370 = arith.mulf %367, %369 : vector<16x256xf32>
    %371 = arith.truncf %370 : vector<16x256xf32> to vector<16x256xbf16>
    %c352 = arith.constant 352 : index
    %c0_101 = arith.constant 0 : index
    %372 = vector.load %arg20[%c352, %c0_101] : memref<784x256xbf16, #tpu.memory_space<vmem>>, vector<16x256xbf16>
    tpu.vector_store %arg20[%c352, %c0_101], %371 {strides = array<i32>} : memref<784x256xbf16, #tpu.memory_space<vmem>>, vector<16x256xbf16>,
    %c1_i32_102 = arith.constant 1 : i32
    %373 = tpu.dynamic_rotate %234 by %c1_i32_102 dim 1 : vector<16x256xf32>, i32 -> vector<16x256xf32>
    %374 = vector.extract_strided_slice %2 {offsets = [23, 0], sizes = [1, 256], strides = [1, 1]} : vector<49x256xf32> to vector<1x256xf32>
    %375 = vector.broadcast %374 : vector<1x256xf32> to vector<16x256xf32>
    %376 = arith.mulf %373, %375 : vector<16x256xf32>
    %377 = arith.truncf %376 : vector<16x256xf32> to vector<16x256xbf16>
    %c368 = arith.constant 368 : index
    %c0_103 = arith.constant 0 : index
    %378 = vector.load %arg20[%c368, %c0_103] : memref<784x256xbf16, #tpu.memory_space<vmem>>, vector<16x256xbf16>
    tpu.vector_store %arg20[%c368, %c0_103], %377 {strides = array<i32>} : memref<784x256xbf16, #tpu.memory_space<vmem>>, vector<16x256xbf16>,
    %379 = vector.extract_strided_slice %2 {offsets = [24, 0], sizes = [1, 256], strides = [1, 1]} : vector<49x256xf32> to vector<1x256xf32>
    %380 = vector.broadcast %379 : vector<1x256xf32> to vector<16x256xf32>
    %381 = arith.mulf %234, %380 : vector<16x256xf32>
    %382 = arith.truncf %381 : vector<16x256xf32> to vector<16x256xbf16>
    %c384 = arith.constant 384 : index
    %c0_104 = arith.constant 0 : index
    %383 = vector.load %arg20[%c384, %c0_104] : memref<784x256xbf16, #tpu.memory_space<vmem>>, vector<16x256xbf16>
    tpu.vector_store %arg20[%c384, %c0_104], %382 {strides = array<i32>} : memref<784x256xbf16, #tpu.memory_space<vmem>>, vector<16x256xbf16>,
    %c255_i32_105 = arith.constant 255 : i32
    %384 = tpu.dynamic_rotate %234 by %c255_i32_105 dim 1 : vector<16x256xf32>, i32 -> vector<16x256xf32>
    %385 = vector.extract_strided_slice %2 {offsets = [25, 0], sizes = [1, 256], strides = [1, 1]} : vector<49x256xf32> to vector<1x256xf32>
    %386 = vector.broadcast %385 : vector<1x256xf32> to vector<16x256xf32>
    %387 = arith.mulf %384, %386 : vector<16x256xf32>
    %388 = arith.truncf %387 : vector<16x256xf32> to vector<16x256xbf16>
    %c400 = arith.constant 400 : index
    %c0_106 = arith.constant 0 : index
    %389 = vector.load %arg20[%c400, %c0_106] : memref<784x256xbf16, #tpu.memory_space<vmem>>, vector<16x256xbf16>
    tpu.vector_store %arg20[%c400, %c0_106], %388 {strides = array<i32>} : memref<784x256xbf16, #tpu.memory_space<vmem>>, vector<16x256xbf16>,
    %c254_i32 = arith.constant 254 : i32
    %390 = tpu.dynamic_rotate %234 by %c254_i32 dim 1 : vector<16x256xf32>, i32 -> vector<16x256xf32>
    %391 = vector.extract_strided_slice %2 {offsets = [26, 0], sizes = [1, 256], strides = [1, 1]} : vector<49x256xf32> to vector<1x256xf32>
    %392 = vector.broadcast %391 : vector<1x256xf32> to vector<16x256xf32>
    %393 = arith.mulf %390, %392 : vector<16x256xf32>
    %394 = arith.truncf %393 : vector<16x256xf32> to vector<16x256xbf16>
    %c416 = arith.constant 416 : index
    %c0_107 = arith.constant 0 : index
    %395 = vector.load %arg20[%c416, %c0_107] : memref<784x256xbf16, #tpu.memory_space<vmem>>, vector<16x256xbf16>
    tpu.vector_store %arg20[%c416, %c0_107], %394 {strides = array<i32>} : memref<784x256xbf16, #tpu.memory_space<vmem>>, vector<16x256xbf16>,
    %c253_i32 = arith.constant 253 : i32
    %396 = tpu.dynamic_rotate %234 by %c253_i32 dim 1 : vector<16x256xf32>, i32 -> vector<16x256xf32>
    %397 = vector.extract_strided_slice %2 {offsets = [27, 0], sizes = [1, 256], strides = [1, 1]} : vector<49x256xf32> to vector<1x256xf32>
    %398 = vector.broadcast %397 : vector<1x256xf32> to vector<16x256xf32>
    %399 = arith.mulf %396, %398 : vector<16x256xf32>
    %400 = arith.truncf %399 : vector<16x256xf32> to vector<16x256xbf16>
    %c432 = arith.constant 432 : index
    %c0_108 = arith.constant 0 : index
    %401 = vector.load %arg20[%c432, %c0_108] : memref<784x256xbf16, #tpu.memory_space<vmem>>, vector<16x256xbf16>
    tpu.vector_store %arg20[%c432, %c0_108], %400 {strides = array<i32>} : memref<784x256xbf16, #tpu.memory_space<vmem>>, vector<16x256xbf16>,
    %c243_i32 = arith.constant 243 : i32
    %402 = tpu.dynamic_rotate %234 by %c243_i32 dim 1 : vector<16x256xf32>, i32 -> vector<16x256xf32>
    %403 = vector.extract_strided_slice %2 {offsets = [28, 0], sizes = [1, 256], strides = [1, 1]} : vector<49x256xf32> to vector<1x256xf32>
    %404 = vector.broadcast %403 : vector<1x256xf32> to vector<16x256xf32>
    %405 = arith.mulf %402, %404 : vector<16x256xf32>
    %406 = arith.truncf %405 : vector<16x256xf32> to vector<16x256xbf16>
    %c448 = arith.constant 448 : index
    %c0_109 = arith.constant 0 : index
    %407 = vector.load %arg20[%c448, %c0_109] : memref<784x256xbf16, #tpu.memory_space<vmem>>, vector<16x256xbf16>
    tpu.vector_store %arg20[%c448, %c0_109], %406 {strides = array<i32>} : memref<784x256xbf16, #tpu.memory_space<vmem>>, vector<16x256xbf16>,
    %c242_i32 = arith.constant 242 : i32
    %408 = tpu.dynamic_rotate %234 by %c242_i32 dim 1 : vector<16x256xf32>, i32 -> vector<16x256xf32>
    %409 = vector.extract_strided_slice %2 {offsets = [29, 0], sizes = [1, 256], strides = [1, 1]} : vector<49x256xf32> to vector<1x256xf32>
    %410 = vector.broadcast %409 : vector<1x256xf32> to vector<16x256xf32>
    %411 = arith.mulf %408, %410 : vector<16x256xf32>
    %412 = arith.truncf %411 : vector<16x256xf32> to vector<16x256xbf16>
    %c464 = arith.constant 464 : index
    %c0_110 = arith.constant 0 : index
    %413 = vector.load %arg20[%c464, %c0_110] : memref<784x256xbf16, #tpu.memory_space<vmem>>, vector<16x256xbf16>
    tpu.vector_store %arg20[%c464, %c0_110], %412 {strides = array<i32>} : memref<784x256xbf16, #tpu.memory_space<vmem>>, vector<16x256xbf16>,
    %c241_i32_111 = arith.constant 241 : i32
    %414 = tpu.dynamic_rotate %234 by %c241_i32_111 dim 1 : vector<16x256xf32>, i32 -> vector<16x256xf32>
    %415 = vector.extract_strided_slice %2 {offsets = [30, 0], sizes = [1, 256], strides = [1, 1]} : vector<49x256xf32> to vector<1x256xf32>
    %416 = vector.broadcast %415 : vector<1x256xf32> to vector<16x256xf32>
    %417 = arith.mulf %414, %416 : vector<16x256xf32>
    %418 = arith.truncf %417 : vector<16x256xf32> to vector<16x256xbf16>
    %c480 = arith.constant 480 : index
    %c0_112 = arith.constant 0 : index
    %419 = vector.load %arg20[%c480, %c0_112] : memref<784x256xbf16, #tpu.memory_space<vmem>>, vector<16x256xbf16>
    tpu.vector_store %arg20[%c480, %c0_112], %418 {strides = array<i32>} : memref<784x256xbf16, #tpu.memory_space<vmem>>, vector<16x256xbf16>,
    %c240_i32_113 = arith.constant 240 : i32
    %420 = tpu.dynamic_rotate %234 by %c240_i32_113 dim 1 : vector<16x256xf32>, i32 -> vector<16x256xf32>
    %421 = vector.extract_strided_slice %2 {offsets = [31, 0], sizes = [1, 256], strides = [1, 1]} : vector<49x256xf32> to vector<1x256xf32>
    %422 = vector.broadcast %421 : vector<1x256xf32> to vector<16x256xf32>
    %423 = arith.mulf %420, %422 : vector<16x256xf32>
    %424 = arith.truncf %423 : vector<16x256xf32> to vector<16x256xbf16>
    %c496 = arith.constant 496 : index
    %c0_114 = arith.constant 0 : index
    %425 = vector.load %arg20[%c496, %c0_114] : memref<784x256xbf16, #tpu.memory_space<vmem>>, vector<16x256xbf16>
    tpu.vector_store %arg20[%c496, %c0_114], %424 {strides = array<i32>} : memref<784x256xbf16, #tpu.memory_space<vmem>>, vector<16x256xbf16>,
    %c239_i32_115 = arith.constant 239 : i32
    %426 = tpu.dynamic_rotate %234 by %c239_i32_115 dim 1 : vector<16x256xf32>, i32 -> vector<16x256xf32>
    %427 = vector.extract_strided_slice %2 {offsets = [32, 0], sizes = [1, 256], strides = [1, 1]} : vector<49x256xf32> to vector<1x256xf32>
    %428 = vector.broadcast %427 : vector<1x256xf32> to vector<16x256xf32>
    %429 = arith.mulf %426, %428 : vector<16x256xf32>
    %430 = arith.truncf %429 : vector<16x256xf32> to vector<16x256xbf16>
    %c512 = arith.constant 512 : index
    %c0_116 = arith.constant 0 : index
    %431 = vector.load %arg20[%c512, %c0_116] : memref<784x256xbf16, #tpu.memory_space<vmem>>, vector<16x256xbf16>
    tpu.vector_store %arg20[%c512, %c0_116], %430 {strides = array<i32>} : memref<784x256xbf16, #tpu.memory_space<vmem>>, vector<16x256xbf16>,
    %c238_i32 = arith.constant 238 : i32
    %432 = tpu.dynamic_rotate %234 by %c238_i32 dim 1 : vector<16x256xf32>, i32 -> vector<16x256xf32>
    %433 = vector.extract_strided_slice %2 {offsets = [33, 0], sizes = [1, 256], strides = [1, 1]} : vector<49x256xf32> to vector<1x256xf32>
    %434 = vector.broadcast %433 : vector<1x256xf32> to vector<16x256xf32>
    %435 = arith.mulf %432, %434 : vector<16x256xf32>
    %436 = arith.truncf %435 : vector<16x256xf32> to vector<16x256xbf16>
    %c528 = arith.constant 528 : index
    %c0_117 = arith.constant 0 : index
    %437 = vector.load %arg20[%c528, %c0_117] : memref<784x256xbf16, #tpu.memory_space<vmem>>, vector<16x256xbf16>
    tpu.vector_store %arg20[%c528, %c0_117], %436 {strides = array<i32>} : memref<784x256xbf16, #tpu.memory_space<vmem>>, vector<16x256xbf16>,
    %c237_i32 = arith.constant 237 : i32
    %438 = tpu.dynamic_rotate %234 by %c237_i32 dim 1 : vector<16x256xf32>, i32 -> vector<16x256xf32>
    %439 = vector.extract_strided_slice %2 {offsets = [34, 0], sizes = [1, 256], strides = [1, 1]} : vector<49x256xf32> to vector<1x256xf32>
    %440 = vector.broadcast %439 : vector<1x256xf32> to vector<16x256xf32>
    %441 = arith.mulf %438, %440 : vector<16x256xf32>
    %442 = arith.truncf %441 : vector<16x256xf32> to vector<16x256xbf16>
    %c544 = arith.constant 544 : index
    %c0_118 = arith.constant 0 : index
    %443 = vector.load %arg20[%c544, %c0_118] : memref<784x256xbf16, #tpu.memory_space<vmem>>, vector<16x256xbf16>
    tpu.vector_store %arg20[%c544, %c0_118], %442 {strides = array<i32>} : memref<784x256xbf16, #tpu.memory_space<vmem>>, vector<16x256xbf16>,
    %c227_i32 = arith.constant 227 : i32
    %444 = tpu.dynamic_rotate %234 by %c227_i32 dim 1 : vector<16x256xf32>, i32 -> vector<16x256xf32>
    %445 = vector.extract_strided_slice %2 {offsets = [35, 0], sizes = [1, 256], strides = [1, 1]} : vector<49x256xf32> to vector<1x256xf32>
    %446 = vector.broadcast %445 : vector<1x256xf32> to vector<16x256xf32>
    %447 = arith.mulf %444, %446 : vector<16x256xf32>
    %448 = arith.truncf %447 : vector<16x256xf32> to vector<16x256xbf16>
    %c560 = arith.constant 560 : index
    %c0_119 = arith.constant 0 : index
    %449 = vector.load %arg20[%c560, %c0_119] : memref<784x256xbf16, #tpu.memory_space<vmem>>, vector<16x256xbf16>
    tpu.vector_store %arg20[%c560, %c0_119], %448 {strides = array<i32>} : memref<784x256xbf16, #tpu.memory_space<vmem>>, vector<16x256xbf16>,
    %c226_i32 = arith.constant 226 : i32
    %450 = tpu.dynamic_rotate %234 by %c226_i32 dim 1 : vector<16x256xf32>, i32 -> vector<16x256xf32>
    %451 = vector.extract_strided_slice %2 {offsets = [36, 0], sizes = [1, 256], strides = [1, 1]} : vector<49x256xf32> to vector<1x256xf32>
    %452 = vector.broadcast %451 : vector<1x256xf32> to vector<16x256xf32>
    %453 = arith.mulf %450, %452 : vector<16x256xf32>
    %454 = arith.truncf %453 : vector<16x256xf32> to vector<16x256xbf16>
    %c576 = arith.constant 576 : index
    %c0_120 = arith.constant 0 : index
    %455 = vector.load %arg20[%c576, %c0_120] : memref<784x256xbf16, #tpu.memory_space<vmem>>, vector<16x256xbf16>
    tpu.vector_store %arg20[%c576, %c0_120], %454 {strides = array<i32>} : memref<784x256xbf16, #tpu.memory_space<vmem>>, vector<16x256xbf16>,
    %c225_i32 = arith.constant 225 : i32
    %456 = tpu.dynamic_rotate %234 by %c225_i32 dim 1 : vector<16x256xf32>, i32 -> vector<16x256xf32>
    %457 = vector.extract_strided_slice %2 {offsets = [37, 0], sizes = [1, 256], strides = [1, 1]} : vector<49x256xf32> to vector<1x256xf32>
    %458 = vector.broadcast %457 : vector<1x256xf32> to vector<16x256xf32>
    %459 = arith.mulf %456, %458 : vector<16x256xf32>
    %460 = arith.truncf %459 : vector<16x256xf32> to vector<16x256xbf16>
    %c592 = arith.constant 592 : index
    %c0_121 = arith.constant 0 : index
    %461 = vector.load %arg20[%c592, %c0_121] : memref<784x256xbf16, #tpu.memory_space<vmem>>, vector<16x256xbf16>
    tpu.vector_store %arg20[%c592, %c0_121], %460 {strides = array<i32>} : memref<784x256xbf16, #tpu.memory_space<vmem>>, vector<16x256xbf16>,
    %c224_i32 = arith.constant 224 : i32
    %462 = tpu.dynamic_rotate %234 by %c224_i32 dim 1 : vector<16x256xf32>, i32 -> vector<16x256xf32>
    %463 = vector.extract_strided_slice %2 {offsets = [38, 0], sizes = [1, 256], strides = [1, 1]} : vector<49x256xf32> to vector<1x256xf32>
    %464 = vector.broadcast %463 : vector<1x256xf32> to vector<16x256xf32>
    %465 = arith.mulf %462, %464 : vector<16x256xf32>
    %466 = arith.truncf %465 : vector<16x256xf32> to vector<16x256xbf16>
    %c608 = arith.constant 608 : index
    %c0_122 = arith.constant 0 : index
    %467 = vector.load %arg20[%c608, %c0_122] : memref<784x256xbf16, #tpu.memory_space<vmem>>, vector<16x256xbf16>
    tpu.vector_store %arg20[%c608, %c0_122], %466 {strides = array<i32>} : memref<784x256xbf16, #tpu.memory_space<vmem>>, vector<16x256xbf16>,
    %c223_i32 = arith.constant 223 : i32
    %468 = tpu.dynamic_rotate %234 by %c223_i32 dim 1 : vector<16x256xf32>, i32 -> vector<16x256xf32>
    %469 = vector.extract_strided_slice %2 {offsets = [39, 0], sizes = [1, 256], strides = [1, 1]} : vector<49x256xf32> to vector<1x256xf32>
    %470 = vector.broadcast %469 : vector<1x256xf32> to vector<16x256xf32>
    %471 = arith.mulf %468, %470 : vector<16x256xf32>
    %472 = arith.truncf %471 : vector<16x256xf32> to vector<16x256xbf16>
    %c624 = arith.constant 624 : index
    %c0_123 = arith.constant 0 : index
    %473 = vector.load %arg20[%c624, %c0_123] : memref<784x256xbf16, #tpu.memory_space<vmem>>, vector<16x256xbf16>
    tpu.vector_store %arg20[%c624, %c0_123], %472 {strides = array<i32>} : memref<784x256xbf16, #tpu.memory_space<vmem>>, vector<16x256xbf16>,
    %c222_i32 = arith.constant 222 : i32
    %474 = tpu.dynamic_rotate %234 by %c222_i32 dim 1 : vector<16x256xf32>, i32 -> vector<16x256xf32>
    %475 = vector.extract_strided_slice %2 {offsets = [40, 0], sizes = [1, 256], strides = [1, 1]} : vector<49x256xf32> to vector<1x256xf32>
    %476 = vector.broadcast %475 : vector<1x256xf32> to vector<16x256xf32>
    %477 = arith.mulf %474, %476 : vector<16x256xf32>
    %478 = arith.truncf %477 : vector<16x256xf32> to vector<16x256xbf16>
    %c640 = arith.constant 640 : index
    %c0_124 = arith.constant 0 : index
    %479 = vector.load %arg20[%c640, %c0_124] : memref<784x256xbf16, #tpu.memory_space<vmem>>, vector<16x256xbf16>
    tpu.vector_store %arg20[%c640, %c0_124], %478 {strides = array<i32>} : memref<784x256xbf16, #tpu.memory_space<vmem>>, vector<16x256xbf16>,
    %c221_i32 = arith.constant 221 : i32
    %480 = tpu.dynamic_rotate %234 by %c221_i32 dim 1 : vector<16x256xf32>, i32 -> vector<16x256xf32>
    %481 = vector.extract_strided_slice %2 {offsets = [41, 0], sizes = [1, 256], strides = [1, 1]} : vector<49x256xf32> to vector<1x256xf32>
    %482 = vector.broadcast %481 : vector<1x256xf32> to vector<16x256xf32>
    %483 = arith.mulf %480, %482 : vector<16x256xf32>
    %484 = arith.truncf %483 : vector<16x256xf32> to vector<16x256xbf16>
    %c656 = arith.constant 656 : index
    %c0_125 = arith.constant 0 : index
    %485 = vector.load %arg20[%c656, %c0_125] : memref<784x256xbf16, #tpu.memory_space<vmem>>, vector<16x256xbf16>
    tpu.vector_store %arg20[%c656, %c0_125], %484 {strides = array<i32>} : memref<784x256xbf16, #tpu.memory_space<vmem>>, vector<16x256xbf16>,
    %c211_i32 = arith.constant 211 : i32
    %486 = tpu.dynamic_rotate %234 by %c211_i32 dim 1 : vector<16x256xf32>, i32 -> vector<16x256xf32>
    %487 = vector.extract_strided_slice %2 {offsets = [42, 0], sizes = [1, 256], strides = [1, 1]} : vector<49x256xf32> to vector<1x256xf32>
    %488 = vector.broadcast %487 : vector<1x256xf32> to vector<16x256xf32>
    %489 = arith.mulf %486, %488 : vector<16x256xf32>
    %490 = arith.truncf %489 : vector<16x256xf32> to vector<16x256xbf16>
    %c672 = arith.constant 672 : index
    %c0_126 = arith.constant 0 : index
    %491 = vector.load %arg20[%c672, %c0_126] : memref<784x256xbf16, #tpu.memory_space<vmem>>, vector<16x256xbf16>
    tpu.vector_store %arg20[%c672, %c0_126], %490 {strides = array<i32>} : memref<784x256xbf16, #tpu.memory_space<vmem>>, vector<16x256xbf16>,
    %c210_i32 = arith.constant 210 : i32
    %492 = tpu.dynamic_rotate %234 by %c210_i32 dim 1 : vector<16x256xf32>, i32 -> vector<16x256xf32>
    %493 = vector.extract_strided_slice %2 {offsets = [43, 0], sizes = [1, 256], strides = [1, 1]} : vector<49x256xf32> to vector<1x256xf32>
    %494 = vector.broadcast %493 : vector<1x256xf32> to vector<16x256xf32>
    %495 = arith.mulf %492, %494 : vector<16x256xf32>
    %496 = arith.truncf %495 : vector<16x256xf32> to vector<16x256xbf16>
    %c688 = arith.constant 688 : index
    %c0_127 = arith.constant 0 : index
    %497 = vector.load %arg20[%c688, %c0_127] : memref<784x256xbf16, #tpu.memory_space<vmem>>, vector<16x256xbf16>
    tpu.vector_store %arg20[%c688, %c0_127], %496 {strides = array<i32>} : memref<784x256xbf16, #tpu.memory_space<vmem>>, vector<16x256xbf16>,
    %c209_i32 = arith.constant 209 : i32
    %498 = tpu.dynamic_rotate %234 by %c209_i32 dim 1 : vector<16x256xf32>, i32 -> vector<16x256xf32>
    %499 = vector.extract_strided_slice %2 {offsets = [44, 0], sizes = [1, 256], strides = [1, 1]} : vector<49x256xf32> to vector<1x256xf32>
    %500 = vector.broadcast %499 : vector<1x256xf32> to vector<16x256xf32>
    %501 = arith.mulf %498, %500 : vector<16x256xf32>
    %502 = arith.truncf %501 : vector<16x256xf32> to vector<16x256xbf16>
    %c704 = arith.constant 704 : index
    %c0_128 = arith.constant 0 : index
    %503 = vector.load %arg20[%c704, %c0_128] : memref<784x256xbf16, #tpu.memory_space<vmem>>, vector<16x256xbf16>
    tpu.vector_store %arg20[%c704, %c0_128], %502 {strides = array<i32>} : memref<784x256xbf16, #tpu.memory_space<vmem>>, vector<16x256xbf16>,
    %c208_i32 = arith.constant 208 : i32
    %504 = tpu.dynamic_rotate %234 by %c208_i32 dim 1 : vector<16x256xf32>, i32 -> vector<16x256xf32>
    %505 = vector.extract_strided_slice %2 {offsets = [45, 0], sizes = [1, 256], strides = [1, 1]} : vector<49x256xf32> to vector<1x256xf32>
    %506 = vector.broadcast %505 : vector<1x256xf32> to vector<16x256xf32>
    %507 = arith.mulf %504, %506 : vector<16x256xf32>
    %508 = arith.truncf %507 : vector<16x256xf32> to vector<16x256xbf16>
    %c720 = arith.constant 720 : index
    %c0_129 = arith.constant 0 : index
    %509 = vector.load %arg20[%c720, %c0_129] : memref<784x256xbf16, #tpu.memory_space<vmem>>, vector<16x256xbf16>
    tpu.vector_store %arg20[%c720, %c0_129], %508 {strides = array<i32>} : memref<784x256xbf16, #tpu.memory_space<vmem>>, vector<16x256xbf16>,
    %c207_i32 = arith.constant 207 : i32
    %510 = tpu.dynamic_rotate %234 by %c207_i32 dim 1 : vector<16x256xf32>, i32 -> vector<16x256xf32>
    %511 = vector.extract_strided_slice %2 {offsets = [46, 0], sizes = [1, 256], strides = [1, 1]} : vector<49x256xf32> to vector<1x256xf32>
    %512 = vector.broadcast %511 : vector<1x256xf32> to vector<16x256xf32>
    %513 = arith.mulf %510, %512 : vector<16x256xf32>
    %514 = arith.truncf %513 : vector<16x256xf32> to vector<16x256xbf16>
    %c736 = arith.constant 736 : index
    %c0_130 = arith.constant 0 : index
    %515 = vector.load %arg20[%c736, %c0_130] : memref<784x256xbf16, #tpu.memory_space<vmem>>, vector<16x256xbf16>
    tpu.vector_store %arg20[%c736, %c0_130], %514 {strides = array<i32>} : memref<784x256xbf16, #tpu.memory_space<vmem>>, vector<16x256xbf16>,
    %c206_i32 = arith.constant 206 : i32
    %516 = tpu.dynamic_rotate %234 by %c206_i32 dim 1 : vector<16x256xf32>, i32 -> vector<16x256xf32>
    %517 = vector.extract_strided_slice %2 {offsets = [47, 0], sizes = [1, 256], strides = [1, 1]} : vector<49x256xf32> to vector<1x256xf32>
    %518 = vector.broadcast %517 : vector<1x256xf32> to vector<16x256xf32>
    %519 = arith.mulf %516, %518 : vector<16x256xf32>
    %520 = arith.truncf %519 : vector<16x256xf32> to vector<16x256xbf16>
    %c752 = arith.constant 752 : index
    %c0_131 = arith.constant 0 : index
    %521 = vector.load %arg20[%c752, %c0_131] : memref<784x256xbf16, #tpu.memory_space<vmem>>, vector<16x256xbf16>
    tpu.vector_store %arg20[%c752, %c0_131], %520 {strides = array<i32>} : memref<784x256xbf16, #tpu.memory_space<vmem>>, vector<16x256xbf16>,
    %c205_i32 = arith.constant 205 : i32
    %522 = tpu.dynamic_rotate %234 by %c205_i32 dim 1 : vector<16x256xf32>, i32 -> vector<16x256xf32>
    %523 = vector.extract_strided_slice %2 {offsets = [48, 0], sizes = [1, 256], strides = [1, 1]} : vector<49x256xf32> to vector<1x256xf32>
    %524 = vector.broadcast %523 : vector<1x256xf32> to vector<16x256xf32>
    %525 = arith.mulf %522, %524 : vector<16x256xf32>
    %526 = arith.truncf %525 : vector<16x256xf32> to vector<16x256xbf16>
    %c768 = arith.constant 768 : index
    %c0_132 = arith.constant 0 : index
    %527 = vector.load %arg20[%c768, %c0_132] : memref<784x256xbf16, #tpu.memory_space<vmem>>, vector<16x256xbf16>
    tpu.vector_store %arg20[%c768, %c0_132], %526 {strides = array<i32>} : memref<784x256xbf16, #tpu.memory_space<vmem>>, vector<16x256xbf16>,
    %c0_133 = arith.constant 0 : index
    %c0_134 = arith.constant 0 : index
    %528 = vector.load %arg11[%c0_133, %c0_134] : memref<64x784xbf16, #tpu.memory_space<vmem>>, vector<64x784xbf16>
    %c0_135 = arith.constant 0 : index
    %c0_136 = arith.constant 0 : index
    %529 = vector.load %arg20[%c0_135, %c0_136] : memref<784x256xbf16, #tpu.memory_space<vmem>>, vector<784x256xbf16>
    %cst_137 = arith.constant dense<0.000000e+00> : vector<64x256xf32>
    %530 = tpu.matmul %528, %529, %cst_137 {dimension_numbers = #tpu.dot_dimension_numbers<[1], [0], [0], [1], [0, 0, 1, 1], [], []>} : vector<64x784xbf16>, vector<784x256xbf16>, vector<64x256xf32> -> vector<64x256xf32>
    %c0_138 = arith.constant 0 : index
    %c0_139 = arith.constant 0 : index
    %531 = vector.load %arg12[%c0_138, %c0_139] : memref<64x1xf32, #tpu.memory_space<vmem>>, vector<64x1xf32>
    %532 = vector.broadcast %531 : vector<64x1xf32> to vector<64x256xf32>
    %533 = arith.addf %530, %532 : vector<64x256xf32>
    %534 = vector.extract_strided_slice %533 {offsets = [0, 0], sizes = [16, 256], strides = [1, 1]} : vector<64x256xf32> to vector<16x256xf32>
    %cst_140 = arith.constant 0.000000e+00 : f32
    %535 = vector.broadcast %cst_140 : f32 to vector<16x256xf32>
    %536 = arith.maximumf %534, %535 : vector<16x256xf32>
    %537 = vector.extract_strided_slice %533 {offsets = [16, 0], sizes = [16, 256], strides = [1, 1]} : vector<64x256xf32> to vector<16x256xf32>
    %cst_141 = arith.constant 0.000000e+00 : f32
    %538 = vector.broadcast %cst_141 : f32 to vector<16x256xf32>
    %539 = arith.maximumf %537, %538 : vector<16x256xf32>
    %540 = vector.extract_strided_slice %533 {offsets = [32, 0], sizes = [16, 256], strides = [1, 1]} : vector<64x256xf32> to vector<16x256xf32>
    %541 = vector.extract_strided_slice %533 {offsets = [48, 0], sizes = [16, 256], strides = [1, 1]} : vector<64x256xf32> to vector<16x256xf32>
    %c34_i32_142 = arith.constant 34 : i32
    %542 = tpu.dynamic_rotate %536 by %c34_i32_142 dim 1 : vector<16x256xf32>, i32 -> vector<16x256xf32>
    %543 = vector.extract_strided_slice %2 {offsets = [8, 0], sizes = [1, 256], strides = [1, 1]} : vector<49x256xf32> to vector<1x256xf32>
    %544 = vector.broadcast %543 : vector<1x256xf32> to vector<16x256xf32>
    %545 = arith.mulf %542, %544 : vector<16x256xf32>
    %546 = arith.truncf %545 : vector<16x256xf32> to vector<16x256xbf16>
    %c0_143 = arith.constant 0 : index
    %c0_144 = arith.constant 0 : index
    %547 = vector.load %arg20[%c0_143, %c0_144] : memref<784x256xbf16, #tpu.memory_space<vmem>>, vector<16x256xbf16>
    tpu.vector_store %arg20[%c0_143, %c0_144], %546 {strides = array<i32>} : memref<784x256xbf16, #tpu.memory_space<vmem>>, vector<16x256xbf16>,
    %c33_i32_145 = arith.constant 33 : i32
    %548 = tpu.dynamic_rotate %536 by %c33_i32_145 dim 1 : vector<16x256xf32>, i32 -> vector<16x256xf32>
    %549 = vector.extract_strided_slice %2 {offsets = [9, 0], sizes = [1, 256], strides = [1, 1]} : vector<49x256xf32> to vector<1x256xf32>
    %550 = vector.broadcast %549 : vector<1x256xf32> to vector<16x256xf32>
    %551 = arith.mulf %548, %550 : vector<16x256xf32>
    %552 = arith.truncf %551 : vector<16x256xf32> to vector<16x256xbf16>
    %c16_146 = arith.constant 16 : index
    %c0_147 = arith.constant 0 : index
    %553 = vector.load %arg20[%c16_146, %c0_147] : memref<784x256xbf16, #tpu.memory_space<vmem>>, vector<16x256xbf16>
    tpu.vector_store %arg20[%c16_146, %c0_147], %552 {strides = array<i32>} : memref<784x256xbf16, #tpu.memory_space<vmem>>, vector<16x256xbf16>,
    %c32_i32_148 = arith.constant 32 : i32
    %554 = tpu.dynamic_rotate %536 by %c32_i32_148 dim 1 : vector<16x256xf32>, i32 -> vector<16x256xf32>
    %555 = vector.extract_strided_slice %2 {offsets = [10, 0], sizes = [1, 256], strides = [1, 1]} : vector<49x256xf32> to vector<1x256xf32>
    %556 = vector.broadcast %555 : vector<1x256xf32> to vector<16x256xf32>
    %557 = arith.mulf %554, %556 : vector<16x256xf32>
    %558 = arith.truncf %557 : vector<16x256xf32> to vector<16x256xbf16>
    %c32_149 = arith.constant 32 : index
    %c0_150 = arith.constant 0 : index
    %559 = vector.load %arg20[%c32_149, %c0_150] : memref<784x256xbf16, #tpu.memory_space<vmem>>, vector<16x256xbf16>
    tpu.vector_store %arg20[%c32_149, %c0_150], %558 {strides = array<i32>} : memref<784x256xbf16, #tpu.memory_space<vmem>>, vector<16x256xbf16>,
    %c31_i32_151 = arith.constant 31 : i32
    %560 = tpu.dynamic_rotate %536 by %c31_i32_151 dim 1 : vector<16x256xf32>, i32 -> vector<16x256xf32>
    %561 = vector.extract_strided_slice %2 {offsets = [11, 0], sizes = [1, 256], strides = [1, 1]} : vector<49x256xf32> to vector<1x256xf32>
    %562 = vector.broadcast %561 : vector<1x256xf32> to vector<16x256xf32>
    %563 = arith.mulf %560, %562 : vector<16x256xf32>
    %564 = arith.truncf %563 : vector<16x256xf32> to vector<16x256xbf16>
    %c48_152 = arith.constant 48 : index
    %c0_153 = arith.constant 0 : index
    %565 = vector.load %arg20[%c48_152, %c0_153] : memref<784x256xbf16, #tpu.memory_space<vmem>>, vector<16x256xbf16>
    tpu.vector_store %arg20[%c48_152, %c0_153], %564 {strides = array<i32>} : memref<784x256xbf16, #tpu.memory_space<vmem>>, vector<16x256xbf16>,
    %c30_i32_154 = arith.constant 30 : i32
    %566 = tpu.dynamic_rotate %536 by %c30_i32_154 dim 1 : vector<16x256xf32>, i32 -> vector<16x256xf32>
    %567 = vector.extract_strided_slice %2 {offsets = [12, 0], sizes = [1, 256], strides = [1, 1]} : vector<49x256xf32> to vector<1x256xf32>
    %568 = vector.broadcast %567 : vector<1x256xf32> to vector<16x256xf32>
    %569 = arith.mulf %566, %568 : vector<16x256xf32>
    %570 = arith.truncf %569 : vector<16x256xf32> to vector<16x256xbf16>
    %c64_155 = arith.constant 64 : index
    %c0_156 = arith.constant 0 : index
    %571 = vector.load %arg20[%c64_155, %c0_156] : memref<784x256xbf16, #tpu.memory_space<vmem>>, vector<16x256xbf16>
    tpu.vector_store %arg20[%c64_155, %c0_156], %570 {strides = array<i32>} : memref<784x256xbf16, #tpu.memory_space<vmem>>, vector<16x256xbf16>,
    %c18_i32_157 = arith.constant 18 : i32
    %572 = tpu.dynamic_rotate %536 by %c18_i32_157 dim 1 : vector<16x256xf32>, i32 -> vector<16x256xf32>
    %573 = vector.extract_strided_slice %2 {offsets = [15, 0], sizes = [1, 256], strides = [1, 1]} : vector<49x256xf32> to vector<1x256xf32>
    %574 = vector.broadcast %573 : vector<1x256xf32> to vector<16x256xf32>
    %575 = arith.mulf %572, %574 : vector<16x256xf32>
    %576 = arith.truncf %575 : vector<16x256xf32> to vector<16x256xbf16>
    %c80_158 = arith.constant 80 : index
    %c0_159 = arith.constant 0 : index
    %577 = vector.load %arg20[%c80_158, %c0_159] : memref<784x256xbf16, #tpu.memory_space<vmem>>, vector<16x256xbf16>
    tpu.vector_store %arg20[%c80_158, %c0_159], %576 {strides = array<i32>} : memref<784x256xbf16, #tpu.memory_space<vmem>>, vector<16x256xbf16>,
    %c17_i32_160 = arith.constant 17 : i32
    %578 = tpu.dynamic_rotate %536 by %c17_i32_160 dim 1 : vector<16x256xf32>, i32 -> vector<16x256xf32>
    %579 = vector.extract_strided_slice %2 {offsets = [16, 0], sizes = [1, 256], strides = [1, 1]} : vector<49x256xf32> to vector<1x256xf32>
    %580 = vector.broadcast %579 : vector<1x256xf32> to vector<16x256xf32>
    %581 = arith.mulf %578, %580 : vector<16x256xf32>
    %582 = arith.truncf %581 : vector<16x256xf32> to vector<16x256xbf16>
    %c96_161 = arith.constant 96 : index
    %c0_162 = arith.constant 0 : index
    %583 = vector.load %arg20[%c96_161, %c0_162] : memref<784x256xbf16, #tpu.memory_space<vmem>>, vector<16x256xbf16>
    tpu.vector_store %arg20[%c96_161, %c0_162], %582 {strides = array<i32>} : memref<784x256xbf16, #tpu.memory_space<vmem>>, vector<16x256xbf16>,
    %c16_i32_163 = arith.constant 16 : i32
    %584 = tpu.dynamic_rotate %536 by %c16_i32_163 dim 1 : vector<16x256xf32>, i32 -> vector<16x256xf32>
    %585 = vector.extract_strided_slice %2 {offsets = [17, 0], sizes = [1, 256], strides = [1, 1]} : vector<49x256xf32> to vector<1x256xf32>
    %586 = vector.broadcast %585 : vector<1x256xf32> to vector<16x256xf32>
    %587 = arith.mulf %584, %586 : vector<16x256xf32>
    %588 = arith.truncf %587 : vector<16x256xf32> to vector<16x256xbf16>
    %c112_164 = arith.constant 112 : index
    %c0_165 = arith.constant 0 : index
    %589 = vector.load %arg20[%c112_164, %c0_165] : memref<784x256xbf16, #tpu.memory_space<vmem>>, vector<16x256xbf16>
    tpu.vector_store %arg20[%c112_164, %c0_165], %588 {strides = array<i32>} : memref<784x256xbf16, #tpu.memory_space<vmem>>, vector<16x256xbf16>,
    %c15_i32_166 = arith.constant 15 : i32
    %590 = tpu.dynamic_rotate %536 by %c15_i32_166 dim 1 : vector<16x256xf32>, i32 -> vector<16x256xf32>
    %591 = vector.extract_strided_slice %2 {offsets = [18, 0], sizes = [1, 256], strides = [1, 1]} : vector<49x256xf32> to vector<1x256xf32>
    %592 = vector.broadcast %591 : vector<1x256xf32> to vector<16x256xf32>
    %593 = arith.mulf %590, %592 : vector<16x256xf32>
    %594 = arith.truncf %593 : vector<16x256xf32> to vector<16x256xbf16>
    %c128_167 = arith.constant 128 : index
    %c0_168 = arith.constant 0 : index
    %595 = vector.load %arg20[%c128_167, %c0_168] : memref<784x256xbf16, #tpu.memory_space<vmem>>, vector<16x256xbf16>
    tpu.vector_store %arg20[%c128_167, %c0_168], %594 {strides = array<i32>} : memref<784x256xbf16, #tpu.memory_space<vmem>>, vector<16x256xbf16>,
    %c14_i32_169 = arith.constant 14 : i32
    %596 = tpu.dynamic_rotate %536 by %c14_i32_169 dim 1 : vector<16x256xf32>, i32 -> vector<16x256xf32>
    %597 = vector.extract_strided_slice %2 {offsets = [19, 0], sizes = [1, 256], strides = [1, 1]} : vector<49x256xf32> to vector<1x256xf32>
    %598 = vector.broadcast %597 : vector<1x256xf32> to vector<16x256xf32>
    %599 = arith.mulf %596, %598 : vector<16x256xf32>
    %600 = arith.truncf %599 : vector<16x256xf32> to vector<16x256xbf16>
    %c144_170 = arith.constant 144 : index
    %c0_171 = arith.constant 0 : index
    %601 = vector.load %arg20[%c144_170, %c0_171] : memref<784x256xbf16, #tpu.memory_space<vmem>>, vector<16x256xbf16>
    tpu.vector_store %arg20[%c144_170, %c0_171], %600 {strides = array<i32>} : memref<784x256xbf16, #tpu.memory_space<vmem>>, vector<16x256xbf16>,
    %c2_i32_172 = arith.constant 2 : i32
    %602 = tpu.dynamic_rotate %536 by %c2_i32_172 dim 1 : vector<16x256xf32>, i32 -> vector<16x256xf32>
    %603 = vector.extract_strided_slice %2 {offsets = [22, 0], sizes = [1, 256], strides = [1, 1]} : vector<49x256xf32> to vector<1x256xf32>
    %604 = vector.broadcast %603 : vector<1x256xf32> to vector<16x256xf32>
    %605 = arith.mulf %602, %604 : vector<16x256xf32>
    %606 = arith.truncf %605 : vector<16x256xf32> to vector<16x256xbf16>
    %c160_173 = arith.constant 160 : index
    %c0_174 = arith.constant 0 : index
    %607 = vector.load %arg20[%c160_173, %c0_174] : memref<784x256xbf16, #tpu.memory_space<vmem>>, vector<16x256xbf16>
    tpu.vector_store %arg20[%c160_173, %c0_174], %606 {strides = array<i32>} : memref<784x256xbf16, #tpu.memory_space<vmem>>, vector<16x256xbf16>,
    %c1_i32_175 = arith.constant 1 : i32
    %608 = tpu.dynamic_rotate %536 by %c1_i32_175 dim 1 : vector<16x256xf32>, i32 -> vector<16x256xf32>
    %609 = vector.extract_strided_slice %2 {offsets = [23, 0], sizes = [1, 256], strides = [1, 1]} : vector<49x256xf32> to vector<1x256xf32>
    %610 = vector.broadcast %609 : vector<1x256xf32> to vector<16x256xf32>
    %611 = arith.mulf %608, %610 : vector<16x256xf32>
    %612 = arith.truncf %611 : vector<16x256xf32> to vector<16x256xbf16>
    %c176_176 = arith.constant 176 : index
    %c0_177 = arith.constant 0 : index
    %613 = vector.load %arg20[%c176_176, %c0_177] : memref<784x256xbf16, #tpu.memory_space<vmem>>, vector<16x256xbf16>
    tpu.vector_store %arg20[%c176_176, %c0_177], %612 {strides = array<i32>} : memref<784x256xbf16, #tpu.memory_space<vmem>>, vector<16x256xbf16>,
    %614 = vector.extract_strided_slice %2 {offsets = [24, 0], sizes = [1, 256], strides = [1, 1]} : vector<49x256xf32> to vector<1x256xf32>
    %615 = vector.broadcast %614 : vector<1x256xf32> to vector<16x256xf32>
    %616 = arith.mulf %536, %615 : vector<16x256xf32>
    %617 = arith.truncf %616 : vector<16x256xf32> to vector<16x256xbf16>
    %c192_178 = arith.constant 192 : index
    %c0_179 = arith.constant 0 : index
    %618 = vector.load %arg20[%c192_178, %c0_179] : memref<784x256xbf16, #tpu.memory_space<vmem>>, vector<16x256xbf16>
    tpu.vector_store %arg20[%c192_178, %c0_179], %617 {strides = array<i32>} : memref<784x256xbf16, #tpu.memory_space<vmem>>, vector<16x256xbf16>,
    %c255_i32_180 = arith.constant 255 : i32
    %619 = tpu.dynamic_rotate %536 by %c255_i32_180 dim 1 : vector<16x256xf32>, i32 -> vector<16x256xf32>
    %620 = vector.extract_strided_slice %2 {offsets = [25, 0], sizes = [1, 256], strides = [1, 1]} : vector<49x256xf32> to vector<1x256xf32>
    %621 = vector.broadcast %620 : vector<1x256xf32> to vector<16x256xf32>
    %622 = arith.mulf %619, %621 : vector<16x256xf32>
    %623 = arith.truncf %622 : vector<16x256xf32> to vector<16x256xbf16>
    %c208_181 = arith.constant 208 : index
    %c0_182 = arith.constant 0 : index
    %624 = vector.load %arg20[%c208_181, %c0_182] : memref<784x256xbf16, #tpu.memory_space<vmem>>, vector<16x256xbf16>
    tpu.vector_store %arg20[%c208_181, %c0_182], %623 {strides = array<i32>} : memref<784x256xbf16, #tpu.memory_space<vmem>>, vector<16x256xbf16>,
    %c254_i32_183 = arith.constant 254 : i32
    %625 = tpu.dynamic_rotate %536 by %c254_i32_183 dim 1 : vector<16x256xf32>, i32 -> vector<16x256xf32>
    %626 = vector.extract_strided_slice %2 {offsets = [26, 0], sizes = [1, 256], strides = [1, 1]} : vector<49x256xf32> to vector<1x256xf32>
    %627 = vector.broadcast %626 : vector<1x256xf32> to vector<16x256xf32>
    %628 = arith.mulf %625, %627 : vector<16x256xf32>
    %629 = arith.truncf %628 : vector<16x256xf32> to vector<16x256xbf16>
    %c224_184 = arith.constant 224 : index
    %c0_185 = arith.constant 0 : index
    %630 = vector.load %arg20[%c224_184, %c0_185] : memref<784x256xbf16, #tpu.memory_space<vmem>>, vector<16x256xbf16>
    tpu.vector_store %arg20[%c224_184, %c0_185], %629 {strides = array<i32>} : memref<784x256xbf16, #tpu.memory_space<vmem>>, vector<16x256xbf16>,
    %c242_i32_186 = arith.constant 242 : i32
    %631 = tpu.dynamic_rotate %536 by %c242_i32_186 dim 1 : vector<16x256xf32>, i32 -> vector<16x256xf32>
    %632 = vector.extract_strided_slice %2 {offsets = [29, 0], sizes = [1, 256], strides = [1, 1]} : vector<49x256xf32> to vector<1x256xf32>
    %633 = vector.broadcast %632 : vector<1x256xf32> to vector<16x256xf32>
    %634 = arith.mulf %631, %633 : vector<16x256xf32>
    %635 = arith.truncf %634 : vector<16x256xf32> to vector<16x256xbf16>
    %c240_187 = arith.constant 240 : index
    %c0_188 = arith.constant 0 : index
    %636 = vector.load %arg20[%c240_187, %c0_188] : memref<784x256xbf16, #tpu.memory_space<vmem>>, vector<16x256xbf16>
    tpu.vector_store %arg20[%c240_187, %c0_188], %635 {strides = array<i32>} : memref<784x256xbf16, #tpu.memory_space<vmem>>, vector<16x256xbf16>,
    %c241_i32_189 = arith.constant 241 : i32
    %637 = tpu.dynamic_rotate %536 by %c241_i32_189 dim 1 : vector<16x256xf32>, i32 -> vector<16x256xf32>
    %638 = vector.extract_strided_slice %2 {offsets = [30, 0], sizes = [1, 256], strides = [1, 1]} : vector<49x256xf32> to vector<1x256xf32>
    %639 = vector.broadcast %638 : vector<1x256xf32> to vector<16x256xf32>
    %640 = arith.mulf %637, %639 : vector<16x256xf32>
    %641 = arith.truncf %640 : vector<16x256xf32> to vector<16x256xbf16>
    %c256_190 = arith.constant 256 : index
    %c0_191 = arith.constant 0 : index
    %642 = vector.load %arg20[%c256_190, %c0_191] : memref<784x256xbf16, #tpu.memory_space<vmem>>, vector<16x256xbf16>
    tpu.vector_store %arg20[%c256_190, %c0_191], %641 {strides = array<i32>} : memref<784x256xbf16, #tpu.memory_space<vmem>>, vector<16x256xbf16>,
    %c240_i32_192 = arith.constant 240 : i32
    %643 = tpu.dynamic_rotate %536 by %c240_i32_192 dim 1 : vector<16x256xf32>, i32 -> vector<16x256xf32>
    %644 = vector.extract_strided_slice %2 {offsets = [31, 0], sizes = [1, 256], strides = [1, 1]} : vector<49x256xf32> to vector<1x256xf32>
    %645 = vector.broadcast %644 : vector<1x256xf32> to vector<16x256xf32>
    %646 = arith.mulf %643, %645 : vector<16x256xf32>
    %647 = arith.truncf %646 : vector<16x256xf32> to vector<16x256xbf16>
    %c272_193 = arith.constant 272 : index
    %c0_194 = arith.constant 0 : index
    %648 = vector.load %arg20[%c272_193, %c0_194] : memref<784x256xbf16, #tpu.memory_space<vmem>>, vector<16x256xbf16>
    tpu.vector_store %arg20[%c272_193, %c0_194], %647 {strides = array<i32>} : memref<784x256xbf16, #tpu.memory_space<vmem>>, vector<16x256xbf16>,
    %c239_i32_195 = arith.constant 239 : i32
    %649 = tpu.dynamic_rotate %536 by %c239_i32_195 dim 1 : vector<16x256xf32>, i32 -> vector<16x256xf32>
    %650 = vector.extract_strided_slice %2 {offsets = [32, 0], sizes = [1, 256], strides = [1, 1]} : vector<49x256xf32> to vector<1x256xf32>
    %651 = vector.broadcast %650 : vector<1x256xf32> to vector<16x256xf32>
    %652 = arith.mulf %649, %651 : vector<16x256xf32>
    %653 = arith.truncf %652 : vector<16x256xf32> to vector<16x256xbf16>
    %c288_196 = arith.constant 288 : index
    %c0_197 = arith.constant 0 : index
    %654 = vector.load %arg20[%c288_196, %c0_197] : memref<784x256xbf16, #tpu.memory_space<vmem>>, vector<16x256xbf16>
    tpu.vector_store %arg20[%c288_196, %c0_197], %653 {strides = array<i32>} : memref<784x256xbf16, #tpu.memory_space<vmem>>, vector<16x256xbf16>,
    %c238_i32_198 = arith.constant 238 : i32
    %655 = tpu.dynamic_rotate %536 by %c238_i32_198 dim 1 : vector<16x256xf32>, i32 -> vector<16x256xf32>
    %656 = vector.extract_strided_slice %2 {offsets = [33, 0], sizes = [1, 256], strides = [1, 1]} : vector<49x256xf32> to vector<1x256xf32>
    %657 = vector.broadcast %656 : vector<1x256xf32> to vector<16x256xf32>
    %658 = arith.mulf %655, %657 : vector<16x256xf32>
    %659 = arith.truncf %658 : vector<16x256xf32> to vector<16x256xbf16>
    %c304_199 = arith.constant 304 : index
    %c0_200 = arith.constant 0 : index
    %660 = vector.load %arg20[%c304_199, %c0_200] : memref<784x256xbf16, #tpu.memory_space<vmem>>, vector<16x256xbf16>
    tpu.vector_store %arg20[%c304_199, %c0_200], %659 {strides = array<i32>} : memref<784x256xbf16, #tpu.memory_space<vmem>>, vector<16x256xbf16>,
    %c226_i32_201 = arith.constant 226 : i32
    %661 = tpu.dynamic_rotate %536 by %c226_i32_201 dim 1 : vector<16x256xf32>, i32 -> vector<16x256xf32>
    %662 = vector.extract_strided_slice %2 {offsets = [36, 0], sizes = [1, 256], strides = [1, 1]} : vector<49x256xf32> to vector<1x256xf32>
    %663 = vector.broadcast %662 : vector<1x256xf32> to vector<16x256xf32>
    %664 = arith.mulf %661, %663 : vector<16x256xf32>
    %665 = arith.truncf %664 : vector<16x256xf32> to vector<16x256xbf16>
    %c320_202 = arith.constant 320 : index
    %c0_203 = arith.constant 0 : index
    %666 = vector.load %arg20[%c320_202, %c0_203] : memref<784x256xbf16, #tpu.memory_space<vmem>>, vector<16x256xbf16>
    tpu.vector_store %arg20[%c320_202, %c0_203], %665 {strides = array<i32>} : memref<784x256xbf16, #tpu.memory_space<vmem>>, vector<16x256xbf16>,
    %c225_i32_204 = arith.constant 225 : i32
    %667 = tpu.dynamic_rotate %536 by %c225_i32_204 dim 1 : vector<16x256xf32>, i32 -> vector<16x256xf32>
    %668 = vector.extract_strided_slice %2 {offsets = [37, 0], sizes = [1, 256], strides = [1, 1]} : vector<49x256xf32> to vector<1x256xf32>
    %669 = vector.broadcast %668 : vector<1x256xf32> to vector<16x256xf32>
    %670 = arith.mulf %667, %669 : vector<16x256xf32>
    %671 = arith.truncf %670 : vector<16x256xf32> to vector<16x256xbf16>
    %c336_205 = arith.constant 336 : index
    %c0_206 = arith.constant 0 : index
    %672 = vector.load %arg20[%c336_205, %c0_206] : memref<784x256xbf16, #tpu.memory_space<vmem>>, vector<16x256xbf16>
    tpu.vector_store %arg20[%c336_205, %c0_206], %671 {strides = array<i32>} : memref<784x256xbf16, #tpu.memory_space<vmem>>, vector<16x256xbf16>,
    %c224_i32_207 = arith.constant 224 : i32
    %673 = tpu.dynamic_rotate %536 by %c224_i32_207 dim 1 : vector<16x256xf32>, i32 -> vector<16x256xf32>
    %674 = vector.extract_strided_slice %2 {offsets = [38, 0], sizes = [1, 256], strides = [1, 1]} : vector<49x256xf32> to vector<1x256xf32>
    %675 = vector.broadcast %674 : vector<1x256xf32> to vector<16x256xf32>
    %676 = arith.mulf %673, %675 : vector<16x256xf32>
    %677 = arith.truncf %676 : vector<16x256xf32> to vector<16x256xbf16>
    %c352_208 = arith.constant 352 : index
    %c0_209 = arith.constant 0 : index
    %678 = vector.load %arg20[%c352_208, %c0_209] : memref<784x256xbf16, #tpu.memory_space<vmem>>, vector<16x256xbf16>
    tpu.vector_store %arg20[%c352_208, %c0_209], %677 {strides = array<i32>} : memref<784x256xbf16, #tpu.memory_space<vmem>>, vector<16x256xbf16>,
    %c223_i32_210 = arith.constant 223 : i32
    %679 = tpu.dynamic_rotate %536 by %c223_i32_210 dim 1 : vector<16x256xf32>, i32 -> vector<16x256xf32>
    %680 = vector.extract_strided_slice %2 {offsets = [39, 0], sizes = [1, 256], strides = [1, 1]} : vector<49x256xf32> to vector<1x256xf32>
    %681 = vector.broadcast %680 : vector<1x256xf32> to vector<16x256xf32>
    %682 = arith.mulf %679, %681 : vector<16x256xf32>
    %683 = arith.truncf %682 : vector<16x256xf32> to vector<16x256xbf16>
    %c368_211 = arith.constant 368 : index
    %c0_212 = arith.constant 0 : index
    %684 = vector.load %arg20[%c368_211, %c0_212] : memref<784x256xbf16, #tpu.memory_space<vmem>>, vector<16x256xbf16>
    tpu.vector_store %arg20[%c368_211, %c0_212], %683 {strides = array<i32>} : memref<784x256xbf16, #tpu.memory_space<vmem>>, vector<16x256xbf16>,
    %c222_i32_213 = arith.constant 222 : i32
    %685 = tpu.dynamic_rotate %536 by %c222_i32_213 dim 1 : vector<16x256xf32>, i32 -> vector<16x256xf32>
    %686 = vector.extract_strided_slice %2 {offsets = [40, 0], sizes = [1, 256], strides = [1, 1]} : vector<49x256xf32> to vector<1x256xf32>
    %687 = vector.broadcast %686 : vector<1x256xf32> to vector<16x256xf32>
    %688 = arith.mulf %685, %687 : vector<16x256xf32>
    %689 = arith.truncf %688 : vector<16x256xf32> to vector<16x256xbf16>
    %c384_214 = arith.constant 384 : index
    %c0_215 = arith.constant 0 : index
    %690 = vector.load %arg20[%c384_214, %c0_215] : memref<784x256xbf16, #tpu.memory_space<vmem>>, vector<16x256xbf16>
    tpu.vector_store %arg20[%c384_214, %c0_215], %689 {strides = array<i32>} : memref<784x256xbf16, #tpu.memory_space<vmem>>, vector<16x256xbf16>,
    %c0_216 = arith.constant 0 : index
    %c0_217 = arith.constant 0 : index
    %691 = vector.load %arg13[%c0_216, %c0_217] : memref<16x400xbf16, #tpu.memory_space<vmem>>, vector<16x400xbf16>
    %c0_218 = arith.constant 0 : index
    %c0_219 = arith.constant 0 : index
    %692 = vector.load %arg20[%c0_218, %c0_219] : memref<784x256xbf16, #tpu.memory_space<vmem>>, vector<400x256xbf16>
    %cst_220 = arith.constant dense<0.000000e+00> : vector<16x256xf32>
    %693 = tpu.matmul %691, %692, %cst_220 {dimension_numbers = #tpu.dot_dimension_numbers<[1], [0], [0], [1], [0, 0, 1, 1], [], []>} : vector<16x400xbf16>, vector<400x256xbf16>, vector<16x256xf32> -> vector<16x256xf32>
    %c0_221 = arith.constant 0 : index
    %c0_222 = arith.constant 0 : index
    %694 = vector.load %arg14[%c0_221, %c0_222] : memref<16x1xf32, #tpu.memory_space<vmem>>, vector<16x1xf32>
    %695 = vector.broadcast %694 : vector<16x1xf32> to vector<16x256xf32>
    %696 = arith.addf %693, %695 : vector<16x256xf32>
    %cst_223 = arith.constant 0.000000e+00 : f32
    %697 = vector.broadcast %cst_223 : f32 to vector<16x256xf32>
    %698 = arith.maximumf %696, %697 : vector<16x256xf32>
    %699 = arith.addf %698, %540 : vector<16x256xf32>
    %c51_i32_224 = arith.constant 51 : i32
    %700 = tpu.dynamic_rotate %539 by %c51_i32_224 dim 1 : vector<16x256xf32>, i32 -> vector<16x256xf32>
    %701 = vector.extract_strided_slice %2 {offsets = [0, 0], sizes = [1, 256], strides = [1, 1]} : vector<49x256xf32> to vector<1x256xf32>
    %702 = vector.broadcast %701 : vector<1x256xf32> to vector<16x256xf32>
    %703 = arith.mulf %700, %702 : vector<16x256xf32>
    %704 = arith.truncf %703 : vector<16x256xf32> to vector<16x256xbf16>
    %c0_225 = arith.constant 0 : index
    %c0_226 = arith.constant 0 : index
    %705 = vector.load %arg20[%c0_225, %c0_226] : memref<784x256xbf16, #tpu.memory_space<vmem>>, vector<16x256xbf16>
    tpu.vector_store %arg20[%c0_225, %c0_226], %704 {strides = array<i32>} : memref<784x256xbf16, #tpu.memory_space<vmem>>, vector<16x256xbf16>,
    %c50_i32_227 = arith.constant 50 : i32
    %706 = tpu.dynamic_rotate %539 by %c50_i32_227 dim 1 : vector<16x256xf32>, i32 -> vector<16x256xf32>
    %707 = vector.extract_strided_slice %2 {offsets = [1, 0], sizes = [1, 256], strides = [1, 1]} : vector<49x256xf32> to vector<1x256xf32>
    %708 = vector.broadcast %707 : vector<1x256xf32> to vector<16x256xf32>
    %709 = arith.mulf %706, %708 : vector<16x256xf32>
    %710 = arith.truncf %709 : vector<16x256xf32> to vector<16x256xbf16>
    %c16_228 = arith.constant 16 : index
    %c0_229 = arith.constant 0 : index
    %711 = vector.load %arg20[%c16_228, %c0_229] : memref<784x256xbf16, #tpu.memory_space<vmem>>, vector<16x256xbf16>
    tpu.vector_store %arg20[%c16_228, %c0_229], %710 {strides = array<i32>} : memref<784x256xbf16, #tpu.memory_space<vmem>>, vector<16x256xbf16>,
    %c49_i32_230 = arith.constant 49 : i32
    %712 = tpu.dynamic_rotate %539 by %c49_i32_230 dim 1 : vector<16x256xf32>, i32 -> vector<16x256xf32>
    %713 = vector.extract_strided_slice %2 {offsets = [2, 0], sizes = [1, 256], strides = [1, 1]} : vector<49x256xf32> to vector<1x256xf32>
    %714 = vector.broadcast %713 : vector<1x256xf32> to vector<16x256xf32>
    %715 = arith.mulf %712, %714 : vector<16x256xf32>
    %716 = arith.truncf %715 : vector<16x256xf32> to vector<16x256xbf16>
    %c32_231 = arith.constant 32 : index
    %c0_232 = arith.constant 0 : index
    %717 = vector.load %arg20[%c32_231, %c0_232] : memref<784x256xbf16, #tpu.memory_space<vmem>>, vector<16x256xbf16>
    tpu.vector_store %arg20[%c32_231, %c0_232], %716 {strides = array<i32>} : memref<784x256xbf16, #tpu.memory_space<vmem>>, vector<16x256xbf16>,
    %c48_i32_233 = arith.constant 48 : i32
    %718 = tpu.dynamic_rotate %539 by %c48_i32_233 dim 1 : vector<16x256xf32>, i32 -> vector<16x256xf32>
    %719 = vector.extract_strided_slice %2 {offsets = [3, 0], sizes = [1, 256], strides = [1, 1]} : vector<49x256xf32> to vector<1x256xf32>
    %720 = vector.broadcast %719 : vector<1x256xf32> to vector<16x256xf32>
    %721 = arith.mulf %718, %720 : vector<16x256xf32>
    %722 = arith.truncf %721 : vector<16x256xf32> to vector<16x256xbf16>
    %c48_234 = arith.constant 48 : index
    %c0_235 = arith.constant 0 : index
    %723 = vector.load %arg20[%c48_234, %c0_235] : memref<784x256xbf16, #tpu.memory_space<vmem>>, vector<16x256xbf16>
    tpu.vector_store %arg20[%c48_234, %c0_235], %722 {strides = array<i32>} : memref<784x256xbf16, #tpu.memory_space<vmem>>, vector<16x256xbf16>,
    %c47_i32_236 = arith.constant 47 : i32
    %724 = tpu.dynamic_rotate %539 by %c47_i32_236 dim 1 : vector<16x256xf32>, i32 -> vector<16x256xf32>
    %725 = vector.extract_strided_slice %2 {offsets = [4, 0], sizes = [1, 256], strides = [1, 1]} : vector<49x256xf32> to vector<1x256xf32>
    %726 = vector.broadcast %725 : vector<1x256xf32> to vector<16x256xf32>
    %727 = arith.mulf %724, %726 : vector<16x256xf32>
    %728 = arith.truncf %727 : vector<16x256xf32> to vector<16x256xbf16>
    %c64_237 = arith.constant 64 : index
    %c0_238 = arith.constant 0 : index
    %729 = vector.load %arg20[%c64_237, %c0_238] : memref<784x256xbf16, #tpu.memory_space<vmem>>, vector<16x256xbf16>
    tpu.vector_store %arg20[%c64_237, %c0_238], %728 {strides = array<i32>} : memref<784x256xbf16, #tpu.memory_space<vmem>>, vector<16x256xbf16>,
    %c46_i32_239 = arith.constant 46 : i32
    %730 = tpu.dynamic_rotate %539 by %c46_i32_239 dim 1 : vector<16x256xf32>, i32 -> vector<16x256xf32>
    %731 = vector.extract_strided_slice %2 {offsets = [5, 0], sizes = [1, 256], strides = [1, 1]} : vector<49x256xf32> to vector<1x256xf32>
    %732 = vector.broadcast %731 : vector<1x256xf32> to vector<16x256xf32>
    %733 = arith.mulf %730, %732 : vector<16x256xf32>
    %734 = arith.truncf %733 : vector<16x256xf32> to vector<16x256xbf16>
    %c80_240 = arith.constant 80 : index
    %c0_241 = arith.constant 0 : index
    %735 = vector.load %arg20[%c80_240, %c0_241] : memref<784x256xbf16, #tpu.memory_space<vmem>>, vector<16x256xbf16>
    tpu.vector_store %arg20[%c80_240, %c0_241], %734 {strides = array<i32>} : memref<784x256xbf16, #tpu.memory_space<vmem>>, vector<16x256xbf16>,
    %c45_i32_242 = arith.constant 45 : i32
    %736 = tpu.dynamic_rotate %539 by %c45_i32_242 dim 1 : vector<16x256xf32>, i32 -> vector<16x256xf32>
    %737 = vector.extract_strided_slice %2 {offsets = [6, 0], sizes = [1, 256], strides = [1, 1]} : vector<49x256xf32> to vector<1x256xf32>
    %738 = vector.broadcast %737 : vector<1x256xf32> to vector<16x256xf32>
    %739 = arith.mulf %736, %738 : vector<16x256xf32>
    %740 = arith.truncf %739 : vector<16x256xf32> to vector<16x256xbf16>
    %c96_243 = arith.constant 96 : index
    %c0_244 = arith.constant 0 : index
    %741 = vector.load %arg20[%c96_243, %c0_244] : memref<784x256xbf16, #tpu.memory_space<vmem>>, vector<16x256xbf16>
    tpu.vector_store %arg20[%c96_243, %c0_244], %740 {strides = array<i32>} : memref<784x256xbf16, #tpu.memory_space<vmem>>, vector<16x256xbf16>,
    %c35_i32_245 = arith.constant 35 : i32
    %742 = tpu.dynamic_rotate %539 by %c35_i32_245 dim 1 : vector<16x256xf32>, i32 -> vector<16x256xf32>
    %743 = vector.extract_strided_slice %2 {offsets = [7, 0], sizes = [1, 256], strides = [1, 1]} : vector<49x256xf32> to vector<1x256xf32>
    %744 = vector.broadcast %743 : vector<1x256xf32> to vector<16x256xf32>
    %745 = arith.mulf %742, %744 : vector<16x256xf32>
    %746 = arith.truncf %745 : vector<16x256xf32> to vector<16x256xbf16>
    %c112_246 = arith.constant 112 : index
    %c0_247 = arith.constant 0 : index
    %747 = vector.load %arg20[%c112_246, %c0_247] : memref<784x256xbf16, #tpu.memory_space<vmem>>, vector<16x256xbf16>
    tpu.vector_store %arg20[%c112_246, %c0_247], %746 {strides = array<i32>} : memref<784x256xbf16, #tpu.memory_space<vmem>>, vector<16x256xbf16>,
    %c34_i32_248 = arith.constant 34 : i32
    %748 = tpu.dynamic_rotate %539 by %c34_i32_248 dim 1 : vector<16x256xf32>, i32 -> vector<16x256xf32>
    %749 = vector.extract_strided_slice %2 {offsets = [8, 0], sizes = [1, 256], strides = [1, 1]} : vector<49x256xf32> to vector<1x256xf32>
    %750 = vector.broadcast %749 : vector<1x256xf32> to vector<16x256xf32>
    %751 = arith.mulf %748, %750 : vector<16x256xf32>
    %752 = arith.truncf %751 : vector<16x256xf32> to vector<16x256xbf16>
    %c128_249 = arith.constant 128 : index
    %c0_250 = arith.constant 0 : index
    %753 = vector.load %arg20[%c128_249, %c0_250] : memref<784x256xbf16, #tpu.memory_space<vmem>>, vector<16x256xbf16>
    tpu.vector_store %arg20[%c128_249, %c0_250], %752 {strides = array<i32>} : memref<784x256xbf16, #tpu.memory_space<vmem>>, vector<16x256xbf16>,
    %c33_i32_251 = arith.constant 33 : i32
    %754 = tpu.dynamic_rotate %539 by %c33_i32_251 dim 1 : vector<16x256xf32>, i32 -> vector<16x256xf32>
    %755 = vector.extract_strided_slice %2 {offsets = [9, 0], sizes = [1, 256], strides = [1, 1]} : vector<49x256xf32> to vector<1x256xf32>
    %756 = vector.broadcast %755 : vector<1x256xf32> to vector<16x256xf32>
    %757 = arith.mulf %754, %756 : vector<16x256xf32>
    %758 = arith.truncf %757 : vector<16x256xf32> to vector<16x256xbf16>
    %c144_252 = arith.constant 144 : index
    %c0_253 = arith.constant 0 : index
    %759 = vector.load %arg20[%c144_252, %c0_253] : memref<784x256xbf16, #tpu.memory_space<vmem>>, vector<16x256xbf16>
    tpu.vector_store %arg20[%c144_252, %c0_253], %758 {strides = array<i32>} : memref<784x256xbf16, #tpu.memory_space<vmem>>, vector<16x256xbf16>,
    %c32_i32_254 = arith.constant 32 : i32
    %760 = tpu.dynamic_rotate %539 by %c32_i32_254 dim 1 : vector<16x256xf32>, i32 -> vector<16x256xf32>
    %761 = vector.extract_strided_slice %2 {offsets = [10, 0], sizes = [1, 256], strides = [1, 1]} : vector<49x256xf32> to vector<1x256xf32>
    %762 = vector.broadcast %761 : vector<1x256xf32> to vector<16x256xf32>
    %763 = arith.mulf %760, %762 : vector<16x256xf32>
    %764 = arith.truncf %763 : vector<16x256xf32> to vector<16x256xbf16>
    %c160_255 = arith.constant 160 : index
    %c0_256 = arith.constant 0 : index
    %765 = vector.load %arg20[%c160_255, %c0_256] : memref<784x256xbf16, #tpu.memory_space<vmem>>, vector<16x256xbf16>
    tpu.vector_store %arg20[%c160_255, %c0_256], %764 {strides = array<i32>} : memref<784x256xbf16, #tpu.memory_space<vmem>>, vector<16x256xbf16>,
    %c31_i32_257 = arith.constant 31 : i32
    %766 = tpu.dynamic_rotate %539 by %c31_i32_257 dim 1 : vector<16x256xf32>, i32 -> vector<16x256xf32>
    %767 = vector.extract_strided_slice %2 {offsets = [11, 0], sizes = [1, 256], strides = [1, 1]} : vector<49x256xf32> to vector<1x256xf32>
    %768 = vector.broadcast %767 : vector<1x256xf32> to vector<16x256xf32>
    %769 = arith.mulf %766, %768 : vector<16x256xf32>
    %770 = arith.truncf %769 : vector<16x256xf32> to vector<16x256xbf16>
    %c176_258 = arith.constant 176 : index
    %c0_259 = arith.constant 0 : index
    %771 = vector.load %arg20[%c176_258, %c0_259] : memref<784x256xbf16, #tpu.memory_space<vmem>>, vector<16x256xbf16>
    tpu.vector_store %arg20[%c176_258, %c0_259], %770 {strides = array<i32>} : memref<784x256xbf16, #tpu.memory_space<vmem>>, vector<16x256xbf16>,
    %c30_i32_260 = arith.constant 30 : i32
    %772 = tpu.dynamic_rotate %539 by %c30_i32_260 dim 1 : vector<16x256xf32>, i32 -> vector<16x256xf32>
    %773 = vector.extract_strided_slice %2 {offsets = [12, 0], sizes = [1, 256], strides = [1, 1]} : vector<49x256xf32> to vector<1x256xf32>
    %774 = vector.broadcast %773 : vector<1x256xf32> to vector<16x256xf32>
    %775 = arith.mulf %772, %774 : vector<16x256xf32>
    %776 = arith.truncf %775 : vector<16x256xf32> to vector<16x256xbf16>
    %c192_261 = arith.constant 192 : index
    %c0_262 = arith.constant 0 : index
    %777 = vector.load %arg20[%c192_261, %c0_262] : memref<784x256xbf16, #tpu.memory_space<vmem>>, vector<16x256xbf16>
    tpu.vector_store %arg20[%c192_261, %c0_262], %776 {strides = array<i32>} : memref<784x256xbf16, #tpu.memory_space<vmem>>, vector<16x256xbf16>,
    %c29_i32_263 = arith.constant 29 : i32
    %778 = tpu.dynamic_rotate %539 by %c29_i32_263 dim 1 : vector<16x256xf32>, i32 -> vector<16x256xf32>
    %779 = vector.extract_strided_slice %2 {offsets = [13, 0], sizes = [1, 256], strides = [1, 1]} : vector<49x256xf32> to vector<1x256xf32>
    %780 = vector.broadcast %779 : vector<1x256xf32> to vector<16x256xf32>
    %781 = arith.mulf %778, %780 : vector<16x256xf32>
    %782 = arith.truncf %781 : vector<16x256xf32> to vector<16x256xbf16>
    %c208_264 = arith.constant 208 : index
    %c0_265 = arith.constant 0 : index
    %783 = vector.load %arg20[%c208_264, %c0_265] : memref<784x256xbf16, #tpu.memory_space<vmem>>, vector<16x256xbf16>
    tpu.vector_store %arg20[%c208_264, %c0_265], %782 {strides = array<i32>} : memref<784x256xbf16, #tpu.memory_space<vmem>>, vector<16x256xbf16>,
    %c19_i32_266 = arith.constant 19 : i32
    %784 = tpu.dynamic_rotate %539 by %c19_i32_266 dim 1 : vector<16x256xf32>, i32 -> vector<16x256xf32>
    %785 = vector.extract_strided_slice %2 {offsets = [14, 0], sizes = [1, 256], strides = [1, 1]} : vector<49x256xf32> to vector<1x256xf32>
    %786 = vector.broadcast %785 : vector<1x256xf32> to vector<16x256xf32>
    %787 = arith.mulf %784, %786 : vector<16x256xf32>
    %788 = arith.truncf %787 : vector<16x256xf32> to vector<16x256xbf16>
    %c224_267 = arith.constant 224 : index
    %c0_268 = arith.constant 0 : index
    %789 = vector.load %arg20[%c224_267, %c0_268] : memref<784x256xbf16, #tpu.memory_space<vmem>>, vector<16x256xbf16>
    tpu.vector_store %arg20[%c224_267, %c0_268], %788 {strides = array<i32>} : memref<784x256xbf16, #tpu.memory_space<vmem>>, vector<16x256xbf16>,
    %c18_i32_269 = arith.constant 18 : i32
    %790 = tpu.dynamic_rotate %539 by %c18_i32_269 dim 1 : vector<16x256xf32>, i32 -> vector<16x256xf32>
    %791 = vector.extract_strided_slice %2 {offsets = [15, 0], sizes = [1, 256], strides = [1, 1]} : vector<49x256xf32> to vector<1x256xf32>
    %792 = vector.broadcast %791 : vector<1x256xf32> to vector<16x256xf32>
    %793 = arith.mulf %790, %792 : vector<16x256xf32>
    %794 = arith.truncf %793 : vector<16x256xf32> to vector<16x256xbf16>
    %c240_270 = arith.constant 240 : index
    %c0_271 = arith.constant 0 : index
    %795 = vector.load %arg20[%c240_270, %c0_271] : memref<784x256xbf16, #tpu.memory_space<vmem>>, vector<16x256xbf16>
    tpu.vector_store %arg20[%c240_270, %c0_271], %794 {strides = array<i32>} : memref<784x256xbf16, #tpu.memory_space<vmem>>, vector<16x256xbf16>,
    %c17_i32_272 = arith.constant 17 : i32
    %796 = tpu.dynamic_rotate %539 by %c17_i32_272 dim 1 : vector<16x256xf32>, i32 -> vector<16x256xf32>
    %797 = vector.extract_strided_slice %2 {offsets = [16, 0], sizes = [1, 256], strides = [1, 1]} : vector<49x256xf32> to vector<1x256xf32>
    %798 = vector.broadcast %797 : vector<1x256xf32> to vector<16x256xf32>
    %799 = arith.mulf %796, %798 : vector<16x256xf32>
    %800 = arith.truncf %799 : vector<16x256xf32> to vector<16x256xbf16>
    %c256_273 = arith.constant 256 : index
    %c0_274 = arith.constant 0 : index
    %801 = vector.load %arg20[%c256_273, %c0_274] : memref<784x256xbf16, #tpu.memory_space<vmem>>, vector<16x256xbf16>
    tpu.vector_store %arg20[%c256_273, %c0_274], %800 {strides = array<i32>} : memref<784x256xbf16, #tpu.memory_space<vmem>>, vector<16x256xbf16>,
    %c16_i32_275 = arith.constant 16 : i32
    %802 = tpu.dynamic_rotate %539 by %c16_i32_275 dim 1 : vector<16x256xf32>, i32 -> vector<16x256xf32>
    %803 = vector.extract_strided_slice %2 {offsets = [17, 0], sizes = [1, 256], strides = [1, 1]} : vector<49x256xf32> to vector<1x256xf32>
    %804 = vector.broadcast %803 : vector<1x256xf32> to vector<16x256xf32>
    %805 = arith.mulf %802, %804 : vector<16x256xf32>
    %806 = arith.truncf %805 : vector<16x256xf32> to vector<16x256xbf16>
    %c272_276 = arith.constant 272 : index
    %c0_277 = arith.constant 0 : index
    %807 = vector.load %arg20[%c272_276, %c0_277] : memref<784x256xbf16, #tpu.memory_space<vmem>>, vector<16x256xbf16>
    tpu.vector_store %arg20[%c272_276, %c0_277], %806 {strides = array<i32>} : memref<784x256xbf16, #tpu.memory_space<vmem>>, vector<16x256xbf16>,
    %c15_i32_278 = arith.constant 15 : i32
    %808 = tpu.dynamic_rotate %539 by %c15_i32_278 dim 1 : vector<16x256xf32>, i32 -> vector<16x256xf32>
    %809 = vector.extract_strided_slice %2 {offsets = [18, 0], sizes = [1, 256], strides = [1, 1]} : vector<49x256xf32> to vector<1x256xf32>
    %810 = vector.broadcast %809 : vector<1x256xf32> to vector<16x256xf32>
    %811 = arith.mulf %808, %810 : vector<16x256xf32>
    %812 = arith.truncf %811 : vector<16x256xf32> to vector<16x256xbf16>
    %c288_279 = arith.constant 288 : index
    %c0_280 = arith.constant 0 : index
    %813 = vector.load %arg20[%c288_279, %c0_280] : memref<784x256xbf16, #tpu.memory_space<vmem>>, vector<16x256xbf16>
    tpu.vector_store %arg20[%c288_279, %c0_280], %812 {strides = array<i32>} : memref<784x256xbf16, #tpu.memory_space<vmem>>, vector<16x256xbf16>,
    %c14_i32_281 = arith.constant 14 : i32
    %814 = tpu.dynamic_rotate %539 by %c14_i32_281 dim 1 : vector<16x256xf32>, i32 -> vector<16x256xf32>
    %815 = vector.extract_strided_slice %2 {offsets = [19, 0], sizes = [1, 256], strides = [1, 1]} : vector<49x256xf32> to vector<1x256xf32>
    %816 = vector.broadcast %815 : vector<1x256xf32> to vector<16x256xf32>
    %817 = arith.mulf %814, %816 : vector<16x256xf32>
    %818 = arith.truncf %817 : vector<16x256xf32> to vector<16x256xbf16>
    %c304_282 = arith.constant 304 : index
    %c0_283 = arith.constant 0 : index
    %819 = vector.load %arg20[%c304_282, %c0_283] : memref<784x256xbf16, #tpu.memory_space<vmem>>, vector<16x256xbf16>
    tpu.vector_store %arg20[%c304_282, %c0_283], %818 {strides = array<i32>} : memref<784x256xbf16, #tpu.memory_space<vmem>>, vector<16x256xbf16>,
    %c13_i32_284 = arith.constant 13 : i32
    %820 = tpu.dynamic_rotate %539 by %c13_i32_284 dim 1 : vector<16x256xf32>, i32 -> vector<16x256xf32>
    %821 = vector.extract_strided_slice %2 {offsets = [20, 0], sizes = [1, 256], strides = [1, 1]} : vector<49x256xf32> to vector<1x256xf32>
    %822 = vector.broadcast %821 : vector<1x256xf32> to vector<16x256xf32>
    %823 = arith.mulf %820, %822 : vector<16x256xf32>
    %824 = arith.truncf %823 : vector<16x256xf32> to vector<16x256xbf16>
    %c320_285 = arith.constant 320 : index
    %c0_286 = arith.constant 0 : index
    %825 = vector.load %arg20[%c320_285, %c0_286] : memref<784x256xbf16, #tpu.memory_space<vmem>>, vector<16x256xbf16>
    tpu.vector_store %arg20[%c320_285, %c0_286], %824 {strides = array<i32>} : memref<784x256xbf16, #tpu.memory_space<vmem>>, vector<16x256xbf16>,
    %c3_i32_287 = arith.constant 3 : i32
    %826 = tpu.dynamic_rotate %539 by %c3_i32_287 dim 1 : vector<16x256xf32>, i32 -> vector<16x256xf32>
    %827 = vector.extract_strided_slice %2 {offsets = [21, 0], sizes = [1, 256], strides = [1, 1]} : vector<49x256xf32> to vector<1x256xf32>
    %828 = vector.broadcast %827 : vector<1x256xf32> to vector<16x256xf32>
    %829 = arith.mulf %826, %828 : vector<16x256xf32>
    %830 = arith.truncf %829 : vector<16x256xf32> to vector<16x256xbf16>
    %c336_288 = arith.constant 336 : index
    %c0_289 = arith.constant 0 : index
    %831 = vector.load %arg20[%c336_288, %c0_289] : memref<784x256xbf16, #tpu.memory_space<vmem>>, vector<16x256xbf16>
    tpu.vector_store %arg20[%c336_288, %c0_289], %830 {strides = array<i32>} : memref<784x256xbf16, #tpu.memory_space<vmem>>, vector<16x256xbf16>,
    %c2_i32_290 = arith.constant 2 : i32
    %832 = tpu.dynamic_rotate %539 by %c2_i32_290 dim 1 : vector<16x256xf32>, i32 -> vector<16x256xf32>
    %833 = vector.extract_strided_slice %2 {offsets = [22, 0], sizes = [1, 256], strides = [1, 1]} : vector<49x256xf32> to vector<1x256xf32>
    %834 = vector.broadcast %833 : vector<1x256xf32> to vector<16x256xf32>
    %835 = arith.mulf %832, %834 : vector<16x256xf32>
    %836 = arith.truncf %835 : vector<16x256xf32> to vector<16x256xbf16>
    %c352_291 = arith.constant 352 : index
    %c0_292 = arith.constant 0 : index
    %837 = vector.load %arg20[%c352_291, %c0_292] : memref<784x256xbf16, #tpu.memory_space<vmem>>, vector<16x256xbf16>
    tpu.vector_store %arg20[%c352_291, %c0_292], %836 {strides = array<i32>} : memref<784x256xbf16, #tpu.memory_space<vmem>>, vector<16x256xbf16>,
    %c1_i32_293 = arith.constant 1 : i32
    %838 = tpu.dynamic_rotate %539 by %c1_i32_293 dim 1 : vector<16x256xf32>, i32 -> vector<16x256xf32>
    %839 = vector.extract_strided_slice %2 {offsets = [23, 0], sizes = [1, 256], strides = [1, 1]} : vector<49x256xf32> to vector<1x256xf32>
    %840 = vector.broadcast %839 : vector<1x256xf32> to vector<16x256xf32>
    %841 = arith.mulf %838, %840 : vector<16x256xf32>
    %842 = arith.truncf %841 : vector<16x256xf32> to vector<16x256xbf16>
    %c368_294 = arith.constant 368 : index
    %c0_295 = arith.constant 0 : index
    %843 = vector.load %arg20[%c368_294, %c0_295] : memref<784x256xbf16, #tpu.memory_space<vmem>>, vector<16x256xbf16>
    tpu.vector_store %arg20[%c368_294, %c0_295], %842 {strides = array<i32>} : memref<784x256xbf16, #tpu.memory_space<vmem>>, vector<16x256xbf16>,
    %844 = vector.extract_strided_slice %2 {offsets = [24, 0], sizes = [1, 256], strides = [1, 1]} : vector<49x256xf32> to vector<1x256xf32>
    %845 = vector.broadcast %844 : vector<1x256xf32> to vector<16x256xf32>
    %846 = arith.mulf %539, %845 : vector<16x256xf32>
    %847 = arith.truncf %846 : vector<16x256xf32> to vector<16x256xbf16>
    %c384_296 = arith.constant 384 : index
    %c0_297 = arith.constant 0 : index
    %848 = vector.load %arg20[%c384_296, %c0_297] : memref<784x256xbf16, #tpu.memory_space<vmem>>, vector<16x256xbf16>
    tpu.vector_store %arg20[%c384_296, %c0_297], %847 {strides = array<i32>} : memref<784x256xbf16, #tpu.memory_space<vmem>>, vector<16x256xbf16>,
    %c255_i32_298 = arith.constant 255 : i32
    %849 = tpu.dynamic_rotate %539 by %c255_i32_298 dim 1 : vector<16x256xf32>, i32 -> vector<16x256xf32>
    %850 = vector.extract_strided_slice %2 {offsets = [25, 0], sizes = [1, 256], strides = [1, 1]} : vector<49x256xf32> to vector<1x256xf32>
    %851 = vector.broadcast %850 : vector<1x256xf32> to vector<16x256xf32>
    %852 = arith.mulf %849, %851 : vector<16x256xf32>
    %853 = arith.truncf %852 : vector<16x256xf32> to vector<16x256xbf16>
    %c400_299 = arith.constant 400 : index
    %c0_300 = arith.constant 0 : index
    %854 = vector.load %arg20[%c400_299, %c0_300] : memref<784x256xbf16, #tpu.memory_space<vmem>>, vector<16x256xbf16>
    tpu.vector_store %arg20[%c400_299, %c0_300], %853 {strides = array<i32>} : memref<784x256xbf16, #tpu.memory_space<vmem>>, vector<16x256xbf16>,
    %c254_i32_301 = arith.constant 254 : i32
    %855 = tpu.dynamic_rotate %539 by %c254_i32_301 dim 1 : vector<16x256xf32>, i32 -> vector<16x256xf32>
    %856 = vector.extract_strided_slice %2 {offsets = [26, 0], sizes = [1, 256], strides = [1, 1]} : vector<49x256xf32> to vector<1x256xf32>
    %857 = vector.broadcast %856 : vector<1x256xf32> to vector<16x256xf32>
    %858 = arith.mulf %855, %857 : vector<16x256xf32>
    %859 = arith.truncf %858 : vector<16x256xf32> to vector<16x256xbf16>
    %c416_302 = arith.constant 416 : index
    %c0_303 = arith.constant 0 : index
    %860 = vector.load %arg20[%c416_302, %c0_303] : memref<784x256xbf16, #tpu.memory_space<vmem>>, vector<16x256xbf16>
    tpu.vector_store %arg20[%c416_302, %c0_303], %859 {strides = array<i32>} : memref<784x256xbf16, #tpu.memory_space<vmem>>, vector<16x256xbf16>,
    %c253_i32_304 = arith.constant 253 : i32
    %861 = tpu.dynamic_rotate %539 by %c253_i32_304 dim 1 : vector<16x256xf32>, i32 -> vector<16x256xf32>
    %862 = vector.extract_strided_slice %2 {offsets = [27, 0], sizes = [1, 256], strides = [1, 1]} : vector<49x256xf32> to vector<1x256xf32>
    %863 = vector.broadcast %862 : vector<1x256xf32> to vector<16x256xf32>
    %864 = arith.mulf %861, %863 : vector<16x256xf32>
    %865 = arith.truncf %864 : vector<16x256xf32> to vector<16x256xbf16>
    %c432_305 = arith.constant 432 : index
    %c0_306 = arith.constant 0 : index
    %866 = vector.load %arg20[%c432_305, %c0_306] : memref<784x256xbf16, #tpu.memory_space<vmem>>, vector<16x256xbf16>
    tpu.vector_store %arg20[%c432_305, %c0_306], %865 {strides = array<i32>} : memref<784x256xbf16, #tpu.memory_space<vmem>>, vector<16x256xbf16>,
    %c243_i32_307 = arith.constant 243 : i32
    %867 = tpu.dynamic_rotate %539 by %c243_i32_307 dim 1 : vector<16x256xf32>, i32 -> vector<16x256xf32>
    %868 = vector.extract_strided_slice %2 {offsets = [28, 0], sizes = [1, 256], strides = [1, 1]} : vector<49x256xf32> to vector<1x256xf32>
    %869 = vector.broadcast %868 : vector<1x256xf32> to vector<16x256xf32>
    %870 = arith.mulf %867, %869 : vector<16x256xf32>
    %871 = arith.truncf %870 : vector<16x256xf32> to vector<16x256xbf16>
    %c448_308 = arith.constant 448 : index
    %c0_309 = arith.constant 0 : index
    %872 = vector.load %arg20[%c448_308, %c0_309] : memref<784x256xbf16, #tpu.memory_space<vmem>>, vector<16x256xbf16>
    tpu.vector_store %arg20[%c448_308, %c0_309], %871 {strides = array<i32>} : memref<784x256xbf16, #tpu.memory_space<vmem>>, vector<16x256xbf16>,
    %c242_i32_310 = arith.constant 242 : i32
    %873 = tpu.dynamic_rotate %539 by %c242_i32_310 dim 1 : vector<16x256xf32>, i32 -> vector<16x256xf32>
    %874 = vector.extract_strided_slice %2 {offsets = [29, 0], sizes = [1, 256], strides = [1, 1]} : vector<49x256xf32> to vector<1x256xf32>
    %875 = vector.broadcast %874 : vector<1x256xf32> to vector<16x256xf32>
    %876 = arith.mulf %873, %875 : vector<16x256xf32>
    %877 = arith.truncf %876 : vector<16x256xf32> to vector<16x256xbf16>
    %c464_311 = arith.constant 464 : index
    %c0_312 = arith.constant 0 : index
    %878 = vector.load %arg20[%c464_311, %c0_312] : memref<784x256xbf16, #tpu.memory_space<vmem>>, vector<16x256xbf16>
    tpu.vector_store %arg20[%c464_311, %c0_312], %877 {strides = array<i32>} : memref<784x256xbf16, #tpu.memory_space<vmem>>, vector<16x256xbf16>,
    %c241_i32_313 = arith.constant 241 : i32
    %879 = tpu.dynamic_rotate %539 by %c241_i32_313 dim 1 : vector<16x256xf32>, i32 -> vector<16x256xf32>
    %880 = vector.extract_strided_slice %2 {offsets = [30, 0], sizes = [1, 256], strides = [1, 1]} : vector<49x256xf32> to vector<1x256xf32>
    %881 = vector.broadcast %880 : vector<1x256xf32> to vector<16x256xf32>
    %882 = arith.mulf %879, %881 : vector<16x256xf32>
    %883 = arith.truncf %882 : vector<16x256xf32> to vector<16x256xbf16>
    %c480_314 = arith.constant 480 : index
    %c0_315 = arith.constant 0 : index
    %884 = vector.load %arg20[%c480_314, %c0_315] : memref<784x256xbf16, #tpu.memory_space<vmem>>, vector<16x256xbf16>
    tpu.vector_store %arg20[%c480_314, %c0_315], %883 {strides = array<i32>} : memref<784x256xbf16, #tpu.memory_space<vmem>>, vector<16x256xbf16>,
    %c240_i32_316 = arith.constant 240 : i32
    %885 = tpu.dynamic_rotate %539 by %c240_i32_316 dim 1 : vector<16x256xf32>, i32 -> vector<16x256xf32>
    %886 = vector.extract_strided_slice %2 {offsets = [31, 0], sizes = [1, 256], strides = [1, 1]} : vector<49x256xf32> to vector<1x256xf32>
    %887 = vector.broadcast %886 : vector<1x256xf32> to vector<16x256xf32>
    %888 = arith.mulf %885, %887 : vector<16x256xf32>
    %889 = arith.truncf %888 : vector<16x256xf32> to vector<16x256xbf16>
    %c496_317 = arith.constant 496 : index
    %c0_318 = arith.constant 0 : index
    %890 = vector.load %arg20[%c496_317, %c0_318] : memref<784x256xbf16, #tpu.memory_space<vmem>>, vector<16x256xbf16>
    tpu.vector_store %arg20[%c496_317, %c0_318], %889 {strides = array<i32>} : memref<784x256xbf16, #tpu.memory_space<vmem>>, vector<16x256xbf16>,
    %c239_i32_319 = arith.constant 239 : i32
    %891 = tpu.dynamic_rotate %539 by %c239_i32_319 dim 1 : vector<16x256xf32>, i32 -> vector<16x256xf32>
    %892 = vector.extract_strided_slice %2 {offsets = [32, 0], sizes = [1, 256], strides = [1, 1]} : vector<49x256xf32> to vector<1x256xf32>
    %893 = vector.broadcast %892 : vector<1x256xf32> to vector<16x256xf32>
    %894 = arith.mulf %891, %893 : vector<16x256xf32>
    %895 = arith.truncf %894 : vector<16x256xf32> to vector<16x256xbf16>
    %c512_320 = arith.constant 512 : index
    %c0_321 = arith.constant 0 : index
    %896 = vector.load %arg20[%c512_320, %c0_321] : memref<784x256xbf16, #tpu.memory_space<vmem>>, vector<16x256xbf16>
    tpu.vector_store %arg20[%c512_320, %c0_321], %895 {strides = array<i32>} : memref<784x256xbf16, #tpu.memory_space<vmem>>, vector<16x256xbf16>,
    %c238_i32_322 = arith.constant 238 : i32
    %897 = tpu.dynamic_rotate %539 by %c238_i32_322 dim 1 : vector<16x256xf32>, i32 -> vector<16x256xf32>
    %898 = vector.extract_strided_slice %2 {offsets = [33, 0], sizes = [1, 256], strides = [1, 1]} : vector<49x256xf32> to vector<1x256xf32>
    %899 = vector.broadcast %898 : vector<1x256xf32> to vector<16x256xf32>
    %900 = arith.mulf %897, %899 : vector<16x256xf32>
    %901 = arith.truncf %900 : vector<16x256xf32> to vector<16x256xbf16>
    %c528_323 = arith.constant 528 : index
    %c0_324 = arith.constant 0 : index
    %902 = vector.load %arg20[%c528_323, %c0_324] : memref<784x256xbf16, #tpu.memory_space<vmem>>, vector<16x256xbf16>
    tpu.vector_store %arg20[%c528_323, %c0_324], %901 {strides = array<i32>} : memref<784x256xbf16, #tpu.memory_space<vmem>>, vector<16x256xbf16>,
    %c237_i32_325 = arith.constant 237 : i32
    %903 = tpu.dynamic_rotate %539 by %c237_i32_325 dim 1 : vector<16x256xf32>, i32 -> vector<16x256xf32>
    %904 = vector.extract_strided_slice %2 {offsets = [34, 0], sizes = [1, 256], strides = [1, 1]} : vector<49x256xf32> to vector<1x256xf32>
    %905 = vector.broadcast %904 : vector<1x256xf32> to vector<16x256xf32>
    %906 = arith.mulf %903, %905 : vector<16x256xf32>
    %907 = arith.truncf %906 : vector<16x256xf32> to vector<16x256xbf16>
    %c544_326 = arith.constant 544 : index
    %c0_327 = arith.constant 0 : index
    %908 = vector.load %arg20[%c544_326, %c0_327] : memref<784x256xbf16, #tpu.memory_space<vmem>>, vector<16x256xbf16>
    tpu.vector_store %arg20[%c544_326, %c0_327], %907 {strides = array<i32>} : memref<784x256xbf16, #tpu.memory_space<vmem>>, vector<16x256xbf16>,
    %c227_i32_328 = arith.constant 227 : i32
    %909 = tpu.dynamic_rotate %539 by %c227_i32_328 dim 1 : vector<16x256xf32>, i32 -> vector<16x256xf32>
    %910 = vector.extract_strided_slice %2 {offsets = [35, 0], sizes = [1, 256], strides = [1, 1]} : vector<49x256xf32> to vector<1x256xf32>
    %911 = vector.broadcast %910 : vector<1x256xf32> to vector<16x256xf32>
    %912 = arith.mulf %909, %911 : vector<16x256xf32>
    %913 = arith.truncf %912 : vector<16x256xf32> to vector<16x256xbf16>
    %c560_329 = arith.constant 560 : index
    %c0_330 = arith.constant 0 : index
    %914 = vector.load %arg20[%c560_329, %c0_330] : memref<784x256xbf16, #tpu.memory_space<vmem>>, vector<16x256xbf16>
    tpu.vector_store %arg20[%c560_329, %c0_330], %913 {strides = array<i32>} : memref<784x256xbf16, #tpu.memory_space<vmem>>, vector<16x256xbf16>,
    %c226_i32_331 = arith.constant 226 : i32
    %915 = tpu.dynamic_rotate %539 by %c226_i32_331 dim 1 : vector<16x256xf32>, i32 -> vector<16x256xf32>
    %916 = vector.extract_strided_slice %2 {offsets = [36, 0], sizes = [1, 256], strides = [1, 1]} : vector<49x256xf32> to vector<1x256xf32>
    %917 = vector.broadcast %916 : vector<1x256xf32> to vector<16x256xf32>
    %918 = arith.mulf %915, %917 : vector<16x256xf32>
    %919 = arith.truncf %918 : vector<16x256xf32> to vector<16x256xbf16>
    %c576_332 = arith.constant 576 : index
    %c0_333 = arith.constant 0 : index
    %920 = vector.load %arg20[%c576_332, %c0_333] : memref<784x256xbf16, #tpu.memory_space<vmem>>, vector<16x256xbf16>
    tpu.vector_store %arg20[%c576_332, %c0_333], %919 {strides = array<i32>} : memref<784x256xbf16, #tpu.memory_space<vmem>>, vector<16x256xbf16>,
    %c225_i32_334 = arith.constant 225 : i32
    %921 = tpu.dynamic_rotate %539 by %c225_i32_334 dim 1 : vector<16x256xf32>, i32 -> vector<16x256xf32>
    %922 = vector.extract_strided_slice %2 {offsets = [37, 0], sizes = [1, 256], strides = [1, 1]} : vector<49x256xf32> to vector<1x256xf32>
    %923 = vector.broadcast %922 : vector<1x256xf32> to vector<16x256xf32>
    %924 = arith.mulf %921, %923 : vector<16x256xf32>
    %925 = arith.truncf %924 : vector<16x256xf32> to vector<16x256xbf16>
    %c592_335 = arith.constant 592 : index
    %c0_336 = arith.constant 0 : index
    %926 = vector.load %arg20[%c592_335, %c0_336] : memref<784x256xbf16, #tpu.memory_space<vmem>>, vector<16x256xbf16>
    tpu.vector_store %arg20[%c592_335, %c0_336], %925 {strides = array<i32>} : memref<784x256xbf16, #tpu.memory_space<vmem>>, vector<16x256xbf16>,
    %c224_i32_337 = arith.constant 224 : i32
    %927 = tpu.dynamic_rotate %539 by %c224_i32_337 dim 1 : vector<16x256xf32>, i32 -> vector<16x256xf32>
    %928 = vector.extract_strided_slice %2 {offsets = [38, 0], sizes = [1, 256], strides = [1, 1]} : vector<49x256xf32> to vector<1x256xf32>
    %929 = vector.broadcast %928 : vector<1x256xf32> to vector<16x256xf32>
    %930 = arith.mulf %927, %929 : vector<16x256xf32>
    %931 = arith.truncf %930 : vector<16x256xf32> to vector<16x256xbf16>
    %c608_338 = arith.constant 608 : index
    %c0_339 = arith.constant 0 : index
    %932 = vector.load %arg20[%c608_338, %c0_339] : memref<784x256xbf16, #tpu.memory_space<vmem>>, vector<16x256xbf16>
    tpu.vector_store %arg20[%c608_338, %c0_339], %931 {strides = array<i32>} : memref<784x256xbf16, #tpu.memory_space<vmem>>, vector<16x256xbf16>,
    %c223_i32_340 = arith.constant 223 : i32
    %933 = tpu.dynamic_rotate %539 by %c223_i32_340 dim 1 : vector<16x256xf32>, i32 -> vector<16x256xf32>
    %934 = vector.extract_strided_slice %2 {offsets = [39, 0], sizes = [1, 256], strides = [1, 1]} : vector<49x256xf32> to vector<1x256xf32>
    %935 = vector.broadcast %934 : vector<1x256xf32> to vector<16x256xf32>
    %936 = arith.mulf %933, %935 : vector<16x256xf32>
    %937 = arith.truncf %936 : vector<16x256xf32> to vector<16x256xbf16>
    %c624_341 = arith.constant 624 : index
    %c0_342 = arith.constant 0 : index
    %938 = vector.load %arg20[%c624_341, %c0_342] : memref<784x256xbf16, #tpu.memory_space<vmem>>, vector<16x256xbf16>
    tpu.vector_store %arg20[%c624_341, %c0_342], %937 {strides = array<i32>} : memref<784x256xbf16, #tpu.memory_space<vmem>>, vector<16x256xbf16>,
    %c222_i32_343 = arith.constant 222 : i32
    %939 = tpu.dynamic_rotate %539 by %c222_i32_343 dim 1 : vector<16x256xf32>, i32 -> vector<16x256xf32>
    %940 = vector.extract_strided_slice %2 {offsets = [40, 0], sizes = [1, 256], strides = [1, 1]} : vector<49x256xf32> to vector<1x256xf32>
    %941 = vector.broadcast %940 : vector<1x256xf32> to vector<16x256xf32>
    %942 = arith.mulf %939, %941 : vector<16x256xf32>
    %943 = arith.truncf %942 : vector<16x256xf32> to vector<16x256xbf16>
    %c640_344 = arith.constant 640 : index
    %c0_345 = arith.constant 0 : index
    %944 = vector.load %arg20[%c640_344, %c0_345] : memref<784x256xbf16, #tpu.memory_space<vmem>>, vector<16x256xbf16>
    tpu.vector_store %arg20[%c640_344, %c0_345], %943 {strides = array<i32>} : memref<784x256xbf16, #tpu.memory_space<vmem>>, vector<16x256xbf16>,
    %c221_i32_346 = arith.constant 221 : i32
    %945 = tpu.dynamic_rotate %539 by %c221_i32_346 dim 1 : vector<16x256xf32>, i32 -> vector<16x256xf32>
    %946 = vector.extract_strided_slice %2 {offsets = [41, 0], sizes = [1, 256], strides = [1, 1]} : vector<49x256xf32> to vector<1x256xf32>
    %947 = vector.broadcast %946 : vector<1x256xf32> to vector<16x256xf32>
    %948 = arith.mulf %945, %947 : vector<16x256xf32>
    %949 = arith.truncf %948 : vector<16x256xf32> to vector<16x256xbf16>
    %c656_347 = arith.constant 656 : index
    %c0_348 = arith.constant 0 : index
    %950 = vector.load %arg20[%c656_347, %c0_348] : memref<784x256xbf16, #tpu.memory_space<vmem>>, vector<16x256xbf16>
    tpu.vector_store %arg20[%c656_347, %c0_348], %949 {strides = array<i32>} : memref<784x256xbf16, #tpu.memory_space<vmem>>, vector<16x256xbf16>,
    %c211_i32_349 = arith.constant 211 : i32
    %951 = tpu.dynamic_rotate %539 by %c211_i32_349 dim 1 : vector<16x256xf32>, i32 -> vector<16x256xf32>
    %952 = vector.extract_strided_slice %2 {offsets = [42, 0], sizes = [1, 256], strides = [1, 1]} : vector<49x256xf32> to vector<1x256xf32>
    %953 = vector.broadcast %952 : vector<1x256xf32> to vector<16x256xf32>
    %954 = arith.mulf %951, %953 : vector<16x256xf32>
    %955 = arith.truncf %954 : vector<16x256xf32> to vector<16x256xbf16>
    %c672_350 = arith.constant 672 : index
    %c0_351 = arith.constant 0 : index
    %956 = vector.load %arg20[%c672_350, %c0_351] : memref<784x256xbf16, #tpu.memory_space<vmem>>, vector<16x256xbf16>
    tpu.vector_store %arg20[%c672_350, %c0_351], %955 {strides = array<i32>} : memref<784x256xbf16, #tpu.memory_space<vmem>>, vector<16x256xbf16>,
    %c210_i32_352 = arith.constant 210 : i32
    %957 = tpu.dynamic_rotate %539 by %c210_i32_352 dim 1 : vector<16x256xf32>, i32 -> vector<16x256xf32>
    %958 = vector.extract_strided_slice %2 {offsets = [43, 0], sizes = [1, 256], strides = [1, 1]} : vector<49x256xf32> to vector<1x256xf32>
    %959 = vector.broadcast %958 : vector<1x256xf32> to vector<16x256xf32>
    %960 = arith.mulf %957, %959 : vector<16x256xf32>
    %961 = arith.truncf %960 : vector<16x256xf32> to vector<16x256xbf16>
    %c688_353 = arith.constant 688 : index
    %c0_354 = arith.constant 0 : index
    %962 = vector.load %arg20[%c688_353, %c0_354] : memref<784x256xbf16, #tpu.memory_space<vmem>>, vector<16x256xbf16>
    tpu.vector_store %arg20[%c688_353, %c0_354], %961 {strides = array<i32>} : memref<784x256xbf16, #tpu.memory_space<vmem>>, vector<16x256xbf16>,
    %c209_i32_355 = arith.constant 209 : i32
    %963 = tpu.dynamic_rotate %539 by %c209_i32_355 dim 1 : vector<16x256xf32>, i32 -> vector<16x256xf32>
    %964 = vector.extract_strided_slice %2 {offsets = [44, 0], sizes = [1, 256], strides = [1, 1]} : vector<49x256xf32> to vector<1x256xf32>
    %965 = vector.broadcast %964 : vector<1x256xf32> to vector<16x256xf32>
    %966 = arith.mulf %963, %965 : vector<16x256xf32>
    %967 = arith.truncf %966 : vector<16x256xf32> to vector<16x256xbf16>
    %c704_356 = arith.constant 704 : index
    %c0_357 = arith.constant 0 : index
    %968 = vector.load %arg20[%c704_356, %c0_357] : memref<784x256xbf16, #tpu.memory_space<vmem>>, vector<16x256xbf16>
    tpu.vector_store %arg20[%c704_356, %c0_357], %967 {strides = array<i32>} : memref<784x256xbf16, #tpu.memory_space<vmem>>, vector<16x256xbf16>,
    %c208_i32_358 = arith.constant 208 : i32
    %969 = tpu.dynamic_rotate %539 by %c208_i32_358 dim 1 : vector<16x256xf32>, i32 -> vector<16x256xf32>
    %970 = vector.extract_strided_slice %2 {offsets = [45, 0], sizes = [1, 256], strides = [1, 1]} : vector<49x256xf32> to vector<1x256xf32>
    %971 = vector.broadcast %970 : vector<1x256xf32> to vector<16x256xf32>
    %972 = arith.mulf %969, %971 : vector<16x256xf32>
    %973 = arith.truncf %972 : vector<16x256xf32> to vector<16x256xbf16>
    %c720_359 = arith.constant 720 : index
    %c0_360 = arith.constant 0 : index
    %974 = vector.load %arg20[%c720_359, %c0_360] : memref<784x256xbf16, #tpu.memory_space<vmem>>, vector<16x256xbf16>
    tpu.vector_store %arg20[%c720_359, %c0_360], %973 {strides = array<i32>} : memref<784x256xbf16, #tpu.memory_space<vmem>>, vector<16x256xbf16>,
    %c207_i32_361 = arith.constant 207 : i32
    %975 = tpu.dynamic_rotate %539 by %c207_i32_361 dim 1 : vector<16x256xf32>, i32 -> vector<16x256xf32>
    %976 = vector.extract_strided_slice %2 {offsets = [46, 0], sizes = [1, 256], strides = [1, 1]} : vector<49x256xf32> to vector<1x256xf32>
    %977 = vector.broadcast %976 : vector<1x256xf32> to vector<16x256xf32>
    %978 = arith.mulf %975, %977 : vector<16x256xf32>
    %979 = arith.truncf %978 : vector<16x256xf32> to vector<16x256xbf16>
    %c736_362 = arith.constant 736 : index
    %c0_363 = arith.constant 0 : index
    %980 = vector.load %arg20[%c736_362, %c0_363] : memref<784x256xbf16, #tpu.memory_space<vmem>>, vector<16x256xbf16>
    tpu.vector_store %arg20[%c736_362, %c0_363], %979 {strides = array<i32>} : memref<784x256xbf16, #tpu.memory_space<vmem>>, vector<16x256xbf16>,
    %c206_i32_364 = arith.constant 206 : i32
    %981 = tpu.dynamic_rotate %539 by %c206_i32_364 dim 1 : vector<16x256xf32>, i32 -> vector<16x256xf32>
    %982 = vector.extract_strided_slice %2 {offsets = [47, 0], sizes = [1, 256], strides = [1, 1]} : vector<49x256xf32> to vector<1x256xf32>
    %983 = vector.broadcast %982 : vector<1x256xf32> to vector<16x256xf32>
    %984 = arith.mulf %981, %983 : vector<16x256xf32>
    %985 = arith.truncf %984 : vector<16x256xf32> to vector<16x256xbf16>
    %c752_365 = arith.constant 752 : index
    %c0_366 = arith.constant 0 : index
    %986 = vector.load %arg20[%c752_365, %c0_366] : memref<784x256xbf16, #tpu.memory_space<vmem>>, vector<16x256xbf16>
    tpu.vector_store %arg20[%c752_365, %c0_366], %985 {strides = array<i32>} : memref<784x256xbf16, #tpu.memory_space<vmem>>, vector<16x256xbf16>,
    %c205_i32_367 = arith.constant 205 : i32
    %987 = tpu.dynamic_rotate %539 by %c205_i32_367 dim 1 : vector<16x256xf32>, i32 -> vector<16x256xf32>
    %988 = vector.extract_strided_slice %2 {offsets = [48, 0], sizes = [1, 256], strides = [1, 1]} : vector<49x256xf32> to vector<1x256xf32>
    %989 = vector.broadcast %988 : vector<1x256xf32> to vector<16x256xf32>
    %990 = arith.mulf %987, %989 : vector<16x256xf32>
    %991 = arith.truncf %990 : vector<16x256xf32> to vector<16x256xbf16>
    %c768_368 = arith.constant 768 : index
    %c0_369 = arith.constant 0 : index
    %992 = vector.load %arg20[%c768_368, %c0_369] : memref<784x256xbf16, #tpu.memory_space<vmem>>, vector<16x256xbf16>
    tpu.vector_store %arg20[%c768_368, %c0_369], %991 {strides = array<i32>} : memref<784x256xbf16, #tpu.memory_space<vmem>>, vector<16x256xbf16>,
    %c0_370 = arith.constant 0 : index
    %c0_371 = arith.constant 0 : index
    %993 = vector.load %arg15[%c0_370, %c0_371] : memref<16x784xbf16, #tpu.memory_space<vmem>>, vector<16x784xbf16>
    %c0_372 = arith.constant 0 : index
    %c0_373 = arith.constant 0 : index
    %994 = vector.load %arg20[%c0_372, %c0_373] : memref<784x256xbf16, #tpu.memory_space<vmem>>, vector<784x256xbf16>
    %cst_374 = arith.constant dense<0.000000e+00> : vector<16x256xf32>
    %995 = tpu.matmul %993, %994, %cst_374 {dimension_numbers = #tpu.dot_dimension_numbers<[1], [0], [0], [1], [0, 0, 1, 1], [], []>} : vector<16x784xbf16>, vector<784x256xbf16>, vector<16x256xf32> -> vector<16x256xf32>
    %c0_375 = arith.constant 0 : index
    %c0_376 = arith.constant 0 : index
    %996 = vector.load %arg16[%c0_375, %c0_376] : memref<16x1xf32, #tpu.memory_space<vmem>>, vector<16x1xf32>
    %997 = vector.broadcast %996 : vector<16x1xf32> to vector<16x256xf32>
    %998 = arith.addf %995, %997 : vector<16x256xf32>
    %cst_377 = arith.constant 0.000000e+00 : f32
    %999 = vector.broadcast %cst_377 : f32 to vector<16x256xf32>
    %1000 = arith.maximumf %998, %999 : vector<16x256xf32>
    %1001 = arith.addf %1000, %541 : vector<16x256xf32>
    %c0_378 = arith.constant 0 : index
    %c0_379 = arith.constant 0 : index
    %1002 = vector.load %arg17[%c0_378, %c0_379] : memref<16x1xf32, #tpu.memory_space<vmem>>, vector<16x1xf32>
    %1003 = arith.addf %699, %1 : vector<16x256xf32>
    %1004 = vector.broadcast %1002 : vector<16x1xf32> to vector<16x256xf32>
    %1005 = arith.mulf %1004, %1003 : vector<16x256xf32>
    %c0_380 = arith.constant 0 : index
    %c0_381 = arith.constant 0 : index
    %1006 = vector.load %arg18[%c0_380, %c0_381] : memref<16x1xf32, #tpu.memory_space<vmem>>, vector<16x1xf32>
    %1007 = arith.addf %1001, %1 : vector<16x256xf32>
    %1008 = vector.broadcast %1006 : vector<16x1xf32> to vector<16x256xf32>
    %1009 = arith.mulf %1008, %1007 : vector<16x256xf32>
    %1010 = arith.addf %1005, %1009 : vector<16x256xf32>
    %cst_382 = arith.constant dense<0.000000e+00> : vector<256xf32>
    %1011 = vector.multi_reduction <add>, %1010, %cst_382 [0] : vector<16x256xf32> to vector<256xf32>
    %1012 = vector.shape_cast %1011 : vector<256xf32> to vector<1x256xf32>
    %1013 = arith.negf %1012 : vector<1x256xf32>
    %1014 = math.exp %1013 : vector<1x256xf32>
    %cst_383 = arith.constant 1.000000e+00 : f32
    %1015 = vector.broadcast %cst_383 : f32 to vector<1x256xf32>
    %1016 = arith.addf %1015, %1014 : vector<1x256xf32>
    %1017 = arith.divf %1015, %1016 : vector<1x256xf32>
    %c0_384 = arith.constant 0 : index
    %c0_385 = arith.constant 0 : index
    %c0_386 = arith.constant 0 : index
    %1018 = vector.load %arg19[%c0_384, %c0_385, %c0_386] : memref<1x1x256xf32, #tpu.memory_space<vmem>>, vector<1x1x256xf32>
    %1019 = vector.shape_cast %1018 : vector<1x1x256xf32> to vector<1x256xf32>
    %1020 = vector.shape_cast %1017 : vector<1x256xf32> to vector<1x1x256xf32>
    tpu.vector_store %arg19[%c0_384, %c0_385, %c0_386], %1020 {strides = array<i32>} : memref<1x1x256xf32, #tpu.memory_space<vmem>>, vector<1x1x256xf32>,
    return
  }
  func.func @transform_0(%arg0: i32) -> (i32, i32, i32) {
    %c0_i32 = arith.constant 0 : i32
    %c0_i32_0 = arith.constant 0 : i32
    %c0_i32_1 = arith.constant 0 : i32
    return %arg0, %c0_i32, %c0_i32_0 : i32, i32, i32
  }
  func.func @transform_1(%arg0: i32) -> (i32, i32) {
    %c0_i32 = arith.constant 0 : i32
    %c0_i32_0 = arith.constant 0 : i32
    %c0_i32_1 = arith.constant 0 : i32
    return %c0_i32, %c0_i32_0 : i32, i32
  }
  func.func @transform_2(%arg0: i32) -> (i32, i32) {
    %c0_i32 = arith.constant 0 : i32
    %c0_i32_0 = arith.constant 0 : i32
    %c0_i32_1 = arith.constant 0 : i32
    return %c0_i32, %c0_i32_0 : i32, i32
  }
  func.func @transform_3(%arg0: i32) -> (i32, i32) {
    %c0_i32 = arith.constant 0 : i32
    %c0_i32_0 = arith.constant 0 : i32
    %c0_i32_1 = arith.constant 0 : i32
    return %c0_i32, %c0_i32_0 : i32, i32
  }
  func.func @transform_4(%arg0: i32) -> (i32, i32) {
    %c0_i32 = arith.constant 0 : i32
    %c0_i32_0 = arith.constant 0 : i32
    %c0_i32_1 = arith.constant 0 : i32
    return %c0_i32, %c0_i32_0 : i32, i32
  }
  func.func @transform_5(%arg0: i32) -> (i32, i32) {
    %c0_i32 = arith.constant 0 : i32
    %c0_i32_0 = arith.constant 0 : i32
    %c0_i32_1 = arith.constant 0 : i32
    return %c0_i32, %c0_i32_0 : i32, i32
  }
  func.func @transform_6(%arg0: i32) -> (i32, i32) {
    %c0_i32 = arith.constant 0 : i32
    %c0_i32_0 = arith.constant 0 : i32
    %c0_i32_1 = arith.constant 0 : i32
    return %c0_i32, %c0_i32_0 : i32, i32
  }
  func.func @transform_7(%arg0: i32) -> (i32, i32) {
    %c0_i32 = arith.constant 0 : i32
    %c0_i32_0 = arith.constant 0 : i32
    %c0_i32_1 = arith.constant 0 : i32
    return %c0_i32, %c0_i32_0 : i32, i32
  }
  func.func @transform_8(%arg0: i32) -> (i32, i32) {
    %c0_i32 = arith.constant 0 : i32
    %c0_i32_0 = arith.constant 0 : i32
    %c0_i32_1 = arith.constant 0 : i32
    return %c0_i32, %c0_i32_0 : i32, i32
  }
  func.func @transform_9(%arg0: i32) -> (i32, i32) {
    %c0_i32 = arith.constant 0 : i32
    %c0_i32_0 = arith.constant 0 : i32
    %c0_i32_1 = arith.constant 0 : i32
    return %c0_i32, %c0_i32_0 : i32, i32
  }
  func.func @transform_10(%arg0: i32) -> (i32, i32) {
    %c0_i32 = arith.constant 0 : i32
    %c0_i32_0 = arith.constant 0 : i32
    %c0_i32_1 = arith.constant 0 : i32
    return %c0_i32, %c0_i32_0 : i32, i32
  }
  func.func @transform_11(%arg0: i32) -> (i32, i32) {
    %c0_i32 = arith.constant 0 : i32
    %c0_i32_0 = arith.constant 0 : i32
    %c0_i32_1 = arith.constant 0 : i32
    return %c0_i32, %c0_i32_0 : i32, i32
  }
  func.func @transform_12(%arg0: i32) -> (i32, i32) {
    %c0_i32 = arith.constant 0 : i32
    %c0_i32_0 = arith.constant 0 : i32
    %c0_i32_1 = arith.constant 0 : i32
    return %c0_i32, %c0_i32_0 : i32, i32
  }
  func.func @transform_13(%arg0: i32) -> (i32, i32) {
    %c0_i32 = arith.constant 0 : i32
    %c0_i32_0 = arith.constant 0 : i32
    %c0_i32_1 = arith.constant 0 : i32
    return %c0_i32, %c0_i32_0 : i32, i32
  }
  func.func @transform_14(%arg0: i32) -> (i32, i32) {
    %c0_i32 = arith.constant 0 : i32
    %c0_i32_0 = arith.constant 0 : i32
    %c0_i32_1 = arith.constant 0 : i32
    return %c0_i32, %c0_i32_0 : i32, i32
  }
  func.func @transform_15(%arg0: i32) -> (i32, i32) {
    %c0_i32 = arith.constant 0 : i32
    %c0_i32_0 = arith.constant 0 : i32
    %c0_i32_1 = arith.constant 0 : i32
    return %c0_i32, %c0_i32_0 : i32, i32
  }
  func.func @transform_16(%arg0: i32) -> (i32, i32) {
    %c0_i32 = arith.constant 0 : i32
    %c0_i32_0 = arith.constant 0 : i32
    %c0_i32_1 = arith.constant 0 : i32
    return %c0_i32, %c0_i32_0 : i32, i32
  }
  func.func @transform_17(%arg0: i32) -> (i32, i32) {
    %c0_i32 = arith.constant 0 : i32
    %c0_i32_0 = arith.constant 0 : i32
    %c0_i32_1 = arith.constant 0 : i32
    return %c0_i32, %c0_i32_0 : i32, i32
  }
  func.func @transform_18(%arg0: i32) -> (i32, i32, i32) {
    %c0_i32 = arith.constant 0 : i32
    %c0_i32_0 = arith.constant 0 : i32
    %c0_i32_1 = arith.constant 0 : i32
    return %arg0, %c0_i32, %c0_i32_0 : i32, i32, i32
  }
}

</mosaic_0001>

<llo_original>
// kernel: ddsm_atternet.1
$region0: #{ddsm_atternet.1}
  #allocation0 [shape = 'u32[]', space=smem, size = 0x4, offset = 0x4, fixed_abs, tag = 'smem constant byte address 0x4 - core index']
  #allocation1 [shape = 'u32[144,128]{1,0:T(1,128)}', space=vmem, size = 0x12000, scoped, tag = 'internal scratch']
  #allocation2 [shape = 'bf16[784,256]{1,0:T(8,128)(2,1)}', space=vmem, size = 0x62000, scoped, tag = 'scratch operand']
  %s0 = inlined_call_operand.vmem [shape: f32[2,16,256], index: 0, kind: input, shape index: {}]
  %s1 = inlined_call_operand.vmem [shape: f32[49,256], index: 1, kind: input, shape index: {}]
  %s2 = inlined_call_operand.vmem [shape: f32[2,16], index: 2, kind: input, shape index: {}]
  %s3 = inlined_call_operand.vmem [shape: f32[2,1], index: 3, kind: input, shape index: {}]
  %s4 = inlined_call_operand.vmem [shape: f32[16,2], index: 4, kind: input, shape index: {}]
  %s5 = inlined_call_operand.vmem [shape: f32[16,1], index: 5, kind: input, shape index: {}]
  %s6 = inlined_call_operand.vmem [shape: bf16[32,144], index: 6, kind: input, shape index: {}]
  %s7 = inlined_call_operand.vmem [shape: f32[32,1], index: 7, kind: input, shape index: {}]
  %s8 = inlined_call_operand.vmem [shape: bf16[16,144], index: 8, kind: input, shape index: {}]
  %s9 = inlined_call_operand.vmem [shape: f32[16,1], index: 9, kind: input, shape index: {}]
  %s10 = inlined_call_operand.vmem [shape: bf16[64,784], index: 10, kind: input, shape index: {}]
  %s11 = inlined_call_operand.vmem [shape: f32[64,1], index: 11, kind: input, shape index: {}]
  %s12 = inlined_call_operand.vmem [shape: bf16[16,400], index: 12, kind: input, shape index: {}]
  %s13 = inlined_call_operand.vmem [shape: f32[16,1], index: 13, kind: input, shape index: {}]
  %s14 = inlined_call_operand.vmem [shape: bf16[16,784], index: 14, kind: input, shape index: {}]
  %s15 = inlined_call_operand.vmem [shape: f32[16,1], index: 15, kind: input, shape index: {}]
  %s16 = inlined_call_operand.vmem [shape: f32[16,1], index: 16, kind: input, shape index: {}]
  %s17 = inlined_call_operand.vmem [shape: f32[16,1], index: 17, kind: input, shape index: {}]
  %s18 = inlined_call_operand.vmem [shape: f32[2,1,256], index: 18, kind: output, shape index: {}]
  %s19 = sld [smem:[#allocation0]]
  $region105: #{ddsm_atternet.1} parent=0
    _
  %s21 = ssub.s32 1, %s19
  %s22 = scalar_select 0, %s21, %s19
  loop: start=0, step=1, limit=4
  $region2: #{ddsm_atternet.1} parent=0 // loop_pre_header
    _
  $region3: #{ddsm_atternet.1} parent=0 // loop_header
    %s24 = sphi 0, %s28
    %p25 = scmp.ge.s32.totalorder %s24, 4
    %s34 = sphi 0, %s36
    %s37 = sphi 0, %s34
    %s38 = sphi 0, %s37
    %s54 = sphi 0, %s38
    %s58 = sphi 0, %s58
    %s60 = sphi 0, %s58
    %s61 = sphi 0, %s60
    %s75 = sphi 0, %s61
    %s79 = sphi 0, %s79
    %s81 = sphi 0, %s79
    %s82 = sphi 0, %s81
    %s96 = sphi 0, %s82
    %s100 = sphi 0, %s100
    %s102 = sphi 0, %s100
    %s103 = sphi 0, %s102
    %s117 = sphi 0, %s103
    %s121 = sphi 0, %s121
    %s123 = sphi 0, %s121
    %s124 = sphi 0, %s123
    %s138 = sphi 0, %s124
    %s142 = sphi 0, %s142
    %s144 = sphi 0, %s142
    %s145 = sphi 0, %s144
    %s159 = sphi 0, %s145
    %s163 = sphi 0, %s163
    %s165 = sphi 0, %s163
    %s166 = sphi 0, %s165
    %s180 = sphi 0, %s166
    %s184 = sphi 0, %s184
    %s186 = sphi 0, %s184
    %s187 = sphi 0, %s186
    %s201 = sphi 0, %s187
    %s205 = sphi 0, %s205
    %s207 = sphi 0, %s205
    %s208 = sphi 0, %s207
    %s222 = sphi 0, %s208
    %s226 = sphi 0, %s226
    %s228 = sphi 0, %s226
    %s229 = sphi 0, %s228
    %s243 = sphi 0, %s229
    %s247 = sphi 0, %s247
    %s249 = sphi 0, %s247
    %s250 = sphi 0, %s249
    %s264 = sphi 0, %s250
    %s268 = sphi 0, %s268
    %s270 = sphi 0, %s268
    %s271 = sphi 0, %s270
    %s285 = sphi 0, %s271
    %s289 = sphi 0, %s289
    %s291 = sphi 0, %s289
    %s292 = sphi 0, %s291
    %s306 = sphi 0, %s292
    %s310 = sphi 0, %s310
    %s312 = sphi 0, %s310
    %s313 = sphi 0, %s312
    %s327 = sphi 0, %s313
    %s331 = sphi 0, %s331
    %s333 = sphi 0, %s331
    %s334 = sphi 0, %s333
    %s348 = sphi 0, %s334
    %s352 = sphi 0, %s352
    %s354 = sphi 0, %s352
    %s355 = sphi 0, %s354
    %s369 = sphi 0, %s355
    %s373 = sphi 0, %s373
    %s375 = sphi 0, %s373
    %s376 = sphi 0, %s375
    %s390 = sphi 0, %s376
    %s394 = sphi 0, %s394
    %s396 = sphi 0, %s394
    %s397 = sphi 0, %s396
    %s411 = sphi 0, %s397
    %s417 = sphi 0, %s419
    %s420 = sphi 0, %s417
    %s421 = sphi 0, %s420
    %s437 = sphi 0, %s421
  $region4: #{ddsm_atternet.1} parent=0 // loop_header_branch
    %27 = sbr.rel (%p25) target = $region8
  $region5: #{ddsm_atternet.1} parent=0 // loop_body
    %s29 = ssub.s32 %s24, 1
    %s30 = ssub.s32 %s24, 2
    %s31 = sadd.s32 %s24, 1
    %s32 = ssub.s32 %s24, %s31
    %p33 = scmp.eq.s32.totalorder %s32, 0
    %s35 = sadd.s32 %s34, 1
    %s36 = scalar_select %p33, %s34, %s35
    %p39 = pneg %p33
    %p40 = scmp.eq.s32.totalorder %s24, 1
    %p41 = por %p39, %p40
    %p42 = scmp.ne.s32.totalorder %s34, %s37
    %p43 = scmp.eq.s32.totalorder %s24, 0
    %p44 = por %p42, %p43
    %p45 = scmp.ne.s32.totalorder %s34, %s37
    %p46 = scmp.eq.s32.totalorder %s29, 1
    %p47 = por %p45, %p46
    %p48 = scmp.ne.s32.totalorder %s37, %s38
    %p49 = scmp.eq.s32.totalorder %s29, 0
    %p50 = por %p48, %p49
    %p51 = scmp.ne.s32.totalorder %s37, %s38
    %p52 = scmp.eq.s32.totalorder %s30, 1
    %p53 = por %p51, %p52
    %p55 = scmp.ne.s32.totalorder %s38, %s54
    %p56 = scmp.eq.s32.totalorder %s30, 0
    %p57 = por %p55, %p56
    %s59 = sadd.s32 %s58, 1
    %p62 = scmp.eq.s32.totalorder %s24, 1
    %p63 = scmp.ne.s32.totalorder %s58, %s60
    %p64 = scmp.eq.s32.totalorder %s24, 0
    %p65 = por %p63, %p64
    %p66 = scmp.ne.s32.totalorder %s58, %s60
    %p67 = scmp.eq.s32.totalorder %s29, 1
    %p68 = por %p66, %p67
    %p69 = scmp.ne.s32.totalorder %s60, %s61
    %p70 = scmp.eq.s32.totalorder %s29, 0
    %p71 = por %p69, %p70
    %p72 = scmp.ne.s32.totalorder %s60, %s61
    %p73 = scmp.eq.s32.totalorder %s30, 1
    %p74 = por %p72, %p73
    %p76 = scmp.ne.s32.totalorder %s61, %s75
    %p77 = scmp.eq.s32.totalorder %s30, 0
    %p78 = por %p76, %p77
    %s80 = sadd.s32 %s79, 1
    %p83 = scmp.eq.s32.totalorder %s24, 1
    %p84 = scmp.ne.s32.totalorder %s79, %s81
    %p85 = scmp.eq.s32.totalorder %s24, 0
    %p86 = por %p84, %p85
    %p87 = scmp.ne.s32.totalorder %s79, %s81
    %p88 = scmp.eq.s32.totalorder %s29, 1
    %p89 = por %p87, %p88
    %p90 = scmp.ne.s32.totalorder %s81, %s82
    %p91 = scmp.eq.s32.totalorder %s29, 0
    %p92 = por %p90, %p91
    %p93 = scmp.ne.s32.totalorder %s81, %s82
    %p94 = scmp.eq.s32.totalorder %s30, 1
    %p95 = por %p93, %p94
    %p97 = scmp.ne.s32.totalorder %s82, %s96
    %p98 = scmp.eq.s32.totalorder %s30, 0
    %p99 = por %p97, %p98
    %s101 = sadd.s32 %s100, 1
    %p104 = scmp.eq.s32.totalorder %s24, 1
    %p105 = scmp.ne.s32.totalorder %s100, %s102
    %p106 = scmp.eq.s32.totalorder %s24, 0
    %p107 = por %p105, %p106
    %p108 = scmp.ne.s32.totalorder %s100, %s102
    %p109 = scmp.eq.s32.totalorder %s29, 1
    %p110 = por %p108, %p109
    %p111 = scmp.ne.s32.totalorder %s102, %s103
    %p112 = scmp.eq.s32.totalorder %s29, 0
    %p113 = por %p111, %p112
    %p114 = scmp.ne.s32.totalorder %s102, %s103
    %p115 = scmp.eq.s32.totalorder %s30, 1
    %p116 = por %p114, %p115
    %p118 = scmp.ne.s32.totalorder %s103, %s117
    %p119 = scmp.eq.s32.totalorder %s30, 0
    %p120 = por %p118, %p119
    %s122 = sadd.s32 %s121, 1
    %p125 = scmp.eq.s32.totalorder %s24, 1
    %p126 = scmp.ne.s32.totalorder %s121, %s123
    %p127 = scmp.eq.s32.totalorder %s24, 0
    %p128 = por %p126, %p127
    %p129 = scmp.ne.s32.totalorder %s121, %s123
    %p130 = scmp.eq.s32.totalorder %s29, 1
    %p131 = por %p129, %p130
    %p132 = scmp.ne.s32.totalorder %s123, %s124
    %p133 = scmp.eq.s32.totalorder %s29, 0
    %p134 = por %p132, %p133
    %p135 = scmp.ne.s32.totalorder %s123, %s124
    %p136 = scmp.eq.s32.totalorder %s30, 1
    %p137 = por %p135, %p136
    %p139 = scmp.ne.s32.totalorder %s124, %s138
    %p140 = scmp.eq.s32.totalorder %s30, 0
    %p141 = por %p139, %p140
    %s143 = sadd.s32 %s142, 1
    %p146 = scmp.eq.s32.totalorder %s24, 1
    %p147 = scmp.ne.s32.totalorder %s142, %s144
    %p148 = scmp.eq.s32.totalorder %s24, 0
    %p149 = por %p147, %p148
    %p150 = scmp.ne.s32.totalorder %s142, %s144
    %p151 = scmp.eq.s32.totalorder %s29, 1
    %p152 = por %p150, %p151
    %p153 = scmp.ne.s32.totalorder %s144, %s145
    %p154 = scmp.eq.s32.totalorder %s29, 0
    %p155 = por %p153, %p154
    %p156 = scmp.ne.s32.totalorder %s144, %s145
    %p157 = scmp.eq.s32.totalorder %s30, 1
    %p158 = por %p156, %p157
    %p160 = scmp.ne.s32.totalorder %s145, %s159
    %p161 = scmp.eq.s32.totalorder %s30, 0
    %p162 = por %p160, %p161
    %s164 = sadd.s32 %s163, 1
    %p167 = scmp.eq.s32.totalorder %s24, 1
    %p168 = scmp.ne.s32.totalorder %s163, %s165
    %p169 = scmp.eq.s32.totalorder %s24, 0
    %p170 = por %p168, %p169
    %p171 = scmp.ne.s32.totalorder %s163, %s165
    %p172 = scmp.eq.s32.totalorder %s29, 1
    %p173 = por %p171, %p172
    %p174 = scmp.ne.s32.totalorder %s165, %s166
    %p175 = scmp.eq.s32.totalorder %s29, 0
    %p176 = por %p174, %p175
    %p177 = scmp.ne.s32.totalorder %s165, %s166
    %p178 = scmp.eq.s32.totalorder %s30, 1
    %p179 = por %p177, %p178
    %p181 = scmp.ne.s32.totalorder %s166, %s180
    %p182 = scmp.eq.s32.totalorder %s30, 0
    %p183 = por %p181, %p182
    %s185 = sadd.s32 %s184, 1
    %p188 = scmp.eq.s32.totalorder %s24, 1
    %p189 = scmp.ne.s32.totalorder %s184, %s186
    %p190 = scmp.eq.s32.totalorder %s24, 0
    %p191 = por %p189, %p190
    %p192 = scmp.ne.s32.totalorder %s184, %s186
    %p193 = scmp.eq.s32.totalorder %s29, 1
    %p194 = por %p192, %p193
    %p195 = scmp.ne.s32.totalorder %s186, %s187
    %p196 = scmp.eq.s32.totalorder %s29, 0
    %p197 = por %p195, %p196
    %p198 = scmp.ne.s32.totalorder %s186, %s187
    %p199 = scmp.eq.s32.totalorder %s30, 1
    %p200 = por %p198, %p199
    %p202 = scmp.ne.s32.totalorder %s187, %s201
    %p203 = scmp.eq.s32.totalorder %s30, 0
    %p204 = por %p202, %p203
    %s206 = sadd.s32 %s205, 1
    %p209 = scmp.eq.s32.totalorder %s24, 1
    %p210 = scmp.ne.s32.totalorder %s205, %s207
    %p211 = scmp.eq.s32.totalorder %s24, 0
    %p212 = por %p210, %p211
    %p213 = scmp.ne.s32.totalorder %s205, %s207
    %p214 = scmp.eq.s32.totalorder %s29, 1
    %p215 = por %p213, %p214
    %p216 = scmp.ne.s32.totalorder %s207, %s208
    %p217 = scmp.eq.s32.totalorder %s29, 0
    %p218 = por %p216, %p217
    %p219 = scmp.ne.s32.totalorder %s207, %s208
    %p220 = scmp.eq.s32.totalorder %s30, 1
    %p221 = por %p219, %p220
    %p223 = scmp.ne.s32.totalorder %s208, %s222
    %p224 = scmp.eq.s32.totalorder %s30, 0
    %p225 = por %p223, %p224
    %s227 = sadd.s32 %s226, 1
    %p230 = scmp.eq.s32.totalorder %s24, 1
    %p231 = scmp.ne.s32.totalorder %s226, %s228
    %p232 = scmp.eq.s32.totalorder %s24, 0
    %p233 = por %p231, %p232
    %p234 = scmp.ne.s32.totalorder %s226, %s228
    %p235 = scmp.eq.s32.totalorder %s29, 1
    %p236 = por %p234, %p235
    %p237 = scmp.ne.s32.totalorder %s228, %s229
    %p238 = scmp.eq.s32.totalorder %s29, 0
    %p239 = por %p237, %p238
    %p240 = scmp.ne.s32.totalorder %s228, %s229
    %p241 = scmp.eq.s32.totalorder %s30, 1
    %p242 = por %p240, %p241
    %p244 = scmp.ne.s32.totalorder %s229, %s243
    %p245 = scmp.eq.s32.totalorder %s30, 0
    %p246 = por %p244, %p245
    %s248 = sadd.s32 %s247, 1
    %p251 = scmp.eq.s32.totalorder %s24, 1
    %p252 = scmp.ne.s32.totalorder %s247, %s249
    %p253 = scmp.eq.s32.totalorder %s24, 0
    %p254 = por %p252, %p253
    %p255 = scmp.ne.s32.totalorder %s247, %s249
    %p256 = scmp.eq.s32.totalorder %s29, 1
    %p257 = por %p255, %p256
    %p258 = scmp.ne.s32.totalorder %s249, %s250
    %p259 = scmp.eq.s32.totalorder %s29, 0
    %p260 = por %p258, %p259
    %p261 = scmp.ne.s32.totalorder %s249, %s250
    %p262 = scmp.eq.s32.totalorder %s30, 1
    %p263 = por %p261, %p262
    %p265 = scmp.ne.s32.totalorder %s250, %s264
    %p266 = scmp.eq.s32.totalorder %s30, 0
    %p267 = por %p265, %p266
    %s269 = sadd.s32 %s268, 1
    %p272 = scmp.eq.s32.totalorder %s24, 1
    %p273 = scmp.ne.s32.totalorder %s268, %s270
    %p274 = scmp.eq.s32.totalorder %s24, 0
    %p275 = por %p273, %p274
    %p276 = scmp.ne.s32.totalorder %s268, %s270
    %p277 = scmp.eq.s32.totalorder %s29, 1
    %p278 = por %p276, %p277
    %p279 = scmp.ne.s32.totalorder %s270, %s271
    %p280 = scmp.eq.s32.totalorder %s29, 0
    %p281 = por %p279, %p280
    %p282 = scmp.ne.s32.totalorder %s270, %s271
    %p283 = scmp.eq.s32.totalorder %s30, 1
    %p284 = por %p282, %p283
    %p286 = scmp.ne.s32.totalorder %s271, %s285
    %p287 = scmp.eq.s32.totalorder %s30, 0
    %p288 = por %p286, %p287
    %s290 = sadd.s32 %s289, 1
    %p293 = scmp.eq.s32.totalorder %s24, 1
    %p294 = scmp.ne.s32.totalorder %s289, %s291
    %p295 = scmp.eq.s32.totalorder %s24, 0
    %p296 = por %p294, %p295
    %p297 = scmp.ne.s32.totalorder %s289, %s291
    %p298 = scmp.eq.s32.totalorder %s29, 1
    %p299 = por %p297, %p298
    %p300 = scmp.ne.s32.totalorder %s291, %s292
    %p301 = scmp.eq.s32.totalorder %s29, 0
    %p302 = por %p300, %p301
    %p303 = scmp.ne.s32.totalorder %s291, %s292
    %p304 = scmp.eq.s32.totalorder %s30, 1
    %p305 = por %p303, %p304
    %p307 = scmp.ne.s32.totalorder %s292, %s306
    %p308 = scmp.eq.s32.totalorder %s30, 0
    %p309 = por %p307, %p308
    %s311 = sadd.s32 %s310, 1
    %p314 = scmp.eq.s32.totalorder %s24, 1
    %p315 = scmp.ne.s32.totalorder %s310, %s312
    %p316 = scmp.eq.s32.totalorder %s24, 0
    %p317 = por %p315, %p316
    %p318 = scmp.ne.s32.totalorder %s310, %s312
    %p319 = scmp.eq.s32.totalorder %s29, 1
    %p320 = por %p318, %p319
    %p321 = scmp.ne.s32.totalorder %s312, %s313
    %p322 = scmp.eq.s32.totalorder %s29, 0
    %p323 = por %p321, %p322
    %p324 = scmp.ne.s32.totalorder %s312, %s313
    %p325 = scmp.eq.s32.totalorder %s30, 1
    %p326 = por %p324, %p325
    %p328 = scmp.ne.s32.totalorder %s313, %s327
    %p329 = scmp.eq.s32.totalorder %s30, 0
    %p330 = por %p328, %p329
    %s332 = sadd.s32 %s331, 1
    %p335 = scmp.eq.s32.totalorder %s24, 1
    %p336 = scmp.ne.s32.totalorder %s331, %s333
    %p337 = scmp.eq.s32.totalorder %s24, 0
    %p338 = por %p336, %p337
    %p339 = scmp.ne.s32.totalorder %s331, %s333
    %p340 = scmp.eq.s32.totalorder %s29, 1
    %p341 = por %p339, %p340
    %p342 = scmp.ne.s32.totalorder %s333, %s334
    %p343 = scmp.eq.s32.totalorder %s29, 0
    %p344 = por %p342, %p343
    %p345 = scmp.ne.s32.totalorder %s333, %s334
    %p346 = scmp.eq.s32.totalorder %s30, 1
    %p347 = por %p345, %p346
    %p349 = scmp.ne.s32.totalorder %s334, %s348
    %p350 = scmp.eq.s32.totalorder %s30, 0
    %p351 = por %p349, %p350
    %s353 = sadd.s32 %s352, 1
    %p356 = scmp.eq.s32.totalorder %s24, 1
    %p357 = scmp.ne.s32.totalorder %s352, %s354
    %p358 = scmp.eq.s32.totalorder %s24, 0
    %p359 = por %p357, %p358
    %p360 = scmp.ne.s32.totalorder %s352, %s354
    %p361 = scmp.eq.s32.totalorder %s29, 1
    %p362 = por %p360, %p361
    %p363 = scmp.ne.s32.totalorder %s354, %s355
    %p364 = scmp.eq.s32.totalorder %s29, 0
    %p365 = por %p363, %p364
    %p366 = scmp.ne.s32.totalorder %s354, %s355
    %p367 = scmp.eq.s32.totalorder %s30, 1
    %p368 = por %p366, %p367
    %p370 = scmp.ne.s32.totalorder %s355, %s369
    %p371 = scmp.eq.s32.totalorder %s30, 0
    %p372 = por %p370, %p371
    %s374 = sadd.s32 %s373, 1
    %p377 = scmp.eq.s32.totalorder %s24, 1
    %p378 = scmp.ne.s32.totalorder %s373, %s375
    %p379 = scmp.eq.s32.totalorder %s24, 0
    %p380 = por %p378, %p379
    %p381 = scmp.ne.s32.totalorder %s373, %s375
    %p382 = scmp.eq.s32.totalorder %s29, 1
    %p383 = por %p381, %p382
    %p384 = scmp.ne.s32.totalorder %s375, %s376
    %p385 = scmp.eq.s32.totalorder %s29, 0
    %p386 = por %p384, %p385
    %p387 = scmp.ne.s32.totalorder %s375, %s376
    %p388 = scmp.eq.s32.totalorder %s30, 1
    %p389 = por %p387, %p388
    %p391 = scmp.ne.s32.totalorder %s376, %s390
    %p392 = scmp.eq.s32.totalorder %s30, 0
    %p393 = por %p391, %p392
    %s395 = sadd.s32 %s394, 1
    %p398 = scmp.eq.s32.totalorder %s24, 1
    %p399 = scmp.ne.s32.totalorder %s394, %s396
    %p400 = scmp.eq.s32.totalorder %s24, 0
    %p401 = por %p399, %p400
    %p402 = scmp.ne.s32.totalorder %s394, %s396
    %p403 = scmp.eq.s32.totalorder %s29, 1
    %p404 = por %p402, %p403
    %p405 = scmp.ne.s32.totalorder %s396, %s397
    %p406 = scmp.eq.s32.totalorder %s29, 0
    %p407 = por %p405, %p406
    %p408 = scmp.ne.s32.totalorder %s396, %s397
    %p409 = scmp.eq.s32.totalorder %s30, 1
    %p410 = por %p408, %p409
    %p412 = scmp.ne.s32.totalorder %s397, %s411
    %p413 = scmp.eq.s32.totalorder %s30, 0
    %p414 = por %p412, %p413
    %s415 = ssub.s32 %s24, %s31
    %p416 = scmp.eq.s32.totalorder %s415, 0
    %s418 = sadd.s32 %s417, 1
    %s419 = scalar_select %p416, %s417, %s418
    %p422 = pneg %p416
    %p423 = scmp.eq.s32.totalorder %s24, 1
    %p424 = por %p422, %p423
    %p425 = scmp.ne.s32.totalorder %s417, %s420
    %p426 = scmp.eq.s32.totalorder %s24, 0
    %p427 = por %p425, %p426
    %p428 = scmp.ne.s32.totalorder %s417, %s420
    %p429 = scmp.eq.s32.totalorder %s29, 1
    %p430 = por %p428, %p429
    %p431 = scmp.ne.s32.totalorder %s420, %s421
    %p432 = scmp.eq.s32.totalorder %s29, 0
    %p433 = por %p431, %p432
    %p434 = scmp.ne.s32.totalorder %s420, %s421
    %p435 = scmp.eq.s32.totalorder %s30, 1
    %p436 = por %p434, %p435
    %p438 = scmp.ne.s32.totalorder %s421, %s437
    %p439 = scmp.eq.s32.totalorder %s30, 0
    %p440 = por %p438, %p439
    %p441 = scmp.le.s32.totalorder 1, %s24
    %p442 = scmp.lt.s32.totalorder %s24, 3
    %p443 = pnand %p441, %p442
    %p444 = pneg %p443
    // Predicated region
    $region9: #{ddsm_atternet.1} parent=5 // pred_check
      _
    $region10: #{ddsm_atternet.1} parent=5 // pred_check_branch
      %446 = sbr.rel (%p443) target = $region12
    $region11: #{ddsm_atternet.1} parent=5 // pred_region
      %s447 = ssub.s32 %s24, 1
      // Predicated region
      $region13: #{ddsm_atternet.1} parent=11 // pred_check
        %p448 = pneg %p71
      $region14: #{ddsm_atternet.1} parent=11 // pred_check_branch
        %450 = sbr.rel (%p448) target = $region16
      $region15: #{ddsm_atternet.1} parent=11 // pred_region
        _
      $region16: #{ddsm_atternet.1} parent=11 // pred_fallthru
        _
      // Predicated region
      $region17: #{ddsm_atternet.1} parent=11 // pred_check
        %p451 = pneg %p92
      $region18: #{ddsm_atternet.1} parent=11 // pred_check_branch
        %453 = sbr.rel (%p451) target = $region20
      $region19: #{ddsm_atternet.1} parent=11 // pred_region
        _
      $region20: #{ddsm_atternet.1} parent=11 // pred_fallthru
        _
      // Predicated region
      $region21: #{ddsm_atternet.1} parent=11 // pred_check
        %p454 = pneg %p113
      $region22: #{ddsm_atternet.1} parent=11 // pred_check_branch
        %456 = sbr.rel (%p454) target = $region24
      $region23: #{ddsm_atternet.1} parent=11 // pred_region
        _
      $region24: #{ddsm_atternet.1} parent=11 // pred_fallthru
        _
      // Predicated region
      $region25: #{ddsm_atternet.1} parent=11 // pred_check
        %p457 = pneg %p134
      $region26: #{ddsm_atternet.1} parent=11 // pred_check_branch
        %459 = sbr.rel (%p457) target = $region28
      $region27: #{ddsm_atternet.1} parent=11 // pred_region
        _
      $region28: #{ddsm_atternet.1} parent=11 // pred_fallthru
        _
      // Predicated region
      $region29: #{ddsm_atternet.1} parent=11 // pred_check
        %p460 = pneg %p155
      $region30: #{ddsm_atternet.1} parent=11 // pred_check_branch
        %462 = sbr.rel (%p460) target = $region32
      $region31: #{ddsm_atternet.1} parent=11 // pred_region
        _
      $region32: #{ddsm_atternet.1} parent=11 // pred_fallthru
        _
      // Predicated region
      $region33: #{ddsm_atternet.1} parent=11 // pred_check
        %p463 = pneg %p176
      $region34: #{ddsm_atternet.1} parent=11 // pred_check_branch
        %465 = sbr.rel (%p463) target = $region36
      $region35: #{ddsm_atternet.1} parent=11 // pred_region
        _
      $region36: #{ddsm_atternet.1} parent=11 // pred_fallthru
        _
      // Predicated region
      $region37: #{ddsm_atternet.1} parent=11 // pred_check
        %p466 = pneg %p197
      $region38: #{ddsm_atternet.1} parent=11 // pred_check_branch
        %468 = sbr.rel (%p466) target = $region40
      $region39: #{ddsm_atternet.1} parent=11 // pred_region
        _
      $region40: #{ddsm_atternet.1} parent=11 // pred_fallthru
        _
      // Predicated region
      $region41: #{ddsm_atternet.1} parent=11 // pred_check
        %p469 = pneg %p218
      $region42: #{ddsm_atternet.1} parent=11 // pred_check_branch
        %471 = sbr.rel (%p469) target = $region44
      $region43: #{ddsm_atternet.1} parent=11 // pred_region
        _
      $region44: #{ddsm_atternet.1} parent=11 // pred_fallthru
        _
      // Predicated region
      $region45: #{ddsm_atternet.1} parent=11 // pred_check
        %p472 = pneg %p239
      $region46: #{ddsm_atternet.1} parent=11 // pred_check_branch
        %474 = sbr.rel (%p472) target = $region48
      $region47: #{ddsm_atternet.1} parent=11 // pred_region
        _
      $region48: #{ddsm_atternet.1} parent=11 // pred_fallthru
        _
      // Predicated region
      $region49: #{ddsm_atternet.1} parent=11 // pred_check
        %p475 = pneg %p260
      $region50: #{ddsm_atternet.1} parent=11 // pred_check_branch
        %477 = sbr.rel (%p475) target = $region52
      $region51: #{ddsm_atternet.1} parent=11 // pred_region
        _
      $region52: #{ddsm_atternet.1} parent=11 // pred_fallthru
        _
      // Predicated region
      $region53: #{ddsm_atternet.1} parent=11 // pred_check
        %p478 = pneg %p281
      $region54: #{ddsm_atternet.1} parent=11 // pred_check_branch
        %480 = sbr.rel (%p478) target = $region56
      $region55: #{ddsm_atternet.1} parent=11 // pred_region
        _
      $region56: #{ddsm_atternet.1} parent=11 // pred_fallthru
        _
      // Predicated region
      $region57: #{ddsm_atternet.1} parent=11 // pred_check
        %p481 = pneg %p302
      $region58: #{ddsm_atternet.1} parent=11 // pred_check_branch
        %483 = sbr.rel (%p481) target = $region60
      $region59: #{ddsm_atternet.1} parent=11 // pred_region
        _
      $region60: #{ddsm_atternet.1} parent=11 // pred_fallthru
        _
      // Predicated region
      $region61: #{ddsm_atternet.1} parent=11 // pred_check
        %p484 = pneg %p323
      $region62: #{ddsm_atternet.1} parent=11 // pred_check_branch
        %486 = sbr.rel (%p484) target = $region64
      $region63: #{ddsm_atternet.1} parent=11 // pred_region
        _
      $region64: #{ddsm_atternet.1} parent=11 // pred_fallthru
        _
      // Predicated region
      $region65: #{ddsm_atternet.1} parent=11 // pred_check
        %p487 = pneg %p344
      $region66: #{ddsm_atternet.1} parent=11 // pred_check_branch
        %489 = sbr.rel (%p487) target = $region68
      $region67: #{ddsm_atternet.1} parent=11 // pred_region
        _
      $region68: #{ddsm_atternet.1} parent=11 // pred_fallthru
        _
      // Predicated region
      $region69: #{ddsm_atternet.1} parent=11 // pred_check
        %p490 = pneg %p365
      $region70: #{ddsm_atternet.1} parent=11 // pred_check_branch
        %492 = sbr.rel (%p490) target = $region72
      $region71: #{ddsm_atternet.1} parent=11 // pred_region
        _
      $region72: #{ddsm_atternet.1} parent=11 // pred_fallthru
        _
      // Predicated region
      $region73: #{ddsm_atternet.1} parent=11 // pred_check
        %p493 = pneg %p386
      $region74: #{ddsm_atternet.1} parent=11 // pred_check_branch
        %495 = sbr.rel (%p493) target = $region76
      $region75: #{ddsm_atternet.1} parent=11 // pred_region
        _
      $region76: #{ddsm_atternet.1} parent=11 // pred_fallthru
        _
      // Predicated region
      $region77: #{ddsm_atternet.1} parent=11 // pred_check
        %p496 = pneg %p407
      $region78: #{ddsm_atternet.1} parent=11 // pred_check_branch
        %498 = sbr.rel (%p496) target = $region80
      $region79: #{ddsm_atternet.1} parent=11 // pred_region
        _
      $region80: #{ddsm_atternet.1} parent=11 // pred_fallthru
        _
    $region12: #{ddsm_atternet.1} parent=5 // pred_fallthru
      _
    %p499 = scmp.lt.s32.totalorder %s24, 2
    // Predicated region
    $region81: #{ddsm_atternet.1} parent=5 // pred_check
      %p500 = pneg %p499
    $region82: #{ddsm_atternet.1} parent=5 // pred_check_branch
      %502 = sbr.rel (%p500) target = $region84
    $region83: #{ddsm_atternet.1} parent=5 // pred_region
      // Predicated region
      $region85: #{ddsm_atternet.1} parent=83 // pred_check
        %p503 = pneg %p44
      $region86: #{ddsm_atternet.1} parent=83 // pred_check_branch
        %505 = sbr.rel (%p503) target = $region88
      $region87: #{ddsm_atternet.1} parent=83 // pred_region
        %p506 = scmp.lt.s32.totalorder %s24, 1
        %s507 = scalar_select %p506, %s24, 1
        %s508 = smul.addr %s507, 4
        %s509 = smul.addr %s508, 8
        %s510 = scalar_lea.vmem %s0, %s509
      $region88: #{ddsm_atternet.1} parent=83 // pred_fallthru
        _
    $region84: #{ddsm_atternet.1} parent=5 // pred_fallthru
      _
    %p511 = scmp.le.s32.totalorder 1, %s24
    %p512 = scmp.lt.s32.totalorder %s24, 3
    %p513 = pnand %p511, %p512
    %p514 = pneg %p513
    // Predicated region
    $region89: #{ddsm_atternet.1} parent=5 // pred_check
      _
    $region90: #{ddsm_atternet.1} parent=5 // pred_check_branch
      %516 = sbr.rel (%p513) target = $region92
    $region91: #{ddsm_atternet.1} parent=5 // pred_region
      %s517 = ssub.s32 %s24, 1
      %p518 = scmp.lt.s32.totalorder %s29, 1
      %s519 = scalar_select %p518, %s29, 1
      %s520 = smul.addr %s519, 4
      %s521 = smul.addr %s520, 8
      %s522 = scalar_lea.vmem %s0, %s521
      %p523 = pneg %p50
      %p524 = pneg %p47
      %p525 = pneg %p71
      %p526 = pneg %p68
      %p527 = pneg %p92
      %p528 = pneg %p89
      %p529 = pneg %p113
      %p530 = pneg %p110
      %p531 = pneg %p134
      %p532 = pneg %p131
      %p533 = pneg %p155
      %p534 = pneg %p152
      %p535 = pneg %p176
      %p536 = pneg %p173
      %p537 = pneg %p197
      %p538 = pneg %p194
      %p539 = pneg %p218
      %p540 = pneg %p215
      %p541 = pneg %p239
      %p542 = pneg %p236
      %p543 = pneg %p260
      %p544 = pneg %p257
      %p545 = pneg %p281
      %p546 = pneg %p278
      %p547 = pneg %p302
      %p548 = pneg %p299
      %p549 = pneg %p323
      %p550 = pneg %p320
      %p551 = pneg %p344
      %p552 = pneg %p341
      %p553 = pneg %p365
      %p554 = pneg %p362
      %p555 = pneg %p386
      %p556 = pneg %p383
      %p557 = pneg %p407
      %p558 = pneg %p404
      %p559 = pneg %p433
      %p560 = pneg %p430
      %p561 = scmp.lt.s32.totalorder %s29, 1
      %s562 = scalar_select %p561, %s29, 1
      %s563 = smul.addr %s562, 2
      %s564 = scalar_lea.vmem %s18, %s563
      %p565 = scmp.lt.s32.totalorder %s29, 1
      %s566 = scalar_select %p565, %s29, 1
      %s567 = smul.addr %s566, 4
      %s568 = smul.addr %s567, 8
      %s569 = scalar_lea.vmem %s0, %s568
      %p570 = scmp.lt.s32.totalorder %s29, 1
      %s571 = scalar_select %p570, %s29, 1
      %s572 = smul.addr %s571, 2
      %s573 = scalar_lea.vmem %s18, %s572
      %v575 = vld [vmem:[%s569] sm:$0xff]
      %v576 = vld [vmem:[%s569 + $0x8] sm:$0xff]
      %v577 = vld [vmem:[%s569 + $0x10] sm:$0xff]
      %v578 = vld [vmem:[%s569 + $0x18] sm:$0xff]
      %v579 = vld [vmem:[%s1] sm:$0xff]
      %v580 = vld [vmem:[%s1 + $0x8] sm:$0xff]
      %v581 = vld [vmem:[%s1 + $0x10] sm:$0xff]
      %v582 = vld [vmem:[%s1 + $0x18] sm:$0xff]
      %v583 = vld [vmem:[%s1 + $0x20] sm:$0xff]
      %v584 = vld [vmem:[%s1 + $0x28] sm:$0xff]
      %v585 = vld [vmem:[%s1 + $0x30] sm:$0xff]
      %v586 = vld [vmem:[%s1 + $0x38] sm:$0xff]
      %v587 = vld [vmem:[%s1 + $0x40] sm:$0xff]
      %v588 = vld [vmem:[%s1 + $0x48] sm:$0xff]
      %v589 = vld [vmem:[%s1 + $0x50] sm:$0xff]
      %v590 = vld [vmem:[%s1 + $0x58] sm:$0xff]
      %v591 = vld [vmem:[%s1 + $0x60] sm:$0x1]
      %v592 = vld [vmem:[%s1 + $0x68] sm:$0x1]
      %v593 = vadd.f32 %v575, %v576
      %594 = vadd.xlane.f32.xlu0 %v593
      %v595 = vpop.xlane.xlu0 %594
      %v596 = vadd.f32 %v577, %v578
      %597 = vadd.xlane.f32.xlu0 %v596
      %v598 = vpop.xlane.xlu0 %597
      %v599 = vrcp.pop 256.0
      %v600 = vmul.f32 %v595, %v599
      %v601 = vmul.f32 %v598, %v599
      %v602 = vld [vmem:[%s2] sm:$0x3]
      %v603 = vld [vmem:[%s3] sm:$0x3]
      %v604 = vlaneseq
      %v605 = vshrl.u32 %v604, 7
      %v606 = vsub.s32 0, %v605
      %v607 = vrot.slane %v600, %v606
      %v608 = vmul.f32 %v602, %v607
      %v609 = vadd.f32 %v603, %v608
      %v610 = vlaneseq
      %v611 = vshrl.u32 %v610, 7
      %v612 = vsub.s32 1, %v611
      %v613 = vrot.slane %v600, %v612
      %v614 = vmul.f32 %v602, %v613
      %616 = vrot.lane.b32.xlu0 %v614, 127
      %v617 = vpop.permute.xlu0 %616
      %v619 = vadd.f32 %v609, %v617
      %v620 = vlaneseq
      %v621 = vshrl.u32 %v620, 7
      %v622 = vsub.s32 2, %v621
      %v623 = vrot.slane %v600, %v622
      %v624 = vmul.f32 %v602, %v623
      %626 = vrot.lane.b32.xlu0 %v624, 126
      %v627 = vpop.permute.xlu0 %626
      %v629 = vadd.f32 %v619, %v627
      %v630 = vlaneseq
      %v631 = vshrl.u32 %v630, 7
      %v632 = vsub.s32 3, %v631
      %v633 = vrot.slane %v600, %v632
      %v634 = vmul.f32 %v602, %v633
      %636 = vrot.lane.b32.xlu0 %v634, 125
      %v637 = vpop.permute.xlu0 %636
      %v639 = vadd.f32 %v629, %v637
      %v640 = vlaneseq
      %v641 = vshrl.u32 %v640, 7
      %v642 = vsub.s32 4, %v641
      %v643 = vrot.slane %v600, %v642
      %v644 = vmul.f32 %v602, %v643
      %646 = vrot.lane.b32.xlu0 %v644, 124
      %v647 = vpop.permute.xlu0 %646
      %v649 = vadd.f32 %v639, %v647
      %v650 = vlaneseq
      %v651 = vshrl.u32 %v650, 7
      %v652 = vsub.s32 5, %v651
      %v653 = vrot.slane %v600, %v652
      %v654 = vmul.f32 %v602, %v653
      %656 = vrot.lane.b32.xlu0 %v654, 123
      %v657 = vpop.permute.xlu0 %656
      %v659 = vadd.f32 %v649, %v657
      %v660 = vlaneseq
      %v661 = vshrl.u32 %v660, 7
      %v662 = vsub.s32 6, %v661
      %v663 = vrot.slane %v600, %v662
      %v664 = vmul.f32 %v602, %v663
      %666 = vrot.lane.b32.xlu0 %v664, 122
      %v667 = vpop.permute.xlu0 %666
      %v669 = vadd.f32 %v659, %v667
      %v670 = vlaneseq
      %v671 = vshrl.u32 %v670, 7
      %v672 = vsub.s32 7, %v671
      %v673 = vrot.slane %v600, %v672
      %v674 = vmul.f32 %v602, %v673
      %676 = vrot.lane.b32.xlu0 %v674, 121
      %v677 = vpop.permute.xlu0 %676
      %v679 = vadd.f32 %v669, %v677
      %v680 = vlaneseq
      %v681 = vshrl.u32 %v680, 7
      %v682 = vsub.s32 0, %v681
      %v683 = vrot.slane %v601, %v682
      %v684 = vmul.f32 %v602, %v683
      %686 = vrot.lane.b32.xlu0 %v684, 120
      %v687 = vpop.permute.xlu0 %686
      %v689 = vadd.f32 %v679, %v687
      %v690 = vlaneseq
      %v691 = vshrl.u32 %v690, 7
      %v692 = vsub.s32 1, %v691
      %v693 = vrot.slane %v601, %v692
      %v694 = vmul.f32 %v602, %v693
      %696 = vrot.lane.b32.xlu0 %v694, 119
      %v697 = vpop.permute.xlu0 %696
      %v699 = vadd.f32 %v689, %v697
      %v700 = vlaneseq
      %v701 = vshrl.u32 %v700, 7
      %v702 = vsub.s32 2, %v701
      %v703 = vrot.slane %v601, %v702
      %v704 = vmul.f32 %v602, %v703
      %706 = vrot.lane.b32.xlu0 %v704, 118
      %v707 = vpop.permute.xlu0 %706
      %v709 = vadd.f32 %v699, %v707
      %v710 = vlaneseq
      %v711 = vshrl.u32 %v710, 7
      %v712 = vsub.s32 3, %v711
      %v713 = vrot.slane %v601, %v712
      %v714 = vmul.f32 %v602, %v713
      %716 = vrot.lane.b32.xlu0 %v714, 117
      %v717 = vpop.permute.xlu0 %716
      %v719 = vadd.f32 %v709, %v717
      %v720 = vlaneseq
      %v721 = vshrl.u32 %v720, 7
      %v722 = vsub.s32 4, %v721
      %v723 = vrot.slane %v601, %v722
      %v724 = vmul.f32 %v602, %v723
      %726 = vrot.lane.b32.xlu0 %v724, 116
      %v727 = vpop.permute.xlu0 %726
      %v729 = vadd.f32 %v719, %v727
      %v730 = vlaneseq
      %v731 = vshrl.u32 %v730, 7
      %v732 = vsub.s32 5, %v731
      %v733 = vrot.slane %v601, %v732
      %v734 = vmul.f32 %v602, %v733
      %736 = vrot.lane.b32.xlu0 %v734, 115
      %v737 = vpop.permute.xlu0 %736
      %v739 = vadd.f32 %v729, %v737
      %v740 = vlaneseq
      %v741 = vshrl.u32 %v740, 7
      %v742 = vsub.s32 6, %v741
      %v743 = vrot.slane %v601, %v742
      %v744 = vmul.f32 %v602, %v743
      %746 = vrot.lane.b32.xlu0 %v744, 114
      %v747 = vpop.permute.xlu0 %746
      %v749 = vadd.f32 %v739, %v747
      %v750 = vlaneseq
      %v751 = vshrl.u32 %v750, 7
      %v752 = vsub.s32 7, %v751
      %v753 = vrot.slane %v601, %v752
      %v754 = vmul.f32 %v602, %v753
      %756 = vrot.lane.b32.xlu0 %v754, 113
      %v757 = vpop.permute.xlu0 %756
      %v759 = vadd.f32 %v749, %v757
      %v760 = vmax.f32 %v759, 0.0
      %v761 = vld [vmem:[%s4] sm:$0xff]
      %v762 = vld [vmem:[%s4 + $0x8] sm:$0xff]
      %v763 = vld [vmem:[%s5] sm:$0xff]
      %v764 = vld [vmem:[%s5 + $0x8] sm:$0xff]
      %v765 = vlaneseq
      %v766 = vshrl.u32 %v765, 7
      %v767 = vsub.s32 0, %v766
      %v768 = vrot.slane %v760, %v767
      %v769 = vmul.f32 %v761, %v768
      %v770 = vmul.f32 %v762, %v768
      %v771 = vadd.f32 %v763, %v769
      %v772 = vadd.f32 %v764, %v770
      %v773 = vlaneseq
      %v774 = vshrl.u32 %v773, 7
      %v775 = vsub.s32 1, %v774
      %v776 = vrot.slane %v760, %v775
      %778 = vrot.lane.b32.xlu0 %v776, 1
      %v779 = vpop.permute.xlu0 %778
      %v781 = vmul.f32 %v761, %v779
      %v782 = vmul.f32 %v762, %v779
      %785 = vrot.lane.b32.xlu0 %v781, 127
      %v786 = vpop.permute.xlu0 %785
      %787 = vrot.lane.b32.xlu0 %v782, 127
      %v788 = vpop.permute.xlu0 %787
      %v791 = vadd.f32 %v771, %v786
      %v792 = vadd.f32 %v772, %v788
      %v793 = vxor.u32 %v791, 2147483648
      %v794 = vxor.u32 %v792, 2147483648
      %v795 = vmul.f32 %v793, 1.442695
      %v796 = vpow.pop %v795
      %v797 = vmul.f32 %v794, 1.442695
      %v798 = vpow.pop %v797
      %v799 = vadd.f32 %v796, 1.0
      %v800 = vadd.f32 %v798, 1.0
      %v801 = vrcp.pop %v799
      %v802 = vmul.f32 1.0, %v801
      %v803 = vrcp.pop %v800
      %v804 = vmul.f32 1.0, %v803
      %806 = vset.pattern.permute.xlu0 0
      %807 = vperm.xlu0 %806, %v802
      %v808 = vpop.permute.xlu0 %807
      %811 = vset.pattern.permute.xlu0 0
      %812 = vperm.xlu0 %811, %v804
      %v813 = vpop.permute.xlu0 %812
      %v815 = vmul.f32 %v575, %v808
      %v816 = vmul.f32 %v576, %v808
      %v817 = vmul.f32 %v577, %v813
      %v818 = vmul.f32 %v578, %v813
      %819 = vrot.lane.b32.xlu0 %v815, 17
      %v820 = vpop.permute.xlu0 %819
      %821 = vrot.lane.b32.xlu0 %v817, 17
      %v822 = vpop.permute.xlu0 %821
      %823 = vrot.lane.b32.xlu0 %v816, 17
      %v824 = vpop.permute.xlu0 %823
      %825 = vrot.lane.b32.xlu0 %v818, 17
      %v826 = vpop.permute.xlu0 %825
      %v827 = vlaneseq
      %v828 = vand.u32 %v827, 127
      %vm829 = vcmp.lt.s32.totalorder %v828, 17
      %v830 = vsel %vm829, %v820, %v824
      %v831 = vsel %vm829, %v822, %v826
      %v832 = vsel %vm829, %v824, %v820
      %v833 = vsel %vm829, %v826, %v822
      %v834 = vlaneseq
      %v835 = vshrl.u32 %v834, 7
      %v836 = vsub.s32 0, %v835
      %v837 = vrot.slane %v583, %v836
      %v838 = vlaneseq
      %v839 = vshrl.u32 %v838, 7
      %v840 = vsub.s32 0, %v839
      %v841 = vrot.slane %v584, %v840
      %v842 = vmul.f32 %v832, %v837
      %v843 = vmul.f32 %v830, %v841
      %v844 = vmul.f32 %v833, %v837
      %v845 = vmul.f32 %v831, %v841
      %v846 = vpack.c.bf16 %v844, %v842
      %v847 = vpack.c.bf16 %v845, %v843
      %v850 = vunpack.c.l.b16 %v846
      %v851 = vunpack.c.l.b16 %v847
      %v852 = vunpack.c.h.b16 %v846
      %v853 = vunpack.c.h.b16 %v847
      %v854 = vpack.c.b16 %v851, %v850
      %v855 = vpack.c.b16 %v853, %v852
      %858 = vst [vmem:[#allocation2] sm:$0xff] %v854
      %859 = vst [vmem:[#allocation2 + $0x8] sm:$0xff] %v855
      %860 = vrot.lane.b32.xlu0 %v815, 16
      %v861 = vpop.permute.xlu0 %860
      %862 = vrot.lane.b32.xlu0 %v817, 16
      %v863 = vpop.permute.xlu0 %862
      %864 = vrot.lane.b32.xlu0 %v816, 16
      %v865 = vpop.permute.xlu0 %864
      %866 = vrot.lane.b32.xlu0 %v818, 16
      %v867 = vpop.permute.xlu0 %866
      %vm868 = vcmp.lt.s32.totalorder %v828, 16
      %v869 = vsel %vm868, %v861, %v865
      %v870 = vsel %vm868, %v863, %v867
      %v871 = vsel %vm868, %v865, %v861
      %v872 = vsel %vm868, %v867, %v863
      %v873 = vlaneseq
      %v874 = vshrl.u32 %v873, 7
      %v875 = vsub.s32 1, %v874
      %v876 = vrot.slane %v583, %v875
      %v877 = vlaneseq
      %v878 = vshrl.u32 %v877, 7
      %v879 = vsub.s32 1, %v878
      %v880 = vrot.slane %v584, %v879
      %v881 = vmul.f32 %v871, %v876
      %v882 = vmul.f32 %v869, %v880
      %v883 = vmul.f32 %v872, %v876
      %v884 = vmul.f32 %v870, %v880
      %v885 = vpack.c.bf16 %v883, %v881
      %v886 = vpack.c.bf16 %v884, %v882
      %v889 = vunpack.c.l.b16 %v885
      %v890 = vunpack.c.l.b16 %v886
      %v891 = vunpack.c.h.b16 %v885
      %v892 = vunpack.c.h.b16 %v886
      %v893 = vpack.c.b16 %v890, %v889
      %v894 = vpack.c.b16 %v892, %v891
      %897 = vst [vmem:[#allocation2 + $0x10] sm:$0xff] %v893
      %898 = vst [vmem:[#allocation2 + $0x18] sm:$0xff] %v894
      %899 = vrot.lane.b32.xlu0 %v815, 15
      %v900 = vpop.permute.xlu0 %899
      %901 = vrot.lane.b32.xlu0 %v817, 15
      %v902 = vpop.permute.xlu0 %901
      %903 = vrot.lane.b32.xlu0 %v816, 15
      %v904 = vpop.permute.xlu0 %903
      %905 = vrot.lane.b32.xlu0 %v818, 15
      %v906 = vpop.permute.xlu0 %905
      %vm907 = vcmp.lt.s32.totalorder %v828, 15
      %v908 = vsel %vm907, %v900, %v904
      %v909 = vsel %vm907, %v902, %v906
      %v910 = vsel %vm907, %v904, %v900
      %v911 = vsel %vm907, %v906, %v902
      %v912 = vlaneseq
      %v913 = vshrl.u32 %v912, 7
      %v914 = vsub.s32 2, %v913
      %v915 = vrot.slane %v583, %v914
      %v916 = vlaneseq
      %v917 = vshrl.u32 %v916, 7
      %v918 = vsub.s32 2, %v917
      %v919 = vrot.slane %v584, %v918
      %v920 = vmul.f32 %v910, %v915
      %v921 = vmul.f32 %v908, %v919
      %v922 = vmul.f32 %v911, %v915
      %v923 = vmul.f32 %v909, %v919
      %v924 = vpack.c.bf16 %v922, %v920
      %v925 = vpack.c.bf16 %v923, %v921
      %v928 = vunpack.c.l.b16 %v924
      %v929 = vunpack.c.l.b16 %v925
      %v930 = vunpack.c.h.b16 %v924
      %v931 = vunpack.c.h.b16 %v925
      %v932 = vpack.c.b16 %v929, %v928
      %v933 = vpack.c.b16 %v931, %v930
      %936 = vst [vmem:[#allocation2 + $0x20] sm:$0xff] %v932
      %937 = vst [vmem:[#allocation2 + $0x28] sm:$0xff] %v933
      %938 = vrot.lane.b32.xlu0 %v815, 1
      %v939 = vpop.permute.xlu0 %938
      %940 = vrot.lane.b32.xlu0 %v817, 1
      %v941 = vpop.permute.xlu0 %940
      %942 = vrot.lane.b32.xlu0 %v816, 1
      %v943 = vpop.permute.xlu0 %942
      %944 = vrot.lane.b32.xlu0 %v818, 1
      %v945 = vpop.permute.xlu0 %944
      %vm946 = vcmp.lt.s32.totalorder %v828, 1
      %v947 = vsel %vm946, %v939, %v943
      %v948 = vsel %vm946, %v941, %v945
      %v949 = vsel %vm946, %v943, %v939
      %v950 = vsel %vm946, %v945, %v941
      %v951 = vlaneseq
      %v952 = vshrl.u32 %v951, 7
      %v953 = vsub.s32 7, %v952
      %v954 = vrot.slane %v583, %v953
      %v955 = vlaneseq
      %v956 = vshrl.u32 %v955, 7
      %v957 = vsub.s32 7, %v956
      %v958 = vrot.slane %v584, %v957
      %v959 = vmul.f32 %v949, %v954
      %v960 = vmul.f32 %v947, %v958
      %v961 = vmul.f32 %v950, %v954
      %v962 = vmul.f32 %v948, %v958
      %v963 = vpack.c.bf16 %v961, %v959
      %v964 = vpack.c.bf16 %v962, %v960
      %v967 = vunpack.c.l.b16 %v963
      %v968 = vunpack.c.l.b16 %v964
      %v969 = vunpack.c.h.b16 %v963
      %v970 = vunpack.c.h.b16 %v964
      %v971 = vpack.c.b16 %v968, %v967
      %v972 = vpack.c.b16 %v970, %v969
      %975 = vst [vmem:[#allocation2 + $0x30] sm:$0xff] %v971
      %976 = vst [vmem:[#allocation2 + $0x38] sm:$0xff] %v972
      %v977 = vlaneseq
      %v978 = vshrl.u32 %v977, 7
      %v979 = vsub.s32 0, %v978
      %v980 = vrot.slane %v585, %v979
      %v981 = vlaneseq
      %v982 = vshrl.u32 %v981, 7
      %v983 = vsub.s32 0, %v982
      %v984 = vrot.slane %v586, %v983
      %v985 = vmul.f32 %v815, %v980
      %v986 = vmul.f32 %v816, %v984
      %v987 = vmul.f32 %v817, %v980
      %v988 = vmul.f32 %v818, %v984
      %v989 = vpack.c.bf16 %v987, %v985
      %v990 = vpack.c.bf16 %v988, %v986
      %v993 = vunpack.c.l.b16 %v989
      %v994 = vunpack.c.l.b16 %v990
      %v995 = vunpack.c.h.b16 %v989
      %v996 = vunpack.c.h.b16 %v990
      %v997 = vpack.c.b16 %v994, %v993
      %v998 = vpack.c.b16 %v996, %v995
      %1001 = vst [vmem:[#allocation2 + $0x40] sm:$0xff] %v997
      %1002 = vst [vmem:[#allocation2 + $0x48] sm:$0xff] %v998
      %1003 = vrot.lane.b32.xlu0 %v815, 127
      %v1004 = vpop.permute.xlu0 %1003
      %1005 = vrot.lane.b32.xlu0 %v817, 127
      %v1006 = vpop.permute.xlu0 %1005
      %1007 = vrot.lane.b32.xlu0 %v816, 127
      %v1008 = vpop.permute.xlu0 %1007
      %1009 = vrot.lane.b32.xlu0 %v818, 127
      %v1010 = vpop.permute.xlu0 %1009
      %vm1011 = vcmp.lt.s32.totalorder %v828, 127
      %v1012 = vsel %vm1011, %v1004, %v1008
      %v1013 = vsel %vm1011, %v1006, %v1010
      %v1014 = vsel %vm1011, %v1008, %v1004
      %v1015 = vsel %vm1011, %v1010, %v1006
      %v1016 = vlaneseq
      %v1017 = vshrl.u32 %v1016, 7
      %v1018 = vsub.s32 1, %v1017
      %v1019 = vrot.slane %v585, %v1018
      %v1020 = vlaneseq
      %v1021 = vshrl.u32 %v1020, 7
      %v1022 = vsub.s32 1, %v1021
      %v1023 = vrot.slane %v586, %v1022
      %v1024 = vmul.f32 %v1012, %v1019
      %v1025 = vmul.f32 %v1014, %v1023
      %v1026 = vmul.f32 %v1013, %v1019
      %v1027 = vmul.f32 %v1015, %v1023
      %v1028 = vpack.c.bf16 %v1026, %v1024
      %v1029 = vpack.c.bf16 %v1027, %v1025
      %v1032 = vunpack.c.l.b16 %v1028
      %v1033 = vunpack.c.l.b16 %v1029
      %v1034 = vunpack.c.h.b16 %v1028
      %v1035 = vunpack.c.h.b16 %v1029
      %v1036 = vpack.c.b16 %v1033, %v1032
      %v1037 = vpack.c.b16 %v1035, %v1034
      %1040 = vst [vmem:[#allocation2 + $0x50] sm:$0xff] %v1036
      %1041 = vst [vmem:[#allocation2 + $0x58] sm:$0xff] %v1037
      %1042 = vrot.lane.b32.xlu0 %v815, 113
      %v1043 = vpop.permute.xlu0 %1042
      %1044 = vrot.lane.b32.xlu0 %v817, 113
      %v1045 = vpop.permute.xlu0 %1044
      %1046 = vrot.lane.b32.xlu0 %v816, 113
      %v1047 = vpop.permute.xlu0 %1046
      %1048 = vrot.lane.b32.xlu0 %v818, 113
      %v1049 = vpop.permute.xlu0 %1048
      %vm1050 = vcmp.lt.s32.totalorder %v828, 113
      %v1051 = vsel %vm1050, %v1043, %v1047
      %v1052 = vsel %vm1050, %v1045, %v1049
      %v1053 = vsel %vm1050, %v1047, %v1043
      %v1054 = vsel %vm1050, %v1049, %v1045
      %v1055 = vlaneseq
      %v1056 = vshrl.u32 %v1055, 7
      %v1057 = vsub.s32 6, %v1056
      %v1058 = vrot.slane %v585, %v1057
      %v1059 = vlaneseq
      %v1060 = vshrl.u32 %v1059, 7
      %v1061 = vsub.s32 6, %v1060
      %v1062 = vrot.slane %v586, %v1061
      %v1063 = vmul.f32 %v1051, %v1058
      %v1064 = vmul.f32 %v1053, %v1062
      %v1065 = vmul.f32 %v1052, %v1058
      %v1066 = vmul.f32 %v1054, %v1062
      %v1067 = vpack.c.bf16 %v1065, %v1063
      %v1068 = vpack.c.bf16 %v1066, %v1064
      %v1071 = vunpack.c.l.b16 %v1067
      %v1072 = vunpack.c.l.b16 %v1068
      %v1073 = vunpack.c.h.b16 %v1067
      %v1074 = vunpack.c.h.b16 %v1068
      %v1075 = vpack.c.b16 %v1072, %v1071
      %v1076 = vpack.c.b16 %v1074, %v1073
      %1079 = vst [vmem:[#allocation2 + $0x60] sm:$0xff] %v1075
      %1080 = vst [vmem:[#allocation2 + $0x68] sm:$0xff] %v1076
      %1081 = vrot.lane.b32.xlu0 %v815, 112
      %v1082 = vpop.permute.xlu0 %1081
      %1083 = vrot.lane.b32.xlu0 %v817, 112
      %v1084 = vpop.permute.xlu0 %1083
      %1085 = vrot.lane.b32.xlu0 %v816, 112
      %v1086 = vpop.permute.xlu0 %1085
      %1087 = vrot.lane.b32.xlu0 %v818, 112
      %v1088 = vpop.permute.xlu0 %1087
      %vm1089 = vcmp.lt.s32.totalorder %v828, 112
      %v1090 = vsel %vm1089, %v1082, %v1086
      %v1091 = vsel %vm1089, %v1084, %v1088
      %v1092 = vsel %vm1089, %v1086, %v1082
      %v1093 = vsel %vm1089, %v1088, %v1084
      %v1094 = vlaneseq
      %v1095 = vshrl.u32 %v1094, 7
      %v1096 = vsub.s32 7, %v1095
      %v1097 = vrot.slane %v585, %v1096
      %v1098 = vlaneseq
      %v1099 = vshrl.u32 %v1098, 7
      %v1100 = vsub.s32 7, %v1099
      %v1101 = vrot.slane %v586, %v1100
      %v1102 = vmul.f32 %v1090, %v1097
      %v1103 = vmul.f32 %v1092, %v1101
      %v1104 = vmul.f32 %v1091, %v1097
      %v1105 = vmul.f32 %v1093, %v1101
      %v1106 = vpack.c.bf16 %v1104, %v1102
      %v1107 = vpack.c.bf16 %v1105, %v1103
      %v1110 = vunpack.c.l.b16 %v1106
      %v1111 = vunpack.c.l.b16 %v1107
      %v1112 = vunpack.c.h.b16 %v1106
      %v1113 = vunpack.c.h.b16 %v1107
      %v1114 = vpack.c.b16 %v1111, %v1110
      %v1115 = vpack.c.b16 %v1113, %v1112
      %1118 = vst [vmem:[#allocation2 + $0x70] sm:$0xff] %v1114
      %1119 = vst [vmem:[#allocation2 + $0x78] sm:$0xff] %v1115
      %1120 = vrot.lane.b32.xlu0 %v815, 111
      %v1121 = vpop.permute.xlu0 %1120
      %1122 = vrot.lane.b32.xlu0 %v817, 111
      %v1123 = vpop.permute.xlu0 %1122
      %1124 = vrot.lane.b32.xlu0 %v816, 111
      %v1125 = vpop.permute.xlu0 %1124
      %1126 = vrot.lane.b32.xlu0 %v818, 111
      %v1127 = vpop.permute.xlu0 %1126
      %vm1128 = vcmp.lt.s32.totalorder %v828, 111
      %v1129 = vsel %vm1128, %v1121, %v1125
      %v1130 = vsel %vm1128, %v1123, %v1127
      %v1131 = vsel %vm1128, %v1125, %v1121
      %v1132 = vsel %vm1128, %v1127, %v1123
      %v1133 = vlaneseq
      %v1134 = vshrl.u32 %v1133, 7
      %v1135 = vsub.s32 0, %v1134
      %v1136 = vrot.slane %v587, %v1135
      %v1137 = vlaneseq
      %v1138 = vshrl.u32 %v1137, 7
      %v1139 = vsub.s32 0, %v1138
      %v1140 = vrot.slane %v588, %v1139
      %v1141 = vmul.f32 %v1129, %v1136
      %v1142 = vmul.f32 %v1131, %v1140
      %v1143 = vmul.f32 %v1130, %v1136
      %v1144 = vmul.f32 %v1132, %v1140
      %v1145 = vpack.c.bf16 %v1143, %v1141
      %v1146 = vpack.c.bf16 %v1144, %v1142
      %v1149 = vunpack.c.l.b16 %v1145
      %v1150 = vunpack.c.l.b16 %v1146
      %v1151 = vunpack.c.h.b16 %v1145
      %v1152 = vunpack.c.h.b16 %v1146
      %v1153 = vpack.c.b16 %v1150, %v1149
      %v1154 = vpack.c.b16 %v1152, %v1151
      %1157 = vst [vmem:[#allocation2 + $0x80] sm:$0xff] %v1153
      %1158 = vst [vmem:[#allocation2 + $0x88] sm:$0xff] %v1154
      %v1159 = vld [vmem:[%s6] sm:$0xff]
      %v1160 = vld [vmem:[%s6 + $0x8] sm:$0xff]
      %v1161 = vld [vmem:[%s6 + $0x10] sm:$0xff]
      %v1162 = vld [vmem:[%s6 + $0x18] sm:$0xff]
      %v1163 = vld [vmem:[#allocation2] sm:$0xff]
      %v1164 = vld [vmem:[#allocation2 + $0x8] sm:$0xff]
      %v1165 = vld [vmem:[#allocation2 + $0x10] sm:$0xff]
      %v1166 = vld [vmem:[#allocation2 + $0x18] sm:$0xff]
      %v1167 = vld [vmem:[#allocation2 + $0x20] sm:$0xff]
      %v1168 = vld [vmem:[#allocation2 + $0x28] sm:$0xff]
      %v1169 = vld [vmem:[#allocation2 + $0x30] sm:$0xff]
      %v1170 = vld [vmem:[#allocation2 + $0x38] sm:$0xff]
      %v1171 = vld [vmem:[#allocation2 + $0x40] sm:$0xff]
      %v1172 = vld [vmem:[#allocation2 + $0x48] sm:$0xff]
      %v1173 = vld [vmem:[#allocation2 + $0x50] sm:$0xff]
      %v1174 = vld [vmem:[#allocation2 + $0x58] sm:$0xff]
      %v1175 = vld [vmem:[#allocation2 + $0x60] sm:$0xff]
      %v1176 = vld [vmem:[#allocation2 + $0x68] sm:$0xff]
      %v1177 = vld [vmem:[#allocation2 + $0x70] sm:$0xff]
      %v1178 = vld [vmem:[#allocation2 + $0x78] sm:$0xff]
      %v1179 = vld [vmem:[#allocation2 + $0x80] sm:$0xff]
      %v1180 = vld [vmem:[#allocation2 + $0x88] sm:$0xff]
      %v1181 = vld [vmem:[%s7] sm:$0xff]
      %v1182 = vld [vmem:[%s7 + $0x8] sm:$0xff]
      %v1183 = vld [vmem:[%s7 + $0x10] sm:$0xff]
      %v1184 = vld [vmem:[%s7 + $0x18] sm:$0xff]
      %1186 = vset.pattern.permute.xlu0 0
      %1187 = vperm.xlu0 %1186, %v1181
      %v1188 = vpop.permute.xlu0 %1187
      %1191 = vset.pattern.permute.xlu0 0
      %1192 = vperm.xlu0 %1191, %v1182
      %v1193 = vpop.permute.xlu0 %1192
      %1196 = vset.pattern.permute.xlu0 0
      %1197 = vperm.xlu0 %1196, %v1183
      %v1198 = vpop.permute.xlu0 %1197
      %1201 = vset.pattern.permute.xlu0 0
      %1202 = vperm.xlu0 %1201, %v1184
      %v1203 = vpop.permute.xlu0 %1202
      %v1209 = vunpack.c.l.b16 %v1159
      %v1210 = vunpack.c.h.b16 %v1159
      %v1211 = vunpack.c.l.b16 %v1160
      %v1212 = vunpack.c.h.b16 %v1160
      %v1213 = vunpack.c.l.b16 %v1161
      %v1214 = vunpack.c.h.b16 %v1161
      %v1215 = vunpack.c.l.b16 %v1162
      %v1216 = vunpack.c.h.b16 %v1162
      %v1217 = vpack.c.b16 %v1211, %v1209
      %v1218 = vpack.c.b16 %v1212, %v1210
      %v1219 = vpack.c.b16 %v1215, %v1213
      %v1220 = vpack.c.b16 %v1216, %v1214
      %v1241 = vunpack.c.l.b16 %v1163
      %v1242 = vunpack.c.h.b16 %v1163
      %v1243 = vunpack.c.l.b16 %v1164
      %v1244 = vunpack.c.h.b16 %v1164
      %v1245 = vunpack.c.l.b16 %v1165
      %v1246 = vunpack.c.h.b16 %v1165
      %v1247 = vunpack.c.l.b16 %v1166
      %v1248 = vunpack.c.h.b16 %v1166
      %v1249 = vunpack.c.l.b16 %v1167
      %v1250 = vunpack.c.h.b16 %v1167
      %v1251 = vunpack.c.l.b16 %v1168
      %v1252 = vunpack.c.h.b16 %v1168
      %v1253 = vunpack.c.l.b16 %v1169
      %v1254 = vunpack.c.h.b16 %v1169
      %v1255 = vunpack.c.l.b16 %v1170
      %v1256 = vunpack.c.h.b16 %v1170
      %v1257 = vunpack.c.l.b16 %v1171
      %v1258 = vunpack.c.h.b16 %v1171
      %v1259 = vunpack.c.l.b16 %v1172
      %v1260 = vunpack.c.h.b16 %v1172
      %v1261 = vunpack.c.l.b16 %v1173
      %v1262 = vunpack.c.h.b16 %v1173
      %v1263 = vunpack.c.l.b16 %v1174
      %v1264 = vunpack.c.h.b16 %v1174
      %v1265 = vunpack.c.l.b16 %v1175
      %v1266 = vunpack.c.h.b16 %v1175
      %v1267 = vunpack.c.l.b16 %v1176
      %v1268 = vunpack.c.h.b16 %v1176
      %v1269 = vunpack.c.l.b16 %v1177
      %v1270 = vunpack.c.h.b16 %v1177
      %v1271 = vunpack.c.l.b16 %v1178
      %v1272 = vunpack.c.h.b16 %v1178
      %v1273 = vunpack.c.l.b16 %v1179
      %v1274 = vunpack.c.h.b16 %v1179
      %v1275 = vunpack.c.l.b16 %v1180
      %v1276 = vunpack.c.h.b16 %v1180
      %v1277 = vpack.c.b16 %v1243, %v1241
      %v1278 = vpack.c.b16 %v1244, %v1242
      %v1279 = vpack.c.b16 %v1247, %v1245
      %v1280 = vpack.c.b16 %v1248, %v1246
      %v1281 = vpack.c.b16 %v1251, %v1249
      %v1282 = vpack.c.b16 %v1252, %v1250
      %v1283 = vpack.c.b16 %v1255, %v1253
      %v1284 = vpack.c.b16 %v1256, %v1254
      %v1285 = vpack.c.b16 %v1259, %v1257
      %v1286 = vpack.c.b16 %v1260, %v1258
      %v1287 = vpack.c.b16 %v1263, %v1261
      %v1288 = vpack.c.b16 %v1264, %v1262
      %v1289 = vpack.c.b16 %v1267, %v1265
      %v1290 = vpack.c.b16 %v1268, %v1266
      %v1291 = vpack.c.b16 %v1271, %v1269
      %v1292 = vpack.c.b16 %v1272, %v1270
      %v1293 = vpack.c.b16 %v1275, %v1273
      %v1294 = vpack.c.b16 %v1276, %v1274
      %vm1313 = vcmask 130048
      %v1315 = vsel %vm1313, %v1218, 0
      %v1318 = vsel %vm1313, %v1220, 0
      %1320 = vmatprep.subr.bf16.mxu0 %v1292
      %1321 = vmatpush1.bf16.msra.mxu0 %v1291
      %1322 = vmatprep.subr.bf16.mxu0 %v1290
      %1323 = vmatpush1.bf16.msra.mxu0 %v1289
      %1324 = vmatprep.subr.bf16.mxu0 %v1288
      %1325 = vmatpush1.bf16.msra.mxu0 %v1287
      %1326 = vmatprep.subr.bf16.mxu0 %v1286
      %1327 = vmatpush1.bf16.msra.mxu0 %v1285
      %1328 = vmatprep.subr.bf16.mxu0 %v1284
      %1329 = vmatpush1.bf16.msra.mxu0 %v1283
      %1330 = vmatprep.subr.bf16.mxu0 %v1282
      %1331 = vmatpush1.bf16.msra.mxu0 %v1281
      %1332 = vmatprep.subr.bf16.mxu0 %v1280
      %1333 = vmatpush1.bf16.msra.mxu0 %v1279
      %1334 = vmatprep.subr.bf16.mxu0 %v1278
      %1335 = vmatpush1.bf16.msra.mxu0 %v1277
      %1336 = vmatprep.subr.bf16.mxu0 0
      %1337 = vmatpush2.bf16.msra.mxu0 0
      %1338 = vmatprep.subr.bf16.mxu0 0
      %1339 = vmatpush2.bf16.msra.mxu0 0
      %1340 = vmatprep.subr.bf16.mxu0 0
      %1341 = vmatpush2.bf16.msra.mxu0 0
      %1342 = vmatprep.subr.bf16.mxu0 0
      %1343 = vmatpush2.bf16.msra.mxu0 0
      %1344 = vmatprep.subr.bf16.mxu0 0
      %1345 = vmatpush2.bf16.msra.mxu0 0
      %1346 = vmatprep.subr.bf16.mxu0 0
      %1347 = vmatpush2.bf16.msra.mxu0 0
      %1348 = vmatprep.subr.bf16.mxu0 0
      %1349 = vmatpush2.bf16.msra.mxu0 0
      %1350 = vmatprep.subr.bf16.mxu0 %v1294
      %1351 = vmatpush2.bf16.msra.mxu0 %v1293
      %1352 = vmatprep.mubr.bf16.mxu0 %v1315
      %1353 = vmatmul.mubr.bf16.gmra.mxu0 %v1217
      %v1354 = vpop.f32.mrf.mxu0
      %v1355 = vadd.f32 %v1188, %v1354
      %v1356 = vpop.f32.mrf.mxu0
      %v1357 = vadd.f32 %v1188, %v1356
      %v1358 = vpop.f32.mrf.mxu0
      %v1359 = vadd.f32 %v1193, %v1358
      %v1360 = vpop.f32.mrf.mxu0
      %v1361 = vadd.f32 %v1193, %v1360
      %1362 = vmatprep.mubr.bf16.mxu0 %v1318
      %1363 = vmatmul.mubr.bf16.gmra.mxu0 %v1219
      %v1364 = vpop.f32.mrf.mxu0
      %v1365 = vadd.f32 %v1198, %v1364
      %v1366 = vpop.f32.mrf.mxu0
      %v1367 = vadd.f32 %v1198, %v1366
      %v1368 = vpop.f32.mrf.mxu0
      %v1369 = vadd.f32 %v1203, %v1368
      %v1370 = vpop.f32.mrf.mxu0
      %v1371 = vadd.f32 %v1203, %v1370
      %1372 = vdwg.mxu0
      %v1373 = vmax.f32 %v1355, 0.0
      %v1374 = vmax.f32 %v1357, 0.0
      %v1375 = vmax.f32 %v1359, 0.0
      %v1376 = vmax.f32 %v1361, 0.0
      %1377 = vrot.lane.b32.xlu0 %v1373, 17
      %v1378 = vpop.permute.xlu0 %1377
      %1379 = vrot.lane.b32.xlu0 %v1375, 17
      %v1380 = vpop.permute.xlu0 %1379
      %1381 = vrot.lane.b32.xlu0 %v1374, 17
      %v1382 = vpop.permute.xlu0 %1381
      %1383 = vrot.lane.b32.xlu0 %v1376, 17
      %v1384 = vpop.permute.xlu0 %1383
      %v1385 = vsel %vm829, %v1378, %v1382
      %v1386 = vsel %vm829, %v1380, %v1384
      %v1387 = vsel %vm829, %v1382, %v1378
      %v1388 = vsel %vm829, %v1384, %v1380
      %v1389 = vmul.f32 %v1387, %v837
      %v1390 = vmul.f32 %v1385, %v841
      %v1391 = vmul.f32 %v1388, %v837
      %v1392 = vmul.f32 %v1386, %v841
      %v1393 = vpack.c.bf16 %v1391, %v1389
      %v1394 = vpack.c.bf16 %v1392, %v1390
      %v1397 = vunpack.c.l.b16 %v1393
      %v1398 = vunpack.c.l.b16 %v1394
      %v1399 = vunpack.c.h.b16 %v1393
      %v1400 = vunpack.c.h.b16 %v1394
      %v1401 = vpack.c.b16 %v1398, %v1397
      %v1402 = vpack.c.b16 %v1400, %v1399
      %1405 = vst [vmem:[#allocation2] sm:$0xff] %v1401
      %1406 = vst [vmem:[#allocation2 + $0x8] sm:$0xff] %v1402
      %1407 = vrot.lane.b32.xlu0 %v1373, 16
      %v1408 = vpop.permute.xlu0 %1407
      %1409 = vrot.lane.b32.xlu0 %v1375, 16
      %v1410 = vpop.permute.xlu0 %1409
      %1411 = vrot.lane.b32.xlu0 %v1374, 16
      %v1412 = vpop.permute.xlu0 %1411
      %1413 = vrot.lane.b32.xlu0 %v1376, 16
      %v1414 = vpop.permute.xlu0 %1413
      %v1415 = vsel %vm868, %v1408, %v1412
      %v1416 = vsel %vm868, %v1410, %v1414
      %v1417 = vsel %vm868, %v1412, %v1408
      %v1418 = vsel %vm868, %v1414, %v1410
      %v1419 = vmul.f32 %v1417, %v876
      %v1420 = vmul.f32 %v1415, %v880
      %v1421 = vmul.f32 %v1418, %v876
      %v1422 = vmul.f32 %v1416, %v880
      %v1423 = vpack.c.bf16 %v1421, %v1419
      %v1424 = vpack.c.bf16 %v1422, %v1420
      %v1427 = vunpack.c.l.b16 %v1423
      %v1428 = vunpack.c.l.b16 %v1424
      %v1429 = vunpack.c.h.b16 %v1423
      %v1430 = vunpack.c.h.b16 %v1424
      %v1431 = vpack.c.b16 %v1428, %v1427
      %v1432 = vpack.c.b16 %v1430, %v1429
      %1435 = vst [vmem:[#allocation2 + $0x10] sm:$0xff] %v1431
      %1436 = vst [vmem:[#allocation2 + $0x18] sm:$0xff] %v1432
      %1437 = vrot.lane.b32.xlu0 %v1373, 15
      %v1438 = vpop.permute.xlu0 %1437
      %1439 = vrot.lane.b32.xlu0 %v1375, 15
      %v1440 = vpop.permute.xlu0 %1439
      %1441 = vrot.lane.b32.xlu0 %v1374, 15
      %v1442 = vpop.permute.xlu0 %1441
      %1443 = vrot.lane.b32.xlu0 %v1376, 15
      %v1444 = vpop.permute.xlu0 %1443
      %v1445 = vsel %vm907, %v1438, %v1442
      %v1446 = vsel %vm907, %v1440, %v1444
      %v1447 = vsel %vm907, %v1442, %v1438
      %v1448 = vsel %vm907, %v1444, %v1440
      %v1449 = vmul.f32 %v1447, %v915
      %v1450 = vmul.f32 %v1445, %v919
      %v1451 = vmul.f32 %v1448, %v915
      %v1452 = vmul.f32 %v1446, %v919
      %v1453 = vpack.c.bf16 %v1451, %v1449
      %v1454 = vpack.c.bf16 %v1452, %v1450
      %v1457 = vunpack.c.l.b16 %v1453
      %v1458 = vunpack.c.l.b16 %v1454
      %v1459 = vunpack.c.h.b16 %v1453
      %v1460 = vunpack.c.h.b16 %v1454
      %v1461 = vpack.c.b16 %v1458, %v1457
      %v1462 = vpack.c.b16 %v1460, %v1459
      %1465 = vst [vmem:[#allocation2 + $0x20] sm:$0xff] %v1461
      %1466 = vst [vmem:[#allocation2 + $0x28] sm:$0xff] %v1462
      %1467 = vrot.lane.b32.xlu0 %v1373, 1
      %v1468 = vpop.permute.xlu0 %1467
      %1469 = vrot.lane.b32.xlu0 %v1375, 1
      %v1470 = vpop.permute.xlu0 %1469
      %1471 = vrot.lane.b32.xlu0 %v1374, 1
      %v1472 = vpop.permute.xlu0 %1471
      %1473 = vrot.lane.b32.xlu0 %v1376, 1
      %v1474 = vpop.permute.xlu0 %1473
      %v1475 = vsel %vm946, %v1468, %v1472
      %v1476 = vsel %vm946, %v1470, %v1474
      %v1477 = vsel %vm946, %v1472, %v1468
      %v1478 = vsel %vm946, %v1474, %v1470
      %v1479 = vmul.f32 %v1477, %v954
      %v1480 = vmul.f32 %v1475, %v958
      %v1481 = vmul.f32 %v1478, %v954
      %v1482 = vmul.f32 %v1476, %v958
      %v1483 = vpack.c.bf16 %v1481, %v1479
      %v1484 = vpack.c.bf16 %v1482, %v1480
      %v1487 = vunpack.c.l.b16 %v1483
      %v1488 = vunpack.c.l.b16 %v1484
      %v1489 = vunpack.c.h.b16 %v1483
      %v1490 = vunpack.c.h.b16 %v1484
      %v1491 = vpack.c.b16 %v1488, %v1487
      %v1492 = vpack.c.b16 %v1490, %v1489
      %1495 = vst [vmem:[#allocation2 + $0x30] sm:$0xff] %v1491
      %1496 = vst [vmem:[#allocation2 + $0x38] sm:$0xff] %v1492
      %v1497 = vmul.f32 %v1373, %v980
      %v1498 = vmul.f32 %v1374, %v984
      %v1499 = vmul.f32 %v1375, %v980
      %v1500 = vmul.f32 %v1376, %v984
      %v1501 = vpack.c.bf16 %v1499, %v1497
      %v1502 = vpack.c.bf16 %v1500, %v1498
      %v1505 = vunpack.c.l.b16 %v1501
      %v1506 = vunpack.c.l.b16 %v1502
      %v1507 = vunpack.c.h.b16 %v1501
      %v1508 = vunpack.c.h.b16 %v1502
      %v1509 = vpack.c.b16 %v1506, %v1505
      %v1510 = vpack.c.b16 %v1508, %v1507
      %1513 = vst [vmem:[#allocation2 + $0x40] sm:$0xff] %v1509
      %1514 = vst [vmem:[#allocation2 + $0x48] sm:$0xff] %v1510
      %1515 = vrot.lane.b32.xlu0 %v1373, 127
      %v1516 = vpop.permute.xlu0 %1515
      %1517 = vrot.lane.b32.xlu0 %v1375, 127
      %v1518 = vpop.permute.xlu0 %1517
      %1519 = vrot.lane.b32.xlu0 %v1374, 127
      %v1520 = vpop.permute.xlu0 %1519
      %1521 = vrot.lane.b32.xlu0 %v1376, 127
      %v1522 = vpop.permute.xlu0 %1521
      %v1523 = vsel %vm1011, %v1516, %v1520
      %v1524 = vsel %vm1011, %v1518, %v1522
      %v1525 = vsel %vm1011, %v1520, %v1516
      %v1526 = vsel %vm1011, %v1522, %v1518
      %v1527 = vmul.f32 %v1523, %v1019
      %v1528 = vmul.f32 %v1525, %v1023
      %v1529 = vmul.f32 %v1524, %v1019
      %v1530 = vmul.f32 %v1526, %v1023
      %v1531 = vpack.c.bf16 %v1529, %v1527
      %v1532 = vpack.c.bf16 %v1530, %v1528
      %v1535 = vunpack.c.l.b16 %v1531
      %v1536 = vunpack.c.l.b16 %v1532
      %v1537 = vunpack.c.h.b16 %v1531
      %v1538 = vunpack.c.h.b16 %v1532
      %v1539 = vpack.c.b16 %v1536, %v1535
      %v1540 = vpack.c.b16 %v1538, %v1537
      %1543 = vst [vmem:[#allocation2 + $0x50] sm:$0xff] %v1539
      %1544 = vst [vmem:[#allocation2 + $0x58] sm:$0xff] %v1540
      %1545 = vrot.lane.b32.xlu0 %v1373, 113
      %v1546 = vpop.permute.xlu0 %1545
      %1547 = vrot.lane.b32.xlu0 %v1375, 113
      %v1548 = vpop.permute.xlu0 %1547
      %1549 = vrot.lane.b32.xlu0 %v1374, 113
      %v1550 = vpop.permute.xlu0 %1549
      %1551 = vrot.lane.b32.xlu0 %v1376, 113
      %v1552 = vpop.permute.xlu0 %1551
      %v1553 = vsel %vm1050, %v1546, %v1550
      %v1554 = vsel %vm1050, %v1548, %v1552
      %v1555 = vsel %vm1050, %v1550, %v1546
      %v1556 = vsel %vm1050, %v1552, %v1548
      %v1557 = vmul.f32 %v1553, %v1058
      %v1558 = vmul.f32 %v1555, %v1062
      %v1559 = vmul.f32 %v1554, %v1058
      %v1560 = vmul.f32 %v1556, %v1062
      %v1561 = vpack.c.bf16 %v1559, %v1557
      %v1562 = vpack.c.bf16 %v1560, %v1558
      %v1565 = vunpack.c.l.b16 %v1561
      %v1566 = vunpack.c.l.b16 %v1562
      %v1567 = vunpack.c.h.b16 %v1561
      %v1568 = vunpack.c.h.b16 %v1562
      %v1569 = vpack.c.b16 %v1566, %v1565
      %v1570 = vpack.c.b16 %v1568, %v1567
      %1573 = vst [vmem:[#allocation2 + $0x60] sm:$0xff] %v1569
      %1574 = vst [vmem:[#allocation2 + $0x68] sm:$0xff] %v1570
      %1575 = vrot.lane.b32.xlu0 %v1373, 112
      %v1576 = vpop.permute.xlu0 %1575
      %1577 = vrot.lane.b32.xlu0 %v1375, 112
      %v1578 = vpop.permute.xlu0 %1577
      %1579 = vrot.lane.b32.xlu0 %v1374, 112
      %v1580 = vpop.permute.xlu0 %1579
      %1581 = vrot.lane.b32.xlu0 %v1376, 112
      %v1582 = vpop.permute.xlu0 %1581
      %v1583 = vsel %vm1089, %v1576, %v1580
      %v1584 = vsel %vm1089, %v1578, %v1582
      %v1585 = vsel %vm1089, %v1580, %v1576
      %v1586 = vsel %vm1089, %v1582, %v1578
      %v1587 = vmul.f32 %v1583, %v1097
      %v1588 = vmul.f32 %v1585, %v1101
      %v1589 = vmul.f32 %v1584, %v1097
      %v1590 = vmul.f32 %v1586, %v1101
      %v1591 = vpack.c.bf16 %v1589, %v1587
      %v1592 = vpack.c.bf16 %v1590, %v1588
      %v1595 = vunpack.c.l.b16 %v1591
      %v1596 = vunpack.c.l.b16 %v1592
      %v1597 = vunpack.c.h.b16 %v1591
      %v1598 = vunpack.c.h.b16 %v1592
      %v1599 = vpack.c.b16 %v1596, %v1595
      %v1600 = vpack.c.b16 %v1598, %v1597
      %1603 = vst [vmem:[#allocation2 + $0x70] sm:$0xff] %v1599
      %1604 = vst [vmem:[#allocation2 + $0x78] sm:$0xff] %v1600
      %1605 = vrot.lane.b32.xlu0 %v1373, 111
      %v1606 = vpop.permute.xlu0 %1605
      %1607 = vrot.lane.b32.xlu0 %v1375, 111
      %v1608 = vpop.permute.xlu0 %1607
      %1609 = vrot.lane.b32.xlu0 %v1374, 111
      %v1610 = vpop.permute.xlu0 %1609
      %1611 = vrot.lane.b32.xlu0 %v1376, 111
      %v1612 = vpop.permute.xlu0 %1611
      %v1613 = vsel %vm1128, %v1606, %v1610
      %v1614 = vsel %vm1128, %v1608, %v1612
      %v1615 = vsel %vm1128, %v1610, %v1606
      %v1616 = vsel %vm1128, %v1612, %v1608
      %v1617 = vmul.f32 %v1613, %v1136
      %v1618 = vmul.f32 %v1615, %v1140
      %v1619 = vmul.f32 %v1614, %v1136
      %v1620 = vmul.f32 %v1616, %v1140
      %v1621 = vpack.c.bf16 %v1619, %v1617
      %v1622 = vpack.c.bf16 %v1620, %v1618
      %v1625 = vunpack.c.l.b16 %v1621
      %v1626 = vunpack.c.l.b16 %v1622
      %v1627 = vunpack.c.h.b16 %v1621
      %v1628 = vunpack.c.h.b16 %v1622
      %v1629 = vpack.c.b16 %v1626, %v1625
      %v1630 = vpack.c.b16 %v1628, %v1627
      %1633 = vst [vmem:[#allocation2 + $0x80] sm:$0xff] %v1629
      %1634 = vst [vmem:[#allocation2 + $0x88] sm:$0xff] %v1630
      %v1635 = vld [vmem:[%s8] sm:$0xff]
      %v1636 = vld [vmem:[%s8 + $0x8] sm:$0xff]
      %v1637 = vld [vmem:[#allocation2] sm:$0xff]
      %v1638 = vld [vmem:[#allocation2 + $0x8] sm:$0xff]
      %v1639 = vld [vmem:[#allocation2 + $0x10] sm:$0xff]
      %v1640 = vld [vmem:[#allocation2 + $0x18] sm:$0xff]
      %v1641 = vld [vmem:[#allocation2 + $0x20] sm:$0xff]
      %v1642 = vld [vmem:[#allocation2 + $0x28] sm:$0xff]
      %v1643 = vld [vmem:[#allocation2 + $0x30] sm:$0xff]
      %v1644 = vld [vmem:[#allocation2 + $0x38] sm:$0xff]
      %v1645 = vld [vmem:[#allocation2 + $0x40] sm:$0xff]
      %v1646 = vld [vmem:[#allocation2 + $0x48] sm:$0xff]
      %v1647 = vld [vmem:[#allocation2 + $0x50] sm:$0xff]
      %v1648 = vld [vmem:[#allocation2 + $0x58] sm:$0xff]
      %v1649 = vld [vmem:[#allocation2 + $0x60] sm:$0xff]
      %v1650 = vld [vmem:[#allocation2 + $0x68] sm:$0xff]
      %v1651 = vld [vmem:[#allocation2 + $0x70] sm:$0xff]
      %v1652 = vld [vmem:[#allocation2 + $0x78] sm:$0xff]
      %v1653 = vld [vmem:[#allocation2 + $0x80] sm:$0xff]
      %v1654 = vld [vmem:[#allocation2 + $0x88] sm:$0xff]
      %v1655 = vld [vmem:[%s9] sm:$0xff]
      %v1656 = vld [vmem:[%s9 + $0x8] sm:$0xff]
      %1658 = vset.pattern.permute.xlu0 0
      %1659 = vperm.xlu0 %1658, %v1655
      %v1660 = vpop.permute.xlu0 %1659
      %1663 = vset.pattern.permute.xlu0 0
      %1664 = vperm.xlu0 %1663, %v1656
      %v1665 = vpop.permute.xlu0 %1664
      %v1669 = vunpack.c.l.b16 %v1635
      %v1670 = vunpack.c.h.b16 %v1635
      %v1671 = vunpack.c.l.b16 %v1636
      %v1672 = vunpack.c.h.b16 %v1636
      %v1673 = vpack.c.b16 %v1671, %v1669
      %v1674 = vpack.c.b16 %v1672, %v1670
      %v1694 = vunpack.c.l.b16 %v1637
      %v1695 = vunpack.c.h.b16 %v1637
      %v1696 = vunpack.c.l.b16 %v1638
      %v1697 = vunpack.c.h.b16 %v1638
      %v1698 = vunpack.c.l.b16 %v1639
      %v1699 = vunpack.c.h.b16 %v1639
      %v1700 = vunpack.c.l.b16 %v1640
      %v1701 = vunpack.c.h.b16 %v1640
      %v1702 = vunpack.c.l.b16 %v1641
      %v1703 = vunpack.c.h.b16 %v1641
      %v1704 = vunpack.c.l.b16 %v1642
      %v1705 = vunpack.c.h.b16 %v1642
      %v1706 = vunpack.c.l.b16 %v1643
      %v1707 = vunpack.c.h.b16 %v1643
      %v1708 = vunpack.c.l.b16 %v1644
      %v1709 = vunpack.c.h.b16 %v1644
      %v1710 = vunpack.c.l.b16 %v1645
      %v1711 = vunpack.c.h.b16 %v1645
      %v1712 = vunpack.c.l.b16 %v1646
      %v1713 = vunpack.c.h.b16 %v1646
      %v1714 = vunpack.c.l.b16 %v1647
      %v1715 = vunpack.c.h.b16 %v1647
      %v1716 = vunpack.c.l.b16 %v1648
      %v1717 = vunpack.c.h.b16 %v1648
      %v1718 = vunpack.c.l.b16 %v1649
      %v1719 = vunpack.c.h.b16 %v1649
      %v1720 = vunpack.c.l.b16 %v1650
      %v1721 = vunpack.c.h.b16 %v1650
      %v1722 = vunpack.c.l.b16 %v1651
      %v1723 = vunpack.c.h.b16 %v1651
      %v1724 = vunpack.c.l.b16 %v1652
      %v1725 = vunpack.c.h.b16 %v1652
      %v1726 = vunpack.c.l.b16 %v1653
      %v1727 = vunpack.c.h.b16 %v1653
      %v1728 = vunpack.c.l.b16 %v1654
      %v1729 = vunpack.c.h.b16 %v1654
      %v1730 = vpack.c.b16 %v1696, %v1694
      %v1731 = vpack.c.b16 %v1697, %v1695
      %v1732 = vpack.c.b16 %v1700, %v1698
      %v1733 = vpack.c.b16 %v1701, %v1699
      %v1734 = vpack.c.b16 %v1704, %v1702
      %v1735 = vpack.c.b16 %v1705, %v1703
      %v1736 = vpack.c.b16 %v1708, %v1706
      %v1737 = vpack.c.b16 %v1709, %v1707
      %v1738 = vpack.c.b16 %v1712, %v1710
      %v1739 = vpack.c.b16 %v1713, %v1711
      %v1740 = vpack.c.b16 %v1716, %v1714
      %v1741 = vpack.c.b16 %v1717, %v1715
      %v1742 = vpack.c.b16 %v1720, %v1718
      %v1743 = vpack.c.b16 %v1721, %v1719
      %v1744 = vpack.c.b16 %v1724, %v1722
      %v1745 = vpack.c.b16 %v1725, %v1723
      %v1746 = vpack.c.b16 %v1728, %v1726
      %v1747 = vpack.c.b16 %v1729, %v1727
      %v1767 = vsel %vm1313, %v1674, 0
      %1769 = vmatprep.subr.bf16.mxu0 %v1745
      %1770 = vmatpush1.bf16.msra.mxu0 %v1744
      %1771 = vmatprep.subr.bf16.mxu0 %v1743
      %1772 = vmatpush1.bf16.msra.mxu0 %v1742
      %1773 = vmatprep.subr.bf16.mxu0 %v1741
      %1774 = vmatpush1.bf16.msra.mxu0 %v1740
      %1775 = vmatprep.subr.bf16.mxu0 %v1739
      %1776 = vmatpush1.bf16.msra.mxu0 %v1738
      %1777 = vmatprep.subr.bf16.mxu0 %v1737
      %1778 = vmatpush1.bf16.msra.mxu0 %v1736
      %1779 = vmatprep.subr.bf16.mxu0 %v1735
      %1780 = vmatpush1.bf16.msra.mxu0 %v1734
      %1781 = vmatprep.subr.bf16.mxu0 %v1733
      %1782 = vmatpush1.bf16.msra.mxu0 %v1732
      %1783 = vmatprep.subr.bf16.mxu0 %v1731
      %1784 = vmatpush1.bf16.msra.mxu0 %v1730
      %1785 = vmatprep.subr.bf16.mxu0 0
      %1786 = vmatpush2.bf16.msra.mxu0 0
      %1787 = vmatprep.subr.bf16.mxu0 0
      %1788 = vmatpush2.bf16.msra.mxu0 0
      %1789 = vmatprep.subr.bf16.mxu0 0
      %1790 = vmatpush2.bf16.msra.mxu0 0
      %1791 = vmatprep.subr.bf16.mxu0 0
      %1792 = vmatpush2.bf16.msra.mxu0 0
      %1793 = vmatprep.subr.bf16.mxu0 0
      %1794 = vmatpush2.bf16.msra.mxu0 0
      %1795 = vmatprep.subr.bf16.mxu0 0
      %1796 = vmatpush2.bf16.msra.mxu0 0
      %1797 = vmatprep.subr.bf16.mxu0 0
      %1798 = vmatpush2.bf16.msra.mxu0 0
      %1799 = vmatprep.subr.bf16.mxu0 %v1747
      %1800 = vmatpush2.bf16.msra.mxu0 %v1746
      %1801 = vmatprep.mubr.bf16.mxu0 %v1767
      %1802 = vmatmul.mubr.bf16.gmra.mxu0 %v1673
      %v1803 = vpop.f32.mrf.mxu0
      %v1804 = vadd.f32 %v1660, %v1803
      %v1805 = vpop.f32.mrf.mxu0
      %v1806 = vadd.f32 %v1660, %v1805
      %v1807 = vpop.f32.mrf.mxu0
      %v1808 = vadd.f32 %v1665, %v1807
      %v1809 = vpop.f32.mrf.mxu0
      %v1810 = vadd.f32 %v1665, %v1809
      %1811 = vdwg.mxu0
      %v1812 = vmax.f32 %v1804, 0.0
      %v1813 = vmax.f32 %v1806, 0.0
      %v1814 = vmax.f32 %v1808, 0.0
      %v1815 = vmax.f32 %v1810, 0.0
      %v1816 = vadd.f32 %v1812, %v1365
      %v1817 = vadd.f32 %v1813, %v1367
      %v1818 = vadd.f32 %v1814, %v1369
      %v1819 = vadd.f32 %v1815, %v1371
      %1820 = vrot.lane.b32.xlu0 %v1816, 51
      %v1821 = vpop.permute.xlu0 %1820
      %1822 = vrot.lane.b32.xlu0 %v1818, 51
      %v1823 = vpop.permute.xlu0 %1822
      %1824 = vrot.lane.b32.xlu0 %v1817, 51
      %v1825 = vpop.permute.xlu0 %1824
      %1826 = vrot.lane.b32.xlu0 %v1819, 51
      %v1827 = vpop.permute.xlu0 %1826
      %vm1828 = vcmp.lt.s32.totalorder %v828, 51
      %v1829 = vsel %vm1828, %v1821, %v1825
      %v1830 = vsel %vm1828, %v1823, %v1827
      %v1831 = vsel %vm1828, %v1825, %v1821
      %v1832 = vsel %vm1828, %v1827, %v1823
      %v1833 = vlaneseq
      %v1834 = vshrl.u32 %v1833, 7
      %v1835 = vsub.s32 0, %v1834
      %v1836 = vrot.slane %v579, %v1835
      %v1837 = vlaneseq
      %v1838 = vshrl.u32 %v1837, 7
      %v1839 = vsub.s32 0, %v1838
      %v1840 = vrot.slane %v580, %v1839
      %v1841 = vmul.f32 %v1831, %v1836
      %v1842 = vmul.f32 %v1829, %v1840
      %v1843 = vmul.f32 %v1832, %v1836
      %v1844 = vmul.f32 %v1830, %v1840
      %v1845 = vpack.c.bf16 %v1843, %v1841
      %v1846 = vpack.c.bf16 %v1844, %v1842
      %v1849 = vunpack.c.l.b16 %v1845
      %v1850 = vunpack.c.l.b16 %v1846
      %v1851 = vunpack.c.h.b16 %v1845
      %v1852 = vunpack.c.h.b16 %v1846
      %v1853 = vpack.c.b16 %v1850, %v1849
      %v1854 = vpack.c.b16 %v1852, %v1851
      %1857 = vst [vmem:[#allocation2] sm:$0xff] %v1853
      %1858 = vst [vmem:[#allocation2 + $0x8] sm:$0xff] %v1854
      %1859 = vrot.lane.b32.xlu0 %v1816, 50
      %v1860 = vpop.permute.xlu0 %1859
      %1861 = vrot.lane.b32.xlu0 %v1818, 50
      %v1862 = vpop.permute.xlu0 %1861
      %1863 = vrot.lane.b32.xlu0 %v1817, 50
      %v1864 = vpop.permute.xlu0 %1863
      %1865 = vrot.lane.b32.xlu0 %v1819, 50
      %v1866 = vpop.permute.xlu0 %1865
      %vm1867 = vcmp.lt.s32.totalorder %v828, 50
      %v1868 = vsel %vm1867, %v1860, %v1864
      %v1869 = vsel %vm1867, %v1862, %v1866
      %v1870 = vsel %vm1867, %v1864, %v1860
      %v1871 = vsel %vm1867, %v1866, %v1862
      %v1872 = vlaneseq
      %v1873 = vshrl.u32 %v1872, 7
      %v1874 = vsub.s32 1, %v1873
      %v1875 = vrot.slane %v579, %v1874
      %v1876 = vlaneseq
      %v1877 = vshrl.u32 %v1876, 7
      %v1878 = vsub.s32 1, %v1877
      %v1879 = vrot.slane %v580, %v1878
      %v1880 = vmul.f32 %v1870, %v1875
      %v1881 = vmul.f32 %v1868, %v1879
      %v1882 = vmul.f32 %v1871, %v1875
      %v1883 = vmul.f32 %v1869, %v1879
      %v1884 = vpack.c.bf16 %v1882, %v1880
      %v1885 = vpack.c.bf16 %v1883, %v1881
      %v1888 = vunpack.c.l.b16 %v1884
      %v1889 = vunpack.c.l.b16 %v1885
      %v1890 = vunpack.c.h.b16 %v1884
      %v1891 = vunpack.c.h.b16 %v1885
      %v1892 = vpack.c.b16 %v1889, %v1888
      %v1893 = vpack.c.b16 %v1891, %v1890
      %1896 = vst [vmem:[#allocation2 + $0x10] sm:$0xff] %v1892
      %1897 = vst [vmem:[#allocation2 + $0x18] sm:$0xff] %v1893
      %1898 = vrot.lane.b32.xlu0 %v1816, 49
      %v1899 = vpop.permute.xlu0 %1898
      %1900 = vrot.lane.b32.xlu0 %v1818, 49
      %v1901 = vpop.permute.xlu0 %1900
      %1902 = vrot.lane.b32.xlu0 %v1817, 49
      %v1903 = vpop.permute.xlu0 %1902
      %1904 = vrot.lane.b32.xlu0 %v1819, 49
      %v1905 = vpop.permute.xlu0 %1904
      %vm1906 = vcmp.lt.s32.totalorder %v828, 49
      %v1907 = vsel %vm1906, %v1899, %v1903
      %v1908 = vsel %vm1906, %v1901, %v1905
      %v1909 = vsel %vm1906, %v1903, %v1899
      %v1910 = vsel %vm1906, %v1905, %v1901
      %v1911 = vlaneseq
      %v1912 = vshrl.u32 %v1911, 7
      %v1913 = vsub.s32 2, %v1912
      %v1914 = vrot.slane %v579, %v1913
      %v1915 = vlaneseq
      %v1916 = vshrl.u32 %v1915, 7
      %v1917 = vsub.s32 2, %v1916
      %v1918 = vrot.slane %v580, %v1917
      %v1919 = vmul.f32 %v1909, %v1914
      %v1920 = vmul.f32 %v1907, %v1918
      %v1921 = vmul.f32 %v1910, %v1914
      %v1922 = vmul.f32 %v1908, %v1918
      %v1923 = vpack.c.bf16 %v1921, %v1919
      %v1924 = vpack.c.bf16 %v1922, %v1920
      %v1927 = vunpack.c.l.b16 %v1923
      %v1928 = vunpack.c.l.b16 %v1924
      %v1929 = vunpack.c.h.b16 %v1923
      %v1930 = vunpack.c.h.b16 %v1924
      %v1931 = vpack.c.b16 %v1928, %v1927
      %v1932 = vpack.c.b16 %v1930, %v1929
      %1935 = vst [vmem:[#allocation2 + $0x20] sm:$0xff] %v1931
      %1936 = vst [vmem:[#allocation2 + $0x28] sm:$0xff] %v1932
      %1937 = vrot.lane.b32.xlu0 %v1816, 48
      %v1938 = vpop.permute.xlu0 %1937
      %1939 = vrot.lane.b32.xlu0 %v1818, 48
      %v1940 = vpop.permute.xlu0 %1939
      %1941 = vrot.lane.b32.xlu0 %v1817, 48
      %v1942 = vpop.permute.xlu0 %1941
      %1943 = vrot.lane.b32.xlu0 %v1819, 48
      %v1944 = vpop.permute.xlu0 %1943
      %vm1945 = vcmp.lt.s32.totalorder %v828, 48
      %v1946 = vsel %vm1945, %v1938, %v1942
      %v1947 = vsel %vm1945, %v1940, %v1944
      %v1948 = vsel %vm1945, %v1942, %v1938
      %v1949 = vsel %vm1945, %v1944, %v1940
      %v1950 = vlaneseq
      %v1951 = vshrl.u32 %v1950, 7
      %v1952 = vsub.s32 3, %v1951
      %v1953 = vrot.slane %v579, %v1952
      %v1954 = vlaneseq
      %v1955 = vshrl.u32 %v1954, 7
      %v1956 = vsub.s32 3, %v1955
      %v1957 = vrot.slane %v580, %v1956
      %v1958 = vmul.f32 %v1948, %v1953
      %v1959 = vmul.f32 %v1946, %v1957
      %v1960 = vmul.f32 %v1949, %v1953
      %v1961 = vmul.f32 %v1947, %v1957
      %v1962 = vpack.c.bf16 %v1960, %v1958
      %v1963 = vpack.c.bf16 %v1961, %v1959
      %v1966 = vunpack.c.l.b16 %v1962
      %v1967 = vunpack.c.l.b16 %v1963
      %v1968 = vunpack.c.h.b16 %v1962
      %v1969 = vunpack.c.h.b16 %v1963
      %v1970 = vpack.c.b16 %v1967, %v1966
      %v1971 = vpack.c.b16 %v1969, %v1968
      %1974 = vst [vmem:[#allocation2 + $0x30] sm:$0xff] %v1970
      %1975 = vst [vmem:[#allocation2 + $0x38] sm:$0xff] %v1971
      %1976 = vrot.lane.b32.xlu0 %v1816, 47
      %v1977 = vpop.permute.xlu0 %1976
      %1978 = vrot.lane.b32.xlu0 %v1818, 47
      %v1979 = vpop.permute.xlu0 %1978
      %1980 = vrot.lane.b32.xlu0 %v1817, 47
      %v1981 = vpop.permute.xlu0 %1980
      %1982 = vrot.lane.b32.xlu0 %v1819, 47
      %v1983 = vpop.permute.xlu0 %1982
      %vm1984 = vcmp.lt.s32.totalorder %v828, 47
      %v1985 = vsel %vm1984, %v1977, %v1981
      %v1986 = vsel %vm1984, %v1979, %v1983
      %v1987 = vsel %vm1984, %v1981, %v1977
      %v1988 = vsel %vm1984, %v1983, %v1979
      %v1989 = vlaneseq
      %v1990 = vshrl.u32 %v1989, 7
      %v1991 = vsub.s32 4, %v1990
      %v1992 = vrot.slane %v579, %v1991
      %v1993 = vlaneseq
      %v1994 = vshrl.u32 %v1993, 7
      %v1995 = vsub.s32 4, %v1994
      %v1996 = vrot.slane %v580, %v1995
      %v1997 = vmul.f32 %v1987, %v1992
      %v1998 = vmul.f32 %v1985, %v1996
      %v1999 = vmul.f32 %v1988, %v1992
      %v2000 = vmul.f32 %v1986, %v1996
      %v2001 = vpack.c.bf16 %v1999, %v1997
      %v2002 = vpack.c.bf16 %v2000, %v1998
      %v2005 = vunpack.c.l.b16 %v2001
      %v2006 = vunpack.c.l.b16 %v2002
      %v2007 = vunpack.c.h.b16 %v2001
      %v2008 = vunpack.c.h.b16 %v2002
      %v2009 = vpack.c.b16 %v2006, %v2005
      %v2010 = vpack.c.b16 %v2008, %v2007
      %2013 = vst [vmem:[#allocation2 + $0x40] sm:$0xff] %v2009
      %2014 = vst [vmem:[#allocation2 + $0x48] sm:$0xff] %v2010
      %2015 = vrot.lane.b32.xlu0 %v1816, 46
      %v2016 = vpop.permute.xlu0 %2015
      %2017 = vrot.lane.b32.xlu0 %v1818, 46
      %v2018 = vpop.permute.xlu0 %2017
      %2019 = vrot.lane.b32.xlu0 %v1817, 46
      %v2020 = vpop.permute.xlu0 %2019
      %2021 = vrot.lane.b32.xlu0 %v1819, 46
      %v2022 = vpop.permute.xlu0 %2021
      %vm2023 = vcmp.lt.s32.totalorder %v828, 46
      %v2024 = vsel %vm2023, %v2016, %v2020
      %v2025 = vsel %vm2023, %v2018, %v2022
      %v2026 = vsel %vm2023, %v2020, %v2016
      %v2027 = vsel %vm2023, %v2022, %v2018
      %v2028 = vlaneseq
      %v2029 = vshrl.u32 %v2028, 7
      %v2030 = vsub.s32 5, %v2029
      %v2031 = vrot.slane %v579, %v2030
      %v2032 = vlaneseq
      %v2033 = vshrl.u32 %v2032, 7
      %v2034 = vsub.s32 5, %v2033
      %v2035 = vrot.slane %v580, %v2034
      %v2036 = vmul.f32 %v2026, %v2031
      %v2037 = vmul.f32 %v2024, %v2035
      %v2038 = vmul.f32 %v2027, %v2031
      %v2039 = vmul.f32 %v2025, %v2035
      %v2040 = vpack.c.bf16 %v2038, %v2036
      %v2041 = vpack.c.bf16 %v2039, %v2037
      %v2044 = vunpack.c.l.b16 %v2040
      %v2045 = vunpack.c.l.b16 %v2041
      %v2046 = vunpack.c.h.b16 %v2040
      %v2047 = vunpack.c.h.b16 %v2041
      %v2048 = vpack.c.b16 %v2045, %v2044
      %v2049 = vpack.c.b16 %v2047, %v2046
      %2052 = vst [vmem:[#allocation2 + $0x50] sm:$0xff] %v2048
      %2053 = vst [vmem:[#allocation2 + $0x58] sm:$0xff] %v2049
      %2054 = vrot.lane.b32.xlu0 %v1816, 45
      %v2055 = vpop.permute.xlu0 %2054
      %2056 = vrot.lane.b32.xlu0 %v1818, 45
      %v2057 = vpop.permute.xlu0 %2056
      %2058 = vrot.lane.b32.xlu0 %v1817, 45
      %v2059 = vpop.permute.xlu0 %2058
      %2060 = vrot.lane.b32.xlu0 %v1819, 45
      %v2061 = vpop.permute.xlu0 %2060
      %vm2062 = vcmp.lt.s32.totalorder %v828, 45
      %v2063 = vsel %vm2062, %v2055, %v2059
      %v2064 = vsel %vm2062, %v2057, %v2061
      %v2065 = vsel %vm2062, %v2059, %v2055
      %v2066 = vsel %vm2062, %v2061, %v2057
      %v2067 = vlaneseq
      %v2068 = vshrl.u32 %v2067, 7
      %v2069 = vsub.s32 6, %v2068
      %v2070 = vrot.slane %v579, %v2069
      %v2071 = vlaneseq
      %v2072 = vshrl.u32 %v2071, 7
      %v2073 = vsub.s32 6, %v2072
      %v2074 = vrot.slane %v580, %v2073
      %v2075 = vmul.f32 %v2065, %v2070
      %v2076 = vmul.f32 %v2063, %v2074
      %v2077 = vmul.f32 %v2066, %v2070
      %v2078 = vmul.f32 %v2064, %v2074
      %v2079 = vpack.c.bf16 %v2077, %v2075
      %v2080 = vpack.c.bf16 %v2078, %v2076
      %v2083 = vunpack.c.l.b16 %v2079
      %v2084 = vunpack.c.l.b16 %v2080
      %v2085 = vunpack.c.h.b16 %v2079
      %v2086 = vunpack.c.h.b16 %v2080
      %v2087 = vpack.c.b16 %v2084, %v2083
      %v2088 = vpack.c.b16 %v2086, %v2085
      %2091 = vst [vmem:[#allocation2 + $0x60] sm:$0xff] %v2087
      %2092 = vst [vmem:[#allocation2 + $0x68] sm:$0xff] %v2088
      %2093 = vrot.lane.b32.xlu0 %v1816, 35
      %v2094 = vpop.permute.xlu0 %2093
      %2095 = vrot.lane.b32.xlu0 %v1818, 35
      %v2096 = vpop.permute.xlu0 %2095
      %2097 = vrot.lane.b32.xlu0 %v1817, 35
      %v2098 = vpop.permute.xlu0 %2097
      %2099 = vrot.lane.b32.xlu0 %v1819, 35
      %v2100 = vpop.permute.xlu0 %2099
      %vm2101 = vcmp.lt.s32.totalorder %v828, 35
      %v2102 = vsel %vm2101, %v2094, %v2098
      %v2103 = vsel %vm2101, %v2096, %v2100
      %v2104 = vsel %vm2101, %v2098, %v2094
      %v2105 = vsel %vm2101, %v2100, %v2096
      %v2106 = vlaneseq
      %v2107 = vshrl.u32 %v2106, 7
      %v2108 = vsub.s32 7, %v2107
      %v2109 = vrot.slane %v579, %v2108
      %v2110 = vlaneseq
      %v2111 = vshrl.u32 %v2110, 7
      %v2112 = vsub.s32 7, %v2111
      %v2113 = vrot.slane %v580, %v2112
      %v2114 = vmul.f32 %v2104, %v2109
      %v2115 = vmul.f32 %v2102, %v2113
      %v2116 = vmul.f32 %v2105, %v2109
      %v2117 = vmul.f32 %v2103, %v2113
      %v2118 = vpack.c.bf16 %v2116, %v2114
      %v2119 = vpack.c.bf16 %v2117, %v2115
      %v2122 = vunpack.c.l.b16 %v2118
      %v2123 = vunpack.c.l.b16 %v2119
      %v2124 = vunpack.c.h.b16 %v2118
      %v2125 = vunpack.c.h.b16 %v2119
      %v2126 = vpack.c.b16 %v2123, %v2122
      %v2127 = vpack.c.b16 %v2125, %v2124
      %2130 = vst [vmem:[#allocation2 + $0x70] sm:$0xff] %v2126
      %2131 = vst [vmem:[#allocation2 + $0x78] sm:$0xff] %v2127
      %2132 = vrot.lane.b32.xlu0 %v1816, 34
      %v2133 = vpop.permute.xlu0 %2132
      %2134 = vrot.lane.b32.xlu0 %v1818, 34
      %v2135 = vpop.permute.xlu0 %2134
      %2136 = vrot.lane.b32.xlu0 %v1817, 34
      %v2137 = vpop.permute.xlu0 %2136
      %2138 = vrot.lane.b32.xlu0 %v1819, 34
      %v2139 = vpop.permute.xlu0 %2138
      %vm2140 = vcmp.lt.s32.totalorder %v828, 34
      %v2141 = vsel %vm2140, %v2133, %v2137
      %v2142 = vsel %vm2140, %v2135, %v2139
      %v2143 = vsel %vm2140, %v2137, %v2133
      %v2144 = vsel %vm2140, %v2139, %v2135
      %v2145 = vlaneseq
      %v2146 = vshrl.u32 %v2145, 7
      %v2147 = vsub.s32 0, %v2146
      %v2148 = vrot.slane %v581, %v2147
      %v2149 = vlaneseq
      %v2150 = vshrl.u32 %v2149, 7
      %v2151 = vsub.s32 0, %v2150
      %v2152 = vrot.slane %v582, %v2151
      %v2153 = vmul.f32 %v2143, %v2148
      %v2154 = vmul.f32 %v2141, %v2152
      %v2155 = vmul.f32 %v2144, %v2148
      %v2156 = vmul.f32 %v2142, %v2152
      %v2157 = vpack.c.bf16 %v2155, %v2153
      %v2158 = vpack.c.bf16 %v2156, %v2154
      %v2161 = vunpack.c.l.b16 %v2157
      %v2162 = vunpack.c.l.b16 %v2158
      %v2163 = vunpack.c.h.b16 %v2157
      %v2164 = vunpack.c.h.b16 %v2158
      %v2165 = vpack.c.b16 %v2162, %v2161
      %v2166 = vpack.c.b16 %v2164, %v2163
      %2169 = vst [vmem:[#allocation2 + $0x80] sm:$0xff] %v2165
      %2170 = vst [vmem:[#allocation2 + $0x88] sm:$0xff] %v2166
      %2171 = vrot.lane.b32.xlu0 %v1816, 33
      %v2172 = vpop.permute.xlu0 %2171
      %2173 = vrot.lane.b32.xlu0 %v1818, 33
      %v2174 = vpop.permute.xlu0 %2173
      %2175 = vrot.lane.b32.xlu0 %v1817, 33
      %v2176 = vpop.permute.xlu0 %2175
      %2177 = vrot.lane.b32.xlu0 %v1819, 33
      %v2178 = vpop.permute.xlu0 %2177
      %vm2179 = vcmp.lt.s32.totalorder %v828, 33
      %v2180 = vsel %vm2179, %v2172, %v2176
      %v2181 = vsel %vm2179, %v2174, %v2178
      %v2182 = vsel %vm2179, %v2176, %v2172
      %v2183 = vsel %vm2179, %v2178, %v2174
      %v2184 = vlaneseq
      %v2185 = vshrl.u32 %v2184, 7
      %v2186 = vsub.s32 1, %v2185
      %v2187 = vrot.slane %v581, %v2186
      %v2188 = vlaneseq
      %v2189 = vshrl.u32 %v2188, 7
      %v2190 = vsub.s32 1, %v2189
      %v2191 = vrot.slane %v582, %v2190
      %v2192 = vmul.f32 %v2182, %v2187
      %v2193 = vmul.f32 %v2180, %v2191
      %v2194 = vmul.f32 %v2183, %v2187
      %v2195 = vmul.f32 %v2181, %v2191
      %v2196 = vpack.c.bf16 %v2194, %v2192
      %v2197 = vpack.c.bf16 %v2195, %v2193
      %v2200 = vunpack.c.l.b16 %v2196
      %v2201 = vunpack.c.l.b16 %v2197
      %v2202 = vunpack.c.h.b16 %v2196
      %v2203 = vunpack.c.h.b16 %v2197
      %v2204 = vpack.c.b16 %v2201, %v2200
      %v2205 = vpack.c.b16 %v2203, %v2202
      %2208 = vst [vmem:[#allocation2 + $0x90] sm:$0xff] %v2204
      %2209 = vst [vmem:[#allocation2 + $0x98] sm:$0xff] %v2205
      %2210 = vrot.lane.b32.xlu0 %v1816, 32
      %v2211 = vpop.permute.xlu0 %2210
      %2212 = vrot.lane.b32.xlu0 %v1818, 32
      %v2213 = vpop.permute.xlu0 %2212
      %2214 = vrot.lane.b32.xlu0 %v1817, 32
      %v2215 = vpop.permute.xlu0 %2214
      %2216 = vrot.lane.b32.xlu0 %v1819, 32
      %v2217 = vpop.permute.xlu0 %2216
      %vm2218 = vcmp.lt.s32.totalorder %v828, 32
      %v2219 = vsel %vm2218, %v2211, %v2215
      %v2220 = vsel %vm2218, %v2213, %v2217
      %v2221 = vsel %vm2218, %v2215, %v2211
      %v2222 = vsel %vm2218, %v2217, %v2213
      %v2223 = vlaneseq
      %v2224 = vshrl.u32 %v2223, 7
      %v2225 = vsub.s32 2, %v2224
      %v2226 = vrot.slane %v581, %v2225
      %v2227 = vlaneseq
      %v2228 = vshrl.u32 %v2227, 7
      %v2229 = vsub.s32 2, %v2228
      %v2230 = vrot.slane %v582, %v2229
      %v2231 = vmul.f32 %v2221, %v2226
      %v2232 = vmul.f32 %v2219, %v2230
      %v2233 = vmul.f32 %v2222, %v2226
      %v2234 = vmul.f32 %v2220, %v2230
      %v2235 = vpack.c.bf16 %v2233, %v2231
      %v2236 = vpack.c.bf16 %v2234, %v2232
      %v2239 = vunpack.c.l.b16 %v2235
      %v2240 = vunpack.c.l.b16 %v2236
      %v2241 = vunpack.c.h.b16 %v2235
      %v2242 = vunpack.c.h.b16 %v2236
      %v2243 = vpack.c.b16 %v2240, %v2239
      %v2244 = vpack.c.b16 %v2242, %v2241
      %2247 = vst [vmem:[#allocation2 + $0xa0] sm:$0xff] %v2243
      %2248 = vst [vmem:[#allocation2 + $0xa8] sm:$0xff] %v2244
      %2249 = vrot.lane.b32.xlu0 %v1816, 31
      %v2250 = vpop.permute.xlu0 %2249
      %2251 = vrot.lane.b32.xlu0 %v1818, 31
      %v2252 = vpop.permute.xlu0 %2251
      %2253 = vrot.lane.b32.xlu0 %v1817, 31
      %v2254 = vpop.permute.xlu0 %2253
      %2255 = vrot.lane.b32.xlu0 %v1819, 31
      %v2256 = vpop.permute.xlu0 %2255
      %vm2257 = vcmp.lt.s32.totalorder %v828, 31
      %v2258 = vsel %vm2257, %v2250, %v2254
      %v2259 = vsel %vm2257, %v2252, %v2256
      %v2260 = vsel %vm2257, %v2254, %v2250
      %v2261 = vsel %vm2257, %v2256, %v2252
      %v2262 = vlaneseq
      %v2263 = vshrl.u32 %v2262, 7
      %v2264 = vsub.s32 3, %v2263
      %v2265 = vrot.slane %v581, %v2264
      %v2266 = vlaneseq
      %v2267 = vshrl.u32 %v2266, 7
      %v2268 = vsub.s32 3, %v2267
      %v2269 = vrot.slane %v582, %v2268
      %v2270 = vmul.f32 %v2260, %v2265
      %v2271 = vmul.f32 %v2258, %v2269
      %v2272 = vmul.f32 %v2261, %v2265
      %v2273 = vmul.f32 %v2259, %v2269
      %v2274 = vpack.c.bf16 %v2272, %v2270
      %v2275 = vpack.c.bf16 %v2273, %v2271
      %v2278 = vunpack.c.l.b16 %v2274
      %v2279 = vunpack.c.l.b16 %v2275
      %v2280 = vunpack.c.h.b16 %v2274
      %v2281 = vunpack.c.h.b16 %v2275
      %v2282 = vpack.c.b16 %v2279, %v2278
      %v2283 = vpack.c.b16 %v2281, %v2280
      %2286 = vst [vmem:[#allocation2 + $0xb0] sm:$0xff] %v2282
      %2287 = vst [vmem:[#allocation2 + $0xb8] sm:$0xff] %v2283
      %2288 = vrot.lane.b32.xlu0 %v1816, 30
      %v2289 = vpop.permute.xlu0 %2288
      %2290 = vrot.lane.b32.xlu0 %v1818, 30
      %v2291 = vpop.permute.xlu0 %2290
      %2292 = vrot.lane.b32.xlu0 %v1817, 30
      %v2293 = vpop.permute.xlu0 %2292
      %2294 = vrot.lane.b32.xlu0 %v1819, 30
      %v2295 = vpop.permute.xlu0 %2294
      %vm2296 = vcmp.lt.s32.totalorder %v828, 30
      %v2297 = vsel %vm2296, %v2289, %v2293
      %v2298 = vsel %vm2296, %v2291, %v2295
      %v2299 = vsel %vm2296, %v2293, %v2289
      %v2300 = vsel %vm2296, %v2295, %v2291
      %v2301 = vlaneseq
      %v2302 = vshrl.u32 %v2301, 7
      %v2303 = vsub.s32 4, %v2302
      %v2304 = vrot.slane %v581, %v2303
      %v2305 = vlaneseq
      %v2306 = vshrl.u32 %v2305, 7
      %v2307 = vsub.s32 4, %v2306
      %v2308 = vrot.slane %v582, %v2307
      %v2309 = vmul.f32 %v2299, %v2304
      %v2310 = vmul.f32 %v2297, %v2308
      %v2311 = vmul.f32 %v2300, %v2304
      %v2312 = vmul.f32 %v2298, %v2308
      %v2313 = vpack.c.bf16 %v2311, %v2309
      %v2314 = vpack.c.bf16 %v2312, %v2310
      %v2317 = vunpack.c.l.b16 %v2313
      %v2318 = vunpack.c.l.b16 %v2314
      %v2319 = vunpack.c.h.b16 %v2313
      %v2320 = vunpack.c.h.b16 %v2314
      %v2321 = vpack.c.b16 %v2318, %v2317
      %v2322 = vpack.c.b16 %v2320, %v2319
      %2325 = vst [vmem:[#allocation2 + $0xc0] sm:$0xff] %v2321
      %2326 = vst [vmem:[#allocation2 + $0xc8] sm:$0xff] %v2322
      %2327 = vrot.lane.b32.xlu0 %v1816, 29
      %v2328 = vpop.permute.xlu0 %2327
      %2329 = vrot.lane.b32.xlu0 %v1818, 29
      %v2330 = vpop.permute.xlu0 %2329
      %2331 = vrot.lane.b32.xlu0 %v1817, 29
      %v2332 = vpop.permute.xlu0 %2331
      %2333 = vrot.lane.b32.xlu0 %v1819, 29
      %v2334 = vpop.permute.xlu0 %2333
      %vm2335 = vcmp.lt.s32.totalorder %v828, 29
      %v2336 = vsel %vm2335, %v2328, %v2332
      %v2337 = vsel %vm2335, %v2330, %v2334
      %v2338 = vsel %vm2335, %v2332, %v2328
      %v2339 = vsel %vm2335, %v2334, %v2330
      %v2340 = vlaneseq
      %v2341 = vshrl.u32 %v2340, 7
      %v2342 = vsub.s32 5, %v2341
      %v2343 = vrot.slane %v581, %v2342
      %v2344 = vlaneseq
      %v2345 = vshrl.u32 %v2344, 7
      %v2346 = vsub.s32 5, %v2345
      %v2347 = vrot.slane %v582, %v2346
      %v2348 = vmul.f32 %v2338, %v2343
      %v2349 = vmul.f32 %v2336, %v2347
      %v2350 = vmul.f32 %v2339, %v2343
      %v2351 = vmul.f32 %v2337, %v2347
      %v2352 = vpack.c.bf16 %v2350, %v2348
      %v2353 = vpack.c.bf16 %v2351, %v2349
      %v2356 = vunpack.c.l.b16 %v2352
      %v2357 = vunpack.c.l.b16 %v2353
      %v2358 = vunpack.c.h.b16 %v2352
      %v2359 = vunpack.c.h.b16 %v2353
      %v2360 = vpack.c.b16 %v2357, %v2356
      %v2361 = vpack.c.b16 %v2359, %v2358
      %2364 = vst [vmem:[#allocation2 + $0xd0] sm:$0xff] %v2360
      %2365 = vst [vmem:[#allocation2 + $0xd8] sm:$0xff] %v2361
      %2366 = vrot.lane.b32.xlu0 %v1816, 19
      %v2367 = vpop.permute.xlu0 %2366
      %2368 = vrot.lane.b32.xlu0 %v1818, 19
      %v2369 = vpop.permute.xlu0 %2368
      %2370 = vrot.lane.b32.xlu0 %v1817, 19
      %v2371 = vpop.permute.xlu0 %2370
      %2372 = vrot.lane.b32.xlu0 %v1819, 19
      %v2373 = vpop.permute.xlu0 %2372
      %vm2374 = vcmp.lt.s32.totalorder %v828, 19
      %v2375 = vsel %vm2374, %v2367, %v2371
      %v2376 = vsel %vm2374, %v2369, %v2373
      %v2377 = vsel %vm2374, %v2371, %v2367
      %v2378 = vsel %vm2374, %v2373, %v2369
      %v2379 = vlaneseq
      %v2380 = vshrl.u32 %v2379, 7
      %v2381 = vsub.s32 6, %v2380
      %v2382 = vrot.slane %v581, %v2381
      %v2383 = vlaneseq
      %v2384 = vshrl.u32 %v2383, 7
      %v2385 = vsub.s32 6, %v2384
      %v2386 = vrot.slane %v582, %v2385
      %v2387 = vmul.f32 %v2377, %v2382
      %v2388 = vmul.f32 %v2375, %v2386
      %v2389 = vmul.f32 %v2378, %v2382
      %v2390 = vmul.f32 %v2376, %v2386
      %v2391 = vpack.c.bf16 %v2389, %v2387
      %v2392 = vpack.c.bf16 %v2390, %v2388
      %v2395 = vunpack.c.l.b16 %v2391
      %v2396 = vunpack.c.l.b16 %v2392
      %v2397 = vunpack.c.h.b16 %v2391
      %v2398 = vunpack.c.h.b16 %v2392
      %v2399 = vpack.c.b16 %v2396, %v2395
      %v2400 = vpack.c.b16 %v2398, %v2397
      %2403 = vst [vmem:[#allocation2 + $0xe0] sm:$0xff] %v2399
      %2404 = vst [vmem:[#allocation2 + $0xe8] sm:$0xff] %v2400
      %2405 = vrot.lane.b32.xlu0 %v1816, 18
      %v2406 = vpop.permute.xlu0 %2405
      %2407 = vrot.lane.b32.xlu0 %v1818, 18
      %v2408 = vpop.permute.xlu0 %2407
      %2409 = vrot.lane.b32.xlu0 %v1817, 18
      %v2410 = vpop.permute.xlu0 %2409
      %2411 = vrot.lane.b32.xlu0 %v1819, 18
      %v2412 = vpop.permute.xlu0 %2411
      %vm2413 = vcmp.lt.s32.totalorder %v828, 18
      %v2414 = vsel %vm2413, %v2406, %v2410
      %v2415 = vsel %vm2413, %v2408, %v2412
      %v2416 = vsel %vm2413, %v2410, %v2406
      %v2417 = vsel %vm2413, %v2412, %v2408
      %v2418 = vlaneseq
      %v2419 = vshrl.u32 %v2418, 7
      %v2420 = vsub.s32 7, %v2419
      %v2421 = vrot.slane %v581, %v2420
      %v2422 = vlaneseq
      %v2423 = vshrl.u32 %v2422, 7
      %v2424 = vsub.s32 7, %v2423
      %v2425 = vrot.slane %v582, %v2424
      %v2426 = vmul.f32 %v2416, %v2421
      %v2427 = vmul.f32 %v2414, %v2425
      %v2428 = vmul.f32 %v2417, %v2421
      %v2429 = vmul.f32 %v2415, %v2425
      %v2430 = vpack.c.bf16 %v2428, %v2426
      %v2431 = vpack.c.bf16 %v2429, %v2427
      %v2434 = vunpack.c.l.b16 %v2430
      %v2435 = vunpack.c.l.b16 %v2431
      %v2436 = vunpack.c.h.b16 %v2430
      %v2437 = vunpack.c.h.b16 %v2431
      %v2438 = vpack.c.b16 %v2435, %v2434
      %v2439 = vpack.c.b16 %v2437, %v2436
      %2442 = vst [vmem:[#allocation2 + $0xf0] sm:$0xff] %v2438
      %2443 = vst [vmem:[#allocation2 + $0xf8] sm:$0xff] %v2439
      %2444 = vrot.lane.b32.xlu0 %v1816, 17
      %v2445 = vpop.permute.xlu0 %2444
      %2446 = vrot.lane.b32.xlu0 %v1818, 17
      %v2447 = vpop.permute.xlu0 %2446
      %2448 = vrot.lane.b32.xlu0 %v1817, 17
      %v2449 = vpop.permute.xlu0 %2448
      %2450 = vrot.lane.b32.xlu0 %v1819, 17
      %v2451 = vpop.permute.xlu0 %2450
      %v2452 = vsel %vm829, %v2445, %v2449
      %v2453 = vsel %vm829, %v2447, %v2451
      %v2454 = vsel %vm829, %v2449, %v2445
      %v2455 = vsel %vm829, %v2451, %v2447
      %v2456 = vmul.f32 %v2454, %v837
      %v2457 = vmul.f32 %v2452, %v841
      %v2458 = vmul.f32 %v2455, %v837
      %v2459 = vmul.f32 %v2453, %v841
      %v2460 = vpack.c.bf16 %v2458, %v2456
      %v2461 = vpack.c.bf16 %v2459, %v2457
      %v2464 = vunpack.c.l.b16 %v2460
      %v2465 = vunpack.c.l.b16 %v2461
      %v2466 = vunpack.c.h.b16 %v2460
      %v2467 = vunpack.c.h.b16 %v2461
      %v2468 = vpack.c.b16 %v2465, %v2464
      %v2469 = vpack.c.b16 %v2467, %v2466
      %2472 = vst [vmem:[#allocation2 + $0x100] sm:$0xff] %v2468
      %2473 = vst [vmem:[#allocation2 + $0x108] sm:$0xff] %v2469
      %2474 = vrot.lane.b32.xlu0 %v1816, 16
      %v2475 = vpop.permute.xlu0 %2474
      %2476 = vrot.lane.b32.xlu0 %v1818, 16
      %v2477 = vpop.permute.xlu0 %2476
      %2478 = vrot.lane.b32.xlu0 %v1817, 16
      %v2479 = vpop.permute.xlu0 %2478
      %2480 = vrot.lane.b32.xlu0 %v1819, 16
      %v2481 = vpop.permute.xlu0 %2480
      %v2482 = vsel %vm868, %v2475, %v2479
      %v2483 = vsel %vm868, %v2477, %v2481
      %v2484 = vsel %vm868, %v2479, %v2475
      %v2485 = vsel %vm868, %v2481, %v2477
      %v2486 = vmul.f32 %v2484, %v876
      %v2487 = vmul.f32 %v2482, %v880
      %v2488 = vmul.f32 %v2485, %v876
      %v2489 = vmul.f32 %v2483, %v880
      %v2490 = vpack.c.bf16 %v2488, %v2486
      %v2491 = vpack.c.bf16 %v2489, %v2487
      %v2494 = vunpack.c.l.b16 %v2490
      %v2495 = vunpack.c.l.b16 %v2491
      %v2496 = vunpack.c.h.b16 %v2490
      %v2497 = vunpack.c.h.b16 %v2491
      %v2498 = vpack.c.b16 %v2495, %v2494
      %v2499 = vpack.c.b16 %v2497, %v2496
      %2502 = vst [vmem:[#allocation2 + $0x110] sm:$0xff] %v2498
      %2503 = vst [vmem:[#allocation2 + $0x118] sm:$0xff] %v2499
      %2504 = vrot.lane.b32.xlu0 %v1816, 15
      %v2505 = vpop.permute.xlu0 %2504
      %2506 = vrot.lane.b32.xlu0 %v1818, 15
      %v2507 = vpop.permute.xlu0 %2506
      %2508 = vrot.lane.b32.xlu0 %v1817, 15
      %v2509 = vpop.permute.xlu0 %2508
      %2510 = vrot.lane.b32.xlu0 %v1819, 15
      %v2511 = vpop.permute.xlu0 %2510
      %v2512 = vsel %vm907, %v2505, %v2509
      %v2513 = vsel %vm907, %v2507, %v2511
      %v2514 = vsel %vm907, %v2509, %v2505
      %v2515 = vsel %vm907, %v2511, %v2507
      %v2516 = vmul.f32 %v2514, %v915
      %v2517 = vmul.f32 %v2512, %v919
      %v2518 = vmul.f32 %v2515, %v915
      %v2519 = vmul.f32 %v2513, %v919
      %v2520 = vpack.c.bf16 %v2518, %v2516
      %v2521 = vpack.c.bf16 %v2519, %v2517
      %v2524 = vunpack.c.l.b16 %v2520
      %v2525 = vunpack.c.l.b16 %v2521
      %v2526 = vunpack.c.h.b16 %v2520
      %v2527 = vunpack.c.h.b16 %v2521
      %v2528 = vpack.c.b16 %v2525, %v2524
      %v2529 = vpack.c.b16 %v2527, %v2526
      %2532 = vst [vmem:[#allocation2 + $0x120] sm:$0xff] %v2528
      %2533 = vst [vmem:[#allocation2 + $0x128] sm:$0xff] %v2529
      %2534 = vrot.lane.b32.xlu0 %v1816, 14
      %v2535 = vpop.permute.xlu0 %2534
      %2536 = vrot.lane.b32.xlu0 %v1818, 14
      %v2537 = vpop.permute.xlu0 %2536
      %2538 = vrot.lane.b32.xlu0 %v1817, 14
      %v2539 = vpop.permute.xlu0 %2538
      %2540 = vrot.lane.b32.xlu0 %v1819, 14
      %v2541 = vpop.permute.xlu0 %2540
      %vm2542 = vcmp.lt.s32.totalorder %v828, 14
      %v2543 = vsel %vm2542, %v2535, %v2539
      %v2544 = vsel %vm2542, %v2537, %v2541
      %v2545 = vsel %vm2542, %v2539, %v2535
      %v2546 = vsel %vm2542, %v2541, %v2537
      %v2547 = vlaneseq
      %v2548 = vshrl.u32 %v2547, 7
      %v2549 = vsub.s32 3, %v2548
      %v2550 = vrot.slane %v583, %v2549
      %v2551 = vlaneseq
      %v2552 = vshrl.u32 %v2551, 7
      %v2553 = vsub.s32 3, %v2552
      %v2554 = vrot.slane %v584, %v2553
      %v2555 = vmul.f32 %v2545, %v2550
      %v2556 = vmul.f32 %v2543, %v2554
      %v2557 = vmul.f32 %v2546, %v2550
      %v2558 = vmul.f32 %v2544, %v2554
      %v2559 = vpack.c.bf16 %v2557, %v2555
      %v2560 = vpack.c.bf16 %v2558, %v2556
      %v2563 = vunpack.c.l.b16 %v2559
      %v2564 = vunpack.c.l.b16 %v2560
      %v2565 = vunpack.c.h.b16 %v2559
      %v2566 = vunpack.c.h.b16 %v2560
      %v2567 = vpack.c.b16 %v2564, %v2563
      %v2568 = vpack.c.b16 %v2566, %v2565
      %2571 = vst [vmem:[#allocation2 + $0x130] sm:$0xff] %v2567
      %2572 = vst [vmem:[#allocation2 + $0x138] sm:$0xff] %v2568
      %2573 = vrot.lane.b32.xlu0 %v1816, 13
      %v2574 = vpop.permute.xlu0 %2573
      %2575 = vrot.lane.b32.xlu0 %v1818, 13
      %v2576 = vpop.permute.xlu0 %2575
      %2577 = vrot.lane.b32.xlu0 %v1817, 13
      %v2578 = vpop.permute.xlu0 %2577
      %2579 = vrot.lane.b32.xlu0 %v1819, 13
      %v2580 = vpop.permute.xlu0 %2579
      %vm2581 = vcmp.lt.s32.totalorder %v828, 13
      %v2582 = vsel %vm2581, %v2574, %v2578
      %v2583 = vsel %vm2581, %v2576, %v2580
      %v2584 = vsel %vm2581, %v2578, %v2574
      %v2585 = vsel %vm2581, %v2580, %v2576
      %v2586 = vlaneseq
      %v2587 = vshrl.u32 %v2586, 7
      %v2588 = vsub.s32 4, %v2587
      %v2589 = vrot.slane %v583, %v2588
      %v2590 = vlaneseq
      %v2591 = vshrl.u32 %v2590, 7
      %v2592 = vsub.s32 4, %v2591
      %v2593 = vrot.slane %v584, %v2592
      %v2594 = vmul.f32 %v2584, %v2589
      %v2595 = vmul.f32 %v2582, %v2593
      %v2596 = vmul.f32 %v2585, %v2589
      %v2597 = vmul.f32 %v2583, %v2593
      %v2598 = vpack.c.bf16 %v2596, %v2594
      %v2599 = vpack.c.bf16 %v2597, %v2595
      %v2602 = vunpack.c.l.b16 %v2598
      %v2603 = vunpack.c.l.b16 %v2599
      %v2604 = vunpack.c.h.b16 %v2598
      %v2605 = vunpack.c.h.b16 %v2599
      %v2606 = vpack.c.b16 %v2603, %v2602
      %v2607 = vpack.c.b16 %v2605, %v2604
      %2610 = vst [vmem:[#allocation2 + $0x140] sm:$0xff] %v2606
      %2611 = vst [vmem:[#allocation2 + $0x148] sm:$0xff] %v2607
      %2612 = vrot.lane.b32.xlu0 %v1816, 3
      %v2613 = vpop.permute.xlu0 %2612
      %2614 = vrot.lane.b32.xlu0 %v1818, 3
      %v2615 = vpop.permute.xlu0 %2614
      %2616 = vrot.lane.b32.xlu0 %v1817, 3
      %v2617 = vpop.permute.xlu0 %2616
      %2618 = vrot.lane.b32.xlu0 %v1819, 3
      %v2619 = vpop.permute.xlu0 %2618
      %vm2620 = vcmp.lt.s32.totalorder %v828, 3
      %v2621 = vsel %vm2620, %v2613, %v2617
      %v2622 = vsel %vm2620, %v2615, %v2619
      %v2623 = vsel %vm2620, %v2617, %v2613
      %v2624 = vsel %vm2620, %v2619, %v2615
      %v2625 = vlaneseq
      %v2626 = vshrl.u32 %v2625, 7
      %v2627 = vsub.s32 5, %v2626
      %v2628 = vrot.slane %v583, %v2627
      %v2629 = vlaneseq
      %v2630 = vshrl.u32 %v2629, 7
      %v2631 = vsub.s32 5, %v2630
      %v2632 = vrot.slane %v584, %v2631
      %v2633 = vmul.f32 %v2623, %v2628
      %v2634 = vmul.f32 %v2621, %v2632
      %v2635 = vmul.f32 %v2624, %v2628
      %v2636 = vmul.f32 %v2622, %v2632
      %v2637 = vpack.c.bf16 %v2635, %v2633
      %v2638 = vpack.c.bf16 %v2636, %v2634
      %v2641 = vunpack.c.l.b16 %v2637
      %v2642 = vunpack.c.l.b16 %v2638
      %v2643 = vunpack.c.h.b16 %v2637
      %v2644 = vunpack.c.h.b16 %v2638
      %v2645 = vpack.c.b16 %v2642, %v2641
      %v2646 = vpack.c.b16 %v2644, %v2643
      %2649 = vst [vmem:[#allocation2 + $0x150] sm:$0xff] %v2645
      %2650 = vst [vmem:[#allocation2 + $0x158] sm:$0xff] %v2646
      %2651 = vrot.lane.b32.xlu0 %v1816, 2
      %v2652 = vpop.permute.xlu0 %2651
      %2653 = vrot.lane.b32.xlu0 %v1818, 2
      %v2654 = vpop.permute.xlu0 %2653
      %2655 = vrot.lane.b32.xlu0 %v1817, 2
      %v2656 = vpop.permute.xlu0 %2655
      %2657 = vrot.lane.b32.xlu0 %v1819, 2
      %v2658 = vpop.permute.xlu0 %2657
      %vm2659 = vcmp.lt.s32.totalorder %v828, 2
      %v2660 = vsel %vm2659, %v2652, %v2656
      %v2661 = vsel %vm2659, %v2654, %v2658
      %v2662 = vsel %vm2659, %v2656, %v2652
      %v2663 = vsel %vm2659, %v2658, %v2654
      %v2664 = vlaneseq
      %v2665 = vshrl.u32 %v2664, 7
      %v2666 = vsub.s32 6, %v2665
      %v2667 = vrot.slane %v583, %v2666
      %v2668 = vlaneseq
      %v2669 = vshrl.u32 %v2668, 7
      %v2670 = vsub.s32 6, %v2669
      %v2671 = vrot.slane %v584, %v2670
      %v2672 = vmul.f32 %v2662, %v2667
      %v2673 = vmul.f32 %v2660, %v2671
      %v2674 = vmul.f32 %v2663, %v2667
      %v2675 = vmul.f32 %v2661, %v2671
      %v2676 = vpack.c.bf16 %v2674, %v2672
      %v2677 = vpack.c.bf16 %v2675, %v2673
      %v2680 = vunpack.c.l.b16 %v2676
      %v2681 = vunpack.c.l.b16 %v2677
      %v2682 = vunpack.c.h.b16 %v2676
      %v2683 = vunpack.c.h.b16 %v2677
      %v2684 = vpack.c.b16 %v2681, %v2680
      %v2685 = vpack.c.b16 %v2683, %v2682
      %2688 = vst [vmem:[#allocation2 + $0x160] sm:$0xff] %v2684
      %2689 = vst [vmem:[#allocation2 + $0x168] sm:$0xff] %v2685
      %2690 = vrot.lane.b32.xlu0 %v1816, 1
      %v2691 = vpop.permute.xlu0 %2690
      %2692 = vrot.lane.b32.xlu0 %v1818, 1
      %v2693 = vpop.permute.xlu0 %2692
      %2694 = vrot.lane.b32.xlu0 %v1817, 1
      %v2695 = vpop.permute.xlu0 %2694
      %2696 = vrot.lane.b32.xlu0 %v1819, 1
      %v2697 = vpop.permute.xlu0 %2696
      %v2698 = vsel %vm946, %v2691, %v2695
      %v2699 = vsel %vm946, %v2693, %v2697
      %v2700 = vsel %vm946, %v2695, %v2691
      %v2701 = vsel %vm946, %v2697, %v2693
      %v2702 = vmul.f32 %v2700, %v954
      %v2703 = vmul.f32 %v2698, %v958
      %v2704 = vmul.f32 %v2701, %v954
      %v2705 = vmul.f32 %v2699, %v958
      %v2706 = vpack.c.bf16 %v2704, %v2702
      %v2707 = vpack.c.bf16 %v2705, %v2703
      %v2710 = vunpack.c.l.b16 %v2706
      %v2711 = vunpack.c.l.b16 %v2707
      %v2712 = vunpack.c.h.b16 %v2706
      %v2713 = vunpack.c.h.b16 %v2707
      %v2714 = vpack.c.b16 %v2711, %v2710
      %v2715 = vpack.c.b16 %v2713, %v2712
      %2718 = vst [vmem:[#allocation2 + $0x170] sm:$0xff] %v2714
      %2719 = vst [vmem:[#allocation2 + $0x178] sm:$0xff] %v2715
      %v2720 = vmul.f32 %v1816, %v980
      %v2721 = vmul.f32 %v1817, %v984
      %v2722 = vmul.f32 %v1818, %v980
      %v2723 = vmul.f32 %v1819, %v984
      %v2724 = vpack.c.bf16 %v2722, %v2720
      %v2725 = vpack.c.bf16 %v2723, %v2721
      %v2728 = vunpack.c.l.b16 %v2724
      %v2729 = vunpack.c.l.b16 %v2725
      %v2730 = vunpack.c.h.b16 %v2724
      %v2731 = vunpack.c.h.b16 %v2725
      %v2732 = vpack.c.b16 %v2729, %v2728
      %v2733 = vpack.c.b16 %v2731, %v2730
      %2736 = vst [vmem:[#allocation2 + $0x180] sm:$0xff] %v2732
      %2737 = vst [vmem:[#allocation2 + $0x188] sm:$0xff] %v2733
      %2738 = vrot.lane.b32.xlu0 %v1816, 127
      %v2739 = vpop.permute.xlu0 %2738
      %2740 = vrot.lane.b32.xlu0 %v1818, 127
      %v2741 = vpop.permute.xlu0 %2740
      %2742 = vrot.lane.b32.xlu0 %v1817, 127
      %v2743 = vpop.permute.xlu0 %2742
      %2744 = vrot.lane.b32.xlu0 %v1819, 127
      %v2745 = vpop.permute.xlu0 %2744
      %v2746 = vsel %vm1011, %v2739, %v2743
      %v2747 = vsel %vm1011, %v2741, %v2745
      %v2748 = vsel %vm1011, %v2743, %v2739
      %v2749 = vsel %vm1011, %v2745, %v2741
      %v2750 = vmul.f32 %v2746, %v1019
      %v2751 = vmul.f32 %v2748, %v1023
      %v2752 = vmul.f32 %v2747, %v1019
      %v2753 = vmul.f32 %v2749, %v1023
      %v2754 = vpack.c.bf16 %v2752, %v2750
      %v2755 = vpack.c.bf16 %v2753, %v2751
      %v2758 = vunpack.c.l.b16 %v2754
      %v2759 = vunpack.c.l.b16 %v2755
      %v2760 = vunpack.c.h.b16 %v2754
      %v2761 = vunpack.c.h.b16 %v2755
      %v2762 = vpack.c.b16 %v2759, %v2758
      %v2763 = vpack.c.b16 %v2761, %v2760
      %2766 = vst [vmem:[#allocation2 + $0x190] sm:$0xff] %v2762
      %2767 = vst [vmem:[#allocation2 + $0x198] sm:$0xff] %v2763
      %2768 = vrot.lane.b32.xlu0 %v1816, 126
      %v2769 = vpop.permute.xlu0 %2768
      %2770 = vrot.lane.b32.xlu0 %v1818, 126
      %v2771 = vpop.permute.xlu0 %2770
      %2772 = vrot.lane.b32.xlu0 %v1817, 126
      %v2773 = vpop.permute.xlu0 %2772
      %2774 = vrot.lane.b32.xlu0 %v1819, 126
      %v2775 = vpop.permute.xlu0 %2774
      %vm2776 = vcmp.lt.s32.totalorder %v828, 126
      %v2777 = vsel %vm2776, %v2769, %v2773
      %v2778 = vsel %vm2776, %v2771, %v2775
      %v2779 = vsel %vm2776, %v2773, %v2769
      %v2780 = vsel %vm2776, %v2775, %v2771
      %v2781 = vlaneseq
      %v2782 = vshrl.u32 %v2781, 7
      %v2783 = vsub.s32 2, %v2782
      %v2784 = vrot.slane %v585, %v2783
      %v2785 = vlaneseq
      %v2786 = vshrl.u32 %v2785, 7
      %v2787 = vsub.s32 2, %v2786
      %v2788 = vrot.slane %v586, %v2787
      %v2789 = vmul.f32 %v2777, %v2784
      %v2790 = vmul.f32 %v2779, %v2788
      %v2791 = vmul.f32 %v2778, %v2784
      %v2792 = vmul.f32 %v2780, %v2788
      %v2793 = vpack.c.bf16 %v2791, %v2789
      %v2794 = vpack.c.bf16 %v2792, %v2790
      %v2797 = vunpack.c.l.b16 %v2793
      %v2798 = vunpack.c.l.b16 %v2794
      %v2799 = vunpack.c.h.b16 %v2793
      %v2800 = vunpack.c.h.b16 %v2794
      %v2801 = vpack.c.b16 %v2798, %v2797
      %v2802 = vpack.c.b16 %v2800, %v2799
      %2805 = vst [vmem:[#allocation2 + $0x1a0] sm:$0xff] %v2801
      %2806 = vst [vmem:[#allocation2 + $0x1a8] sm:$0xff] %v2802
      %2807 = vrot.lane.b32.xlu0 %v1816, 125
      %v2808 = vpop.permute.xlu0 %2807
      %2809 = vrot.lane.b32.xlu0 %v1818, 125
      %v2810 = vpop.permute.xlu0 %2809
      %2811 = vrot.lane.b32.xlu0 %v1817, 125
      %v2812 = vpop.permute.xlu0 %2811
      %2813 = vrot.lane.b32.xlu0 %v1819, 125
      %v2814 = vpop.permute.xlu0 %2813
      %vm2815 = vcmp.lt.s32.totalorder %v828, 125
      %v2816 = vsel %vm2815, %v2808, %v2812
      %v2817 = vsel %vm2815, %v2810, %v2814
      %v2818 = vsel %vm2815, %v2812, %v2808
      %v2819 = vsel %vm2815, %v2814, %v2810
      %v2820 = vlaneseq
      %v2821 = vshrl.u32 %v2820, 7
      %v2822 = vsub.s32 3, %v2821
      %v2823 = vrot.slane %v585, %v2822
      %v2824 = vlaneseq
      %v2825 = vshrl.u32 %v2824, 7
      %v2826 = vsub.s32 3, %v2825
      %v2827 = vrot.slane %v586, %v2826
      %v2828 = vmul.f32 %v2816, %v2823
      %v2829 = vmul.f32 %v2818, %v2827
      %v2830 = vmul.f32 %v2817, %v2823
      %v2831 = vmul.f32 %v2819, %v2827
      %v2832 = vpack.c.bf16 %v2830, %v2828
      %v2833 = vpack.c.bf16 %v2831, %v2829
      %v2836 = vunpack.c.l.b16 %v2832
      %v2837 = vunpack.c.l.b16 %v2833
      %v2838 = vunpack.c.h.b16 %v2832
      %v2839 = vunpack.c.h.b16 %v2833
      %v2840 = vpack.c.b16 %v2837, %v2836
      %v2841 = vpack.c.b16 %v2839, %v2838
      %2844 = vst [vmem:[#allocation2 + $0x1b0] sm:$0xff] %v2840
      %2845 = vst [vmem:[#allocation2 + $0x1b8] sm:$0xff] %v2841
      %2846 = vrot.lane.b32.xlu0 %v1816, 115
      %v2847 = vpop.permute.xlu0 %2846
      %2848 = vrot.lane.b32.xlu0 %v1818, 115
      %v2849 = vpop.permute.xlu0 %2848
      %2850 = vrot.lane.b32.xlu0 %v1817, 115
      %v2851 = vpop.permute.xlu0 %2850
      %2852 = vrot.lane.b32.xlu0 %v1819, 115
      %v2853 = vpop.permute.xlu0 %2852
      %vm2854 = vcmp.lt.s32.totalorder %v828, 115
      %v2855 = vsel %vm2854, %v2847, %v2851
      %v2856 = vsel %vm2854, %v2849, %v2853
      %v2857 = vsel %vm2854, %v2851, %v2847
      %v2858 = vsel %vm2854, %v2853, %v2849
      %v2859 = vlaneseq
      %v2860 = vshrl.u32 %v2859, 7
      %v2861 = vsub.s32 4, %v2860
      %v2862 = vrot.slane %v585, %v2861
      %v2863 = vlaneseq
      %v2864 = vshrl.u32 %v2863, 7
      %v2865 = vsub.s32 4, %v2864
      %v2866 = vrot.slane %v586, %v2865
      %v2867 = vmul.f32 %v2855, %v2862
      %v2868 = vmul.f32 %v2857, %v2866
      %v2869 = vmul.f32 %v2856, %v2862
      %v2870 = vmul.f32 %v2858, %v2866
      %v2871 = vpack.c.bf16 %v2869, %v2867
      %v2872 = vpack.c.bf16 %v2870, %v2868
      %v2875 = vunpack.c.l.b16 %v2871
      %v2876 = vunpack.c.l.b16 %v2872
      %v2877 = vunpack.c.h.b16 %v2871
      %v2878 = vunpack.c.h.b16 %v2872
      %v2879 = vpack.c.b16 %v2876, %v2875
      %v2880 = vpack.c.b16 %v2878, %v2877
      %2883 = vst [vmem:[#allocation2 + $0x1c0] sm:$0xff] %v2879
      %2884 = vst [vmem:[#allocation2 + $0x1c8] sm:$0xff] %v2880
      %2885 = vrot.lane.b32.xlu0 %v1816, 114
      %v2886 = vpop.permute.xlu0 %2885
      %2887 = vrot.lane.b32.xlu0 %v1818, 114
      %v2888 = vpop.permute.xlu0 %2887
      %2889 = vrot.lane.b32.xlu0 %v1817, 114
      %v2890 = vpop.permute.xlu0 %2889
      %2891 = vrot.lane.b32.xlu0 %v1819, 114
      %v2892 = vpop.permute.xlu0 %2891
      %vm2893 = vcmp.lt.s32.totalorder %v828, 114
      %v2894 = vsel %vm2893, %v2886, %v2890
      %v2895 = vsel %vm2893, %v2888, %v2892
      %v2896 = vsel %vm2893, %v2890, %v2886
      %v2897 = vsel %vm2893, %v2892, %v2888
      %v2898 = vlaneseq
      %v2899 = vshrl.u32 %v2898, 7
      %v2900 = vsub.s32 5, %v2899
      %v2901 = vrot.slane %v585, %v2900
      %v2902 = vlaneseq
      %v2903 = vshrl.u32 %v2902, 7
      %v2904 = vsub.s32 5, %v2903
      %v2905 = vrot.slane %v586, %v2904
      %v2906 = vmul.f32 %v2894, %v2901
      %v2907 = vmul.f32 %v2896, %v2905
      %v2908 = vmul.f32 %v2895, %v2901
      %v2909 = vmul.f32 %v2897, %v2905
      %v2910 = vpack.c.bf16 %v2908, %v2906
      %v2911 = vpack.c.bf16 %v2909, %v2907
      %v2914 = vunpack.c.l.b16 %v2910
      %v2915 = vunpack.c.l.b16 %v2911
      %v2916 = vunpack.c.h.b16 %v2910
      %v2917 = vunpack.c.h.b16 %v2911
      %v2918 = vpack.c.b16 %v2915, %v2914
      %v2919 = vpack.c.b16 %v2917, %v2916
      %2922 = vst [vmem:[#allocation2 + $0x1d0] sm:$0xff] %v2918
      %2923 = vst [vmem:[#allocation2 + $0x1d8] sm:$0xff] %v2919
      %2924 = vrot.lane.b32.xlu0 %v1816, 113
      %v2925 = vpop.permute.xlu0 %2924
      %2926 = vrot.lane.b32.xlu0 %v1818, 113
      %v2927 = vpop.permute.xlu0 %2926
      %2928 = vrot.lane.b32.xlu0 %v1817, 113
      %v2929 = vpop.permute.xlu0 %2928
      %2930 = vrot.lane.b32.xlu0 %v1819, 113
      %v2931 = vpop.permute.xlu0 %2930
      %v2932 = vsel %vm1050, %v2925, %v2929
      %v2933 = vsel %vm1050, %v2927, %v2931
      %v2934 = vsel %vm1050, %v2929, %v2925
      %v2935 = vsel %vm1050, %v2931, %v2927
      %v2936 = vmul.f32 %v2932, %v1058
      %v2937 = vmul.f32 %v2934, %v1062
      %v2938 = vmul.f32 %v2933, %v1058
      %v2939 = vmul.f32 %v2935, %v1062
      %v2940 = vpack.c.bf16 %v2938, %v2936
      %v2941 = vpack.c.bf16 %v2939, %v2937
      %v2944 = vunpack.c.l.b16 %v2940
      %v2945 = vunpack.c.l.b16 %v2941
      %v2946 = vunpack.c.h.b16 %v2940
      %v2947 = vunpack.c.h.b16 %v2941
      %v2948 = vpack.c.b16 %v2945, %v2944
      %v2949 = vpack.c.b16 %v2947, %v2946
      %2952 = vst [vmem:[#allocation2 + $0x1e0] sm:$0xff] %v2948
      %2953 = vst [vmem:[#allocation2 + $0x1e8] sm:$0xff] %v2949
      %2954 = vrot.lane.b32.xlu0 %v1816, 112
      %v2955 = vpop.permute.xlu0 %2954
      %2956 = vrot.lane.b32.xlu0 %v1818, 112
      %v2957 = vpop.permute.xlu0 %2956
      %2958 = vrot.lane.b32.xlu0 %v1817, 112
      %v2959 = vpop.permute.xlu0 %2958
      %2960 = vrot.lane.b32.xlu0 %v1819, 112
      %v2961 = vpop.permute.xlu0 %2960
      %v2962 = vsel %vm1089, %v2955, %v2959
      %v2963 = vsel %vm1089, %v2957, %v2961
      %v2964 = vsel %vm1089, %v2959, %v2955
      %v2965 = vsel %vm1089, %v2961, %v2957
      %v2966 = vmul.f32 %v2962, %v1097
      %v2967 = vmul.f32 %v2964, %v1101
      %v2968 = vmul.f32 %v2963, %v1097
      %v2969 = vmul.f32 %v2965, %v1101
      %v2970 = vpack.c.bf16 %v2968, %v2966
      %v2971 = vpack.c.bf16 %v2969, %v2967
      %v2974 = vunpack.c.l.b16 %v2970
      %v2975 = vunpack.c.l.b16 %v2971
      %v2976 = vunpack.c.h.b16 %v2970
      %v2977 = vunpack.c.h.b16 %v2971
      %v2978 = vpack.c.b16 %v2975, %v2974
      %v2979 = vpack.c.b16 %v2977, %v2976
      %2982 = vst [vmem:[#allocation2 + $0x1f0] sm:$0xff] %v2978
      %2983 = vst [vmem:[#allocation2 + $0x1f8] sm:$0xff] %v2979
      %2984 = vrot.lane.b32.xlu0 %v1816, 111
      %v2985 = vpop.permute.xlu0 %2984
      %2986 = vrot.lane.b32.xlu0 %v1818, 111
      %v2987 = vpop.permute.xlu0 %2986
      %2988 = vrot.lane.b32.xlu0 %v1817, 111
      %v2989 = vpop.permute.xlu0 %2988
      %2990 = vrot.lane.b32.xlu0 %v1819, 111
      %v2991 = vpop.permute.xlu0 %2990
      %v2992 = vsel %vm1128, %v2985, %v2989
      %v2993 = vsel %vm1128, %v2987, %v2991
      %v2994 = vsel %vm1128, %v2989, %v2985
      %v2995 = vsel %vm1128, %v2991, %v2987
      %v2996 = vmul.f32 %v2992, %v1136
      %v2997 = vmul.f32 %v2994, %v1140
      %v2998 = vmul.f32 %v2993, %v1136
      %v2999 = vmul.f32 %v2995, %v1140
      %v3000 = vpack.c.bf16 %v2998, %v2996
      %v3001 = vpack.c.bf16 %v2999, %v2997
      %v3004 = vunpack.c.l.b16 %v3000
      %v3005 = vunpack.c.l.b16 %v3001
      %v3006 = vunpack.c.h.b16 %v3000
      %v3007 = vunpack.c.h.b16 %v3001
      %v3008 = vpack.c.b16 %v3005, %v3004
      %v3009 = vpack.c.b16 %v3007, %v3006
      %3012 = vst [vmem:[#allocation2 + $0x200] sm:$0xff] %v3008
      %3013 = vst [vmem:[#allocation2 + $0x208] sm:$0xff] %v3009
      %3014 = vrot.lane.b32.xlu0 %v1816, 110
      %v3015 = vpop.permute.xlu0 %3014
      %3016 = vrot.lane.b32.xlu0 %v1818, 110
      %v3017 = vpop.permute.xlu0 %3016
      %3018 = vrot.lane.b32.xlu0 %v1817, 110
      %v3019 = vpop.permute.xlu0 %3018
      %3020 = vrot.lane.b32.xlu0 %v1819, 110
      %v3021 = vpop.permute.xlu0 %3020
      %vm3022 = vcmp.lt.s32.totalorder %v828, 110
      %v3023 = vsel %vm3022, %v3015, %v3019
      %v3024 = vsel %vm3022, %v3017, %v3021
      %v3025 = vsel %vm3022, %v3019, %v3015
      %v3026 = vsel %vm3022, %v3021, %v3017
      %v3027 = vlaneseq
      %v3028 = vshrl.u32 %v3027, 7
      %v3029 = vsub.s32 1, %v3028
      %v3030 = vrot.slane %v587, %v3029
      %v3031 = vlaneseq
      %v3032 = vshrl.u32 %v3031, 7
      %v3033 = vsub.s32 1, %v3032
      %v3034 = vrot.slane %v588, %v3033
      %v3035 = vmul.f32 %v3023, %v3030
      %v3036 = vmul.f32 %v3025, %v3034
      %v3037 = vmul.f32 %v3024, %v3030
      %v3038 = vmul.f32 %v3026, %v3034
      %v3039 = vpack.c.bf16 %v3037, %v3035
      %v3040 = vpack.c.bf16 %v3038, %v3036
      %v3043 = vunpack.c.l.b16 %v3039
      %v3044 = vunpack.c.l.b16 %v3040
      %v3045 = vunpack.c.h.b16 %v3039
      %v3046 = vunpack.c.h.b16 %v3040
      %v3047 = vpack.c.b16 %v3044, %v3043
      %v3048 = vpack.c.b16 %v3046, %v3045
      %3051 = vst [vmem:[#allocation2 + $0x210] sm:$0xff] %v3047
      %3052 = vst [vmem:[#allocation2 + $0x218] sm:$0xff] %v3048
      %3053 = vrot.lane.b32.xlu0 %v1816, 109
      %v3054 = vpop.permute.xlu0 %3053
      %3055 = vrot.lane.b32.xlu0 %v1818, 109
      %v3056 = vpop.permute.xlu0 %3055
      %3057 = vrot.lane.b32.xlu0 %v1817, 109
      %v3058 = vpop.permute.xlu0 %3057
      %3059 = vrot.lane.b32.xlu0 %v1819, 109
      %v3060 = vpop.permute.xlu0 %3059
      %vm3061 = vcmp.lt.s32.totalorder %v828, 109
      %v3062 = vsel %vm3061, %v3054, %v3058
      %v3063 = vsel %vm3061, %v3056, %v3060
      %v3064 = vsel %vm3061, %v3058, %v3054
      %v3065 = vsel %vm3061, %v3060, %v3056
      %v3066 = vlaneseq
      %v3067 = vshrl.u32 %v3066, 7
      %v3068 = vsub.s32 2, %v3067
      %v3069 = vrot.slane %v587, %v3068
      %v3070 = vlaneseq
      %v3071 = vshrl.u32 %v3070, 7
      %v3072 = vsub.s32 2, %v3071
      %v3073 = vrot.slane %v588, %v3072
      %v3074 = vmul.f32 %v3062, %v3069
      %v3075 = vmul.f32 %v3064, %v3073
      %v3076 = vmul.f32 %v3063, %v3069
      %v3077 = vmul.f32 %v3065, %v3073
      %v3078 = vpack.c.bf16 %v3076, %v3074
      %v3079 = vpack.c.bf16 %v3077, %v3075
      %v3082 = vunpack.c.l.b16 %v3078
      %v3083 = vunpack.c.l.b16 %v3079
      %v3084 = vunpack.c.h.b16 %v3078
      %v3085 = vunpack.c.h.b16 %v3079
      %v3086 = vpack.c.b16 %v3083, %v3082
      %v3087 = vpack.c.b16 %v3085, %v3084
      %3090 = vst [vmem:[#allocation2 + $0x220] sm:$0xff] %v3086
      %3091 = vst [vmem:[#allocation2 + $0x228] sm:$0xff] %v3087
      %3092 = vrot.lane.b32.xlu0 %v1816, 99
      %v3093 = vpop.permute.xlu0 %3092
      %3094 = vrot.lane.b32.xlu0 %v1818, 99
      %v3095 = vpop.permute.xlu0 %3094
      %3096 = vrot.lane.b32.xlu0 %v1817, 99
      %v3097 = vpop.permute.xlu0 %3096
      %3098 = vrot.lane.b32.xlu0 %v1819, 99
      %v3099 = vpop.permute.xlu0 %3098
      %vm3100 = vcmp.lt.s32.totalorder %v828, 99
      %v3101 = vsel %vm3100, %v3093, %v3097
      %v3102 = vsel %vm3100, %v3095, %v3099
      %v3103 = vsel %vm3100, %v3097, %v3093
      %v3104 = vsel %vm3100, %v3099, %v3095
      %v3105 = vlaneseq
      %v3106 = vshrl.u32 %v3105, 7
      %v3107 = vsub.s32 3, %v3106
      %v3108 = vrot.slane %v587, %v3107
      %v3109 = vlaneseq
      %v3110 = vshrl.u32 %v3109, 7
      %v3111 = vsub.s32 3, %v3110
      %v3112 = vrot.slane %v588, %v3111
      %v3113 = vmul.f32 %v3101, %v3108
      %v3114 = vmul.f32 %v3103, %v3112
      %v3115 = vmul.f32 %v3102, %v3108
      %v3116 = vmul.f32 %v3104, %v3112
      %v3117 = vpack.c.bf16 %v3115, %v3113
      %v3118 = vpack.c.bf16 %v3116, %v3114
      %v3121 = vunpack.c.l.b16 %v3117
      %v3122 = vunpack.c.l.b16 %v3118
      %v3123 = vunpack.c.h.b16 %v3117
      %v3124 = vunpack.c.h.b16 %v3118
      %v3125 = vpack.c.b16 %v3122, %v3121
      %v3126 = vpack.c.b16 %v3124, %v3123
      %3129 = vst [vmem:[#allocation2 + $0x230] sm:$0xff] %v3125
      %3130 = vst [vmem:[#allocation2 + $0x238] sm:$0xff] %v3126
      %3131 = vrot.lane.b32.xlu0 %v1816, 98
      %v3132 = vpop.permute.xlu0 %3131
      %3133 = vrot.lane.b32.xlu0 %v1818, 98
      %v3134 = vpop.permute.xlu0 %3133
      %3135 = vrot.lane.b32.xlu0 %v1817, 98
      %v3136 = vpop.permute.xlu0 %3135
      %3137 = vrot.lane.b32.xlu0 %v1819, 98
      %v3138 = vpop.permute.xlu0 %3137
      %vm3139 = vcmp.lt.s32.totalorder %v828, 98
      %v3140 = vsel %vm3139, %v3132, %v3136
      %v3141 = vsel %vm3139, %v3134, %v3138
      %v3142 = vsel %vm3139, %v3136, %v3132
      %v3143 = vsel %vm3139, %v3138, %v3134
      %v3144 = vlaneseq
      %v3145 = vshrl.u32 %v3144, 7
      %v3146 = vsub.s32 4, %v3145
      %v3147 = vrot.slane %v587, %v3146
      %v3148 = vlaneseq
      %v3149 = vshrl.u32 %v3148, 7
      %v3150 = vsub.s32 4, %v3149
      %v3151 = vrot.slane %v588, %v3150
      %v3152 = vmul.f32 %v3140, %v3147
      %v3153 = vmul.f32 %v3142, %v3151
      %v3154 = vmul.f32 %v3141, %v3147
      %v3155 = vmul.f32 %v3143, %v3151
      %v3156 = vpack.c.bf16 %v3154, %v3152
      %v3157 = vpack.c.bf16 %v3155, %v3153
      %v3160 = vunpack.c.l.b16 %v3156
      %v3161 = vunpack.c.l.b16 %v3157
      %v3162 = vunpack.c.h.b16 %v3156
      %v3163 = vunpack.c.h.b16 %v3157
      %v3164 = vpack.c.b16 %v3161, %v3160
      %v3165 = vpack.c.b16 %v3163, %v3162
      %3168 = vst [vmem:[#allocation2 + $0x240] sm:$0xff] %v3164
      %3169 = vst [vmem:[#allocation2 + $0x248] sm:$0xff] %v3165
      %3170 = vrot.lane.b32.xlu0 %v1816, 97
      %v3171 = vpop.permute.xlu0 %3170
      %3172 = vrot.lane.b32.xlu0 %v1818, 97
      %v3173 = vpop.permute.xlu0 %3172
      %3174 = vrot.lane.b32.xlu0 %v1817, 97
      %v3175 = vpop.permute.xlu0 %3174
      %3176 = vrot.lane.b32.xlu0 %v1819, 97
      %v3177 = vpop.permute.xlu0 %3176
      %vm3178 = vcmp.lt.s32.totalorder %v828, 97
      %v3179 = vsel %vm3178, %v3171, %v3175
      %v3180 = vsel %vm3178, %v3173, %v3177
      %v3181 = vsel %vm3178, %v3175, %v3171
      %v3182 = vsel %vm3178, %v3177, %v3173
      %v3183 = vlaneseq
      %v3184 = vshrl.u32 %v3183, 7
      %v3185 = vsub.s32 5, %v3184
      %v3186 = vrot.slane %v587, %v3185
      %v3187 = vlaneseq
      %v3188 = vshrl.u32 %v3187, 7
      %v3189 = vsub.s32 5, %v3188
      %v3190 = vrot.slane %v588, %v3189
      %v3191 = vmul.f32 %v3179, %v3186
      %v3192 = vmul.f32 %v3181, %v3190
      %v3193 = vmul.f32 %v3180, %v3186
      %v3194 = vmul.f32 %v3182, %v3190
      %v3195 = vpack.c.bf16 %v3193, %v3191
      %v3196 = vpack.c.bf16 %v3194, %v3192
      %v3199 = vunpack.c.l.b16 %v3195
      %v3200 = vunpack.c.l.b16 %v3196
      %v3201 = vunpack.c.h.b16 %v3195
      %v3202 = vunpack.c.h.b16 %v3196
      %v3203 = vpack.c.b16 %v3200, %v3199
      %v3204 = vpack.c.b16 %v3202, %v3201
      %3207 = vst [vmem:[#allocation2 + $0x250] sm:$0xff] %v3203
      %3208 = vst [vmem:[#allocation2 + $0x258] sm:$0xff] %v3204
      %3209 = vrot.lane.b32.xlu0 %v1816, 96
      %v3210 = vpop.permute.xlu0 %3209
      %3211 = vrot.lane.b32.xlu0 %v1818, 96
      %v3212 = vpop.permute.xlu0 %3211
      %3213 = vrot.lane.b32.xlu0 %v1817, 96
      %v3214 = vpop.permute.xlu0 %3213
      %3215 = vrot.lane.b32.xlu0 %v1819, 96
      %v3216 = vpop.permute.xlu0 %3215
      %vm3217 = vcmp.lt.s32.totalorder %v828, 96
      %v3218 = vsel %vm3217, %v3210, %v3214
      %v3219 = vsel %vm3217, %v3212, %v3216
      %v3220 = vsel %vm3217, %v3214, %v3210
      %v3221 = vsel %vm3217, %v3216, %v3212
      %v3222 = vlaneseq
      %v3223 = vshrl.u32 %v3222, 7
      %v3224 = vsub.s32 6, %v3223
      %v3225 = vrot.slane %v587, %v3224
      %v3226 = vlaneseq
      %v3227 = vshrl.u32 %v3226, 7
      %v3228 = vsub.s32 6, %v3227
      %v3229 = vrot.slane %v588, %v3228
      %v3230 = vmul.f32 %v3218, %v3225
      %v3231 = vmul.f32 %v3220, %v3229
      %v3232 = vmul.f32 %v3219, %v3225
      %v3233 = vmul.f32 %v3221, %v3229
      %v3234 = vpack.c.bf16 %v3232, %v3230
      %v3235 = vpack.c.bf16 %v3233, %v3231
      %v3238 = vunpack.c.l.b16 %v3234
      %v3239 = vunpack.c.l.b16 %v3235
      %v3240 = vunpack.c.h.b16 %v3234
      %v3241 = vunpack.c.h.b16 %v3235
      %v3242 = vpack.c.b16 %v3239, %v3238
      %v3243 = vpack.c.b16 %v3241, %v3240
      %3246 = vst [vmem:[#allocation2 + $0x260] sm:$0xff] %v3242
      %3247 = vst [vmem:[#allocation2 + $0x268] sm:$0xff] %v3243
      %3248 = vrot.lane.b32.xlu0 %v1816, 95
      %v3249 = vpop.permute.xlu0 %3248
      %3250 = vrot.lane.b32.xlu0 %v1818, 95
      %v3251 = vpop.permute.xlu0 %3250
      %3252 = vrot.lane.b32.xlu0 %v1817, 95
      %v3253 = vpop.permute.xlu0 %3252
      %3254 = vrot.lane.b32.xlu0 %v1819, 95
      %v3255 = vpop.permute.xlu0 %3254
      %vm3256 = vcmp.lt.s32.totalorder %v828, 95
      %v3257 = vsel %vm3256, %v3249, %v3253
      %v3258 = vsel %vm3256, %v3251, %v3255
      %v3259 = vsel %vm3256, %v3253, %v3249
      %v3260 = vsel %vm3256, %v3255, %v3251
      %v3261 = vlaneseq
      %v3262 = vshrl.u32 %v3261, 7
      %v3263 = vsub.s32 7, %v3262
      %v3264 = vrot.slane %v587, %v3263
      %v3265 = vlaneseq
      %v3266 = vshrl.u32 %v3265, 7
      %v3267 = vsub.s32 7, %v3266
      %v3268 = vrot.slane %v588, %v3267
      %v3269 = vmul.f32 %v3257, %v3264
      %v3270 = vmul.f32 %v3259, %v3268
      %v3271 = vmul.f32 %v3258, %v3264
      %v3272 = vmul.f32 %v3260, %v3268
      %v3273 = vpack.c.bf16 %v3271, %v3269
      %v3274 = vpack.c.bf16 %v3272, %v3270
      %v3277 = vunpack.c.l.b16 %v3273
      %v3278 = vunpack.c.l.b16 %v3274
      %v3279 = vunpack.c.h.b16 %v3273
      %v3280 = vunpack.c.h.b16 %v3274
      %v3281 = vpack.c.b16 %v3278, %v3277
      %v3282 = vpack.c.b16 %v3280, %v3279
      %3285 = vst [vmem:[#allocation2 + $0x270] sm:$0xff] %v3281
      %3286 = vst [vmem:[#allocation2 + $0x278] sm:$0xff] %v3282
      %3287 = vrot.lane.b32.xlu0 %v1816, 94
      %v3288 = vpop.permute.xlu0 %3287
      %3289 = vrot.lane.b32.xlu0 %v1818, 94
      %v3290 = vpop.permute.xlu0 %3289
      %3291 = vrot.lane.b32.xlu0 %v1817, 94
      %v3292 = vpop.permute.xlu0 %3291
      %3293 = vrot.lane.b32.xlu0 %v1819, 94
      %v3294 = vpop.permute.xlu0 %3293
      %vm3295 = vcmp.lt.s32.totalorder %v828, 94
      %v3296 = vsel %vm3295, %v3288, %v3292
      %v3297 = vsel %vm3295, %v3290, %v3294
      %v3298 = vsel %vm3295, %v3292, %v3288
      %v3299 = vsel %vm3295, %v3294, %v3290
      %v3300 = vlaneseq
      %v3301 = vshrl.u32 %v3300, 7
      %v3302 = vsub.s32 0, %v3301
      %v3303 = vrot.slane %v589, %v3302
      %v3304 = vlaneseq
      %v3305 = vshrl.u32 %v3304, 7
      %v3306 = vsub.s32 0, %v3305
      %v3307 = vrot.slane %v590, %v3306
      %v3308 = vmul.f32 %v3296, %v3303
      %v3309 = vmul.f32 %v3298, %v3307
      %v3310 = vmul.f32 %v3297, %v3303
      %v3311 = vmul.f32 %v3299, %v3307
      %v3312 = vpack.c.bf16 %v3310, %v3308
      %v3313 = vpack.c.bf16 %v3311, %v3309
      %v3316 = vunpack.c.l.b16 %v3312
      %v3317 = vunpack.c.l.b16 %v3313
      %v3318 = vunpack.c.h.b16 %v3312
      %v3319 = vunpack.c.h.b16 %v3313
      %v3320 = vpack.c.b16 %v3317, %v3316
      %v3321 = vpack.c.b16 %v3319, %v3318
      %3324 = vst [vmem:[#allocation2 + $0x280] sm:$0xff] %v3320
      %3325 = vst [vmem:[#allocation2 + $0x288] sm:$0xff] %v3321
      %3326 = vrot.lane.b32.xlu0 %v1816, 93
      %v3327 = vpop.permute.xlu0 %3326
      %3328 = vrot.lane.b32.xlu0 %v1818, 93
      %v3329 = vpop.permute.xlu0 %3328
      %3330 = vrot.lane.b32.xlu0 %v1817, 93
      %v3331 = vpop.permute.xlu0 %3330
      %3332 = vrot.lane.b32.xlu0 %v1819, 93
      %v3333 = vpop.permute.xlu0 %3332
      %vm3334 = vcmp.lt.s32.totalorder %v828, 93
      %v3335 = vsel %vm3334, %v3327, %v3331
      %v3336 = vsel %vm3334, %v3329, %v3333
      %v3337 = vsel %vm3334, %v3331, %v3327
      %v3338 = vsel %vm3334, %v3333, %v3329
      %v3339 = vlaneseq
      %v3340 = vshrl.u32 %v3339, 7
      %v3341 = vsub.s32 1, %v3340
      %v3342 = vrot.slane %v589, %v3341
      %v3343 = vlaneseq
      %v3344 = vshrl.u32 %v3343, 7
      %v3345 = vsub.s32 1, %v3344
      %v3346 = vrot.slane %v590, %v3345
      %v3347 = vmul.f32 %v3335, %v3342
      %v3348 = vmul.f32 %v3337, %v3346
      %v3349 = vmul.f32 %v3336, %v3342
      %v3350 = vmul.f32 %v3338, %v3346
      %v3351 = vpack.c.bf16 %v3349, %v3347
      %v3352 = vpack.c.bf16 %v3350, %v3348
      %v3355 = vunpack.c.l.b16 %v3351
      %v3356 = vunpack.c.l.b16 %v3352
      %v3357 = vunpack.c.h.b16 %v3351
      %v3358 = vunpack.c.h.b16 %v3352
      %v3359 = vpack.c.b16 %v3356, %v3355
      %v3360 = vpack.c.b16 %v3358, %v3357
      %3363 = vst [vmem:[#allocation2 + $0x290] sm:$0xff] %v3359
      %3364 = vst [vmem:[#allocation2 + $0x298] sm:$0xff] %v3360
      %3365 = vrot.lane.b32.xlu0 %v1816, 83
      %v3366 = vpop.permute.xlu0 %3365
      %3367 = vrot.lane.b32.xlu0 %v1818, 83
      %v3368 = vpop.permute.xlu0 %3367
      %3369 = vrot.lane.b32.xlu0 %v1817, 83
      %v3370 = vpop.permute.xlu0 %3369
      %3371 = vrot.lane.b32.xlu0 %v1819, 83
      %v3372 = vpop.permute.xlu0 %3371
      %vm3373 = vcmp.lt.s32.totalorder %v828, 83
      %v3374 = vsel %vm3373, %v3366, %v3370
      %v3375 = vsel %vm3373, %v3368, %v3372
      %v3376 = vsel %vm3373, %v3370, %v3366
      %v3377 = vsel %vm3373, %v3372, %v3368
      %v3378 = vlaneseq
      %v3379 = vshrl.u32 %v3378, 7
      %v3380 = vsub.s32 2, %v3379
      %v3381 = vrot.slane %v589, %v3380
      %v3382 = vlaneseq
      %v3383 = vshrl.u32 %v3382, 7
      %v3384 = vsub.s32 2, %v3383
      %v3385 = vrot.slane %v590, %v3384
      %v3386 = vmul.f32 %v3374, %v3381
      %v3387 = vmul.f32 %v3376, %v3385
      %v3388 = vmul.f32 %v3375, %v3381
      %v3389 = vmul.f32 %v3377, %v3385
      %v3390 = vpack.c.bf16 %v3388, %v3386
      %v3391 = vpack.c.bf16 %v3389, %v3387
      %v3394 = vunpack.c.l.b16 %v3390
      %v3395 = vunpack.c.l.b16 %v3391
      %v3396 = vunpack.c.h.b16 %v3390
      %v3397 = vunpack.c.h.b16 %v3391
      %v3398 = vpack.c.b16 %v3395, %v3394
      %v3399 = vpack.c.b16 %v3397, %v3396
      %3402 = vst [vmem:[#allocation2 + $0x2a0] sm:$0xff] %v3398
      %3403 = vst [vmem:[#allocation2 + $0x2a8] sm:$0xff] %v3399
      %3404 = vrot.lane.b32.xlu0 %v1816, 82
      %v3405 = vpop.permute.xlu0 %3404
      %3406 = vrot.lane.b32.xlu0 %v1818, 82
      %v3407 = vpop.permute.xlu0 %3406
      %3408 = vrot.lane.b32.xlu0 %v1817, 82
      %v3409 = vpop.permute.xlu0 %3408
      %3410 = vrot.lane.b32.xlu0 %v1819, 82
      %v3411 = vpop.permute.xlu0 %3410
      %vm3412 = vcmp.lt.s32.totalorder %v828, 82
      %v3413 = vsel %vm3412, %v3405, %v3409
      %v3414 = vsel %vm3412, %v3407, %v3411
      %v3415 = vsel %vm3412, %v3409, %v3405
      %v3416 = vsel %vm3412, %v3411, %v3407
      %v3417 = vlaneseq
      %v3418 = vshrl.u32 %v3417, 7
      %v3419 = vsub.s32 3, %v3418
      %v3420 = vrot.slane %v589, %v3419
      %v3421 = vlaneseq
      %v3422 = vshrl.u32 %v3421, 7
      %v3423 = vsub.s32 3, %v3422
      %v3424 = vrot.slane %v590, %v3423
      %v3425 = vmul.f32 %v3413, %v3420
      %v3426 = vmul.f32 %v3415, %v3424
      %v3427 = vmul.f32 %v3414, %v3420
      %v3428 = vmul.f32 %v3416, %v3424
      %v3429 = vpack.c.bf16 %v3427, %v3425
      %v3430 = vpack.c.bf16 %v3428, %v3426
      %v3433 = vunpack.c.l.b16 %v3429
      %v3434 = vunpack.c.l.b16 %v3430
      %v3435 = vunpack.c.h.b16 %v3429
      %v3436 = vunpack.c.h.b16 %v3430
      %v3437 = vpack.c.b16 %v3434, %v3433
      %v3438 = vpack.c.b16 %v3436, %v3435
      %3441 = vst [vmem:[#allocation2 + $0x2b0] sm:$0xff] %v3437
      %3442 = vst [vmem:[#allocation2 + $0x2b8] sm:$0xff] %v3438
      %3443 = vrot.lane.b32.xlu0 %v1816, 81
      %v3444 = vpop.permute.xlu0 %3443
      %3445 = vrot.lane.b32.xlu0 %v1818, 81
      %v3446 = vpop.permute.xlu0 %3445
      %3447 = vrot.lane.b32.xlu0 %v1817, 81
      %v3448 = vpop.permute.xlu0 %3447
      %3449 = vrot.lane.b32.xlu0 %v1819, 81
      %v3450 = vpop.permute.xlu0 %3449
      %vm3451 = vcmp.lt.s32.totalorder %v828, 81
      %v3452 = vsel %vm3451, %v3444, %v3448
      %v3453 = vsel %vm3451, %v3446, %v3450
      %v3454 = vsel %vm3451, %v3448, %v3444
      %v3455 = vsel %vm3451, %v3450, %v3446
      %v3456 = vlaneseq
      %v3457 = vshrl.u32 %v3456, 7
      %v3458 = vsub.s32 4, %v3457
      %v3459 = vrot.slane %v589, %v3458
      %v3460 = vlaneseq
      %v3461 = vshrl.u32 %v3460, 7
      %v3462 = vsub.s32 4, %v3461
      %v3463 = vrot.slane %v590, %v3462
      %v3464 = vmul.f32 %v3452, %v3459
      %v3465 = vmul.f32 %v3454, %v3463
      %v3466 = vmul.f32 %v3453, %v3459
      %v3467 = vmul.f32 %v3455, %v3463
      %v3468 = vpack.c.bf16 %v3466, %v3464
      %v3469 = vpack.c.bf16 %v3467, %v3465
      %v3472 = vunpack.c.l.b16 %v3468
      %v3473 = vunpack.c.l.b16 %v3469
      %v3474 = vunpack.c.h.b16 %v3468
      %v3475 = vunpack.c.h.b16 %v3469
      %v3476 = vpack.c.b16 %v3473, %v3472
      %v3477 = vpack.c.b16 %v3475, %v3474
      %3480 = vst [vmem:[#allocation2 + $0x2c0] sm:$0xff] %v3476
      %3481 = vst [vmem:[#allocation2 + $0x2c8] sm:$0xff] %v3477
      %3482 = vrot.lane.b32.xlu0 %v1816, 80
      %v3483 = vpop.permute.xlu0 %3482
      %3484 = vrot.lane.b32.xlu0 %v1818, 80
      %v3485 = vpop.permute.xlu0 %3484
      %3486 = vrot.lane.b32.xlu0 %v1817, 80
      %v3487 = vpop.permute.xlu0 %3486
      %3488 = vrot.lane.b32.xlu0 %v1819, 80
      %v3489 = vpop.permute.xlu0 %3488
      %vm3490 = vcmp.lt.s32.totalorder %v828, 80
      %v3491 = vsel %vm3490, %v3483, %v3487
      %v3492 = vsel %vm3490, %v3485, %v3489
      %v3493 = vsel %vm3490, %v3487, %v3483
      %v3494 = vsel %vm3490, %v3489, %v3485
      %v3495 = vlaneseq
      %v3496 = vshrl.u32 %v3495, 7
      %v3497 = vsub.s32 5, %v3496
      %v3498 = vrot.slane %v589, %v3497
      %v3499 = vlaneseq
      %v3500 = vshrl.u32 %v3499, 7
      %v3501 = vsub.s32 5, %v3500
      %v3502 = vrot.slane %v590, %v3501
      %v3503 = vmul.f32 %v3491, %v3498
      %v3504 = vmul.f32 %v3493, %v3502
      %v3505 = vmul.f32 %v3492, %v3498
      %v3506 = vmul.f32 %v3494, %v3502
      %v3507 = vpack.c.bf16 %v3505, %v3503
      %v3508 = vpack.c.bf16 %v3506, %v3504
      %v3511 = vunpack.c.l.b16 %v3507
      %v3512 = vunpack.c.l.b16 %v3508
      %v3513 = vunpack.c.h.b16 %v3507
      %v3514 = vunpack.c.h.b16 %v3508
      %v3515 = vpack.c.b16 %v3512, %v3511
      %v3516 = vpack.c.b16 %v3514, %v3513
      %3519 = vst [vmem:[#allocation2 + $0x2d0] sm:$0xff] %v3515
      %3520 = vst [vmem:[#allocation2 + $0x2d8] sm:$0xff] %v3516
      %3521 = vrot.lane.b32.xlu0 %v1816, 79
      %v3522 = vpop.permute.xlu0 %3521
      %3523 = vrot.lane.b32.xlu0 %v1818, 79
      %v3524 = vpop.permute.xlu0 %3523
      %3525 = vrot.lane.b32.xlu0 %v1817, 79
      %v3526 = vpop.permute.xlu0 %3525
      %3527 = vrot.lane.b32.xlu0 %v1819, 79
      %v3528 = vpop.permute.xlu0 %3527
      %vm3529 = vcmp.lt.s32.totalorder %v828, 79
      %v3530 = vsel %vm3529, %v3522, %v3526
      %v3531 = vsel %vm3529, %v3524, %v3528
      %v3532 = vsel %vm3529, %v3526, %v3522
      %v3533 = vsel %vm3529, %v3528, %v3524
      %v3534 = vlaneseq
      %v3535 = vshrl.u32 %v3534, 7
      %v3536 = vsub.s32 6, %v3535
      %v3537 = vrot.slane %v589, %v3536
      %v3538 = vlaneseq
      %v3539 = vshrl.u32 %v3538, 7
      %v3540 = vsub.s32 6, %v3539
      %v3541 = vrot.slane %v590, %v3540
      %v3542 = vmul.f32 %v3530, %v3537
      %v3543 = vmul.f32 %v3532, %v3541
      %v3544 = vmul.f32 %v3531, %v3537
      %v3545 = vmul.f32 %v3533, %v3541
      %v3546 = vpack.c.bf16 %v3544, %v3542
      %v3547 = vpack.c.bf16 %v3545, %v3543
      %v3550 = vunpack.c.l.b16 %v3546
      %v3551 = vunpack.c.l.b16 %v3547
      %v3552 = vunpack.c.h.b16 %v3546
      %v3553 = vunpack.c.h.b16 %v3547
      %v3554 = vpack.c.b16 %v3551, %v3550
      %v3555 = vpack.c.b16 %v3553, %v3552
      %3558 = vst [vmem:[#allocation2 + $0x2e0] sm:$0xff] %v3554
      %3559 = vst [vmem:[#allocation2 + $0x2e8] sm:$0xff] %v3555
      %3560 = vrot.lane.b32.xlu0 %v1816, 78
      %v3561 = vpop.permute.xlu0 %3560
      %3562 = vrot.lane.b32.xlu0 %v1818, 78
      %v3563 = vpop.permute.xlu0 %3562
      %3564 = vrot.lane.b32.xlu0 %v1817, 78
      %v3565 = vpop.permute.xlu0 %3564
      %3566 = vrot.lane.b32.xlu0 %v1819, 78
      %v3567 = vpop.permute.xlu0 %3566
      %vm3568 = vcmp.lt.s32.totalorder %v828, 78
      %v3569 = vsel %vm3568, %v3561, %v3565
      %v3570 = vsel %vm3568, %v3563, %v3567
      %v3571 = vsel %vm3568, %v3565, %v3561
      %v3572 = vsel %vm3568, %v3567, %v3563
      %v3573 = vlaneseq
      %v3574 = vshrl.u32 %v3573, 7
      %v3575 = vsub.s32 7, %v3574
      %v3576 = vrot.slane %v589, %v3575
      %v3577 = vlaneseq
      %v3578 = vshrl.u32 %v3577, 7
      %v3579 = vsub.s32 7, %v3578
      %v3580 = vrot.slane %v590, %v3579
      %v3581 = vmul.f32 %v3569, %v3576
      %v3582 = vmul.f32 %v3571, %v3580
      %v3583 = vmul.f32 %v3570, %v3576
      %v3584 = vmul.f32 %v3572, %v3580
      %v3585 = vpack.c.bf16 %v3583, %v3581
      %v3586 = vpack.c.bf16 %v3584, %v3582
      %v3589 = vunpack.c.l.b16 %v3585
      %v3590 = vunpack.c.l.b16 %v3586
      %v3591 = vunpack.c.h.b16 %v3585
      %v3592 = vunpack.c.h.b16 %v3586
      %v3593 = vpack.c.b16 %v3590, %v3589
      %v3594 = vpack.c.b16 %v3592, %v3591
      %3597 = vst [vmem:[#allocation2 + $0x2f0] sm:$0xff] %v3593
      %3598 = vst [vmem:[#allocation2 + $0x2f8] sm:$0xff] %v3594
      %3599 = vrot.lane.b32.xlu0 %v1816, 77
      %v3600 = vpop.permute.xlu0 %3599
      %3601 = vrot.lane.b32.xlu0 %v1818, 77
      %v3602 = vpop.permute.xlu0 %3601
      %3603 = vrot.lane.b32.xlu0 %v1817, 77
      %v3604 = vpop.permute.xlu0 %3603
      %3605 = vrot.lane.b32.xlu0 %v1819, 77
      %v3606 = vpop.permute.xlu0 %3605
      %vm3607 = vcmp.lt.s32.totalorder %v828, 77
      %v3608 = vsel %vm3607, %v3600, %v3604
      %v3609 = vsel %vm3607, %v3602, %v3606
      %v3610 = vsel %vm3607, %v3604, %v3600
      %v3611 = vsel %vm3607, %v3606, %v3602
      %v3612 = vlaneseq
      %v3613 = vshrl.u32 %v3612, 7
      %v3614 = vsub.s32 0, %v3613
      %v3615 = vrot.slane %v591, %v3614
      %v3616 = vlaneseq
      %v3617 = vshrl.u32 %v3616, 7
      %v3618 = vsub.s32 0, %v3617
      %v3619 = vrot.slane %v592, %v3618
      %v3620 = vmul.f32 %v3608, %v3615
      %v3621 = vmul.f32 %v3610, %v3619
      %v3622 = vmul.f32 %v3609, %v3615
      %v3623 = vmul.f32 %v3611, %v3619
      %v3624 = vpack.c.bf16 %v3622, %v3620
      %v3625 = vpack.c.bf16 %v3623, %v3621
      %v3628 = vunpack.c.l.b16 %v3624
      %v3629 = vunpack.c.l.b16 %v3625
      %v3630 = vunpack.c.h.b16 %v3624
      %v3631 = vunpack.c.h.b16 %v3625
      %v3632 = vpack.c.b16 %v3629, %v3628
      %v3633 = vpack.c.b16 %v3631, %v3630
      %3636 = vst [vmem:[#allocation2 + $0x300] sm:$0xff] %v3632
      %3637 = vst [vmem:[#allocation2 + $0x308] sm:$0xff] %v3633
      %v3638 = vld [vmem:[%s10] sm:$0xff]
      %v3639 = vld [vmem:[%s10 + $0x8] sm:$0xff]
      %v3640 = vld [vmem:[%s10 + $0x10] sm:$0xff]
      %v3641 = vld [vmem:[%s10 + $0x18] sm:$0xf]
      %v3642 = vld [vmem:[%s10 + $0x1c] sm:$0xff]
      %v3643 = vld [vmem:[%s10 + $0x24] sm:$0xff]
      %v3644 = vld [vmem:[%s10 + $0x2c] sm:$0xff]
      %v3645 = vld [vmem:[%s10 + $0x34] sm:$0xf]
      %v3646 = vld [vmem:[%s10 + $0x38] sm:$0xff]
      %v3647 = vld [vmem:[%s10 + $0x40] sm:$0xff]
      %v3648 = vld [vmem:[%s10 + $0x48] sm:$0xff]
      %v3649 = vld [vmem:[%s10 + $0x50] sm:$0xf]
      %v3650 = vld [vmem:[%s10 + $0x54] sm:$0xff]
      %v3651 = vld [vmem:[%s10 + $0x5c] sm:$0xff]
      %v3652 = vld [vmem:[%s10 + $0x64] sm:$0xff]
      %v3653 = vld [vmem:[%s10 + $0x6c] sm:$0xf]
      %v3654 = vld [vmem:[%s10 + $0x70] sm:$0xff]
      %v3655 = vld [vmem:[%s10 + $0x78] sm:$0xff]
      %v3656 = vld [vmem:[%s10 + $0x80] sm:$0xff]
      %v3657 = vld [vmem:[%s10 + $0x88] sm:$0xf]
      %v3658 = vld [vmem:[%s10 + $0x8c] sm:$0xff]
      %v3659 = vld [vmem:[%s10 + $0x94] sm:$0xff]
      %v3660 = vld [vmem:[%s10 + $0x9c] sm:$0xff]
      %v3661 = vld [vmem:[%s10 + $0xa4] sm:$0xf]
      %v3662 = vld [vmem:[%s10 + $0xa8] sm:$0xff]
      %v3663 = vld [vmem:[%s10 + $0xb0] sm:$0xff]
      %v3664 = vld [vmem:[%s10 + $0xb8] sm:$0xff]
      %v3665 = vld [vmem:[%s10 + $0xc0] sm:$0xf]
      %v3666 = vld [vmem:[%s10 + $0xc4] sm:$0xff]
      %v3667 = vld [vmem:[%s10 + $0xcc] sm:$0xff]
      %v3668 = vld [vmem:[%s10 + $0xd4] sm:$0xff]
      %v3669 = vld [vmem:[%s10 + $0xdc] sm:$0xf]
      %v3670 = vld [vmem:[#allocation2] sm:$0xff]
      %v3671 = vld [vmem:[#allocation2 + $0x8] sm:$0xff]
      %v3672 = vld [vmem:[#allocation2 + $0x10] sm:$0xff]
      %v3673 = vld [vmem:[#allocation2 + $0x18] sm:$0xff]
      %v3674 = vld [vmem:[#allocation2 + $0x20] sm:$0xff]
      %v3675 = vld [vmem:[#allocation2 + $0x28] sm:$0xff]
      %v3676 = vld [vmem:[#allocation2 + $0x30] sm:$0xff]
      %v3677 = vld [vmem:[#allocation2 + $0x38] sm:$0xff]
      %v3678 = vld [vmem:[#allocation2 + $0x40] sm:$0xff]
      %v3679 = vld [vmem:[#allocation2 + $0x48] sm:$0xff]
      %v3680 = vld [vmem:[#allocation2 + $0x50] sm:$0xff]
      %v3681 = vld [vmem:[#allocation2 + $0x58] sm:$0xff]
      %v3682 = vld [vmem:[#allocation2 + $0x60] sm:$0xff]
      %v3683 = vld [vmem:[#allocation2 + $0x68] sm:$0xff]
      %v3684 = vld [vmem:[#allocation2 + $0x70] sm:$0xff]
      %v3685 = vld [vmem:[#allocation2 + $0x78] sm:$0xff]
      %v3686 = vld [vmem:[#allocation2 + $0x80] sm:$0xff]
      %v3687 = vld [vmem:[#allocation2 + $0x88] sm:$0xff]
      %v3688 = vld [vmem:[#allocation2 + $0x90] sm:$0xff]
      %v3689 = vld [vmem:[#allocation2 + $0x98] sm:$0xff]
      %v3690 = vld [vmem:[#allocation2 + $0xa0] sm:$0xff]
      %v3691 = vld [vmem:[#allocation2 + $0xa8] sm:$0xff]
      %v3692 = vld [vmem:[#allocation2 + $0xb0] sm:$0xff]
      %v3693 = vld [vmem:[#allocation2 + $0xb8] sm:$0xff]
      %v3694 = vld [vmem:[#allocation2 + $0xc0] sm:$0xff]
      %v3695 = vld [vmem:[#allocation2 + $0xc8] sm:$0xff]
      %v3696 = vld [vmem:[#allocation2 + $0xd0] sm:$0xff]
      %v3697 = vld [vmem:[#allocation2 + $0xd8] sm:$0xff]
      %v3698 = vld [vmem:[#allocation2 + $0xe0] sm:$0xff]
      %v3699 = vld [vmem:[#allocation2 + $0xe8] sm:$0xff]
      %v3700 = vld [vmem:[#allocation2 + $0xf0] sm:$0xff]
      %v3701 = vld [vmem:[#allocation2 + $0xf8] sm:$0xff]
      %v3702 = vld [vmem:[#allocation2 + $0x100] sm:$0xff]
      %v3703 = vld [vmem:[#allocation2 + $0x108] sm:$0xff]
      %v3704 = vld [vmem:[#allocation2 + $0x110] sm:$0xff]
      %v3705 = vld [vmem:[#allocation2 + $0x118] sm:$0xff]
      %v3706 = vld [vmem:[#allocation2 + $0x120] sm:$0xff]
      %v3707 = vld [vmem:[#allocation2 + $0x128] sm:$0xff]
      %v3708 = vld [vmem:[#allocation2 + $0x130] sm:$0xff]
      %v3709 = vld [vmem:[#allocation2 + $0x138] sm:$0xff]
      %v3710 = vld [vmem:[#allocation2 + $0x140] sm:$0xff]
      %v3711 = vld [vmem:[#allocation2 + $0x148] sm:$0xff]
      %v3712 = vld [vmem:[#allocation2 + $0x150] sm:$0xff]
      %v3713 = vld [vmem:[#allocation2 + $0x158] sm:$0xff]
      %v3714 = vld [vmem:[#allocation2 + $0x160] sm:$0xff]
      %v3715 = vld [vmem:[#allocation2 + $0x168] sm:$0xff]
      %v3716 = vld [vmem:[#allocation2 + $0x170] sm:$0xff]
      %v3717 = vld [vmem:[#allocation2 + $0x178] sm:$0xff]
      %v3718 = vld [vmem:[#allocation2 + $0x180] sm:$0xff]
      %v3719 = vld [vmem:[#allocation2 + $0x188] sm:$0xff]
      %v3720 = vld [vmem:[#allocation2 + $0x190] sm:$0xff]
      %v3721 = vld [vmem:[#allocation2 + $0x198] sm:$0xff]
      %v3722 = vld [vmem:[#allocation2 + $0x1a0] sm:$0xff]
      %v3723 = vld [vmem:[#allocation2 + $0x1a8] sm:$0xff]
      %v3724 = vld [vmem:[#allocation2 + $0x1b0] sm:$0xff]
      %v3725 = vld [vmem:[#allocation2 + $0x1b8] sm:$0xff]
      %v3726 = vld [vmem:[#allocation2 + $0x1c0] sm:$0xff]
      %v3727 = vld [vmem:[#allocation2 + $0x1c8] sm:$0xff]
      %v3728 = vld [vmem:[#allocation2 + $0x1d0] sm:$0xff]
      %v3729 = vld [vmem:[#allocation2 + $0x1d8] sm:$0xff]
      %v3730 = vld [vmem:[#allocation2 + $0x1e0] sm:$0xff]
      %v3731 = vld [vmem:[#allocation2 + $0x1e8] sm:$0xff]
      %v3732 = vld [vmem:[#allocation2 + $0x1f0] sm:$0xff]
      %v3733 = vld [vmem:[#allocation2 + $0x1f8] sm:$0xff]
      %v3734 = vld [vmem:[#allocation2 + $0x200] sm:$0xff]
      %v3735 = vld [vmem:[#allocation2 + $0x208] sm:$0xff]
      %v3736 = vld [vmem:[#allocation2 + $0x210] sm:$0xff]
      %v3737 = vld [vmem:[#allocation2 + $0x218] sm:$0xff]
      %v3738 = vld [vmem:[#allocation2 + $0x220] sm:$0xff]
      %v3739 = vld [vmem:[#allocation2 + $0x228] sm:$0xff]
      %v3740 = vld [vmem:[#allocation2 + $0x230] sm:$0xff]
      %v3741 = vld [vmem:[#allocation2 + $0x238] sm:$0xff]
      %v3742 = vld [vmem:[#allocation2 + $0x240] sm:$0xff]
      %v3743 = vld [vmem:[#allocation2 + $0x248] sm:$0xff]
      %v3744 = vld [vmem:[#allocation2 + $0x250] sm:$0xff]
      %v3745 = vld [vmem:[#allocation2 + $0x258] sm:$0xff]
      %v3746 = vld [vmem:[#allocation2 + $0x260] sm:$0xff]
      %v3747 = vld [vmem:[#allocation2 + $0x268] sm:$0xff]
      %v3748 = vld [vmem:[#allocation2 + $0x270] sm:$0xff]
      %v3749 = vld [vmem:[#allocation2 + $0x278] sm:$0xff]
      %v3750 = vld [vmem:[#allocation2 + $0x280] sm:$0xff]
      %v3751 = vld [vmem:[#allocation2 + $0x288] sm:$0xff]
      %v3752 = vld [vmem:[#allocation2 + $0x290] sm:$0xff]
      %v3753 = vld [vmem:[#allocation2 + $0x298] sm:$0xff]
      %v3754 = vld [vmem:[#allocation2 + $0x2a0] sm:$0xff]
      %v3755 = vld [vmem:[#allocation2 + $0x2a8] sm:$0xff]
      %v3756 = vld [vmem:[#allocation2 + $0x2b0] sm:$0xff]
      %v3757 = vld [vmem:[#allocation2 + $0x2b8] sm:$0xff]
      %v3758 = vld [vmem:[#allocation2 + $0x2c0] sm:$0xff]
      %v3759 = vld [vmem:[#allocation2 + $0x2c8] sm:$0xff]
      %v3760 = vld [vmem:[#allocation2 + $0x2d0] sm:$0xff]
      %v3761 = vld [vmem:[#allocation2 + $0x2d8] sm:$0xff]
      %v3762 = vld [vmem:[#allocation2 + $0x2e0] sm:$0xff]
      %v3763 = vld [vmem:[#allocation2 + $0x2e8] sm:$0xff]
      %v3764 = vld [vmem:[#allocation2 + $0x2f0] sm:$0xff]
      %v3765 = vld [vmem:[#allocation2 + $0x2f8] sm:$0xff]
      %v3766 = vld [vmem:[#allocation2 + $0x300] sm:$0xff]
      %v3767 = vld [vmem:[#allocation2 + $0x308] sm:$0xff]
      %v3768 = vld [vmem:[%s11] sm:$0xff]
      %v3769 = vld [vmem:[%s11 + $0x8] sm:$0xff]
      %v3770 = vld [vmem:[%s11 + $0x10] sm:$0xff]
      %v3771 = vld [vmem:[%s11 + $0x18] sm:$0xff]
      %v3772 = vld [vmem:[%s11 + $0x20] sm:$0xff]
      %v3773 = vld [vmem:[%s11 + $0x28] sm:$0xff]
      %v3774 = vld [vmem:[%s11 + $0x30] sm:$0xff]
      %v3775 = vld [vmem:[%s11 + $0x38] sm:$0xff]
      %3777 = vset.pattern.permute.xlu0 0
      %3778 = vperm.xlu0 %3777, %v3768
      %v3779 = vpop.permute.xlu0 %3778
      %3782 = vset.pattern.permute.xlu0 0
      %3783 = vperm.xlu0 %3782, %v3769
      %v3784 = vpop.permute.xlu0 %3783
      %3787 = vset.pattern.permute.xlu0 0
      %3788 = vperm.xlu0 %3787, %v3770
      %v3789 = vpop.permute.xlu0 %3788
      %3792 = vset.pattern.permute.xlu0 0
      %3793 = vperm.xlu0 %3792, %v3771
      %v3794 = vpop.permute.xlu0 %3793
      %3797 = vset.pattern.permute.xlu0 0
      %3798 = vperm.xlu0 %3797, %v3772
      %v3799 = vpop.permute.xlu0 %3798
      %3802 = vset.pattern.permute.xlu0 0
      %3803 = vperm.xlu0 %3802, %v3773
      %v3804 = vpop.permute.xlu0 %3803
      %3807 = vset.pattern.permute.xlu0 0
      %3808 = vperm.xlu0 %3807, %v3774
      %v3809 = vpop.permute.xlu0 %3808
      %3812 = vset.pattern.permute.xlu0 0
      %3813 = vperm.xlu0 %3812, %v3775
      %v3814 = vpop.permute.xlu0 %3813
      %v3848 = vunpack.c.l.b16 %v3638
      %v3849 = vunpack.c.h.b16 %v3638
      %v3850 = vunpack.c.l.b16 %v3639
      %v3851 = vunpack.c.h.b16 %v3639
      %v3852 = vunpack.c.l.b16 %v3640
      %v3853 = vunpack.c.h.b16 %v3640
      %v3854 = vunpack.c.l.b16 %v3641
      %v3855 = vunpack.c.l.b16 %v3642
      %v3856 = vunpack.c.h.b16 %v3642
      %v3857 = vunpack.c.l.b16 %v3643
      %v3858 = vunpack.c.h.b16 %v3643
      %v3859 = vunpack.c.l.b16 %v3644
      %v3860 = vunpack.c.h.b16 %v3644
      %v3861 = vunpack.c.l.b16 %v3645
      %v3862 = vunpack.c.l.b16 %v3646
      %v3863 = vunpack.c.h.b16 %v3646
      %v3864 = vunpack.c.l.b16 %v3647
      %v3865 = vunpack.c.h.b16 %v3647
      %v3866 = vunpack.c.l.b16 %v3648
      %v3867 = vunpack.c.h.b16 %v3648
      %v3868 = vunpack.c.l.b16 %v3649
      %v3869 = vunpack.c.l.b16 %v3650
      %v3870 = vunpack.c.h.b16 %v3650
      %v3871 = vunpack.c.l.b16 %v3651
      %v3872 = vunpack.c.h.b16 %v3651
      %v3873 = vunpack.c.l.b16 %v3652
      %v3874 = vunpack.c.h.b16 %v3652
      %v3875 = vunpack.c.l.b16 %v3653
      %v3876 = vunpack.c.l.b16 %v3654
      %v3877 = vunpack.c.h.b16 %v3654
      %v3878 = vunpack.c.l.b16 %v3655
      %v3879 = vunpack.c.h.b16 %v3655
      %v3880 = vunpack.c.l.b16 %v3656
      %v3881 = vunpack.c.h.b16 %v3656
      %v3882 = vunpack.c.l.b16 %v3657
      %v3883 = vunpack.c.l.b16 %v3658
      %v3884 = vunpack.c.h.b16 %v3658
      %v3885 = vunpack.c.l.b16 %v3659
      %v3886 = vunpack.c.h.b16 %v3659
      %v3887 = vunpack.c.l.b16 %v3660
      %v3888 = vunpack.c.h.b16 %v3660
      %v3889 = vunpack.c.l.b16 %v3661
      %v3890 = vunpack.c.l.b16 %v3662
      %v3891 = vunpack.c.h.b16 %v3662
      %v3892 = vunpack.c.l.b16 %v3663
      %v3893 = vunpack.c.h.b16 %v3663
      %v3894 = vunpack.c.l.b16 %v3664
      %v3895 = vunpack.c.h.b16 %v3664
      %v3896 = vunpack.c.l.b16 %v3665
      %v3897 = vunpack.c.l.b16 %v3666
      %v3898 = vunpack.c.h.b16 %v3666
      %v3899 = vunpack.c.l.b16 %v3667
      %v3900 = vunpack.c.h.b16 %v3667
      %v3901 = vunpack.c.l.b16 %v3668
      %v3902 = vunpack.c.h.b16 %v3668
      %v3903 = vunpack.c.l.b16 %v3669
      %v3904 = vpack.c.b16 %v3855, %v3848
      %v3905 = vpack.c.b16 %v3856, %v3849
      %v3906 = vpack.c.b16 %v3857, %v3850
      %v3907 = vpack.c.b16 %v3858, %v3851
      %v3908 = vpack.c.b16 %v3859, %v3852
      %v3909 = vpack.c.b16 %v3860, %v3853
      %v3910 = vpack.c.b16 %v3861, %v3854
      %v3911 = vpack.c.b16 %v3869, %v3862
      %v3912 = vpack.c.b16 %v3870, %v3863
      %v3913 = vpack.c.b16 %v3871, %v3864
      %v3914 = vpack.c.b16 %v3872, %v3865
      %v3915 = vpack.c.b16 %v3873, %v3866
      %v3916 = vpack.c.b16 %v3874, %v3867
      %v3917 = vpack.c.b16 %v3875, %v3868
      %v3918 = vpack.c.b16 %v3883, %v3876
      %v3919 = vpack.c.b16 %v3884, %v3877
      %v3920 = vpack.c.b16 %v3885, %v3878
      %v3921 = vpack.c.b16 %v3886, %v3879
      %v3922 = vpack.c.b16 %v3887, %v3880
      %v3923 = vpack.c.b16 %v3888, %v3881
      %v3924 = vpack.c.b16 %v3889, %v3882
      %v3925 = vpack.c.b16 %v3897, %v3890
      %v3926 = vpack.c.b16 %v3898, %v3891
      %v3927 = vpack.c.b16 %v3899, %v3892
      %v3928 = vpack.c.b16 %v3900, %v3893
      %v3929 = vpack.c.b16 %v3901, %v3894
      %v3930 = vpack.c.b16 %v3902, %v3895
      %v3931 = vpack.c.b16 %v3903, %v3896
      %v4054 = vunpack.c.l.b16 %v3670
      %v4055 = vunpack.c.h.b16 %v3670
      %v4056 = vunpack.c.l.b16 %v3671
      %v4057 = vunpack.c.h.b16 %v3671
      %v4058 = vunpack.c.l.b16 %v3672
      %v4059 = vunpack.c.h.b16 %v3672
      %v4060 = vunpack.c.l.b16 %v3673
      %v4061 = vunpack.c.h.b16 %v3673
      %v4062 = vunpack.c.l.b16 %v3674
      %v4063 = vunpack.c.h.b16 %v3674
      %v4064 = vunpack.c.l.b16 %v3675
      %v4065 = vunpack.c.h.b16 %v3675
      %v4066 = vunpack.c.l.b16 %v3676
      %v4067 = vunpack.c.h.b16 %v3676
      %v4068 = vunpack.c.l.b16 %v3677
      %v4069 = vunpack.c.h.b16 %v3677
      %v4070 = vunpack.c.l.b16 %v3678
      %v4071 = vunpack.c.h.b16 %v3678
      %v4072 = vunpack.c.l.b16 %v3679
      %v4073 = vunpack.c.h.b16 %v3679
      %v4074 = vunpack.c.l.b16 %v3680
      %v4075 = vunpack.c.h.b16 %v3680
      %v4076 = vunpack.c.l.b16 %v3681
      %v4077 = vunpack.c.h.b16 %v3681
      %v4078 = vunpack.c.l.b16 %v3682
      %v4079 = vunpack.c.h.b16 %v3682
      %v4080 = vunpack.c.l.b16 %v3683
      %v4081 = vunpack.c.h.b16 %v3683
      %v4082 = vunpack.c.l.b16 %v3684
      %v4083 = vunpack.c.h.b16 %v3684
      %v4084 = vunpack.c.l.b16 %v3685
      %v4085 = vunpack.c.h.b16 %v3685
      %v4086 = vunpack.c.l.b16 %v3686
      %v4087 = vunpack.c.h.b16 %v3686
      %v4088 = vunpack.c.l.b16 %v3687
      %v4089 = vunpack.c.h.b16 %v3687
      %v4090 = vunpack.c.l.b16 %v3688
      %v4091 = vunpack.c.h.b16 %v3688
      %v4092 = vunpack.c.l.b16 %v3689
      %v4093 = vunpack.c.h.b16 %v3689
      %v4094 = vunpack.c.l.b16 %v3690
      %v4095 = vunpack.c.h.b16 %v3690
      %v4096 = vunpack.c.l.b16 %v3691
      %v4097 = vunpack.c.h.b16 %v3691
      %v4098 = vunpack.c.l.b16 %v3692
      %v4099 = vunpack.c.h.b16 %v3692
      %v4100 = vunpack.c.l.b16 %v3693
      %v4101 = vunpack.c.h.b16 %v3693
      %v4102 = vunpack.c.l.b16 %v3694
      %v4103 = vunpack.c.h.b16 %v3694
      %v4104 = vunpack.c.l.b16 %v3695
      %v4105 = vunpack.c.h.b16 %v3695
      %v4106 = vunpack.c.l.b16 %v3696
      %v4107 = vunpack.c.h.b16 %v3696
      %v4108 = vunpack.c.l.b16 %v3697
      %v4109 = vunpack.c.h.b16 %v3697
      %v4110 = vunpack.c.l.b16 %v3698
      %v4111 = vunpack.c.h.b16 %v3698
      %v4112 = vunpack.c.l.b16 %v3699
      %v4113 = vunpack.c.h.b16 %v3699
      %v4114 = vunpack.c.l.b16 %v3700
      %v4115 = vunpack.c.h.b16 %v3700
      %v4116 = vunpack.c.l.b16 %v3701
      %v4117 = vunpack.c.h.b16 %v3701
      %v4118 = vunpack.c.l.b16 %v3702
      %v4119 = vunpack.c.h.b16 %v3702
      %v4120 = vunpack.c.l.b16 %v3703
      %v4121 = vunpack.c.h.b16 %v3703
      %v4122 = vunpack.c.l.b16 %v3704
      %v4123 = vunpack.c.h.b16 %v3704
      %v4124 = vunpack.c.l.b16 %v3705
      %v4125 = vunpack.c.h.b16 %v3705
      %v4126 = vunpack.c.l.b16 %v3706
      %v4127 = vunpack.c.h.b16 %v3706
      %v4128 = vunpack.c.l.b16 %v3707
      %v4129 = vunpack.c.h.b16 %v3707
      %v4130 = vunpack.c.l.b16 %v3708
      %v4131 = vunpack.c.h.b16 %v3708
      %v4132 = vunpack.c.l.b16 %v3709
      %v4133 = vunpack.c.h.b16 %v3709
      %v4134 = vunpack.c.l.b16 %v3710
      %v4135 = vunpack.c.h.b16 %v3710
      %v4136 = vunpack.c.l.b16 %v3711
      %v4137 = vunpack.c.h.b16 %v3711
      %v4138 = vunpack.c.l.b16 %v3712
      %v4139 = vunpack.c.h.b16 %v3712
      %v4140 = vunpack.c.l.b16 %v3713
      %v4141 = vunpack.c.h.b16 %v3713
      %v4142 = vunpack.c.l.b16 %v3714
      %v4143 = vunpack.c.h.b16 %v3714
      %v4144 = vunpack.c.l.b16 %v3715
      %v4145 = vunpack.c.h.b16 %v3715
      %v4146 = vunpack.c.l.b16 %v3716
      %v4147 = vunpack.c.h.b16 %v3716
      %v4148 = vunpack.c.l.b16 %v3717
      %v4149 = vunpack.c.h.b16 %v3717
      %v4150 = vunpack.c.l.b16 %v3718
      %v4151 = vunpack.c.h.b16 %v3718
      %v4152 = vunpack.c.l.b16 %v3719
      %v4153 = vunpack.c.h.b16 %v3719
      %v4154 = vunpack.c.l.b16 %v3720
      %v4155 = vunpack.c.h.b16 %v3720
      %v4156 = vunpack.c.l.b16 %v3721
      %v4157 = vunpack.c.h.b16 %v3721
      %v4158 = vunpack.c.l.b16 %v3722
      %v4159 = vunpack.c.h.b16 %v3722
      %v4160 = vunpack.c.l.b16 %v3723
      %v4161 = vunpack.c.h.b16 %v3723
      %v4162 = vunpack.c.l.b16 %v3724
      %v4163 = vunpack.c.h.b16 %v3724
      %v4164 = vunpack.c.l.b16 %v3725
      %v4165 = vunpack.c.h.b16 %v3725
      %v4166 = vunpack.c.l.b16 %v3726
      %v4167 = vunpack.c.h.b16 %v3726
      %v4168 = vunpack.c.l.b16 %v3727
      %v4169 = vunpack.c.h.b16 %v3727
      %v4170 = vunpack.c.l.b16 %v3728
      %v4171 = vunpack.c.h.b16 %v3728
      %v4172 = vunpack.c.l.b16 %v3729
      %v4173 = vunpack.c.h.b16 %v3729
      %v4174 = vunpack.c.l.b16 %v3730
      %v4175 = vunpack.c.h.b16 %v3730
      %v4176 = vunpack.c.l.b16 %v3731
      %v4177 = vunpack.c.h.b16 %v3731
      %v4178 = vunpack.c.l.b16 %v3732
      %v4179 = vunpack.c.h.b16 %v3732
      %v4180 = vunpack.c.l.b16 %v3733
      %v4181 = vunpack.c.h.b16 %v3733
      %v4182 = vunpack.c.l.b16 %v3734
      %v4183 = vunpack.c.h.b16 %v3734
      %v4184 = vunpack.c.l.b16 %v3735
      %v4185 = vunpack.c.h.b16 %v3735
      %v4186 = vunpack.c.l.b16 %v3736
      %v4187 = vunpack.c.h.b16 %v3736
      %v4188 = vunpack.c.l.b16 %v3737
      %v4189 = vunpack.c.h.b16 %v3737
      %v4190 = vunpack.c.l.b16 %v3738
      %v4191 = vunpack.c.h.b16 %v3738
      %v4192 = vunpack.c.l.b16 %v3739
      %v4193 = vunpack.c.h.b16 %v3739
      %v4194 = vunpack.c.l.b16 %v3740
      %v4195 = vunpack.c.h.b16 %v3740
      %v4196 = vunpack.c.l.b16 %v3741
      %v4197 = vunpack.c.h.b16 %v3741
      %v4198 = vunpack.c.l.b16 %v3742
      %v4199 = vunpack.c.h.b16 %v3742
      %v4200 = vunpack.c.l.b16 %v3743
      %v4201 = vunpack.c.h.b16 %v3743
      %v4202 = vunpack.c.l.b16 %v3744
      %v4203 = vunpack.c.h.b16 %v3744
      %v4204 = vunpack.c.l.b16 %v3745
      %v4205 = vunpack.c.h.b16 %v3745
      %v4206 = vunpack.c.l.b16 %v3746
      %v4207 = vunpack.c.h.b16 %v3746
      %v4208 = vunpack.c.l.b16 %v3747
      %v4209 = vunpack.c.h.b16 %v3747
      %v4210 = vunpack.c.l.b16 %v3748
      %v4211 = vunpack.c.h.b16 %v3748
      %v4212 = vunpack.c.l.b16 %v3749
      %v4213 = vunpack.c.h.b16 %v3749
      %v4214 = vunpack.c.l.b16 %v3750
      %v4215 = vunpack.c.h.b16 %v3750
      %v4216 = vunpack.c.l.b16 %v3751
      %v4217 = vunpack.c.h.b16 %v3751
      %v4218 = vunpack.c.l.b16 %v3752
      %v4219 = vunpack.c.h.b16 %v3752
      %v4220 = vunpack.c.l.b16 %v3753
      %v4221 = vunpack.c.h.b16 %v3753
      %v4222 = vunpack.c.l.b16 %v3754
      %v4223 = vunpack.c.h.b16 %v3754
      %v4224 = vunpack.c.l.b16 %v3755
      %v4225 = vunpack.c.h.b16 %v3755
      %v4226 = vunpack.c.l.b16 %v3756
      %v4227 = vunpack.c.h.b16 %v3756
      %v4228 = vunpack.c.l.b16 %v3757
      %v4229 = vunpack.c.h.b16 %v3757
      %v4230 = vunpack.c.l.b16 %v3758
      %v4231 = vunpack.c.h.b16 %v3758
      %v4232 = vunpack.c.l.b16 %v3759
      %v4233 = vunpack.c.h.b16 %v3759
      %v4234 = vunpack.c.l.b16 %v3760
      %v4235 = vunpack.c.h.b16 %v3760
      %v4236 = vunpack.c.l.b16 %v3761
      %v4237 = vunpack.c.h.b16 %v3761
      %v4238 = vunpack.c.l.b16 %v3762
      %v4239 = vunpack.c.h.b16 %v3762
      %v4240 = vunpack.c.l.b16 %v3763
      %v4241 = vunpack.c.h.b16 %v3763
      %v4242 = vunpack.c.l.b16 %v3764
      %v4243 = vunpack.c.h.b16 %v3764
      %v4244 = vunpack.c.l.b16 %v3765
      %v4245 = vunpack.c.h.b16 %v3765
      %v4246 = vunpack.c.l.b16 %v3766
      %v4247 = vunpack.c.h.b16 %v3766
      %v4248 = vunpack.c.l.b16 %v3767
      %v4249 = vunpack.c.h.b16 %v3767
      %v4250 = vpack.c.b16 %v4056, %v4054
      %v4251 = vpack.c.b16 %v4057, %v4055
      %v4252 = vpack.c.b16 %v4060, %v4058
      %v4253 = vpack.c.b16 %v4061, %v4059
      %v4254 = vpack.c.b16 %v4064, %v4062
      %v4255 = vpack.c.b16 %v4065, %v4063
      %v4256 = vpack.c.b16 %v4068, %v4066
      %v4257 = vpack.c.b16 %v4069, %v4067
      %v4258 = vpack.c.b16 %v4072, %v4070
      %v4259 = vpack.c.b16 %v4073, %v4071
      %v4260 = vpack.c.b16 %v4076, %v4074
      %v4261 = vpack.c.b16 %v4077, %v4075
      %v4262 = vpack.c.b16 %v4080, %v4078
      %v4263 = vpack.c.b16 %v4081, %v4079
      %v4264 = vpack.c.b16 %v4084, %v4082
      %v4265 = vpack.c.b16 %v4085, %v4083
      %v4266 = vpack.c.b16 %v4088, %v4086
      %v4267 = vpack.c.b16 %v4089, %v4087
      %v4268 = vpack.c.b16 %v4092, %v4090
      %v4269 = vpack.c.b16 %v4093, %v4091
      %v4270 = vpack.c.b16 %v4096, %v4094
      %v4271 = vpack.c.b16 %v4097, %v4095
      %v4272 = vpack.c.b16 %v4100, %v4098
      %v4273 = vpack.c.b16 %v4101, %v4099
      %v4274 = vpack.c.b16 %v4104, %v4102
      %v4275 = vpack.c.b16 %v4105, %v4103
      %v4276 = vpack.c.b16 %v4108, %v4106
      %v4277 = vpack.c.b16 %v4109, %v4107
      %v4278 = vpack.c.b16 %v4112, %v4110
      %v4279 = vpack.c.b16 %v4113, %v4111
      %v4280 = vpack.c.b16 %v4116, %v4114
      %v4281 = vpack.c.b16 %v4117, %v4115
      %v4282 = vpack.c.b16 %v4120, %v4118
      %v4283 = vpack.c.b16 %v4121, %v4119
      %v4284 = vpack.c.b16 %v4124, %v4122
      %v4285 = vpack.c.b16 %v4125, %v4123
      %v4286 = vpack.c.b16 %v4128, %v4126
      %v4287 = vpack.c.b16 %v4129, %v4127
      %v4288 = vpack.c.b16 %v4132, %v4130
      %v4289 = vpack.c.b16 %v4133, %v4131
      %v4290 = vpack.c.b16 %v4136, %v4134
      %v4291 = vpack.c.b16 %v4137, %v4135
      %v4292 = vpack.c.b16 %v4140, %v4138
      %v4293 = vpack.c.b16 %v4141, %v4139
      %v4294 = vpack.c.b16 %v4144, %v4142
      %v4295 = vpack.c.b16 %v4145, %v4143
      %v4296 = vpack.c.b16 %v4148, %v4146
      %v4297 = vpack.c.b16 %v4149, %v4147
      %v4298 = vpack.c.b16 %v4152, %v4150
      %v4299 = vpack.c.b16 %v4153, %v4151
      %v4300 = vpack.c.b16 %v4156, %v4154
      %v4301 = vpack.c.b16 %v4157, %v4155
      %v4302 = vpack.c.b16 %v4160, %v4158
      %v4303 = vpack.c.b16 %v4161, %v4159
      %v4304 = vpack.c.b16 %v4164, %v4162
      %v4305 = vpack.c.b16 %v4165, %v4163
      %v4306 = vpack.c.b16 %v4168, %v4166
      %v4307 = vpack.c.b16 %v4169, %v4167
      %v4308 = vpack.c.b16 %v4172, %v4170
      %v4309 = vpack.c.b16 %v4173, %v4171
      %v4310 = vpack.c.b16 %v4176, %v4174
      %v4311 = vpack.c.b16 %v4177, %v4175
      %v4312 = vpack.c.b16 %v4180, %v4178
      %v4313 = vpack.c.b16 %v4181, %v4179
      %v4314 = vpack.c.b16 %v4184, %v4182
      %v4315 = vpack.c.b16 %v4185, %v4183
      %v4316 = vpack.c.b16 %v4188, %v4186
      %v4317 = vpack.c.b16 %v4189, %v4187
      %v4318 = vpack.c.b16 %v4192, %v4190
      %v4319 = vpack.c.b16 %v4193, %v4191
      %v4320 = vpack.c.b16 %v4196, %v4194
      %v4321 = vpack.c.b16 %v4197, %v4195
      %v4322 = vpack.c.b16 %v4200, %v4198
      %v4323 = vpack.c.b16 %v4201, %v4199
      %v4324 = vpack.c.b16 %v4204, %v4202
      %v4325 = vpack.c.b16 %v4205, %v4203
      %v4326 = vpack.c.b16 %v4208, %v4206
      %v4327 = vpack.c.b16 %v4209, %v4207
      %v4328 = vpack.c.b16 %v4212, %v4210
      %v4329 = vpack.c.b16 %v4213, %v4211
      %v4330 = vpack.c.b16 %v4216, %v4214
      %v4331 = vpack.c.b16 %v4217, %v4215
      %v4332 = vpack.c.b16 %v4220, %v4218
      %v4333 = vpack.c.b16 %v4221, %v4219
      %v4334 = vpack.c.b16 %v4224, %v4222
      %v4335 = vpack.c.b16 %v4225, %v4223
      %v4336 = vpack.c.b16 %v4228, %v4226
      %v4337 = vpack.c.b16 %v4229, %v4227
      %v4338 = vpack.c.b16 %v4232, %v4230
      %v4339 = vpack.c.b16 %v4233, %v4231
      %v4340 = vpack.c.b16 %v4236, %v4234
      %v4341 = vpack.c.b16 %v4237, %v4235
      %v4342 = vpack.c.b16 %v4240, %v4238
      %v4343 = vpack.c.b16 %v4241, %v4239
      %v4344 = vpack.c.b16 %v4244, %v4242
      %v4345 = vpack.c.b16 %v4245, %v4243
      %v4346 = vpack.c.b16 %v4248, %v4246
      %v4347 = vpack.c.b16 %v4249, %v4247
      %v4447 = vsel %vm1313, %v3910, 0
      %v4450 = vsel %vm1313, %v3917, 0
      %v4453 = vsel %vm1313, %v3924, 0
      %v4456 = vsel %vm1313, %v3931, 0
      %4458 = vmatprep.subr.bf16.mxu0 %v4265
      %4459 = vmatpush1.bf16.msra.mxu0 %v4264
      %4460 = vmatprep.subr.bf16.mxu0 %v4263
      %4461 = vmatpush1.bf16.msra.mxu0 %v4262
      %4462 = vmatprep.subr.bf16.mxu0 %v4261
      %4463 = vmatpush1.bf16.msra.mxu0 %v4260
      %4464 = vmatprep.subr.bf16.mxu0 %v4259
      %4465 = vmatpush1.bf16.msra.mxu0 %v4258
      %4466 = vmatprep.subr.bf16.mxu0 %v4257
      %4467 = vmatpush1.bf16.msra.mxu0 %v4256
      %4468 = vmatprep.subr.bf16.mxu0 %v4255
      %4469 = vmatpush1.bf16.msra.mxu0 %v4254
      %4470 = vmatprep.subr.bf16.mxu0 %v4253
      %4471 = vmatpush1.bf16.msra.mxu0 %v4252
      %4472 = vmatprep.subr.bf16.mxu0 %v4251
      %4473 = vmatpush1.bf16.msra.mxu0 %v4250
      %4474 = vmatprep.subr.bf16.mxu0 %v4281
      %4475 = vmatpush2.bf16.msra.mxu0 %v4280
      %4476 = vmatprep.subr.bf16.mxu0 %v4279
      %4477 = vmatpush2.bf16.msra.mxu0 %v4278
      %4478 = vmatprep.subr.bf16.mxu0 %v4277
      %4479 = vmatpush2.bf16.msra.mxu0 %v4276
      %4480 = vmatprep.subr.bf16.mxu0 %v4275
      %4481 = vmatpush2.bf16.msra.mxu0 %v4274
      %4482 = vmatprep.subr.bf16.mxu0 %v4273
      %4483 = vmatpush2.bf16.msra.mxu0 %v4272
      %4484 = vmatprep.subr.bf16.mxu0 %v4271
      %4485 = vmatpush2.bf16.msra.mxu0 %v4270
      %4486 = vmatprep.subr.bf16.mxu0 %v4269
      %4487 = vmatpush2.bf16.msra.mxu0 %v4268
      %4488 = vmatprep.subr.bf16.mxu0 %v4267
      %4489 = vmatpush2.bf16.msra.mxu0 %v4266
      %4490 = vmatprep.mubr.bf16.mxu0 %v3905
      %4491 = vmatmul.mubr.bf16.gmra.mxu0 %v3904
      %v4492 = vpop.f32.mrf.mxu0
      %v4493 = vadd.f32 %v3779, %v4492
      %v4494 = vpop.f32.mrf.mxu0
      %v4495 = vadd.f32 %v3779, %v4494
      %v4496 = vpop.f32.mrf.mxu0
      %v4497 = vadd.f32 %v3784, %v4496
      %v4498 = vpop.f32.mrf.mxu0
      %v4499 = vadd.f32 %v3784, %v4498
      %4500 = vmatprep.mubr.bf16.mxu0 %v3912
      %4501 = vmatmul.mubr.bf16.gmra.mxu0 %v3911
      %v4502 = vpop.f32.mrf.mxu0
      %v4503 = vadd.f32 %v3789, %v4502
      %v4504 = vpop.f32.mrf.mxu0
      %v4505 = vadd.f32 %v3789, %v4504
      %v4506 = vpop.f32.mrf.mxu0
      %v4507 = vadd.f32 %v3794, %v4506
      %v4508 = vpop.f32.mrf.mxu0
      %v4509 = vadd.f32 %v3794, %v4508
      %4510 = vmatprep.mubr.bf16.mxu0 %v3919
      %4511 = vmatmul.mubr.bf16.gmra.mxu0 %v3918
      %v4512 = vpop.f32.mrf.mxu0
      %v4513 = vadd.f32 %v3799, %v4512
      %v4514 = vpop.f32.mrf.mxu0
      %v4515 = vadd.f32 %v3799, %v4514
      %v4516 = vpop.f32.mrf.mxu0
      %v4517 = vadd.f32 %v3804, %v4516
      %v4518 = vpop.f32.mrf.mxu0
      %v4519 = vadd.f32 %v3804, %v4518
      %4520 = vmatprep.mubr.bf16.mxu0 %v3926
      %4521 = vmatmul.mubr.bf16.gmra.mxu0 %v3925
      %v4522 = vpop.f32.mrf.mxu0
      %v4523 = vadd.f32 %v3809, %v4522
      %v4524 = vpop.f32.mrf.mxu0
      %v4525 = vadd.f32 %v3809, %v4524
      %v4526 = vpop.f32.mrf.mxu0
      %v4527 = vadd.f32 %v3814, %v4526
      %v4528 = vpop.f32.mrf.mxu0
      %v4529 = vadd.f32 %v3814, %v4528
      %4530 = vdwg.mxu0
      %4531 = vmatprep.subr.bf16.mxu0 %v4297
      %4532 = vmatpush1.bf16.msra.mxu0 %v4296
      %4533 = vmatprep.subr.bf16.mxu0 %v4295
      %4534 = vmatpush1.bf16.msra.mxu0 %v4294
      %4535 = vmatprep.subr.bf16.mxu0 %v4293
      %4536 = vmatpush1.bf16.msra.mxu0 %v4292
      %4537 = vmatprep.subr.bf16.mxu0 %v4291
      %4538 = vmatpush1.bf16.msra.mxu0 %v4290
      %4539 = vmatprep.subr.bf16.mxu0 %v4289
      %4540 = vmatpush1.bf16.msra.mxu0 %v4288
      %4541 = vmatprep.subr.bf16.mxu0 %v4287
      %4542 = vmatpush1.bf16.msra.mxu0 %v4286
      %4543 = vmatprep.subr.bf16.mxu0 %v4285
      %4544 = vmatpush1.bf16.msra.mxu0 %v4284
      %4545 = vmatprep.subr.bf16.mxu0 %v4283
      %4546 = vmatpush1.bf16.msra.mxu0 %v4282
      %4547 = vmatprep.subr.bf16.mxu0 %v4313
      %4548 = vmatpush2.bf16.msra.mxu0 %v4312
      %4549 = vmatprep.subr.bf16.mxu0 %v4311
      %4550 = vmatpush2.bf16.msra.mxu0 %v4310
      %4551 = vmatprep.subr.bf16.mxu0 %v4309
      %4552 = vmatpush2.bf16.msra.mxu0 %v4308
      %4553 = vmatprep.subr.bf16.mxu0 %v4307
      %4554 = vmatpush2.bf16.msra.mxu0 %v4306
      %4555 = vmatprep.subr.bf16.mxu0 %v4305
      %4556 = vmatpush2.bf16.msra.mxu0 %v4304
      %4557 = vmatprep.subr.bf16.mxu0 %v4303
      %4558 = vmatpush2.bf16.msra.mxu0 %v4302
      %4559 = vmatprep.subr.bf16.mxu0 %v4301
      %4560 = vmatpush2.bf16.msra.mxu0 %v4300
      %4561 = vmatprep.subr.bf16.mxu0 %v4299
      %4562 = vmatpush2.bf16.msra.mxu0 %v4298
      %4563 = vmatprep.mubr.bf16.mxu0 %v3907
      %4564 = vmatmul.mubr.bf16.gmra.mxu0 %v3906
      %v4565 = vpop.f32.mrf.mxu0
      %v4566 = vadd.f32 %v4493, %v4565
      %v4567 = vpop.f32.mrf.mxu0
      %v4568 = vadd.f32 %v4495, %v4567
      %v4569 = vpop.f32.mrf.mxu0
      %v4570 = vadd.f32 %v4497, %v4569
      %v4571 = vpop.f32.mrf.mxu0
      %v4572 = vadd.f32 %v4499, %v4571
      %4573 = vmatprep.mubr.bf16.mxu0 %v3914
      %4574 = vmatmul.mubr.bf16.gmra.mxu0 %v3913
      %v4575 = vpop.f32.mrf.mxu0
      %v4576 = vadd.f32 %v4503, %v4575
      %v4577 = vpop.f32.mrf.mxu0
      %v4578 = vadd.f32 %v4505, %v4577
      %v4579 = vpop.f32.mrf.mxu0
      %v4580 = vadd.f32 %v4507, %v4579
      %v4581 = vpop.f32.mrf.mxu0
      %v4582 = vadd.f32 %v4509, %v4581
      %4583 = vmatprep.mubr.bf16.mxu0 %v3921
      %4584 = vmatmul.mubr.bf16.gmra.mxu0 %v3920
      %v4585 = vpop.f32.mrf.mxu0
      %v4586 = vadd.f32 %v4513, %v4585
      %v4587 = vpop.f32.mrf.mxu0
      %v4588 = vadd.f32 %v4515, %v4587
      %v4589 = vpop.f32.mrf.mxu0
      %v4590 = vadd.f32 %v4517, %v4589
      %v4591 = vpop.f32.mrf.mxu0
      %v4592 = vadd.f32 %v4519, %v4591
      %4593 = vmatprep.mubr.bf16.mxu0 %v3928
      %4594 = vmatmul.mubr.bf16.gmra.mxu0 %v3927
      %v4595 = vpop.f32.mrf.mxu0
      %v4596 = vadd.f32 %v4523, %v4595
      %v4597 = vpop.f32.mrf.mxu0
      %v4598 = vadd.f32 %v4525, %v4597
      %v4599 = vpop.f32.mrf.mxu0
      %v4600 = vadd.f32 %v4527, %v4599
      %v4601 = vpop.f32.mrf.mxu0
      %v4602 = vadd.f32 %v4529, %v4601
      %4603 = vdwg.mxu0
      %4604 = vmatprep.subr.bf16.mxu0 %v4329
      %4605 = vmatpush1.bf16.msra.mxu0 %v4328
      %4606 = vmatprep.subr.bf16.mxu0 %v4327
      %4607 = vmatpush1.bf16.msra.mxu0 %v4326
      %4608 = vmatprep.subr.bf16.mxu0 %v4325
      %4609 = vmatpush1.bf16.msra.mxu0 %v4324
      %4610 = vmatprep.subr.bf16.mxu0 %v4323
      %4611 = vmatpush1.bf16.msra.mxu0 %v4322
      %4612 = vmatprep.subr.bf16.mxu0 %v4321
      %4613 = vmatpush1.bf16.msra.mxu0 %v4320
      %4614 = vmatprep.subr.bf16.mxu0 %v4319
      %4615 = vmatpush1.bf16.msra.mxu0 %v4318
      %4616 = vmatprep.subr.bf16.mxu0 %v4317
      %4617 = vmatpush1.bf16.msra.mxu0 %v4316
      %4618 = vmatprep.subr.bf16.mxu0 %v4315
      %4619 = vmatpush1.bf16.msra.mxu0 %v4314
      %4620 = vmatprep.subr.bf16.mxu0 %v4345
      %4621 = vmatpush2.bf16.msra.mxu0 %v4344
      %4622 = vmatprep.subr.bf16.mxu0 %v4343
      %4623 = vmatpush2.bf16.msra.mxu0 %v4342
      %4624 = vmatprep.subr.bf16.mxu0 %v4341
      %4625 = vmatpush2.bf16.msra.mxu0 %v4340
      %4626 = vmatprep.subr.bf16.mxu0 %v4339
      %4627 = vmatpush2.bf16.msra.mxu0 %v4338
      %4628 = vmatprep.subr.bf16.mxu0 %v4337
      %4629 = vmatpush2.bf16.msra.mxu0 %v4336
      %4630 = vmatprep.subr.bf16.mxu0 %v4335
      %4631 = vmatpush2.bf16.msra.mxu0 %v4334
      %4632 = vmatprep.subr.bf16.mxu0 %v4333
      %4633 = vmatpush2.bf16.msra.mxu0 %v4332
      %4634 = vmatprep.subr.bf16.mxu0 %v4331
      %4635 = vmatpush2.bf16.msra.mxu0 %v4330
      %4636 = vmatprep.mubr.bf16.mxu0 %v3909
      %4637 = vmatmul.mubr.bf16.gmra.mxu0 %v3908
      %v4638 = vpop.f32.mrf.mxu0
      %v4639 = vadd.f32 %v4566, %v4638
      %v4640 = vpop.f32.mrf.mxu0
      %v4641 = vadd.f32 %v4568, %v4640
      %v4642 = vpop.f32.mrf.mxu0
      %v4643 = vadd.f32 %v4570, %v4642
      %v4644 = vpop.f32.mrf.mxu0
      %v4645 = vadd.f32 %v4572, %v4644
      %4646 = vmatprep.mubr.bf16.mxu0 %v3916
      %4647 = vmatmul.mubr.bf16.gmra.mxu0 %v3915
      %v4648 = vpop.f32.mrf.mxu0
      %v4649 = vadd.f32 %v4576, %v4648
      %v4650 = vpop.f32.mrf.mxu0
      %v4651 = vadd.f32 %v4578, %v4650
      %v4652 = vpop.f32.mrf.mxu0
      %v4653 = vadd.f32 %v4580, %v4652
      %v4654 = vpop.f32.mrf.mxu0
      %v4655 = vadd.f32 %v4582, %v4654
      %4656 = vmatprep.mubr.bf16.mxu0 %v3923
      %4657 = vmatmul.mubr.bf16.gmra.mxu0 %v3922
      %v4658 = vpop.f32.mrf.mxu0
      %v4659 = vadd.f32 %v4586, %v4658
      %v4660 = vpop.f32.mrf.mxu0
      %v4661 = vadd.f32 %v4588, %v4660
      %v4662 = vpop.f32.mrf.mxu0
      %v4663 = vadd.f32 %v4590, %v4662
      %v4664 = vpop.f32.mrf.mxu0
      %v4665 = vadd.f32 %v4592, %v4664
      %4666 = vmatprep.mubr.bf16.mxu0 %v3930
      %4667 = vmatmul.mubr.bf16.gmra.mxu0 %v3929
      %v4668 = vpop.f32.mrf.mxu0
      %v4669 = vadd.f32 %v4596, %v4668
      %v4670 = vpop.f32.mrf.mxu0
      %v4671 = vadd.f32 %v4598, %v4670
      %v4672 = vpop.f32.mrf.mxu0
      %v4673 = vadd.f32 %v4600, %v4672
      %v4674 = vpop.f32.mrf.mxu0
      %v4675 = vadd.f32 %v4602, %v4674
      %4676 = vdwg.mxu0
      %4677 = vmatprep.subr.bf16.mxu0 0
      %4678 = vmatpush1.bf16.msra.mxu0 0
      %4679 = vmatprep.subr.bf16.mxu0 0
      %4680 = vmatpush1.bf16.msra.mxu0 0
      %4681 = vmatprep.subr.bf16.mxu0 0
      %4682 = vmatpush1.bf16.msra.mxu0 0
      %4683 = vmatprep.subr.bf16.mxu0 0
      %4684 = vmatpush1.bf16.msra.mxu0 0
      %4685 = vmatprep.subr.bf16.mxu0 0
      %4686 = vmatpush1.bf16.msra.mxu0 0
      %4687 = vmatprep.subr.bf16.mxu0 0
      %4688 = vmatpush1.bf16.msra.mxu0 0
      %4689 = vmatprep.subr.bf16.mxu0 0
      %4690 = vmatpush1.bf16.msra.mxu0 0
      %4691 = vmatprep.subr.bf16.mxu0 %v4347
      %4692 = vmatpush1.bf16.msra.mxu0 %v4346
      %4693 = vmatprep.subr.bf16.mxu0 0
      %4694 = vmatpush2.bf16.msra.mxu0 0
      %4695 = vmatprep.subr.bf16.mxu0 0
      %4696 = vmatpush2.bf16.msra.mxu0 0
      %4697 = vmatprep.subr.bf16.mxu0 0
      %4698 = vmatpush2.bf16.msra.mxu0 0
      %4699 = vmatprep.subr.bf16.mxu0 0
      %4700 = vmatpush2.bf16.msra.mxu0 0
      %4701 = vmatprep.subr.bf16.mxu0 0
      %4702 = vmatpush2.bf16.msra.mxu0 0
      %4703 = vmatprep.subr.bf16.mxu0 0
      %4704 = vmatpush2.bf16.msra.mxu0 0
      %4705 = vmatprep.subr.bf16.mxu0 0
      %4706 = vmatpush2.bf16.msra.mxu0 0
      %4707 = vmatprep.subr.bf16.mxu0 0
      %4708 = vmatpush2.bf16.msra.mxu0 0
      %4709 = vmatprep.mubr.bf16.mxu0 0
      %4710 = vmatmul.mubr.bf16.gmra.mxu0 %v4447
      %v4711 = vpop.f32.mrf.mxu0
      %v4712 = vadd.f32 %v4639, %v4711
      %v4713 = vpop.f32.mrf.mxu0
      %v4714 = vadd.f32 %v4641, %v4713
      %v4715 = vpop.f32.mrf.mxu0
      %v4716 = vadd.f32 %v4643, %v4715
      %v4717 = vpop.f32.mrf.mxu0
      %v4718 = vadd.f32 %v4645, %v4717
      %4719 = vmatprep.mubr.bf16.mxu0 0
      %4720 = vmatmul.mubr.bf16.gmra.mxu0 %v4450
      %v4721 = vpop.f32.mrf.mxu0
      %v4722 = vadd.f32 %v4649, %v4721
      %v4723 = vpop.f32.mrf.mxu0
      %v4724 = vadd.f32 %v4651, %v4723
      %v4725 = vpop.f32.mrf.mxu0
      %v4726 = vadd.f32 %v4653, %v4725
      %v4727 = vpop.f32.mrf.mxu0
      %v4728 = vadd.f32 %v4655, %v4727
      %4729 = vmatprep.mubr.bf16.mxu0 0
      %4730 = vmatmul.mubr.bf16.gmra.mxu0 %v4453
      %v4731 = vpop.f32.mrf.mxu0
      %v4732 = vadd.f32 %v4659, %v4731
      %v4733 = vpop.f32.mrf.mxu0
      %v4734 = vadd.f32 %v4661, %v4733
      %v4735 = vpop.f32.mrf.mxu0
      %v4736 = vadd.f32 %v4663, %v4735
      %v4737 = vpop.f32.mrf.mxu0
      %v4738 = vadd.f32 %v4665, %v4737
      %4739 = vmatprep.mubr.bf16.mxu0 0
      %4740 = vmatmul.mubr.bf16.gmra.mxu0 %v4456
      %v4741 = vpop.f32.mrf.mxu0
      %v4742 = vadd.f32 %v4669, %v4741
      %v4743 = vpop.f32.mrf.mxu0
      %v4744 = vadd.f32 %v4671, %v4743
      %v4745 = vpop.f32.mrf.mxu0
      %v4746 = vadd.f32 %v4673, %v4745
      %v4747 = vpop.f32.mrf.mxu0
      %v4748 = vadd.f32 %v4675, %v4747
      %4749 = vdwg.mxu0
      %v4750 = vmax.f32 %v4712, 0.0
      %v4751 = vmax.f32 %v4714, 0.0
      %v4752 = vmax.f32 %v4716, 0.0
      %v4753 = vmax.f32 %v4718, 0.0
      %v4754 = vmax.f32 %v4722, 0.0
      %v4755 = vmax.f32 %v4724, 0.0
      %v4756 = vmax.f32 %v4726, 0.0
      %v4757 = vmax.f32 %v4728, 0.0
      %4758 = vrot.lane.b32.xlu0 %v4750, 34
      %v4759 = vpop.permute.xlu0 %4758
      %4760 = vrot.lane.b32.xlu0 %v4752, 34
      %v4761 = vpop.permute.xlu0 %4760
      %4762 = vrot.lane.b32.xlu0 %v4751, 34
      %v4763 = vpop.permute.xlu0 %4762
      %4764 = vrot.lane.b32.xlu0 %v4753, 34
      %v4765 = vpop.permute.xlu0 %4764
      %v4766 = vsel %vm2140, %v4759, %v4763
      %v4767 = vsel %vm2140, %v4761, %v4765
      %v4768 = vsel %vm2140, %v4763, %v4759
      %v4769 = vsel %vm2140, %v4765, %v4761
      %v4770 = vmul.f32 %v4768, %v2148
      %v4771 = vmul.f32 %v4766, %v2152
      %v4772 = vmul.f32 %v4769, %v2148
      %v4773 = vmul.f32 %v4767, %v2152
      %v4774 = vpack.c.bf16 %v4772, %v4770
      %v4775 = vpack.c.bf16 %v4773, %v4771
      %v4778 = vunpack.c.l.b16 %v4774
      %v4779 = vunpack.c.l.b16 %v4775
      %v4780 = vunpack.c.h.b16 %v4774
      %v4781 = vunpack.c.h.b16 %v4775
      %v4782 = vpack.c.b16 %v4779, %v4778
      %v4783 = vpack.c.b16 %v4781, %v4780
      %4786 = vst [vmem:[#allocation2] sm:$0xff] %v4782
      %4787 = vst [vmem:[#allocation2 + $0x8] sm:$0xff] %v4783
      %4788 = vrot.lane.b32.xlu0 %v4750, 33
      %v4789 = vpop.permute.xlu0 %4788
      %4790 = vrot.lane.b32.xlu0 %v4752, 33
      %v4791 = vpop.permute.xlu0 %4790
      %4792 = vrot.lane.b32.xlu0 %v4751, 33
      %v4793 = vpop.permute.xlu0 %4792
      %4794 = vrot.lane.b32.xlu0 %v4753, 33
      %v4795 = vpop.permute.xlu0 %4794
      %v4796 = vsel %vm2179, %v4789, %v4793
      %v4797 = vsel %vm2179, %v4791, %v4795
      %v4798 = vsel %vm2179, %v4793, %v4789
      %v4799 = vsel %vm2179, %v4795, %v4791
      %v4800 = vmul.f32 %v4798, %v2187
      %v4801 = vmul.f32 %v4796, %v2191
      %v4802 = vmul.f32 %v4799, %v2187
      %v4803 = vmul.f32 %v4797, %v2191
      %v4804 = vpack.c.bf16 %v4802, %v4800
      %v4805 = vpack.c.bf16 %v4803, %v4801
      %v4808 = vunpack.c.l.b16 %v4804
      %v4809 = vunpack.c.l.b16 %v4805
      %v4810 = vunpack.c.h.b16 %v4804
      %v4811 = vunpack.c.h.b16 %v4805
      %v4812 = vpack.c.b16 %v4809, %v4808
      %v4813 = vpack.c.b16 %v4811, %v4810
      %4816 = vst [vmem:[#allocation2 + $0x10] sm:$0xff] %v4812
      %4817 = vst [vmem:[#allocation2 + $0x18] sm:$0xff] %v4813
      %4818 = vrot.lane.b32.xlu0 %v4750, 32
      %v4819 = vpop.permute.xlu0 %4818
      %4820 = vrot.lane.b32.xlu0 %v4752, 32
      %v4821 = vpop.permute.xlu0 %4820
      %4822 = vrot.lane.b32.xlu0 %v4751, 32
      %v4823 = vpop.permute.xlu0 %4822
      %4824 = vrot.lane.b32.xlu0 %v4753, 32
      %v4825 = vpop.permute.xlu0 %4824
      %v4826 = vsel %vm2218, %v4819, %v4823
      %v4827 = vsel %vm2218, %v4821, %v4825
      %v4828 = vsel %vm2218, %v4823, %v4819
      %v4829 = vsel %vm2218, %v4825, %v4821
      %v4830 = vmul.f32 %v4828, %v2226
      %v4831 = vmul.f32 %v4826, %v2230
      %v4832 = vmul.f32 %v4829, %v2226
      %v4833 = vmul.f32 %v4827, %v2230
      %v4834 = vpack.c.bf16 %v4832, %v4830
      %v4835 = vpack.c.bf16 %v4833, %v4831
      %v4838 = vunpack.c.l.b16 %v4834
      %v4839 = vunpack.c.l.b16 %v4835
      %v4840 = vunpack.c.h.b16 %v4834
      %v4841 = vunpack.c.h.b16 %v4835
      %v4842 = vpack.c.b16 %v4839, %v4838
      %v4843 = vpack.c.b16 %v4841, %v4840
      %4846 = vst [vmem:[#allocation2 + $0x20] sm:$0xff] %v4842
      %4847 = vst [vmem:[#allocation2 + $0x28] sm:$0xff] %v4843
      %4848 = vrot.lane.b32.xlu0 %v4750, 31
      %v4849 = vpop.permute.xlu0 %4848
      %4850 = vrot.lane.b32.xlu0 %v4752, 31
      %v4851 = vpop.permute.xlu0 %4850
      %4852 = vrot.lane.b32.xlu0 %v4751, 31
      %v4853 = vpop.permute.xlu0 %4852
      %4854 = vrot.lane.b32.xlu0 %v4753, 31
      %v4855 = vpop.permute.xlu0 %4854
      %v4856 = vsel %vm2257, %v4849, %v4853
      %v4857 = vsel %vm2257, %v4851, %v4855
      %v4858 = vsel %vm2257, %v4853, %v4849
      %v4859 = vsel %vm2257, %v4855, %v4851
      %v4860 = vmul.f32 %v4858, %v2265
      %v4861 = vmul.f32 %v4856, %v2269
      %v4862 = vmul.f32 %v4859, %v2265
      %v4863 = vmul.f32 %v4857, %v2269
      %v4864 = vpack.c.bf16 %v4862, %v4860
      %v4865 = vpack.c.bf16 %v4863, %v4861
      %v4868 = vunpack.c.l.b16 %v4864
      %v4869 = vunpack.c.l.b16 %v4865
      %v4870 = vunpack.c.h.b16 %v4864
      %v4871 = vunpack.c.h.b16 %v4865
      %v4872 = vpack.c.b16 %v4869, %v4868
      %v4873 = vpack.c.b16 %v4871, %v4870
      %4876 = vst [vmem:[#allocation2 + $0x30] sm:$0xff] %v4872
      %4877 = vst [vmem:[#allocation2 + $0x38] sm:$0xff] %v4873
      %4878 = vrot.lane.b32.xlu0 %v4750, 30
      %v4879 = vpop.permute.xlu0 %4878
      %4880 = vrot.lane.b32.xlu0 %v4752, 30
      %v4881 = vpop.permute.xlu0 %4880
      %4882 = vrot.lane.b32.xlu0 %v4751, 30
      %v4883 = vpop.permute.xlu0 %4882
      %4884 = vrot.lane.b32.xlu0 %v4753, 30
      %v4885 = vpop.permute.xlu0 %4884
      %v4886 = vsel %vm2296, %v4879, %v4883
      %v4887 = vsel %vm2296, %v4881, %v4885
      %v4888 = vsel %vm2296, %v4883, %v4879
      %v4889 = vsel %vm2296, %v4885, %v4881
      %v4890 = vmul.f32 %v4888, %v2304
      %v4891 = vmul.f32 %v4886, %v2308
      %v4892 = vmul.f32 %v4889, %v2304
      %v4893 = vmul.f32 %v4887, %v2308
      %v4894 = vpack.c.bf16 %v4892, %v4890
      %v4895 = vpack.c.bf16 %v4893, %v4891
      %v4898 = vunpack.c.l.b16 %v4894
      %v4899 = vunpack.c.l.b16 %v4895
      %v4900 = vunpack.c.h.b16 %v4894
      %v4901 = vunpack.c.h.b16 %v4895
      %v4902 = vpack.c.b16 %v4899, %v4898
      %v4903 = vpack.c.b16 %v4901, %v4900
      %4906 = vst [vmem:[#allocation2 + $0x40] sm:$0xff] %v4902
      %4907 = vst [vmem:[#allocation2 + $0x48] sm:$0xff] %v4903
      %4908 = vrot.lane.b32.xlu0 %v4750, 18
      %v4909 = vpop.permute.xlu0 %4908
      %4910 = vrot.lane.b32.xlu0 %v4752, 18
      %v4911 = vpop.permute.xlu0 %4910
      %4912 = vrot.lane.b32.xlu0 %v4751, 18
      %v4913 = vpop.permute.xlu0 %4912
      %4914 = vrot.lane.b32.xlu0 %v4753, 18
      %v4915 = vpop.permute.xlu0 %4914
      %v4916 = vsel %vm2413, %v4909, %v4913
      %v4917 = vsel %vm2413, %v4911, %v4915
      %v4918 = vsel %vm2413, %v4913, %v4909
      %v4919 = vsel %vm2413, %v4915, %v4911
      %v4920 = vmul.f32 %v4918, %v2421
      %v4921 = vmul.f32 %v4916, %v2425
      %v4922 = vmul.f32 %v4919, %v2421
      %v4923 = vmul.f32 %v4917, %v2425
      %v4924 = vpack.c.bf16 %v4922, %v4920
      %v4925 = vpack.c.bf16 %v4923, %v4921
      %v4928 = vunpack.c.l.b16 %v4924
      %v4929 = vunpack.c.l.b16 %v4925
      %v4930 = vunpack.c.h.b16 %v4924
      %v4931 = vunpack.c.h.b16 %v4925
      %v4932 = vpack.c.b16 %v4929, %v4928
      %v4933 = vpack.c.b16 %v4931, %v4930
      %4936 = vst [vmem:[#allocation2 + $0x50] sm:$0xff] %v4932
      %4937 = vst [vmem:[#allocation2 + $0x58] sm:$0xff] %v4933
      %4938 = vrot.lane.b32.xlu0 %v4750, 17
      %v4939 = vpop.permute.xlu0 %4938
      %4940 = vrot.lane.b32.xlu0 %v4752, 17
      %v4941 = vpop.permute.xlu0 %4940
      %4942 = vrot.lane.b32.xlu0 %v4751, 17
      %v4943 = vpop.permute.xlu0 %4942
      %4944 = vrot.lane.b32.xlu0 %v4753, 17
      %v4945 = vpop.permute.xlu0 %4944
      %v4946 = vsel %vm829, %v4939, %v4943
      %v4947 = vsel %vm829, %v4941, %v4945
      %v4948 = vsel %vm829, %v4943, %v4939
      %v4949 = vsel %vm829, %v4945, %v4941
      %v4950 = vmul.f32 %v4948, %v837
      %v4951 = vmul.f32 %v4946, %v841
      %v4952 = vmul.f32 %v4949, %v837
      %v4953 = vmul.f32 %v4947, %v841
      %v4954 = vpack.c.bf16 %v4952, %v4950
      %v4955 = vpack.c.bf16 %v4953, %v4951
      %v4958 = vunpack.c.l.b16 %v4954
      %v4959 = vunpack.c.l.b16 %v4955
      %v4960 = vunpack.c.h.b16 %v4954
      %v4961 = vunpack.c.h.b16 %v4955
      %v4962 = vpack.c.b16 %v4959, %v4958
      %v4963 = vpack.c.b16 %v4961, %v4960
      %4966 = vst [vmem:[#allocation2 + $0x60] sm:$0xff] %v4962
      %4967 = vst [vmem:[#allocation2 + $0x68] sm:$0xff] %v4963
      %4968 = vrot.lane.b32.xlu0 %v4750, 16
      %v4969 = vpop.permute.xlu0 %4968
      %4970 = vrot.lane.b32.xlu0 %v4752, 16
      %v4971 = vpop.permute.xlu0 %4970
      %4972 = vrot.lane.b32.xlu0 %v4751, 16
      %v4973 = vpop.permute.xlu0 %4972
      %4974 = vrot.lane.b32.xlu0 %v4753, 16
      %v4975 = vpop.permute.xlu0 %4974
      %v4976 = vsel %vm868, %v4969, %v4973
      %v4977 = vsel %vm868, %v4971, %v4975
      %v4978 = vsel %vm868, %v4973, %v4969
      %v4979 = vsel %vm868, %v4975, %v4971
      %v4980 = vmul.f32 %v4978, %v876
      %v4981 = vmul.f32 %v4976, %v880
      %v4982 = vmul.f32 %v4979, %v876
      %v4983 = vmul.f32 %v4977, %v880
      %v4984 = vpack.c.bf16 %v4982, %v4980
      %v4985 = vpack.c.bf16 %v4983, %v4981
      %v4988 = vunpack.c.l.b16 %v4984
      %v4989 = vunpack.c.l.b16 %v4985
      %v4990 = vunpack.c.h.b16 %v4984
      %v4991 = vunpack.c.h.b16 %v4985
      %v4992 = vpack.c.b16 %v4989, %v4988
      %v4993 = vpack.c.b16 %v4991, %v4990
      %4996 = vst [vmem:[#allocation2 + $0x70] sm:$0xff] %v4992
      %4997 = vst [vmem:[#allocation2 + $0x78] sm:$0xff] %v4993
      %4998 = vrot.lane.b32.xlu0 %v4750, 15
      %v4999 = vpop.permute.xlu0 %4998
      %5000 = vrot.lane.b32.xlu0 %v4752, 15
      %v5001 = vpop.permute.xlu0 %5000
      %5002 = vrot.lane.b32.xlu0 %v4751, 15
      %v5003 = vpop.permute.xlu0 %5002
      %5004 = vrot.lane.b32.xlu0 %v4753, 15
      %v5005 = vpop.permute.xlu0 %5004
      %v5006 = vsel %vm907, %v4999, %v5003
      %v5007 = vsel %vm907, %v5001, %v5005
      %v5008 = vsel %vm907, %v5003, %v4999
      %v5009 = vsel %vm907, %v5005, %v5001
      %v5010 = vmul.f32 %v5008, %v915
      %v5011 = vmul.f32 %v5006, %v919
      %v5012 = vmul.f32 %v5009, %v915
      %v5013 = vmul.f32 %v5007, %v919
      %v5014 = vpack.c.bf16 %v5012, %v5010
      %v5015 = vpack.c.bf16 %v5013, %v5011
      %v5018 = vunpack.c.l.b16 %v5014
      %v5019 = vunpack.c.l.b16 %v5015
      %v5020 = vunpack.c.h.b16 %v5014
      %v5021 = vunpack.c.h.b16 %v5015
      %v5022 = vpack.c.b16 %v5019, %v5018
      %v5023 = vpack.c.b16 %v5021, %v5020
      %5026 = vst [vmem:[#allocation2 + $0x80] sm:$0xff] %v5022
      %5027 = vst [vmem:[#allocation2 + $0x88] sm:$0xff] %v5023
      %5028 = vrot.lane.b32.xlu0 %v4750, 14
      %v5029 = vpop.permute.xlu0 %5028
      %5030 = vrot.lane.b32.xlu0 %v4752, 14
      %v5031 = vpop.permute.xlu0 %5030
      %5032 = vrot.lane.b32.xlu0 %v4751, 14
      %v5033 = vpop.permute.xlu0 %5032
      %5034 = vrot.lane.b32.xlu0 %v4753, 14
      %v5035 = vpop.permute.xlu0 %5034
      %v5036 = vsel %vm2542, %v5029, %v5033
      %v5037 = vsel %vm2542, %v5031, %v5035
      %v5038 = vsel %vm2542, %v5033, %v5029
      %v5039 = vsel %vm2542, %v5035, %v5031
      %v5040 = vmul.f32 %v5038, %v2550
      %v5041 = vmul.f32 %v5036, %v2554
      %v5042 = vmul.f32 %v5039, %v2550
      %v5043 = vmul.f32 %v5037, %v2554
      %v5044 = vpack.c.bf16 %v5042, %v5040
      %v5045 = vpack.c.bf16 %v5043, %v5041
      %v5048 = vunpack.c.l.b16 %v5044
      %v5049 = vunpack.c.l.b16 %v5045
      %v5050 = vunpack.c.h.b16 %v5044
      %v5051 = vunpack.c.h.b16 %v5045
      %v5052 = vpack.c.b16 %v5049, %v5048
      %v5053 = vpack.c.b16 %v5051, %v5050
      %5056 = vst [vmem:[#allocation2 + $0x90] sm:$0xff] %v5052
      %5057 = vst [vmem:[#allocation2 + $0x98] sm:$0xff] %v5053
      %5058 = vrot.lane.b32.xlu0 %v4750, 2
      %v5059 = vpop.permute.xlu0 %5058
      %5060 = vrot.lane.b32.xlu0 %v4752, 2
      %v5061 = vpop.permute.xlu0 %5060
      %5062 = vrot.lane.b32.xlu0 %v4751, 2
      %v5063 = vpop.permute.xlu0 %5062
      %5064 = vrot.lane.b32.xlu0 %v4753, 2
      %v5065 = vpop.permute.xlu0 %5064
      %v5066 = vsel %vm2659, %v5059, %v5063
      %v5067 = vsel %vm2659, %v5061, %v5065
      %v5068 = vsel %vm2659, %v5063, %v5059
      %v5069 = vsel %vm2659, %v5065, %v5061
      %v5070 = vmul.f32 %v5068, %v2667
      %v5071 = vmul.f32 %v5066, %v2671
      %v5072 = vmul.f32 %v5069, %v2667
      %v5073 = vmul.f32 %v5067, %v2671
      %v5074 = vpack.c.bf16 %v5072, %v5070
      %v5075 = vpack.c.bf16 %v5073, %v5071
      %v5078 = vunpack.c.l.b16 %v5074
      %v5079 = vunpack.c.l.b16 %v5075
      %v5080 = vunpack.c.h.b16 %v5074
      %v5081 = vunpack.c.h.b16 %v5075
      %v5082 = vpack.c.b16 %v5079, %v5078
      %v5083 = vpack.c.b16 %v5081, %v5080
      %5086 = vst [vmem:[#allocation2 + $0xa0] sm:$0xff] %v5082
      %5087 = vst [vmem:[#allocation2 + $0xa8] sm:$0xff] %v5083
      %5088 = vrot.lane.b32.xlu0 %v4750, 1
      %v5089 = vpop.permute.xlu0 %5088
      %5090 = vrot.lane.b32.xlu0 %v4752, 1
      %v5091 = vpop.permute.xlu0 %5090
      %5092 = vrot.lane.b32.xlu0 %v4751, 1
      %v5093 = vpop.permute.xlu0 %5092
      %5094 = vrot.lane.b32.xlu0 %v4753, 1
      %v5095 = vpop.permute.xlu0 %5094
      %v5096 = vsel %vm946, %v5089, %v5093
      %v5097 = vsel %vm946, %v5091, %v5095
      %v5098 = vsel %vm946, %v5093, %v5089
      %v5099 = vsel %vm946, %v5095, %v5091
      %v5100 = vmul.f32 %v5098, %v954
      %v5101 = vmul.f32 %v5096, %v958
      %v5102 = vmul.f32 %v5099, %v954
      %v5103 = vmul.f32 %v5097, %v958
      %v5104 = vpack.c.bf16 %v5102, %v5100
      %v5105 = vpack.c.bf16 %v5103, %v5101
      %v5108 = vunpack.c.l.b16 %v5104
      %v5109 = vunpack.c.l.b16 %v5105
      %v5110 = vunpack.c.h.b16 %v5104
      %v5111 = vunpack.c.h.b16 %v5105
      %v5112 = vpack.c.b16 %v5109, %v5108
      %v5113 = vpack.c.b16 %v5111, %v5110
      %5116 = vst [vmem:[#allocation2 + $0xb0] sm:$0xff] %v5112
      %5117 = vst [vmem:[#allocation2 + $0xb8] sm:$0xff] %v5113
      %v5118 = vmul.f32 %v4750, %v980
      %v5119 = vmul.f32 %v4751, %v984
      %v5120 = vmul.f32 %v4752, %v980
      %v5121 = vmul.f32 %v4753, %v984
      %v5122 = vpack.c.bf16 %v5120, %v5118
      %v5123 = vpack.c.bf16 %v5121, %v5119
      %v5126 = vunpack.c.l.b16 %v5122
      %v5127 = vunpack.c.l.b16 %v5123
      %v5128 = vunpack.c.h.b16 %v5122
      %v5129 = vunpack.c.h.b16 %v5123
      %v5130 = vpack.c.b16 %v5127, %v5126
      %v5131 = vpack.c.b16 %v5129, %v5128
      %5134 = vst [vmem:[#allocation2 + $0xc0] sm:$0xff] %v5130
      %5135 = vst [vmem:[#allocation2 + $0xc8] sm:$0xff] %v5131
      %5136 = vrot.lane.b32.xlu0 %v4750, 127
      %v5137 = vpop.permute.xlu0 %5136
      %5138 = vrot.lane.b32.xlu0 %v4752, 127
      %v5139 = vpop.permute.xlu0 %5138
      %5140 = vrot.lane.b32.xlu0 %v4751, 127
      %v5141 = vpop.permute.xlu0 %5140
      %5142 = vrot.lane.b32.xlu0 %v4753, 127
      %v5143 = vpop.permute.xlu0 %5142
      %v5144 = vsel %vm1011, %v5137, %v5141
      %v5145 = vsel %vm1011, %v5139, %v5143
      %v5146 = vsel %vm1011, %v5141, %v5137
      %v5147 = vsel %vm1011, %v5143, %v5139
      %v5148 = vmul.f32 %v5144, %v1019
      %v5149 = vmul.f32 %v5146, %v1023
      %v5150 = vmul.f32 %v5145, %v1019
      %v5151 = vmul.f32 %v5147, %v1023
      %v5152 = vpack.c.bf16 %v5150, %v5148
      %v5153 = vpack.c.bf16 %v5151, %v5149
      %v5156 = vunpack.c.l.b16 %v5152
      %v5157 = vunpack.c.l.b16 %v5153
      %v5158 = vunpack.c.h.b16 %v5152
      %v5159 = vunpack.c.h.b16 %v5153
      %v5160 = vpack.c.b16 %v5157, %v5156
      %v5161 = vpack.c.b16 %v5159, %v5158
      %5164 = vst [vmem:[#allocation2 + $0xd0] sm:$0xff] %v5160
      %5165 = vst [vmem:[#allocation2 + $0xd8] sm:$0xff] %v5161
      %5166 = vrot.lane.b32.xlu0 %v4750, 126
      %v5167 = vpop.permute.xlu0 %5166
      %5168 = vrot.lane.b32.xlu0 %v4752, 126
      %v5169 = vpop.permute.xlu0 %5168
      %5170 = vrot.lane.b32.xlu0 %v4751, 126
      %v5171 = vpop.permute.xlu0 %5170
      %5172 = vrot.lane.b32.xlu0 %v4753, 126
      %v5173 = vpop.permute.xlu0 %5172
      %v5174 = vsel %vm2776, %v5167, %v5171
      %v5175 = vsel %vm2776, %v5169, %v5173
      %v5176 = vsel %vm2776, %v5171, %v5167
      %v5177 = vsel %vm2776, %v5173, %v5169
      %v5178 = vmul.f32 %v5174, %v2784
      %v5179 = vmul.f32 %v5176, %v2788
      %v5180 = vmul.f32 %v5175, %v2784
      %v5181 = vmul.f32 %v5177, %v2788
      %v5182 = vpack.c.bf16 %v5180, %v5178
      %v5183 = vpack.c.bf16 %v5181, %v5179
      %v5186 = vunpack.c.l.b16 %v5182
      %v5187 = vunpack.c.l.b16 %v5183
      %v5188 = vunpack.c.h.b16 %v5182
      %v5189 = vunpack.c.h.b16 %v5183
      %v5190 = vpack.c.b16 %v5187, %v5186
      %v5191 = vpack.c.b16 %v5189, %v5188
      %5194 = vst [vmem:[#allocation2 + $0xe0] sm:$0xff] %v5190
      %5195 = vst [vmem:[#allocation2 + $0xe8] sm:$0xff] %v5191
      %5196 = vrot.lane.b32.xlu0 %v4750, 114
      %v5197 = vpop.permute.xlu0 %5196
      %5198 = vrot.lane.b32.xlu0 %v4752, 114
      %v5199 = vpop.permute.xlu0 %5198
      %5200 = vrot.lane.b32.xlu0 %v4751, 114
      %v5201 = vpop.permute.xlu0 %5200
      %5202 = vrot.lane.b32.xlu0 %v4753, 114
      %v5203 = vpop.permute.xlu0 %5202
      %v5204 = vsel %vm2893, %v5197, %v5201
      %v5205 = vsel %vm2893, %v5199, %v5203
      %v5206 = vsel %vm2893, %v5201, %v5197
      %v5207 = vsel %vm2893, %v5203, %v5199
      %v5208 = vmul.f32 %v5204, %v2901
      %v5209 = vmul.f32 %v5206, %v2905
      %v5210 = vmul.f32 %v5205, %v2901
      %v5211 = vmul.f32 %v5207, %v2905
      %v5212 = vpack.c.bf16 %v5210, %v5208
      %v5213 = vpack.c.bf16 %v5211, %v5209
      %v5216 = vunpack.c.l.b16 %v5212
      %v5217 = vunpack.c.l.b16 %v5213
      %v5218 = vunpack.c.h.b16 %v5212
      %v5219 = vunpack.c.h.b16 %v5213
      %v5220 = vpack.c.b16 %v5217, %v5216
      %v5221 = vpack.c.b16 %v5219, %v5218
      %5224 = vst [vmem:[#allocation2 + $0xf0] sm:$0xff] %v5220
      %5225 = vst [vmem:[#allocation2 + $0xf8] sm:$0xff] %v5221
      %5226 = vrot.lane.b32.xlu0 %v4750, 113
      %v5227 = vpop.permute.xlu0 %5226
      %5228 = vrot.lane.b32.xlu0 %v4752, 113
      %v5229 = vpop.permute.xlu0 %5228
      %5230 = vrot.lane.b32.xlu0 %v4751, 113
      %v5231 = vpop.permute.xlu0 %5230
      %5232 = vrot.lane.b32.xlu0 %v4753, 113
      %v5233 = vpop.permute.xlu0 %5232
      %v5234 = vsel %vm1050, %v5227, %v5231
      %v5235 = vsel %vm1050, %v5229, %v5233
      %v5236 = vsel %vm1050, %v5231, %v5227
      %v5237 = vsel %vm1050, %v5233, %v5229
      %v5238 = vmul.f32 %v5234, %v1058
      %v5239 = vmul.f32 %v5236, %v1062
      %v5240 = vmul.f32 %v5235, %v1058
      %v5241 = vmul.f32 %v5237, %v1062
      %v5242 = vpack.c.bf16 %v5240, %v5238
      %v5243 = vpack.c.bf16 %v5241, %v5239
      %v5246 = vunpack.c.l.b16 %v5242
      %v5247 = vunpack.c.l.b16 %v5243
      %v5248 = vunpack.c.h.b16 %v5242
      %v5249 = vunpack.c.h.b16 %v5243
      %v5250 = vpack.c.b16 %v5247, %v5246
      %v5251 = vpack.c.b16 %v5249, %v5248
      %5254 = vst [vmem:[#allocation2 + $0x100] sm:$0xff] %v5250
      %5255 = vst [vmem:[#allocation2 + $0x108] sm:$0xff] %v5251
      %5256 = vrot.lane.b32.xlu0 %v4750, 112
      %v5257 = vpop.permute.xlu0 %5256
      %5258 = vrot.lane.b32.xlu0 %v4752, 112
      %v5259 = vpop.permute.xlu0 %5258
      %5260 = vrot.lane.b32.xlu0 %v4751, 112
      %v5261 = vpop.permute.xlu0 %5260
      %5262 = vrot.lane.b32.xlu0 %v4753, 112
      %v5263 = vpop.permute.xlu0 %5262
      %v5264 = vsel %vm1089, %v5257, %v5261
      %v5265 = vsel %vm1089, %v5259, %v5263
      %v5266 = vsel %vm1089, %v5261, %v5257
      %v5267 = vsel %vm1089, %v5263, %v5259
      %v5268 = vmul.f32 %v5264, %v1097
      %v5269 = vmul.f32 %v5266, %v1101
      %v5270 = vmul.f32 %v5265, %v1097
      %v5271 = vmul.f32 %v5267, %v1101
      %v5272 = vpack.c.bf16 %v5270, %v5268
      %v5273 = vpack.c.bf16 %v5271, %v5269
      %v5276 = vunpack.c.l.b16 %v5272
      %v5277 = vunpack.c.l.b16 %v5273
      %v5278 = vunpack.c.h.b16 %v5272
      %v5279 = vunpack.c.h.b16 %v5273
      %v5280 = vpack.c.b16 %v5277, %v5276
      %v5281 = vpack.c.b16 %v5279, %v5278
      %5284 = vst [vmem:[#allocation2 + $0x110] sm:$0xff] %v5280
      %5285 = vst [vmem:[#allocation2 + $0x118] sm:$0xff] %v5281
      %5286 = vrot.lane.b32.xlu0 %v4750, 111
      %v5287 = vpop.permute.xlu0 %5286
      %5288 = vrot.lane.b32.xlu0 %v4752, 111
      %v5289 = vpop.permute.xlu0 %5288
      %5290 = vrot.lane.b32.xlu0 %v4751, 111
      %v5291 = vpop.permute.xlu0 %5290
      %5292 = vrot.lane.b32.xlu0 %v4753, 111
      %v5293 = vpop.permute.xlu0 %5292
      %v5294 = vsel %vm1128, %v5287, %v5291
      %v5295 = vsel %vm1128, %v5289, %v5293
      %v5296 = vsel %vm1128, %v5291, %v5287
      %v5297 = vsel %vm1128, %v5293, %v5289
      %v5298 = vmul.f32 %v5294, %v1136
      %v5299 = vmul.f32 %v5296, %v1140
      %v5300 = vmul.f32 %v5295, %v1136
      %v5301 = vmul.f32 %v5297, %v1140
      %v5302 = vpack.c.bf16 %v5300, %v5298
      %v5303 = vpack.c.bf16 %v5301, %v5299
      %v5306 = vunpack.c.l.b16 %v5302
      %v5307 = vunpack.c.l.b16 %v5303
      %v5308 = vunpack.c.h.b16 %v5302
      %v5309 = vunpack.c.h.b16 %v5303
      %v5310 = vpack.c.b16 %v5307, %v5306
      %v5311 = vpack.c.b16 %v5309, %v5308
      %5314 = vst [vmem:[#allocation2 + $0x120] sm:$0xff] %v5310
      %5315 = vst [vmem:[#allocation2 + $0x128] sm:$0xff] %v5311
      %5316 = vrot.lane.b32.xlu0 %v4750, 110
      %v5317 = vpop.permute.xlu0 %5316
      %5318 = vrot.lane.b32.xlu0 %v4752, 110
      %v5319 = vpop.permute.xlu0 %5318
      %5320 = vrot.lane.b32.xlu0 %v4751, 110
      %v5321 = vpop.permute.xlu0 %5320
      %5322 = vrot.lane.b32.xlu0 %v4753, 110
      %v5323 = vpop.permute.xlu0 %5322
      %v5324 = vsel %vm3022, %v5317, %v5321
      %v5325 = vsel %vm3022, %v5319, %v5323
      %v5326 = vsel %vm3022, %v5321, %v5317
      %v5327 = vsel %vm3022, %v5323, %v5319
      %v5328 = vmul.f32 %v5324, %v3030
      %v5329 = vmul.f32 %v5326, %v3034
      %v5330 = vmul.f32 %v5325, %v3030
      %v5331 = vmul.f32 %v5327, %v3034
      %v5332 = vpack.c.bf16 %v5330, %v5328
      %v5333 = vpack.c.bf16 %v5331, %v5329
      %v5336 = vunpack.c.l.b16 %v5332
      %v5337 = vunpack.c.l.b16 %v5333
      %v5338 = vunpack.c.h.b16 %v5332
      %v5339 = vunpack.c.h.b16 %v5333
      %v5340 = vpack.c.b16 %v5337, %v5336
      %v5341 = vpack.c.b16 %v5339, %v5338
      %5344 = vst [vmem:[#allocation2 + $0x130] sm:$0xff] %v5340
      %5345 = vst [vmem:[#allocation2 + $0x138] sm:$0xff] %v5341
      %5346 = vrot.lane.b32.xlu0 %v4750, 98
      %v5347 = vpop.permute.xlu0 %5346
      %5348 = vrot.lane.b32.xlu0 %v4752, 98
      %v5349 = vpop.permute.xlu0 %5348
      %5350 = vrot.lane.b32.xlu0 %v4751, 98
      %v5351 = vpop.permute.xlu0 %5350
      %5352 = vrot.lane.b32.xlu0 %v4753, 98
      %v5353 = vpop.permute.xlu0 %5352
      %v5354 = vsel %vm3139, %v5347, %v5351
      %v5355 = vsel %vm3139, %v5349, %v5353
      %v5356 = vsel %vm3139, %v5351, %v5347
      %v5357 = vsel %vm3139, %v5353, %v5349
      %v5358 = vmul.f32 %v5354, %v3147
      %v5359 = vmul.f32 %v5356, %v3151
      %v5360 = vmul.f32 %v5355, %v3147
      %v5361 = vmul.f32 %v5357, %v3151
      %v5362 = vpack.c.bf16 %v5360, %v5358
      %v5363 = vpack.c.bf16 %v5361, %v5359
      %v5366 = vunpack.c.l.b16 %v5362
      %v5367 = vunpack.c.l.b16 %v5363
      %v5368 = vunpack.c.h.b16 %v5362
      %v5369 = vunpack.c.h.b16 %v5363
      %v5370 = vpack.c.b16 %v5367, %v5366
      %v5371 = vpack.c.b16 %v5369, %v5368
      %5374 = vst [vmem:[#allocation2 + $0x140] sm:$0xff] %v5370
      %5375 = vst [vmem:[#allocation2 + $0x148] sm:$0xff] %v5371
      %5376 = vrot.lane.b32.xlu0 %v4750, 97
      %v5377 = vpop.permute.xlu0 %5376
      %5378 = vrot.lane.b32.xlu0 %v4752, 97
      %v5379 = vpop.permute.xlu0 %5378
      %5380 = vrot.lane.b32.xlu0 %v4751, 97
      %v5381 = vpop.permute.xlu0 %5380
      %5382 = vrot.lane.b32.xlu0 %v4753, 97
      %v5383 = vpop.permute.xlu0 %5382
      %v5384 = vsel %vm3178, %v5377, %v5381
      %v5385 = vsel %vm3178, %v5379, %v5383
      %v5386 = vsel %vm3178, %v5381, %v5377
      %v5387 = vsel %vm3178, %v5383, %v5379
      %v5388 = vmul.f32 %v5384, %v3186
      %v5389 = vmul.f32 %v5386, %v3190
      %v5390 = vmul.f32 %v5385, %v3186
      %v5391 = vmul.f32 %v5387, %v3190
      %v5392 = vpack.c.bf16 %v5390, %v5388
      %v5393 = vpack.c.bf16 %v5391, %v5389
      %v5396 = vunpack.c.l.b16 %v5392
      %v5397 = vunpack.c.l.b16 %v5393
      %v5398 = vunpack.c.h.b16 %v5392
      %v5399 = vunpack.c.h.b16 %v5393
      %v5400 = vpack.c.b16 %v5397, %v5396
      %v5401 = vpack.c.b16 %v5399, %v5398
      %5404 = vst [vmem:[#allocation2 + $0x150] sm:$0xff] %v5400
      %5405 = vst [vmem:[#allocation2 + $0x158] sm:$0xff] %v5401
      %5406 = vrot.lane.b32.xlu0 %v4750, 96
      %v5407 = vpop.permute.xlu0 %5406
      %5408 = vrot.lane.b32.xlu0 %v4752, 96
      %v5409 = vpop.permute.xlu0 %5408
      %5410 = vrot.lane.b32.xlu0 %v4751, 96
      %v5411 = vpop.permute.xlu0 %5410
      %5412 = vrot.lane.b32.xlu0 %v4753, 96
      %v5413 = vpop.permute.xlu0 %5412
      %v5414 = vsel %vm3217, %v5407, %v5411
      %v5415 = vsel %vm3217, %v5409, %v5413
      %v5416 = vsel %vm3217, %v5411, %v5407
      %v5417 = vsel %vm3217, %v5413, %v5409
      %v5418 = vmul.f32 %v5414, %v3225
      %v5419 = vmul.f32 %v5416, %v3229
      %v5420 = vmul.f32 %v5415, %v3225
      %v5421 = vmul.f32 %v5417, %v3229
      %v5422 = vpack.c.bf16 %v5420, %v5418
      %v5423 = vpack.c.bf16 %v5421, %v5419
      %v5426 = vunpack.c.l.b16 %v5422
      %v5427 = vunpack.c.l.b16 %v5423
      %v5428 = vunpack.c.h.b16 %v5422
      %v5429 = vunpack.c.h.b16 %v5423
      %v5430 = vpack.c.b16 %v5427, %v5426
      %v5431 = vpack.c.b16 %v5429, %v5428
      %5434 = vst [vmem:[#allocation2 + $0x160] sm:$0xff] %v5430
      %5435 = vst [vmem:[#allocation2 + $0x168] sm:$0xff] %v5431
      %5436 = vrot.lane.b32.xlu0 %v4750, 95
      %v5437 = vpop.permute.xlu0 %5436
      %5438 = vrot.lane.b32.xlu0 %v4752, 95
      %v5439 = vpop.permute.xlu0 %5438
      %5440 = vrot.lane.b32.xlu0 %v4751, 95
      %v5441 = vpop.permute.xlu0 %5440
      %5442 = vrot.lane.b32.xlu0 %v4753, 95
      %v5443 = vpop.permute.xlu0 %5442
      %v5444 = vsel %vm3256, %v5437, %v5441
      %v5445 = vsel %vm3256, %v5439, %v5443
      %v5446 = vsel %vm3256, %v5441, %v5437
      %v5447 = vsel %vm3256, %v5443, %v5439
      %v5448 = vmul.f32 %v5444, %v3264
      %v5449 = vmul.f32 %v5446, %v3268
      %v5450 = vmul.f32 %v5445, %v3264
      %v5451 = vmul.f32 %v5447, %v3268
      %v5452 = vpack.c.bf16 %v5450, %v5448
      %v5453 = vpack.c.bf16 %v5451, %v5449
      %v5456 = vunpack.c.l.b16 %v5452
      %v5457 = vunpack.c.l.b16 %v5453
      %v5458 = vunpack.c.h.b16 %v5452
      %v5459 = vunpack.c.h.b16 %v5453
      %v5460 = vpack.c.b16 %v5457, %v5456
      %v5461 = vpack.c.b16 %v5459, %v5458
      %5464 = vst [vmem:[#allocation2 + $0x170] sm:$0xff] %v5460
      %5465 = vst [vmem:[#allocation2 + $0x178] sm:$0xff] %v5461
      %5466 = vrot.lane.b32.xlu0 %v4750, 94
      %v5467 = vpop.permute.xlu0 %5466
      %5468 = vrot.lane.b32.xlu0 %v4752, 94
      %v5469 = vpop.permute.xlu0 %5468
      %5470 = vrot.lane.b32.xlu0 %v4751, 94
      %v5471 = vpop.permute.xlu0 %5470
      %5472 = vrot.lane.b32.xlu0 %v4753, 94
      %v5473 = vpop.permute.xlu0 %5472
      %v5474 = vsel %vm3295, %v5467, %v5471
      %v5475 = vsel %vm3295, %v5469, %v5473
      %v5476 = vsel %vm3295, %v5471, %v5467
      %v5477 = vsel %vm3295, %v5473, %v5469
      %v5478 = vmul.f32 %v5474, %v3303
      %v5479 = vmul.f32 %v5476, %v3307
      %v5480 = vmul.f32 %v5475, %v3303
      %v5481 = vmul.f32 %v5477, %v3307
      %v5482 = vpack.c.bf16 %v5480, %v5478
      %v5483 = vpack.c.bf16 %v5481, %v5479
      %v5486 = vunpack.c.l.b16 %v5482
      %v5487 = vunpack.c.l.b16 %v5483
      %v5488 = vunpack.c.h.b16 %v5482
      %v5489 = vunpack.c.h.b16 %v5483
      %v5490 = vpack.c.b16 %v5487, %v5486
      %v5491 = vpack.c.b16 %v5489, %v5488
      %5494 = vst [vmem:[#allocation2 + $0x180] sm:$0xff] %v5490
      %5495 = vst [vmem:[#allocation2 + $0x188] sm:$0xff] %v5491
      %v5496 = vld [vmem:[%s12] sm:$0xff]
      %v5497 = vld [vmem:[%s12 + $0x8] sm:$0xff]
      %v5498 = vld [vmem:[%s12 + $0x10] sm:$0xff]
      %v5499 = vld [vmem:[%s12 + $0x18] sm:$0xff]
      %v5500 = vld [vmem:[#allocation2] sm:$0xff]
      %v5501 = vld [vmem:[#allocation2 + $0x8] sm:$0xff]
      %v5502 = vld [vmem:[#allocation2 + $0x10] sm:$0xff]
      %v5503 = vld [vmem:[#allocation2 + $0x18] sm:$0xff]
      %v5504 = vld [vmem:[#allocation2 + $0x20] sm:$0xff]
      %v5505 = vld [vmem:[#allocation2 + $0x28] sm:$0xff]
      %v5506 = vld [vmem:[#allocation2 + $0x30] sm:$0xff]
      %v5507 = vld [vmem:[#allocation2 + $0x38] sm:$0xff]
      %v5508 = vld [vmem:[#allocation2 + $0x40] sm:$0xff]
      %v5509 = vld [vmem:[#allocation2 + $0x48] sm:$0xff]
      %v5510 = vld [vmem:[#allocation2 + $0x50] sm:$0xff]
      %v5511 = vld [vmem:[#allocation2 + $0x58] sm:$0xff]
      %v5512 = vld [vmem:[#allocation2 + $0x60] sm:$0xff]
      %v5513 = vld [vmem:[#allocation2 + $0x68] sm:$0xff]
      %v5514 = vld [vmem:[#allocation2 + $0x70] sm:$0xff]
      %v5515 = vld [vmem:[#allocation2 + $0x78] sm:$0xff]
      %v5516 = vld [vmem:[#allocation2 + $0x80] sm:$0xff]
      %v5517 = vld [vmem:[#allocation2 + $0x88] sm:$0xff]
      %v5518 = vld [vmem:[#allocation2 + $0x90] sm:$0xff]
      %v5519 = vld [vmem:[#allocation2 + $0x98] sm:$0xff]
      %v5520 = vld [vmem:[#allocation2 + $0xa0] sm:$0xff]
      %v5521 = vld [vmem:[#allocation2 + $0xa8] sm:$0xff]
      %v5522 = vld [vmem:[#allocation2 + $0xb0] sm:$0xff]
      %v5523 = vld [vmem:[#allocation2 + $0xb8] sm:$0xff]
      %v5524 = vld [vmem:[#allocation2 + $0xc0] sm:$0xff]
      %v5525 = vld [vmem:[#allocation2 + $0xc8] sm:$0xff]
      %v5526 = vld [vmem:[#allocation2 + $0xd0] sm:$0xff]
      %v5527 = vld [vmem:[#allocation2 + $0xd8] sm:$0xff]
      %v5528 = vld [vmem:[#allocation2 + $0xe0] sm:$0xff]
      %v5529 = vld [vmem:[#allocation2 + $0xe8] sm:$0xff]
      %v5530 = vld [vmem:[#allocation2 + $0xf0] sm:$0xff]
      %v5531 = vld [vmem:[#allocation2 + $0xf8] sm:$0xff]
      %v5532 = vld [vmem:[#allocation2 + $0x100] sm:$0xff]
      %v5533 = vld [vmem:[#allocation2 + $0x108] sm:$0xff]
      %v5534 = vld [vmem:[#allocation2 + $0x110] sm:$0xff]
      %v5535 = vld [vmem:[#allocation2 + $0x118] sm:$0xff]
      %v5536 = vld [vmem:[#allocation2 + $0x120] sm:$0xff]
      %v5537 = vld [vmem:[#allocation2 + $0x128] sm:$0xff]
      %v5538 = vld [vmem:[#allocation2 + $0x130] sm:$0xff]
      %v5539 = vld [vmem:[#allocation2 + $0x138] sm:$0xff]
      %v5540 = vld [vmem:[#allocation2 + $0x140] sm:$0xff]
      %v5541 = vld [vmem:[#allocation2 + $0x148] sm:$0xff]
      %v5542 = vld [vmem:[#allocation2 + $0x150] sm:$0xff]
      %v5543 = vld [vmem:[#allocation2 + $0x158] sm:$0xff]
      %v5544 = vld [vmem:[#allocation2 + $0x160] sm:$0xff]
      %v5545 = vld [vmem:[#allocation2 + $0x168] sm:$0xff]
      %v5546 = vld [vmem:[#allocation2 + $0x170] sm:$0xff]
      %v5547 = vld [vmem:[#allocation2 + $0x178] sm:$0xff]
      %v5548 = vld [vmem:[#allocation2 + $0x180] sm:$0xff]
      %v5549 = vld [vmem:[#allocation2 + $0x188] sm:$0xff]
      %v5550 = vld [vmem:[%s13] sm:$0xff]
      %v5551 = vld [vmem:[%s13 + $0x8] sm:$0xff]
      %5553 = vset.pattern.permute.xlu0 0
      %5554 = vperm.xlu0 %5553, %v5550
      %v5555 = vpop.permute.xlu0 %5554
      %5558 = vset.pattern.permute.xlu0 0
      %5559 = vperm.xlu0 %5558, %v5551
      %v5560 = vpop.permute.xlu0 %5559
      %v5566 = vunpack.c.l.b16 %v5496
      %v5567 = vunpack.c.h.b16 %v5496
      %v5568 = vunpack.c.l.b16 %v5497
      %v5569 = vunpack.c.h.b16 %v5497
      %v5570 = vunpack.c.l.b16 %v5498
      %v5571 = vunpack.c.h.b16 %v5498
      %v5572 = vunpack.c.l.b16 %v5499
      %v5573 = vunpack.c.h.b16 %v5499
      %v5574 = vpack.c.b16 %v5570, %v5566
      %v5575 = vpack.c.b16 %v5571, %v5567
      %v5576 = vpack.c.b16 %v5572, %v5568
      %v5577 = vpack.c.b16 %v5573, %v5569
      %v5631 = vunpack.c.l.b16 %v5500
      %v5632 = vunpack.c.h.b16 %v5500
      %v5633 = vunpack.c.l.b16 %v5501
      %v5634 = vunpack.c.h.b16 %v5501
      %v5635 = vunpack.c.l.b16 %v5502
      %v5636 = vunpack.c.h.b16 %v5502
      %v5637 = vunpack.c.l.b16 %v5503
      %v5638 = vunpack.c.h.b16 %v5503
      %v5639 = vunpack.c.l.b16 %v5504
      %v5640 = vunpack.c.h.b16 %v5504
      %v5641 = vunpack.c.l.b16 %v5505
      %v5642 = vunpack.c.h.b16 %v5505
      %v5643 = vunpack.c.l.b16 %v5506
      %v5644 = vunpack.c.h.b16 %v5506
      %v5645 = vunpack.c.l.b16 %v5507
      %v5646 = vunpack.c.h.b16 %v5507
      %v5647 = vunpack.c.l.b16 %v5508
      %v5648 = vunpack.c.h.b16 %v5508
      %v5649 = vunpack.c.l.b16 %v5509
      %v5650 = vunpack.c.h.b16 %v5509
      %v5651 = vunpack.c.l.b16 %v5510
      %v5652 = vunpack.c.h.b16 %v5510
      %v5653 = vunpack.c.l.b16 %v5511
      %v5654 = vunpack.c.h.b16 %v5511
      %v5655 = vunpack.c.l.b16 %v5512
      %v5656 = vunpack.c.h.b16 %v5512
      %v5657 = vunpack.c.l.b16 %v5513
      %v5658 = vunpack.c.h.b16 %v5513
      %v5659 = vunpack.c.l.b16 %v5514
      %v5660 = vunpack.c.h.b16 %v5514
      %v5661 = vunpack.c.l.b16 %v5515
      %v5662 = vunpack.c.h.b16 %v5515
      %v5663 = vunpack.c.l.b16 %v5516
      %v5664 = vunpack.c.h.b16 %v5516
      %v5665 = vunpack.c.l.b16 %v5517
      %v5666 = vunpack.c.h.b16 %v5517
      %v5667 = vunpack.c.l.b16 %v5518
      %v5668 = vunpack.c.h.b16 %v5518
      %v5669 = vunpack.c.l.b16 %v5519
      %v5670 = vunpack.c.h.b16 %v5519
      %v5671 = vunpack.c.l.b16 %v5520
      %v5672 = vunpack.c.h.b16 %v5520
      %v5673 = vunpack.c.l.b16 %v5521
      %v5674 = vunpack.c.h.b16 %v5521
      %v5675 = vunpack.c.l.b16 %v5522
      %v5676 = vunpack.c.h.b16 %v5522
      %v5677 = vunpack.c.l.b16 %v5523
      %v5678 = vunpack.c.h.b16 %v5523
      %v5679 = vunpack.c.l.b16 %v5524
      %v5680 = vunpack.c.h.b16 %v5524
      %v5681 = vunpack.c.l.b16 %v5525
      %v5682 = vunpack.c.h.b16 %v5525
      %v5683 = vunpack.c.l.b16 %v5526
      %v5684 = vunpack.c.h.b16 %v5526
      %v5685 = vunpack.c.l.b16 %v5527
      %v5686 = vunpack.c.h.b16 %v5527
      %v5687 = vunpack.c.l.b16 %v5528
      %v5688 = vunpack.c.h.b16 %v5528
      %v5689 = vunpack.c.l.b16 %v5529
      %v5690 = vunpack.c.h.b16 %v5529
      %v5691 = vunpack.c.l.b16 %v5530
      %v5692 = vunpack.c.h.b16 %v5530
      %v5693 = vunpack.c.l.b16 %v5531
      %v5694 = vunpack.c.h.b16 %v5531
      %v5695 = vunpack.c.l.b16 %v5532
      %v5696 = vunpack.c.h.b16 %v5532
      %v5697 = vunpack.c.l.b16 %v5533
      %v5698 = vunpack.c.h.b16 %v5533
      %v5699 = vunpack.c.l.b16 %v5534
      %v5700 = vunpack.c.h.b16 %v5534
      %v5701 = vunpack.c.l.b16 %v5535
      %v5702 = vunpack.c.h.b16 %v5535
      %v5703 = vunpack.c.l.b16 %v5536
      %v5704 = vunpack.c.h.b16 %v5536
      %v5705 = vunpack.c.l.b16 %v5537
      %v5706 = vunpack.c.h.b16 %v5537
      %v5707 = vunpack.c.l.b16 %v5538
      %v5708 = vunpack.c.h.b16 %v5538
      %v5709 = vunpack.c.l.b16 %v5539
      %v5710 = vunpack.c.h.b16 %v5539
      %v5711 = vunpack.c.l.b16 %v5540
      %v5712 = vunpack.c.h.b16 %v5540
      %v5713 = vunpack.c.l.b16 %v5541
      %v5714 = vunpack.c.h.b16 %v5541
      %v5715 = vunpack.c.l.b16 %v5542
      %v5716 = vunpack.c.h.b16 %v5542
      %v5717 = vunpack.c.l.b16 %v5543
      %v5718 = vunpack.c.h.b16 %v5543
      %v5719 = vunpack.c.l.b16 %v5544
      %v5720 = vunpack.c.h.b16 %v5544
      %v5721 = vunpack.c.l.b16 %v5545
      %v5722 = vunpack.c.h.b16 %v5545
      %v5723 = vunpack.c.l.b16 %v5546
      %v5724 = vunpack.c.h.b16 %v5546
      %v5725 = vunpack.c.l.b16 %v5547
      %v5726 = vunpack.c.h.b16 %v5547
      %v5727 = vunpack.c.l.b16 %v5548
      %v5728 = vunpack.c.h.b16 %v5548
      %v5729 = vunpack.c.l.b16 %v5549
      %v5730 = vunpack.c.h.b16 %v5549
      %v5731 = vpack.c.b16 %v5633, %v5631
      %v5732 = vpack.c.b16 %v5634, %v5632
      %v5733 = vpack.c.b16 %v5637, %v5635
      %v5734 = vpack.c.b16 %v5638, %v5636
      %v5735 = vpack.c.b16 %v5641, %v5639
      %v5736 = vpack.c.b16 %v5642, %v5640
      %v5737 = vpack.c.b16 %v5645, %v5643
      %v5738 = vpack.c.b16 %v5646, %v5644
      %v5739 = vpack.c.b16 %v5649, %v5647
      %v5740 = vpack.c.b16 %v5650, %v5648
      %v5741 = vpack.c.b16 %v5653, %v5651
      %v5742 = vpack.c.b16 %v5654, %v5652
      %v5743 = vpack.c.b16 %v5657, %v5655
      %v5744 = vpack.c.b16 %v5658, %v5656
      %v5745 = vpack.c.b16 %v5661, %v5659
      %v5746 = vpack.c.b16 %v5662, %v5660
      %v5747 = vpack.c.b16 %v5665, %v5663
      %v5748 = vpack.c.b16 %v5666, %v5664
      %v5749 = vpack.c.b16 %v5669, %v5667
      %v5750 = vpack.c.b16 %v5670, %v5668
      %v5751 = vpack.c.b16 %v5673, %v5671
      %v5752 = vpack.c.b16 %v5674, %v5672
      %v5753 = vpack.c.b16 %v5677, %v5675
      %v5754 = vpack.c.b16 %v5678, %v5676
      %v5755 = vpack.c.b16 %v5681, %v5679
      %v5756 = vpack.c.b16 %v5682, %v5680
      %v5757 = vpack.c.b16 %v5685, %v5683
      %v5758 = vpack.c.b16 %v5686, %v5684
      %v5759 = vpack.c.b16 %v5689, %v5687
      %v5760 = vpack.c.b16 %v5690, %v5688
      %v5761 = vpack.c.b16 %v5693, %v5691
      %v5762 = vpack.c.b16 %v5694, %v5692
      %v5763 = vpack.c.b16 %v5697, %v5695
      %v5764 = vpack.c.b16 %v5698, %v5696
      %v5765 = vpack.c.b16 %v5701, %v5699
      %v5766 = vpack.c.b16 %v5702, %v5700
      %v5767 = vpack.c.b16 %v5705, %v5703
      %v5768 = vpack.c.b16 %v5706, %v5704
      %v5769 = vpack.c.b16 %v5709, %v5707
      %v5770 = vpack.c.b16 %v5710, %v5708
      %v5771 = vpack.c.b16 %v5713, %v5711
      %v5772 = vpack.c.b16 %v5714, %v5712
      %v5773 = vpack.c.b16 %v5717, %v5715
      %v5774 = vpack.c.b16 %v5718, %v5716
      %v5775 = vpack.c.b16 %v5721, %v5719
      %v5776 = vpack.c.b16 %v5722, %v5720
      %v5777 = vpack.c.b16 %v5725, %v5723
      %v5778 = vpack.c.b16 %v5726, %v5724
      %v5779 = vpack.c.b16 %v5729, %v5727
      %v5780 = vpack.c.b16 %v5730, %v5728
      %v5832 = vsel %vm1313, %v5577, 0
      %5834 = vmatprep.subr.bf16.mxu0 %v5746
      %5835 = vmatpush1.bf16.msra.mxu0 %v5745
      %5836 = vmatprep.subr.bf16.mxu0 %v5744
      %5837 = vmatpush1.bf16.msra.mxu0 %v5743
      %5838 = vmatprep.subr.bf16.mxu0 %v5742
      %5839 = vmatpush1.bf16.msra.mxu0 %v5741
      %5840 = vmatprep.subr.bf16.mxu0 %v5740
      %5841 = vmatpush1.bf16.msra.mxu0 %v5739
      %5842 = vmatprep.subr.bf16.mxu0 %v5738
      %5843 = vmatpush1.bf16.msra.mxu0 %v5737
      %5844 = vmatprep.subr.bf16.mxu0 %v5736
      %5845 = vmatpush1.bf16.msra.mxu0 %v5735
      %5846 = vmatprep.subr.bf16.mxu0 %v5734
      %5847 = vmatpush1.bf16.msra.mxu0 %v5733
      %5848 = vmatprep.subr.bf16.mxu0 %v5732
      %5849 = vmatpush1.bf16.msra.mxu0 %v5731
      %5850 = vmatprep.subr.bf16.mxu0 %v5762
      %5851 = vmatpush2.bf16.msra.mxu0 %v5761
      %5852 = vmatprep.subr.bf16.mxu0 %v5760
      %5853 = vmatpush2.bf16.msra.mxu0 %v5759
      %5854 = vmatprep.subr.bf16.mxu0 %v5758
      %5855 = vmatpush2.bf16.msra.mxu0 %v5757
      %5856 = vmatprep.subr.bf16.mxu0 %v5756
      %5857 = vmatpush2.bf16.msra.mxu0 %v5755
      %5858 = vmatprep.subr.bf16.mxu0 %v5754
      %5859 = vmatpush2.bf16.msra.mxu0 %v5753
      %5860 = vmatprep.subr.bf16.mxu0 %v5752
      %5861 = vmatpush2.bf16.msra.mxu0 %v5751
      %5862 = vmatprep.subr.bf16.mxu0 %v5750
      %5863 = vmatpush2.bf16.msra.mxu0 %v5749
      %5864 = vmatprep.subr.bf16.mxu0 %v5748
      %5865 = vmatpush2.bf16.msra.mxu0 %v5747
      %5866 = vmatprep.mubr.bf16.mxu0 %v5575
      %5867 = vmatmul.mubr.bf16.gmra.mxu0 %v5574
      %v5868 = vpop.f32.mrf.mxu0
      %v5869 = vadd.f32 %v5555, %v5868
      %v5870 = vpop.f32.mrf.mxu0
      %v5871 = vadd.f32 %v5555, %v5870
      %v5872 = vpop.f32.mrf.mxu0
      %v5873 = vadd.f32 %v5560, %v5872
      %v5874 = vpop.f32.mrf.mxu0
      %v5875 = vadd.f32 %v5560, %v5874
      %5876 = vdwg.mxu0
      %5877 = vmatprep.subr.bf16.mxu0 %v5778
      %5878 = vmatpush1.bf16.msra.mxu0 %v5777
      %5879 = vmatprep.subr.bf16.mxu0 %v5776
      %5880 = vmatpush1.bf16.msra.mxu0 %v5775
      %5881 = vmatprep.subr.bf16.mxu0 %v5774
      %5882 = vmatpush1.bf16.msra.mxu0 %v5773
      %5883 = vmatprep.subr.bf16.mxu0 %v5772
      %5884 = vmatpush1.bf16.msra.mxu0 %v5771
      %5885 = vmatprep.subr.bf16.mxu0 %v5770
      %5886 = vmatpush1.bf16.msra.mxu0 %v5769
      %5887 = vmatprep.subr.bf16.mxu0 %v5768
      %5888 = vmatpush1.bf16.msra.mxu0 %v5767
      %5889 = vmatprep.subr.bf16.mxu0 %v5766
      %5890 = vmatpush1.bf16.msra.mxu0 %v5765
      %5891 = vmatprep.subr.bf16.mxu0 %v5764
      %5892 = vmatpush1.bf16.msra.mxu0 %v5763
      %5893 = vmatprep.subr.bf16.mxu0 0
      %5894 = vmatpush2.bf16.msra.mxu0 0
      %5895 = vmatprep.subr.bf16.mxu0 0
      %5896 = vmatpush2.bf16.msra.mxu0 0
      %5897 = vmatprep.subr.bf16.mxu0 0
      %5898 = vmatpush2.bf16.msra.mxu0 0
      %5899 = vmatprep.subr.bf16.mxu0 0
      %5900 = vmatpush2.bf16.msra.mxu0 0
      %5901 = vmatprep.subr.bf16.mxu0 0
      %5902 = vmatpush2.bf16.msra.mxu0 0
      %5903 = vmatprep.subr.bf16.mxu0 0
      %5904 = vmatpush2.bf16.msra.mxu0 0
      %5905 = vmatprep.subr.bf16.mxu0 0
      %5906 = vmatpush2.bf16.msra.mxu0 0
      %5907 = vmatprep.subr.bf16.mxu0 %v5780
      %5908 = vmatpush2.bf16.msra.mxu0 %v5779
      %5909 = vmatprep.mubr.bf16.mxu0 %v5832
      %5910 = vmatmul.mubr.bf16.gmra.mxu0 %v5576
      %v5911 = vpop.f32.mrf.mxu0
      %v5912 = vadd.f32 %v5869, %v5911
      %v5913 = vpop.f32.mrf.mxu0
      %v5914 = vadd.f32 %v5871, %v5913
      %v5915 = vpop.f32.mrf.mxu0
      %v5916 = vadd.f32 %v5873, %v5915
      %v5917 = vpop.f32.mrf.mxu0
      %v5918 = vadd.f32 %v5875, %v5917
      %5919 = vdwg.mxu0
      %v5920 = vmax.f32 %v5912, 0.0
      %v5921 = vmax.f32 %v5914, 0.0
      %v5922 = vmax.f32 %v5916, 0.0
      %v5923 = vmax.f32 %v5918, 0.0
      %v5924 = vadd.f32 %v5920, %v4732
      %v5925 = vadd.f32 %v5921, %v4734
      %v5926 = vadd.f32 %v5922, %v4736
      %v5927 = vadd.f32 %v5923, %v4738
      %5928 = vrot.lane.b32.xlu0 %v4754, 51
      %v5929 = vpop.permute.xlu0 %5928
      %5930 = vrot.lane.b32.xlu0 %v4756, 51
      %v5931 = vpop.permute.xlu0 %5930
      %5932 = vrot.lane.b32.xlu0 %v4755, 51
      %v5933 = vpop.permute.xlu0 %5932
      %5934 = vrot.lane.b32.xlu0 %v4757, 51
      %v5935 = vpop.permute.xlu0 %5934
      %v5936 = vsel %vm1828, %v5929, %v5933
      %v5937 = vsel %vm1828, %v5931, %v5935
      %v5938 = vsel %vm1828, %v5933, %v5929
      %v5939 = vsel %vm1828, %v5935, %v5931
      %v5940 = vmul.f32 %v5938, %v1836
      %v5941 = vmul.f32 %v5936, %v1840
      %v5942 = vmul.f32 %v5939, %v1836
      %v5943 = vmul.f32 %v5937, %v1840
      %v5944 = vpack.c.bf16 %v5942, %v5940
      %v5945 = vpack.c.bf16 %v5943, %v5941
      %v5948 = vunpack.c.l.b16 %v5944
      %v5949 = vunpack.c.l.b16 %v5945
      %v5950 = vunpack.c.h.b16 %v5944
      %v5951 = vunpack.c.h.b16 %v5945
      %v5952 = vpack.c.b16 %v5949, %v5948
      %v5953 = vpack.c.b16 %v5951, %v5950
      %5956 = vst [vmem:[#allocation2] sm:$0xff] %v5952
      %5957 = vst [vmem:[#allocation2 + $0x8] sm:$0xff] %v5953
      %5958 = vrot.lane.b32.xlu0 %v4754, 50
      %v5959 = vpop.permute.xlu0 %5958
      %5960 = vrot.lane.b32.xlu0 %v4756, 50
      %v5961 = vpop.permute.xlu0 %5960
      %5962 = vrot.lane.b32.xlu0 %v4755, 50
      %v5963 = vpop.permute.xlu0 %5962
      %5964 = vrot.lane.b32.xlu0 %v4757, 50
      %v5965 = vpop.permute.xlu0 %5964
      %v5966 = vsel %vm1867, %v5959, %v5963
      %v5967 = vsel %vm1867, %v5961, %v5965
      %v5968 = vsel %vm1867, %v5963, %v5959
      %v5969 = vsel %vm1867, %v5965, %v5961
      %v5970 = vmul.f32 %v5968, %v1875
      %v5971 = vmul.f32 %v5966, %v1879
      %v5972 = vmul.f32 %v5969, %v1875
      %v5973 = vmul.f32 %v5967, %v1879
      %v5974 = vpack.c.bf16 %v5972, %v5970
      %v5975 = vpack.c.bf16 %v5973, %v5971
      %v5978 = vunpack.c.l.b16 %v5974
      %v5979 = vunpack.c.l.b16 %v5975
      %v5980 = vunpack.c.h.b16 %v5974
      %v5981 = vunpack.c.h.b16 %v5975
      %v5982 = vpack.c.b16 %v5979, %v5978
      %v5983 = vpack.c.b16 %v5981, %v5980
      %5986 = vst [vmem:[#allocation2 + $0x10] sm:$0xff] %v5982
      %5987 = vst [vmem:[#allocation2 + $0x18] sm:$0xff] %v5983
      %5988 = vrot.lane.b32.xlu0 %v4754, 49
      %v5989 = vpop.permute.xlu0 %5988
      %5990 = vrot.lane.b32.xlu0 %v4756, 49
      %v5991 = vpop.permute.xlu0 %5990
      %5992 = vrot.lane.b32.xlu0 %v4755, 49
      %v5993 = vpop.permute.xlu0 %5992
      %5994 = vrot.lane.b32.xlu0 %v4757, 49
      %v5995 = vpop.permute.xlu0 %5994
      %v5996 = vsel %vm1906, %v5989, %v5993
      %v5997 = vsel %vm1906, %v5991, %v5995
      %v5998 = vsel %vm1906, %v5993, %v5989
      %v5999 = vsel %vm1906, %v5995, %v5991
      %v6000 = vmul.f32 %v5998, %v1914
      %v6001 = vmul.f32 %v5996, %v1918
      %v6002 = vmul.f32 %v5999, %v1914
      %v6003 = vmul.f32 %v5997, %v1918
      %v6004 = vpack.c.bf16 %v6002, %v6000
      %v6005 = vpack.c.bf16 %v6003, %v6001
      %v6008 = vunpack.c.l.b16 %v6004
      %v6009 = vunpack.c.l.b16 %v6005
      %v6010 = vunpack.c.h.b16 %v6004
      %v6011 = vunpack.c.h.b16 %v6005
      %v6012 = vpack.c.b16 %v6009, %v6008
      %v6013 = vpack.c.b16 %v6011, %v6010
      %6016 = vst [vmem:[#allocation2 + $0x20] sm:$0xff] %v6012
      %6017 = vst [vmem:[#allocation2 + $0x28] sm:$0xff] %v6013
      %6018 = vrot.lane.b32.xlu0 %v4754, 48
      %v6019 = vpop.permute.xlu0 %6018
      %6020 = vrot.lane.b32.xlu0 %v4756, 48
      %v6021 = vpop.permute.xlu0 %6020
      %6022 = vrot.lane.b32.xlu0 %v4755, 48
      %v6023 = vpop.permute.xlu0 %6022
      %6024 = vrot.lane.b32.xlu0 %v4757, 48
      %v6025 = vpop.permute.xlu0 %6024
      %v6026 = vsel %vm1945, %v6019, %v6023
      %v6027 = vsel %vm1945, %v6021, %v6025
      %v6028 = vsel %vm1945, %v6023, %v6019
      %v6029 = vsel %vm1945, %v6025, %v6021
      %v6030 = vmul.f32 %v6028, %v1953
      %v6031 = vmul.f32 %v6026, %v1957
      %v6032 = vmul.f32 %v6029, %v1953
      %v6033 = vmul.f32 %v6027, %v1957
      %v6034 = vpack.c.bf16 %v6032, %v6030
      %v6035 = vpack.c.bf16 %v6033, %v6031
      %v6038 = vunpack.c.l.b16 %v6034
      %v6039 = vunpack.c.l.b16 %v6035
      %v6040 = vunpack.c.h.b16 %v6034
      %v6041 = vunpack.c.h.b16 %v6035
      %v6042 = vpack.c.b16 %v6039, %v6038
      %v6043 = vpack.c.b16 %v6041, %v6040
      %6046 = vst [vmem:[#allocation2 + $0x30] sm:$0xff] %v6042
      %6047 = vst [vmem:[#allocation2 + $0x38] sm:$0xff] %v6043
      %6048 = vrot.lane.b32.xlu0 %v4754, 47
      %v6049 = vpop.permute.xlu0 %6048
      %6050 = vrot.lane.b32.xlu0 %v4756, 47
      %v6051 = vpop.permute.xlu0 %6050
      %6052 = vrot.lane.b32.xlu0 %v4755, 47
      %v6053 = vpop.permute.xlu0 %6052
      %6054 = vrot.lane.b32.xlu0 %v4757, 47
      %v6055 = vpop.permute.xlu0 %6054
      %v6056 = vsel %vm1984, %v6049, %v6053
      %v6057 = vsel %vm1984, %v6051, %v6055
      %v6058 = vsel %vm1984, %v6053, %v6049
      %v6059 = vsel %vm1984, %v6055, %v6051
      %v6060 = vmul.f32 %v6058, %v1992
      %v6061 = vmul.f32 %v6056, %v1996
      %v6062 = vmul.f32 %v6059, %v1992
      %v6063 = vmul.f32 %v6057, %v1996
      %v6064 = vpack.c.bf16 %v6062, %v6060
      %v6065 = vpack.c.bf16 %v6063, %v6061
      %v6068 = vunpack.c.l.b16 %v6064
      %v6069 = vunpack.c.l.b16 %v6065
      %v6070 = vunpack.c.h.b16 %v6064
      %v6071 = vunpack.c.h.b16 %v6065
      %v6072 = vpack.c.b16 %v6069, %v6068
      %v6073 = vpack.c.b16 %v6071, %v6070
      %6076 = vst [vmem:[#allocation2 + $0x40] sm:$0xff] %v6072
      %6077 = vst [vmem:[#allocation2 + $0x48] sm:$0xff] %v6073
      %6078 = vrot.lane.b32.xlu0 %v4754, 46
      %v6079 = vpop.permute.xlu0 %6078
      %6080 = vrot.lane.b32.xlu0 %v4756, 46
      %v6081 = vpop.permute.xlu0 %6080
      %6082 = vrot.lane.b32.xlu0 %v4755, 46
      %v6083 = vpop.permute.xlu0 %6082
      %6084 = vrot.lane.b32.xlu0 %v4757, 46
      %v6085 = vpop.permute.xlu0 %6084
      %v6086 = vsel %vm2023, %v6079, %v6083
      %v6087 = vsel %vm2023, %v6081, %v6085
      %v6088 = vsel %vm2023, %v6083, %v6079
      %v6089 = vsel %vm2023, %v6085, %v6081
      %v6090 = vmul.f32 %v6088, %v2031
      %v6091 = vmul.f32 %v6086, %v2035
      %v6092 = vmul.f32 %v6089, %v2031
      %v6093 = vmul.f32 %v6087, %v2035
      %v6094 = vpack.c.bf16 %v6092, %v6090
      %v6095 = vpack.c.bf16 %v6093, %v6091
      %v6098 = vunpack.c.l.b16 %v6094
      %v6099 = vunpack.c.l.b16 %v6095
      %v6100 = vunpack.c.h.b16 %v6094
      %v6101 = vunpack.c.h.b16 %v6095
      %v6102 = vpack.c.b16 %v6099, %v6098
      %v6103 = vpack.c.b16 %v6101, %v6100
      %6106 = vst [vmem:[#allocation2 + $0x50] sm:$0xff] %v6102
      %6107 = vst [vmem:[#allocation2 + $0x58] sm:$0xff] %v6103
      %6108 = vrot.lane.b32.xlu0 %v4754, 45
      %v6109 = vpop.permute.xlu0 %6108
      %6110 = vrot.lane.b32.xlu0 %v4756, 45
      %v6111 = vpop.permute.xlu0 %6110
      %6112 = vrot.lane.b32.xlu0 %v4755, 45
      %v6113 = vpop.permute.xlu0 %6112
      %6114 = vrot.lane.b32.xlu0 %v4757, 45
      %v6115 = vpop.permute.xlu0 %6114
      %v6116 = vsel %vm2062, %v6109, %v6113
      %v6117 = vsel %vm2062, %v6111, %v6115
      %v6118 = vsel %vm2062, %v6113, %v6109
      %v6119 = vsel %vm2062, %v6115, %v6111
      %v6120 = vmul.f32 %v6118, %v2070
      %v6121 = vmul.f32 %v6116, %v2074
      %v6122 = vmul.f32 %v6119, %v2070
      %v6123 = vmul.f32 %v6117, %v2074
      %v6124 = vpack.c.bf16 %v6122, %v6120
      %v6125 = vpack.c.bf16 %v6123, %v6121
      %v6128 = vunpack.c.l.b16 %v6124
      %v6129 = vunpack.c.l.b16 %v6125
      %v6130 = vunpack.c.h.b16 %v6124
      %v6131 = vunpack.c.h.b16 %v6125
      %v6132 = vpack.c.b16 %v6129, %v6128
      %v6133 = vpack.c.b16 %v6131, %v6130
      %6136 = vst [vmem:[#allocation2 + $0x60] sm:$0xff] %v6132
      %6137 = vst [vmem:[#allocation2 + $0x68] sm:$0xff] %v6133
      %6138 = vrot.lane.b32.xlu0 %v4754, 35
      %v6139 = vpop.permute.xlu0 %6138
      %6140 = vrot.lane.b32.xlu0 %v4756, 35
      %v6141 = vpop.permute.xlu0 %6140
      %6142 = vrot.lane.b32.xlu0 %v4755, 35
      %v6143 = vpop.permute.xlu0 %6142
      %6144 = vrot.lane.b32.xlu0 %v4757, 35
      %v6145 = vpop.permute.xlu0 %6144
      %v6146 = vsel %vm2101, %v6139, %v6143
      %v6147 = vsel %vm2101, %v6141, %v6145
      %v6148 = vsel %vm2101, %v6143, %v6139
      %v6149 = vsel %vm2101, %v6145, %v6141
      %v6150 = vmul.f32 %v6148, %v2109
      %v6151 = vmul.f32 %v6146, %v2113
      %v6152 = vmul.f32 %v6149, %v2109
      %v6153 = vmul.f32 %v6147, %v2113
      %v6154 = vpack.c.bf16 %v6152, %v6150
      %v6155 = vpack.c.bf16 %v6153, %v6151
      %v6158 = vunpack.c.l.b16 %v6154
      %v6159 = vunpack.c.l.b16 %v6155
      %v6160 = vunpack.c.h.b16 %v6154
      %v6161 = vunpack.c.h.b16 %v6155
      %v6162 = vpack.c.b16 %v6159, %v6158
      %v6163 = vpack.c.b16 %v6161, %v6160
      %6166 = vst [vmem:[#allocation2 + $0x70] sm:$0xff] %v6162
      %6167 = vst [vmem:[#allocation2 + $0x78] sm:$0xff] %v6163
      %6168 = vrot.lane.b32.xlu0 %v4754, 34
      %v6169 = vpop.permute.xlu0 %6168
      %6170 = vrot.lane.b32.xlu0 %v4756, 34
      %v6171 = vpop.permute.xlu0 %6170
      %6172 = vrot.lane.b32.xlu0 %v4755, 34
      %v6173 = vpop.permute.xlu0 %6172
      %6174 = vrot.lane.b32.xlu0 %v4757, 34
      %v6175 = vpop.permute.xlu0 %6174
      %v6176 = vsel %vm2140, %v6169, %v6173
      %v6177 = vsel %vm2140, %v6171, %v6175
      %v6178 = vsel %vm2140, %v6173, %v6169
      %v6179 = vsel %vm2140, %v6175, %v6171
      %v6180 = vmul.f32 %v6178, %v2148
      %v6181 = vmul.f32 %v6176, %v2152
      %v6182 = vmul.f32 %v6179, %v2148
      %v6183 = vmul.f32 %v6177, %v2152
      %v6184 = vpack.c.bf16 %v6182, %v6180
      %v6185 = vpack.c.bf16 %v6183, %v6181
      %v6188 = vunpack.c.l.b16 %v6184
      %v6189 = vunpack.c.l.b16 %v6185
      %v6190 = vunpack.c.h.b16 %v6184
      %v6191 = vunpack.c.h.b16 %v6185
      %v6192 = vpack.c.b16 %v6189, %v6188
      %v6193 = vpack.c.b16 %v6191, %v6190
      %6196 = vst [vmem:[#allocation2 + $0x80] sm:$0xff] %v6192
      %6197 = vst [vmem:[#allocation2 + $0x88] sm:$0xff] %v6193
      %6198 = vrot.lane.b32.xlu0 %v4754, 33
      %v6199 = vpop.permute.xlu0 %6198
      %6200 = vrot.lane.b32.xlu0 %v4756, 33
      %v6201 = vpop.permute.xlu0 %6200
      %6202 = vrot.lane.b32.xlu0 %v4755, 33
      %v6203 = vpop.permute.xlu0 %6202
      %6204 = vrot.lane.b32.xlu0 %v4757, 33
      %v6205 = vpop.permute.xlu0 %6204
      %v6206 = vsel %vm2179, %v6199, %v6203
      %v6207 = vsel %vm2179, %v6201, %v6205
      %v6208 = vsel %vm2179, %v6203, %v6199
      %v6209 = vsel %vm2179, %v6205, %v6201
      %v6210 = vmul.f32 %v6208, %v2187
      %v6211 = vmul.f32 %v6206, %v2191
      %v6212 = vmul.f32 %v6209, %v2187
      %v6213 = vmul.f32 %v6207, %v2191
      %v6214 = vpack.c.bf16 %v6212, %v6210
      %v6215 = vpack.c.bf16 %v6213, %v6211
      %v6218 = vunpack.c.l.b16 %v6214
      %v6219 = vunpack.c.l.b16 %v6215
      %v6220 = vunpack.c.h.b16 %v6214
      %v6221 = vunpack.c.h.b16 %v6215
      %v6222 = vpack.c.b16 %v6219, %v6218
      %v6223 = vpack.c.b16 %v6221, %v6220
      %6226 = vst [vmem:[#allocation2 + $0x90] sm:$0xff] %v6222
      %6227 = vst [vmem:[#allocation2 + $0x98] sm:$0xff] %v6223
      %6228 = vrot.lane.b32.xlu0 %v4754, 32
      %v6229 = vpop.permute.xlu0 %6228
      %6230 = vrot.lane.b32.xlu0 %v4756, 32
      %v6231 = vpop.permute.xlu0 %6230
      %6232 = vrot.lane.b32.xlu0 %v4755, 32
      %v6233 = vpop.permute.xlu0 %6232
      %6234 = vrot.lane.b32.xlu0 %v4757, 32
      %v6235 = vpop.permute.xlu0 %6234
      %v6236 = vsel %vm2218, %v6229, %v6233
      %v6237 = vsel %vm2218, %v6231, %v6235
      %v6238 = vsel %vm2218, %v6233, %v6229
      %v6239 = vsel %vm2218, %v6235, %v6231
      %v6240 = vmul.f32 %v6238, %v2226
      %v6241 = vmul.f32 %v6236, %v2230
      %v6242 = vmul.f32 %v6239, %v2226
      %v6243 = vmul.f32 %v6237, %v2230
      %v6244 = vpack.c.bf16 %v6242, %v6240
      %v6245 = vpack.c.bf16 %v6243, %v6241
      %v6248 = vunpack.c.l.b16 %v6244
      %v6249 = vunpack.c.l.b16 %v6245
      %v6250 = vunpack.c.h.b16 %v6244
      %v6251 = vunpack.c.h.b16 %v6245
      %v6252 = vpack.c.b16 %v6249, %v6248
      %v6253 = vpack.c.b16 %v6251, %v6250
      %6256 = vst [vmem:[#allocation2 + $0xa0] sm:$0xff] %v6252
      %6257 = vst [vmem:[#allocation2 + $0xa8] sm:$0xff] %v6253
      %6258 = vrot.lane.b32.xlu0 %v4754, 31
      %v6259 = vpop.permute.xlu0 %6258
      %6260 = vrot.lane.b32.xlu0 %v4756, 31
      %v6261 = vpop.permute.xlu0 %6260
      %6262 = vrot.lane.b32.xlu0 %v4755, 31
      %v6263 = vpop.permute.xlu0 %6262
      %6264 = vrot.lane.b32.xlu0 %v4757, 31
      %v6265 = vpop.permute.xlu0 %6264
      %v6266 = vsel %vm2257, %v6259, %v6263
      %v6267 = vsel %vm2257, %v6261, %v6265
      %v6268 = vsel %vm2257, %v6263, %v6259
      %v6269 = vsel %vm2257, %v6265, %v6261
      %v6270 = vmul.f32 %v6268, %v2265
      %v6271 = vmul.f32 %v6266, %v2269
      %v6272 = vmul.f32 %v6269, %v2265
      %v6273 = vmul.f32 %v6267, %v2269
      %v6274 = vpack.c.bf16 %v6272, %v6270
      %v6275 = vpack.c.bf16 %v6273, %v6271
      %v6278 = vunpack.c.l.b16 %v6274
      %v6279 = vunpack.c.l.b16 %v6275
      %v6280 = vunpack.c.h.b16 %v6274
      %v6281 = vunpack.c.h.b16 %v6275
      %v6282 = vpack.c.b16 %v6279, %v6278
      %v6283 = vpack.c.b16 %v6281, %v6280
      %6286 = vst [vmem:[#allocation2 + $0xb0] sm:$0xff] %v6282
      %6287 = vst [vmem:[#allocation2 + $0xb8] sm:$0xff] %v6283
      %6288 = vrot.lane.b32.xlu0 %v4754, 30
      %v6289 = vpop.permute.xlu0 %6288
      %6290 = vrot.lane.b32.xlu0 %v4756, 30
      %v6291 = vpop.permute.xlu0 %6290
      %6292 = vrot.lane.b32.xlu0 %v4755, 30
      %v6293 = vpop.permute.xlu0 %6292
      %6294 = vrot.lane.b32.xlu0 %v4757, 30
      %v6295 = vpop.permute.xlu0 %6294
      %v6296 = vsel %vm2296, %v6289, %v6293
      %v6297 = vsel %vm2296, %v6291, %v6295
      %v6298 = vsel %vm2296, %v6293, %v6289
      %v6299 = vsel %vm2296, %v6295, %v6291
      %v6300 = vmul.f32 %v6298, %v2304
      %v6301 = vmul.f32 %v6296, %v2308
      %v6302 = vmul.f32 %v6299, %v2304
      %v6303 = vmul.f32 %v6297, %v2308
      %v6304 = vpack.c.bf16 %v6302, %v6300
      %v6305 = vpack.c.bf16 %v6303, %v6301
      %v6308 = vunpack.c.l.b16 %v6304
      %v6309 = vunpack.c.l.b16 %v6305
      %v6310 = vunpack.c.h.b16 %v6304
      %v6311 = vunpack.c.h.b16 %v6305
      %v6312 = vpack.c.b16 %v6309, %v6308
      %v6313 = vpack.c.b16 %v6311, %v6310
      %6316 = vst [vmem:[#allocation2 + $0xc0] sm:$0xff] %v6312
      %6317 = vst [vmem:[#allocation2 + $0xc8] sm:$0xff] %v6313
      %6318 = vrot.lane.b32.xlu0 %v4754, 29
      %v6319 = vpop.permute.xlu0 %6318
      %6320 = vrot.lane.b32.xlu0 %v4756, 29
      %v6321 = vpop.permute.xlu0 %6320
      %6322 = vrot.lane.b32.xlu0 %v4755, 29
      %v6323 = vpop.permute.xlu0 %6322
      %6324 = vrot.lane.b32.xlu0 %v4757, 29
      %v6325 = vpop.permute.xlu0 %6324
      %v6326 = vsel %vm2335, %v6319, %v6323
      %v6327 = vsel %vm2335, %v6321, %v6325
      %v6328 = vsel %vm2335, %v6323, %v6319
      %v6329 = vsel %vm2335, %v6325, %v6321
      %v6330 = vmul.f32 %v6328, %v2343
      %v6331 = vmul.f32 %v6326, %v2347
      %v6332 = vmul.f32 %v6329, %v2343
      %v6333 = vmul.f32 %v6327, %v2347
      %v6334 = vpack.c.bf16 %v6332, %v6330
      %v6335 = vpack.c.bf16 %v6333, %v6331
      %v6338 = vunpack.c.l.b16 %v6334
      %v6339 = vunpack.c.l.b16 %v6335
      %v6340 = vunpack.c.h.b16 %v6334
      %v6341 = vunpack.c.h.b16 %v6335
      %v6342 = vpack.c.b16 %v6339, %v6338
      %v6343 = vpack.c.b16 %v6341, %v6340
      %6346 = vst [vmem:[#allocation2 + $0xd0] sm:$0xff] %v6342
      %6347 = vst [vmem:[#allocation2 + $0xd8] sm:$0xff] %v6343
      %6348 = vrot.lane.b32.xlu0 %v4754, 19
      %v6349 = vpop.permute.xlu0 %6348
      %6350 = vrot.lane.b32.xlu0 %v4756, 19
      %v6351 = vpop.permute.xlu0 %6350
      %6352 = vrot.lane.b32.xlu0 %v4755, 19
      %v6353 = vpop.permute.xlu0 %6352
      %6354 = vrot.lane.b32.xlu0 %v4757, 19
      %v6355 = vpop.permute.xlu0 %6354
      %v6356 = vsel %vm2374, %v6349, %v6353
      %v6357 = vsel %vm2374, %v6351, %v6355
      %v6358 = vsel %vm2374, %v6353, %v6349
      %v6359 = vsel %vm2374, %v6355, %v6351
      %v6360 = vmul.f32 %v6358, %v2382
      %v6361 = vmul.f32 %v6356, %v2386
      %v6362 = vmul.f32 %v6359, %v2382
      %v6363 = vmul.f32 %v6357, %v2386
      %v6364 = vpack.c.bf16 %v6362, %v6360
      %v6365 = vpack.c.bf16 %v6363, %v6361
      %v6368 = vunpack.c.l.b16 %v6364
      %v6369 = vunpack.c.l.b16 %v6365
      %v6370 = vunpack.c.h.b16 %v6364
      %v6371 = vunpack.c.h.b16 %v6365
      %v6372 = vpack.c.b16 %v6369, %v6368
      %v6373 = vpack.c.b16 %v6371, %v6370
      %6376 = vst [vmem:[#allocation2 + $0xe0] sm:$0xff] %v6372
      %6377 = vst [vmem:[#allocation2 + $0xe8] sm:$0xff] %v6373
      %6378 = vrot.lane.b32.xlu0 %v4754, 18
      %v6379 = vpop.permute.xlu0 %6378
      %6380 = vrot.lane.b32.xlu0 %v4756, 18
      %v6381 = vpop.permute.xlu0 %6380
      %6382 = vrot.lane.b32.xlu0 %v4755, 18
      %v6383 = vpop.permute.xlu0 %6382
      %6384 = vrot.lane.b32.xlu0 %v4757, 18
      %v6385 = vpop.permute.xlu0 %6384
      %v6386 = vsel %vm2413, %v6379, %v6383
      %v6387 = vsel %vm2413, %v6381, %v6385
      %v6388 = vsel %vm2413, %v6383, %v6379
      %v6389 = vsel %vm2413, %v6385, %v6381
      %v6390 = vmul.f32 %v6388, %v2421
      %v6391 = vmul.f32 %v6386, %v2425
      %v6392 = vmul.f32 %v6389, %v2421
      %v6393 = vmul.f32 %v6387, %v2425
      %v6394 = vpack.c.bf16 %v6392, %v6390
      %v6395 = vpack.c.bf16 %v6393, %v6391
      %v6398 = vunpack.c.l.b16 %v6394
      %v6399 = vunpack.c.l.b16 %v6395
      %v6400 = vunpack.c.h.b16 %v6394
      %v6401 = vunpack.c.h.b16 %v6395
      %v6402 = vpack.c.b16 %v6399, %v6398
      %v6403 = vpack.c.b16 %v6401, %v6400
      %6406 = vst [vmem:[#allocation2 + $0xf0] sm:$0xff] %v6402
      %6407 = vst [vmem:[#allocation2 + $0xf8] sm:$0xff] %v6403
      %6408 = vrot.lane.b32.xlu0 %v4754, 17
      %v6409 = vpop.permute.xlu0 %6408
      %6410 = vrot.lane.b32.xlu0 %v4756, 17
      %v6411 = vpop.permute.xlu0 %6410
      %6412 = vrot.lane.b32.xlu0 %v4755, 17
      %v6413 = vpop.permute.xlu0 %6412
      %6414 = vrot.lane.b32.xlu0 %v4757, 17
      %v6415 = vpop.permute.xlu0 %6414
      %v6416 = vsel %vm829, %v6409, %v6413
      %v6417 = vsel %vm829, %v6411, %v6415
      %v6418 = vsel %vm829, %v6413, %v6409
      %v6419 = vsel %vm829, %v6415, %v6411
      %v6420 = vmul.f32 %v6418, %v837
      %v6421 = vmul.f32 %v6416, %v841
      %v6422 = vmul.f32 %v6419, %v837
      %v6423 = vmul.f32 %v6417, %v841
      %v6424 = vpack.c.bf16 %v6422, %v6420
      %v6425 = vpack.c.bf16 %v6423, %v6421
      %v6428 = vunpack.c.l.b16 %v6424
      %v6429 = vunpack.c.l.b16 %v6425
      %v6430 = vunpack.c.h.b16 %v6424
      %v6431 = vunpack.c.h.b16 %v6425
      %v6432 = vpack.c.b16 %v6429, %v6428
      %v6433 = vpack.c.b16 %v6431, %v6430
      %6436 = vst [vmem:[#allocation2 + $0x100] sm:$0xff] %v6432
      %6437 = vst [vmem:[#allocation2 + $0x108] sm:$0xff] %v6433
      %6438 = vrot.lane.b32.xlu0 %v4754, 16
      %v6439 = vpop.permute.xlu0 %6438
      %6440 = vrot.lane.b32.xlu0 %v4756, 16
      %v6441 = vpop.permute.xlu0 %6440
      %6442 = vrot.lane.b32.xlu0 %v4755, 16
      %v6443 = vpop.permute.xlu0 %6442
      %6444 = vrot.lane.b32.xlu0 %v4757, 16
      %v6445 = vpop.permute.xlu0 %6444
      %v6446 = vsel %vm868, %v6439, %v6443
      %v6447 = vsel %vm868, %v6441, %v6445
      %v6448 = vsel %vm868, %v6443, %v6439
      %v6449 = vsel %vm868, %v6445, %v6441
      %v6450 = vmul.f32 %v6448, %v876
      %v6451 = vmul.f32 %v6446, %v880
      %v6452 = vmul.f32 %v6449, %v876
      %v6453 = vmul.f32 %v6447, %v880
      %v6454 = vpack.c.bf16 %v6452, %v6450
      %v6455 = vpack.c.bf16 %v6453, %v6451
      %v6458 = vunpack.c.l.b16 %v6454
      %v6459 = vunpack.c.l.b16 %v6455
      %v6460 = vunpack.c.h.b16 %v6454
      %v6461 = vunpack.c.h.b16 %v6455
      %v6462 = vpack.c.b16 %v6459, %v6458
      %v6463 = vpack.c.b16 %v6461, %v6460
      %6466 = vst [vmem:[#allocation2 + $0x110] sm:$0xff] %v6462
      %6467 = vst [vmem:[#allocation2 + $0x118] sm:$0xff] %v6463
      %6468 = vrot.lane.b32.xlu0 %v4754, 15
      %v6469 = vpop.permute.xlu0 %6468
      %6470 = vrot.lane.b32.xlu0 %v4756, 15
      %v6471 = vpop.permute.xlu0 %6470
      %6472 = vrot.lane.b32.xlu0 %v4755, 15
      %v6473 = vpop.permute.xlu0 %6472
      %6474 = vrot.lane.b32.xlu0 %v4757, 15
      %v6475 = vpop.permute.xlu0 %6474
      %v6476 = vsel %vm907, %v6469, %v6473
      %v6477 = vsel %vm907, %v6471, %v6475
      %v6478 = vsel %vm907, %v6473, %v6469
      %v6479 = vsel %vm907, %v6475, %v6471
      %v6480 = vmul.f32 %v6478, %v915
      %v6481 = vmul.f32 %v6476, %v919
      %v6482 = vmul.f32 %v6479, %v915
      %v6483 = vmul.f32 %v6477, %v919
      %v6484 = vpack.c.bf16 %v6482, %v6480
      %v6485 = vpack.c.bf16 %v6483, %v6481
      %v6488 = vunpack.c.l.b16 %v6484
      %v6489 = vunpack.c.l.b16 %v6485
      %v6490 = vunpack.c.h.b16 %v6484
      %v6491 = vunpack.c.h.b16 %v6485
      %v6492 = vpack.c.b16 %v6489, %v6488
      %v6493 = vpack.c.b16 %v6491, %v6490
      %6496 = vst [vmem:[#allocation2 + $0x120] sm:$0xff] %v6492
      %6497 = vst [vmem:[#allocation2 + $0x128] sm:$0xff] %v6493
      %6498 = vrot.lane.b32.xlu0 %v4754, 14
      %v6499 = vpop.permute.xlu0 %6498
      %6500 = vrot.lane.b32.xlu0 %v4756, 14
      %v6501 = vpop.permute.xlu0 %6500
      %6502 = vrot.lane.b32.xlu0 %v4755, 14
      %v6503 = vpop.permute.xlu0 %6502
      %6504 = vrot.lane.b32.xlu0 %v4757, 14
      %v6505 = vpop.permute.xlu0 %6504
      %v6506 = vsel %vm2542, %v6499, %v6503
      %v6507 = vsel %vm2542, %v6501, %v6505
      %v6508 = vsel %vm2542, %v6503, %v6499
      %v6509 = vsel %vm2542, %v6505, %v6501
      %v6510 = vmul.f32 %v6508, %v2550
      %v6511 = vmul.f32 %v6506, %v2554
      %v6512 = vmul.f32 %v6509, %v2550
      %v6513 = vmul.f32 %v6507, %v2554
      %v6514 = vpack.c.bf16 %v6512, %v6510
      %v6515 = vpack.c.bf16 %v6513, %v6511
      %v6518 = vunpack.c.l.b16 %v6514
      %v6519 = vunpack.c.l.b16 %v6515
      %v6520 = vunpack.c.h.b16 %v6514
      %v6521 = vunpack.c.h.b16 %v6515
      %v6522 = vpack.c.b16 %v6519, %v6518
      %v6523 = vpack.c.b16 %v6521, %v6520
      %6526 = vst [vmem:[#allocation2 + $0x130] sm:$0xff] %v6522
      %6527 = vst [vmem:[#allocation2 + $0x138] sm:$0xff] %v6523
      %6528 = vrot.lane.b32.xlu0 %v4754, 13
      %v6529 = vpop.permute.xlu0 %6528
      %6530 = vrot.lane.b32.xlu0 %v4756, 13
      %v6531 = vpop.permute.xlu0 %6530
      %6532 = vrot.lane.b32.xlu0 %v4755, 13
      %v6533 = vpop.permute.xlu0 %6532
      %6534 = vrot.lane.b32.xlu0 %v4757, 13
      %v6535 = vpop.permute.xlu0 %6534
      %v6536 = vsel %vm2581, %v6529, %v6533
      %v6537 = vsel %vm2581, %v6531, %v6535
      %v6538 = vsel %vm2581, %v6533, %v6529
      %v6539 = vsel %vm2581, %v6535, %v6531
      %v6540 = vmul.f32 %v6538, %v2589
      %v6541 = vmul.f32 %v6536, %v2593
      %v6542 = vmul.f32 %v6539, %v2589
      %v6543 = vmul.f32 %v6537, %v2593
      %v6544 = vpack.c.bf16 %v6542, %v6540
      %v6545 = vpack.c.bf16 %v6543, %v6541
      %v6548 = vunpack.c.l.b16 %v6544
      %v6549 = vunpack.c.l.b16 %v6545
      %v6550 = vunpack.c.h.b16 %v6544
      %v6551 = vunpack.c.h.b16 %v6545
      %v6552 = vpack.c.b16 %v6549, %v6548
      %v6553 = vpack.c.b16 %v6551, %v6550
      %6556 = vst [vmem:[#allocation2 + $0x140] sm:$0xff] %v6552
      %6557 = vst [vmem:[#allocation2 + $0x148] sm:$0xff] %v6553
      %6558 = vrot.lane.b32.xlu0 %v4754, 3
      %v6559 = vpop.permute.xlu0 %6558
      %6560 = vrot.lane.b32.xlu0 %v4756, 3
      %v6561 = vpop.permute.xlu0 %6560
      %6562 = vrot.lane.b32.xlu0 %v4755, 3
      %v6563 = vpop.permute.xlu0 %6562
      %6564 = vrot.lane.b32.xlu0 %v4757, 3
      %v6565 = vpop.permute.xlu0 %6564
      %v6566 = vsel %vm2620, %v6559, %v6563
      %v6567 = vsel %vm2620, %v6561, %v6565
      %v6568 = vsel %vm2620, %v6563, %v6559
      %v6569 = vsel %vm2620, %v6565, %v6561
      %v6570 = vmul.f32 %v6568, %v2628
      %v6571 = vmul.f32 %v6566, %v2632
      %v6572 = vmul.f32 %v6569, %v2628
      %v6573 = vmul.f32 %v6567, %v2632
      %v6574 = vpack.c.bf16 %v6572, %v6570
      %v6575 = vpack.c.bf16 %v6573, %v6571
      %v6578 = vunpack.c.l.b16 %v6574
      %v6579 = vunpack.c.l.b16 %v6575
      %v6580 = vunpack.c.h.b16 %v6574
      %v6581 = vunpack.c.h.b16 %v6575
      %v6582 = vpack.c.b16 %v6579, %v6578
      %v6583 = vpack.c.b16 %v6581, %v6580
      %6586 = vst [vmem:[#allocation2 + $0x150] sm:$0xff] %v6582
      %6587 = vst [vmem:[#allocation2 + $0x158] sm:$0xff] %v6583
      %6588 = vrot.lane.b32.xlu0 %v4754, 2
      %v6589 = vpop.permute.xlu0 %6588
      %6590 = vrot.lane.b32.xlu0 %v4756, 2
      %v6591 = vpop.permute.xlu0 %6590
      %6592 = vrot.lane.b32.xlu0 %v4755, 2
      %v6593 = vpop.permute.xlu0 %6592
      %6594 = vrot.lane.b32.xlu0 %v4757, 2
      %v6595 = vpop.permute.xlu0 %6594
      %v6596 = vsel %vm2659, %v6589, %v6593
      %v6597 = vsel %vm2659, %v6591, %v6595
      %v6598 = vsel %vm2659, %v6593, %v6589
      %v6599 = vsel %vm2659, %v6595, %v6591
      %v6600 = vmul.f32 %v6598, %v2667
      %v6601 = vmul.f32 %v6596, %v2671
      %v6602 = vmul.f32 %v6599, %v2667
      %v6603 = vmul.f32 %v6597, %v2671
      %v6604 = vpack.c.bf16 %v6602, %v6600
      %v6605 = vpack.c.bf16 %v6603, %v6601
      %v6608 = vunpack.c.l.b16 %v6604
      %v6609 = vunpack.c.l.b16 %v6605
      %v6610 = vunpack.c.h.b16 %v6604
      %v6611 = vunpack.c.h.b16 %v6605
      %v6612 = vpack.c.b16 %v6609, %v6608
      %v6613 = vpack.c.b16 %v6611, %v6610
      %6616 = vst [vmem:[#allocation2 + $0x160] sm:$0xff] %v6612
      %6617 = vst [vmem:[#allocation2 + $0x168] sm:$0xff] %v6613
      %6618 = vrot.lane.b32.xlu0 %v4754, 1
      %v6619 = vpop.permute.xlu0 %6618
      %6620 = vrot.lane.b32.xlu0 %v4756, 1
      %v6621 = vpop.permute.xlu0 %6620
      %6622 = vrot.lane.b32.xlu0 %v4755, 1
      %v6623 = vpop.permute.xlu0 %6622
      %6624 = vrot.lane.b32.xlu0 %v4757, 1
      %v6625 = vpop.permute.xlu0 %6624
      %v6626 = vsel %vm946, %v6619, %v6623
      %v6627 = vsel %vm946, %v6621, %v6625
      %v6628 = vsel %vm946, %v6623, %v6619
      %v6629 = vsel %vm946, %v6625, %v6621
      %v6630 = vmul.f32 %v6628, %v954
      %v6631 = vmul.f32 %v6626, %v958
      %v6632 = vmul.f32 %v6629, %v954
      %v6633 = vmul.f32 %v6627, %v958
      %v6634 = vpack.c.bf16 %v6632, %v6630
      %v6635 = vpack.c.bf16 %v6633, %v6631
      %v6638 = vunpack.c.l.b16 %v6634
      %v6639 = vunpack.c.l.b16 %v6635
      %v6640 = vunpack.c.h.b16 %v6634
      %v6641 = vunpack.c.h.b16 %v6635
      %v6642 = vpack.c.b16 %v6639, %v6638
      %v6643 = vpack.c.b16 %v6641, %v6640
      %6646 = vst [vmem:[#allocation2 + $0x170] sm:$0xff] %v6642
      %6647 = vst [vmem:[#allocation2 + $0x178] sm:$0xff] %v6643
      %v6648 = vmul.f32 %v4754, %v980
      %v6649 = vmul.f32 %v4755, %v984
      %v6650 = vmul.f32 %v4756, %v980
      %v6651 = vmul.f32 %v4757, %v984
      %v6652 = vpack.c.bf16 %v6650, %v6648
      %v6653 = vpack.c.bf16 %v6651, %v6649
      %v6656 = vunpack.c.l.b16 %v6652
      %v6657 = vunpack.c.l.b16 %v6653
      %v6658 = vunpack.c.h.b16 %v6652
      %v6659 = vunpack.c.h.b16 %v6653
      %v6660 = vpack.c.b16 %v6657, %v6656
      %v6661 = vpack.c.b16 %v6659, %v6658
      %6664 = vst [vmem:[#allocation2 + $0x180] sm:$0xff] %v6660
      %6665 = vst [vmem:[#allocation2 + $0x188] sm:$0xff] %v6661
      %6666 = vrot.lane.b32.xlu0 %v4754, 127
      %v6667 = vpop.permute.xlu0 %6666
      %6668 = vrot.lane.b32.xlu0 %v4756, 127
      %v6669 = vpop.permute.xlu0 %6668
      %6670 = vrot.lane.b32.xlu0 %v4755, 127
      %v6671 = vpop.permute.xlu0 %6670
      %6672 = vrot.lane.b32.xlu0 %v4757, 127
      %v6673 = vpop.permute.xlu0 %6672
      %v6674 = vsel %vm1011, %v6667, %v6671
      %v6675 = vsel %vm1011, %v6669, %v6673
      %v6676 = vsel %vm1011, %v6671, %v6667
      %v6677 = vsel %vm1011, %v6673, %v6669
      %v6678 = vmul.f32 %v6674, %v1019
      %v6679 = vmul.f32 %v6676, %v1023
      %v6680 = vmul.f32 %v6675, %v1019
      %v6681 = vmul.f32 %v6677, %v1023
      %v6682 = vpack.c.bf16 %v6680, %v6678
      %v6683 = vpack.c.bf16 %v6681, %v6679
      %v6686 = vunpack.c.l.b16 %v6682
      %v6687 = vunpack.c.l.b16 %v6683
      %v6688 = vunpack.c.h.b16 %v6682
      %v6689 = vunpack.c.h.b16 %v6683
      %v6690 = vpack.c.b16 %v6687, %v6686
      %v6691 = vpack.c.b16 %v6689, %v6688
      %6694 = vst [vmem:[#allocation2 + $0x190] sm:$0xff] %v6690
      %6695 = vst [vmem:[#allocation2 + $0x198] sm:$0xff] %v6691
      %6696 = vrot.lane.b32.xlu0 %v4754, 126
      %v6697 = vpop.permute.xlu0 %6696
      %6698 = vrot.lane.b32.xlu0 %v4756, 126
      %v6699 = vpop.permute.xlu0 %6698
      %6700 = vrot.lane.b32.xlu0 %v4755, 126
      %v6701 = vpop.permute.xlu0 %6700
      %6702 = vrot.lane.b32.xlu0 %v4757, 126
      %v6703 = vpop.permute.xlu0 %6702
      %v6704 = vsel %vm2776, %v6697, %v6701
      %v6705 = vsel %vm2776, %v6699, %v6703
      %v6706 = vsel %vm2776, %v6701, %v6697
      %v6707 = vsel %vm2776, %v6703, %v6699
      %v6708 = vmul.f32 %v6704, %v2784
      %v6709 = vmul.f32 %v6706, %v2788
      %v6710 = vmul.f32 %v6705, %v2784
      %v6711 = vmul.f32 %v6707, %v2788
      %v6712 = vpack.c.bf16 %v6710, %v6708
      %v6713 = vpack.c.bf16 %v6711, %v6709
      %v6716 = vunpack.c.l.b16 %v6712
      %v6717 = vunpack.c.l.b16 %v6713
      %v6718 = vunpack.c.h.b16 %v6712
      %v6719 = vunpack.c.h.b16 %v6713
      %v6720 = vpack.c.b16 %v6717, %v6716
      %v6721 = vpack.c.b16 %v6719, %v6718
      %6724 = vst [vmem:[#allocation2 + $0x1a0] sm:$0xff] %v6720
      %6725 = vst [vmem:[#allocation2 + $0x1a8] sm:$0xff] %v6721
      %6726 = vrot.lane.b32.xlu0 %v4754, 125
      %v6727 = vpop.permute.xlu0 %6726
      %6728 = vrot.lane.b32.xlu0 %v4756, 125
      %v6729 = vpop.permute.xlu0 %6728
      %6730 = vrot.lane.b32.xlu0 %v4755, 125
      %v6731 = vpop.permute.xlu0 %6730
      %6732 = vrot.lane.b32.xlu0 %v4757, 125
      %v6733 = vpop.permute.xlu0 %6732
      %v6734 = vsel %vm2815, %v6727, %v6731
      %v6735 = vsel %vm2815, %v6729, %v6733
      %v6736 = vsel %vm2815, %v6731, %v6727
      %v6737 = vsel %vm2815, %v6733, %v6729
      %v6738 = vmul.f32 %v6734, %v2823
      %v6739 = vmul.f32 %v6736, %v2827
      %v6740 = vmul.f32 %v6735, %v2823
      %v6741 = vmul.f32 %v6737, %v2827
      %v6742 = vpack.c.bf16 %v6740, %v6738
      %v6743 = vpack.c.bf16 %v6741, %v6739
      %v6746 = vunpack.c.l.b16 %v6742
      %v6747 = vunpack.c.l.b16 %v6743
      %v6748 = vunpack.c.h.b16 %v6742
      %v6749 = vunpack.c.h.b16 %v6743
      %v6750 = vpack.c.b16 %v6747, %v6746
      %v6751 = vpack.c.b16 %v6749, %v6748
      %6754 = vst [vmem:[#allocation2 + $0x1b0] sm:$0xff] %v6750
      %6755 = vst [vmem:[#allocation2 + $0x1b8] sm:$0xff] %v6751
      %6756 = vrot.lane.b32.xlu0 %v4754, 115
      %v6757 = vpop.permute.xlu0 %6756
      %6758 = vrot.lane.b32.xlu0 %v4756, 115
      %v6759 = vpop.permute.xlu0 %6758
      %6760 = vrot.lane.b32.xlu0 %v4755, 115
      %v6761 = vpop.permute.xlu0 %6760
      %6762 = vrot.lane.b32.xlu0 %v4757, 115
      %v6763 = vpop.permute.xlu0 %6762
      %v6764 = vsel %vm2854, %v6757, %v6761
      %v6765 = vsel %vm2854, %v6759, %v6763
      %v6766 = vsel %vm2854, %v6761, %v6757
      %v6767 = vsel %vm2854, %v6763, %v6759
      %v6768 = vmul.f32 %v6764, %v2862
      %v6769 = vmul.f32 %v6766, %v2866
      %v6770 = vmul.f32 %v6765, %v2862
      %v6771 = vmul.f32 %v6767, %v2866
      %v6772 = vpack.c.bf16 %v6770, %v6768
      %v6773 = vpack.c.bf16 %v6771, %v6769
      %v6776 = vunpack.c.l.b16 %v6772
      %v6777 = vunpack.c.l.b16 %v6773
      %v6778 = vunpack.c.h.b16 %v6772
      %v6779 = vunpack.c.h.b16 %v6773
      %v6780 = vpack.c.b16 %v6777, %v6776
      %v6781 = vpack.c.b16 %v6779, %v6778
      %6784 = vst [vmem:[#allocation2 + $0x1c0] sm:$0xff] %v6780
      %6785 = vst [vmem:[#allocation2 + $0x1c8] sm:$0xff] %v6781
      %6786 = vrot.lane.b32.xlu0 %v4754, 114
      %v6787 = vpop.permute.xlu0 %6786
      %6788 = vrot.lane.b32.xlu0 %v4756, 114
      %v6789 = vpop.permute.xlu0 %6788
      %6790 = vrot.lane.b32.xlu0 %v4755, 114
      %v6791 = vpop.permute.xlu0 %6790
      %6792 = vrot.lane.b32.xlu0 %v4757, 114
      %v6793 = vpop.permute.xlu0 %6792
      %v6794 = vsel %vm2893, %v6787, %v6791
      %v6795 = vsel %vm2893, %v6789, %v6793
      %v6796 = vsel %vm2893, %v6791, %v6787
      %v6797 = vsel %vm2893, %v6793, %v6789
      %v6798 = vmul.f32 %v6794, %v2901
      %v6799 = vmul.f32 %v6796, %v2905
      %v6800 = vmul.f32 %v6795, %v2901
      %v6801 = vmul.f32 %v6797, %v2905
      %v6802 = vpack.c.bf16 %v6800, %v6798
      %v6803 = vpack.c.bf16 %v6801, %v6799
      %v6806 = vunpack.c.l.b16 %v6802
      %v6807 = vunpack.c.l.b16 %v6803
      %v6808 = vunpack.c.h.b16 %v6802
      %v6809 = vunpack.c.h.b16 %v6803
      %v6810 = vpack.c.b16 %v6807, %v6806
      %v6811 = vpack.c.b16 %v6809, %v6808
      %6814 = vst [vmem:[#allocation2 + $0x1d0] sm:$0xff] %v6810
      %6815 = vst [vmem:[#allocation2 + $0x1d8] sm:$0xff] %v6811
      %6816 = vrot.lane.b32.xlu0 %v4754, 113
      %v6817 = vpop.permute.xlu0 %6816
      %6818 = vrot.lane.b32.xlu0 %v4756, 113
      %v6819 = vpop.permute.xlu0 %6818
      %6820 = vrot.lane.b32.xlu0 %v4755, 113
      %v6821 = vpop.permute.xlu0 %6820
      %6822 = vrot.lane.b32.xlu0 %v4757, 113
      %v6823 = vpop.permute.xlu0 %6822
      %v6824 = vsel %vm1050, %v6817, %v6821
      %v6825 = vsel %vm1050, %v6819, %v6823
      %v6826 = vsel %vm1050, %v6821, %v6817
      %v6827 = vsel %vm1050, %v6823, %v6819
      %v6828 = vmul.f32 %v6824, %v1058
      %v6829 = vmul.f32 %v6826, %v1062
      %v6830 = vmul.f32 %v6825, %v1058
      %v6831 = vmul.f32 %v6827, %v1062
      %v6832 = vpack.c.bf16 %v6830, %v6828
      %v6833 = vpack.c.bf16 %v6831, %v6829
      %v6836 = vunpack.c.l.b16 %v6832
      %v6837 = vunpack.c.l.b16 %v6833
      %v6838 = vunpack.c.h.b16 %v6832
      %v6839 = vunpack.c.h.b16 %v6833
      %v6840 = vpack.c.b16 %v6837, %v6836
      %v6841 = vpack.c.b16 %v6839, %v6838
      %6844 = vst [vmem:[#allocation2 + $0x1e0] sm:$0xff] %v6840
      %6845 = vst [vmem:[#allocation2 + $0x1e8] sm:$0xff] %v6841
      %6846 = vrot.lane.b32.xlu0 %v4754, 112
      %v6847 = vpop.permute.xlu0 %6846
      %6848 = vrot.lane.b32.xlu0 %v4756, 112
      %v6849 = vpop.permute.xlu0 %6848
      %6850 = vrot.lane.b32.xlu0 %v4755, 112
      %v6851 = vpop.permute.xlu0 %6850
      %6852 = vrot.lane.b32.xlu0 %v4757, 112
      %v6853 = vpop.permute.xlu0 %6852
      %v6854 = vsel %vm1089, %v6847, %v6851
      %v6855 = vsel %vm1089, %v6849, %v6853
      %v6856 = vsel %vm1089, %v6851, %v6847
      %v6857 = vsel %vm1089, %v6853, %v6849
      %v6858 = vmul.f32 %v6854, %v1097
      %v6859 = vmul.f32 %v6856, %v1101
      %v6860 = vmul.f32 %v6855, %v1097
      %v6861 = vmul.f32 %v6857, %v1101
      %v6862 = vpack.c.bf16 %v6860, %v6858
      %v6863 = vpack.c.bf16 %v6861, %v6859
      %v6866 = vunpack.c.l.b16 %v6862
      %v6867 = vunpack.c.l.b16 %v6863
      %v6868 = vunpack.c.h.b16 %v6862
      %v6869 = vunpack.c.h.b16 %v6863
      %v6870 = vpack.c.b16 %v6867, %v6866
      %v6871 = vpack.c.b16 %v6869, %v6868
      %6874 = vst [vmem:[#allocation2 + $0x1f0] sm:$0xff] %v6870
      %6875 = vst [vmem:[#allocation2 + $0x1f8] sm:$0xff] %v6871
      %6876 = vrot.lane.b32.xlu0 %v4754, 111
      %v6877 = vpop.permute.xlu0 %6876
      %6878 = vrot.lane.b32.xlu0 %v4756, 111
      %v6879 = vpop.permute.xlu0 %6878
      %6880 = vrot.lane.b32.xlu0 %v4755, 111
      %v6881 = vpop.permute.xlu0 %6880
      %6882 = vrot.lane.b32.xlu0 %v4757, 111
      %v6883 = vpop.permute.xlu0 %6882
      %v6884 = vsel %vm1128, %v6877, %v6881
      %v6885 = vsel %vm1128, %v6879, %v6883
      %v6886 = vsel %vm1128, %v6881, %v6877
      %v6887 = vsel %vm1128, %v6883, %v6879
      %v6888 = vmul.f32 %v6884, %v1136
      %v6889 = vmul.f32 %v6886, %v1140
      %v6890 = vmul.f32 %v6885, %v1136
      %v6891 = vmul.f32 %v6887, %v1140
      %v6892 = vpack.c.bf16 %v6890, %v6888
      %v6893 = vpack.c.bf16 %v6891, %v6889
      %v6896 = vunpack.c.l.b16 %v6892
      %v6897 = vunpack.c.l.b16 %v6893
      %v6898 = vunpack.c.h.b16 %v6892
      %v6899 = vunpack.c.h.b16 %v6893
      %v6900 = vpack.c.b16 %v6897, %v6896
      %v6901 = vpack.c.b16 %v6899, %v6898
      %6904 = vst [vmem:[#allocation2 + $0x200] sm:$0xff] %v6900
      %6905 = vst [vmem:[#allocation2 + $0x208] sm:$0xff] %v6901
      %6906 = vrot.lane.b32.xlu0 %v4754, 110
      %v6907 = vpop.permute.xlu0 %6906
      %6908 = vrot.lane.b32.xlu0 %v4756, 110
      %v6909 = vpop.permute.xlu0 %6908
      %6910 = vrot.lane.b32.xlu0 %v4755, 110
      %v6911 = vpop.permute.xlu0 %6910
      %6912 = vrot.lane.b32.xlu0 %v4757, 110
      %v6913 = vpop.permute.xlu0 %6912
      %v6914 = vsel %vm3022, %v6907, %v6911
      %v6915 = vsel %vm3022, %v6909, %v6913
      %v6916 = vsel %vm3022, %v6911, %v6907
      %v6917 = vsel %vm3022, %v6913, %v6909
      %v6918 = vmul.f32 %v6914, %v3030
      %v6919 = vmul.f32 %v6916, %v3034
      %v6920 = vmul.f32 %v6915, %v3030
      %v6921 = vmul.f32 %v6917, %v3034
      %v6922 = vpack.c.bf16 %v6920, %v6918
      %v6923 = vpack.c.bf16 %v6921, %v6919
      %v6926 = vunpack.c.l.b16 %v6922
      %v6927 = vunpack.c.l.b16 %v6923
      %v6928 = vunpack.c.h.b16 %v6922
      %v6929 = vunpack.c.h.b16 %v6923
      %v6930 = vpack.c.b16 %v6927, %v6926
      %v6931 = vpack.c.b16 %v6929, %v6928
      %6934 = vst [vmem:[#allocation2 + $0x210] sm:$0xff] %v6930
      %6935 = vst [vmem:[#allocation2 + $0x218] sm:$0xff] %v6931
      %6936 = vrot.lane.b32.xlu0 %v4754, 109
      %v6937 = vpop.permute.xlu0 %6936
      %6938 = vrot.lane.b32.xlu0 %v4756, 109
      %v6939 = vpop.permute.xlu0 %6938
      %6940 = vrot.lane.b32.xlu0 %v4755, 109
      %v6941 = vpop.permute.xlu0 %6940
      %6942 = vrot.lane.b32.xlu0 %v4757, 109
      %v6943 = vpop.permute.xlu0 %6942
      %v6944 = vsel %vm3061, %v6937, %v6941
      %v6945 = vsel %vm3061, %v6939, %v6943
      %v6946 = vsel %vm3061, %v6941, %v6937
      %v6947 = vsel %vm3061, %v6943, %v6939
      %v6948 = vmul.f32 %v6944, %v3069
      %v6949 = vmul.f32 %v6946, %v3073
      %v6950 = vmul.f32 %v6945, %v3069
      %v6951 = vmul.f32 %v6947, %v3073
      %v6952 = vpack.c.bf16 %v6950, %v6948
      %v6953 = vpack.c.bf16 %v6951, %v6949
      %v6956 = vunpack.c.l.b16 %v6952
      %v6957 = vunpack.c.l.b16 %v6953
      %v6958 = vunpack.c.h.b16 %v6952
      %v6959 = vunpack.c.h.b16 %v6953
      %v6960 = vpack.c.b16 %v6957, %v6956
      %v6961 = vpack.c.b16 %v6959, %v6958
      %6964 = vst [vmem:[#allocation2 + $0x220] sm:$0xff] %v6960
      %6965 = vst [vmem:[#allocation2 + $0x228] sm:$0xff] %v6961
      %6966 = vrot.lane.b32.xlu0 %v4754, 99
      %v6967 = vpop.permute.xlu0 %6966
      %6968 = vrot.lane.b32.xlu0 %v4756, 99
      %v6969 = vpop.permute.xlu0 %6968
      %6970 = vrot.lane.b32.xlu0 %v4755, 99
      %v6971 = vpop.permute.xlu0 %6970
      %6972 = vrot.lane.b32.xlu0 %v4757, 99
      %v6973 = vpop.permute.xlu0 %6972
      %v6974 = vsel %vm3100, %v6967, %v6971
      %v6975 = vsel %vm3100, %v6969, %v6973
      %v6976 = vsel %vm3100, %v6971, %v6967
      %v6977 = vsel %vm3100, %v6973, %v6969
      %v6978 = vmul.f32 %v6974, %v3108
      %v6979 = vmul.f32 %v6976, %v3112
      %v6980 = vmul.f32 %v6975, %v3108
      %v6981 = vmul.f32 %v6977, %v3112
      %v6982 = vpack.c.bf16 %v6980, %v6978
      %v6983 = vpack.c.bf16 %v6981, %v6979
      %v6986 = vunpack.c.l.b16 %v6982
      %v6987 = vunpack.c.l.b16 %v6983
      %v6988 = vunpack.c.h.b16 %v6982
      %v6989 = vunpack.c.h.b16 %v6983
      %v6990 = vpack.c.b16 %v6987, %v6986
      %v6991 = vpack.c.b16 %v6989, %v6988
      %6994 = vst [vmem:[#allocation2 + $0x230] sm:$0xff] %v6990
      %6995 = vst [vmem:[#allocation2 + $0x238] sm:$0xff] %v6991
      %6996 = vrot.lane.b32.xlu0 %v4754, 98
      %v6997 = vpop.permute.xlu0 %6996
      %6998 = vrot.lane.b32.xlu0 %v4756, 98
      %v6999 = vpop.permute.xlu0 %6998
      %7000 = vrot.lane.b32.xlu0 %v4755, 98
      %v7001 = vpop.permute.xlu0 %7000
      %7002 = vrot.lane.b32.xlu0 %v4757, 98
      %v7003 = vpop.permute.xlu0 %7002
      %v7004 = vsel %vm3139, %v6997, %v7001
      %v7005 = vsel %vm3139, %v6999, %v7003
      %v7006 = vsel %vm3139, %v7001, %v6997
      %v7007 = vsel %vm3139, %v7003, %v6999
      %v7008 = vmul.f32 %v7004, %v3147
      %v7009 = vmul.f32 %v7006, %v3151
      %v7010 = vmul.f32 %v7005, %v3147
      %v7011 = vmul.f32 %v7007, %v3151
      %v7012 = vpack.c.bf16 %v7010, %v7008
      %v7013 = vpack.c.bf16 %v7011, %v7009
      %v7016 = vunpack.c.l.b16 %v7012
      %v7017 = vunpack.c.l.b16 %v7013
      %v7018 = vunpack.c.h.b16 %v7012
      %v7019 = vunpack.c.h.b16 %v7013
      %v7020 = vpack.c.b16 %v7017, %v7016
      %v7021 = vpack.c.b16 %v7019, %v7018
      %7024 = vst [vmem:[#allocation2 + $0x240] sm:$0xff] %v7020
      %7025 = vst [vmem:[#allocation2 + $0x248] sm:$0xff] %v7021
      %7026 = vrot.lane.b32.xlu0 %v4754, 97
      %v7027 = vpop.permute.xlu0 %7026
      %7028 = vrot.lane.b32.xlu0 %v4756, 97
      %v7029 = vpop.permute.xlu0 %7028
      %7030 = vrot.lane.b32.xlu0 %v4755, 97
      %v7031 = vpop.permute.xlu0 %7030
      %7032 = vrot.lane.b32.xlu0 %v4757, 97
      %v7033 = vpop.permute.xlu0 %7032
      %v7034 = vsel %vm3178, %v7027, %v7031
      %v7035 = vsel %vm3178, %v7029, %v7033
      %v7036 = vsel %vm3178, %v7031, %v7027
      %v7037 = vsel %vm3178, %v7033, %v7029
      %v7038 = vmul.f32 %v7034, %v3186
      %v7039 = vmul.f32 %v7036, %v3190
      %v7040 = vmul.f32 %v7035, %v3186
      %v7041 = vmul.f32 %v7037, %v3190
      %v7042 = vpack.c.bf16 %v7040, %v7038
      %v7043 = vpack.c.bf16 %v7041, %v7039
      %v7046 = vunpack.c.l.b16 %v7042
      %v7047 = vunpack.c.l.b16 %v7043
      %v7048 = vunpack.c.h.b16 %v7042
      %v7049 = vunpack.c.h.b16 %v7043
      %v7050 = vpack.c.b16 %v7047, %v7046
      %v7051 = vpack.c.b16 %v7049, %v7048
      %7054 = vst [vmem:[#allocation2 + $0x250] sm:$0xff] %v7050
      %7055 = vst [vmem:[#allocation2 + $0x258] sm:$0xff] %v7051
      %7056 = vrot.lane.b32.xlu0 %v4754, 96
      %v7057 = vpop.permute.xlu0 %7056
      %7058 = vrot.lane.b32.xlu0 %v4756, 96
      %v7059 = vpop.permute.xlu0 %7058
      %7060 = vrot.lane.b32.xlu0 %v4755, 96
      %v7061 = vpop.permute.xlu0 %7060
      %7062 = vrot.lane.b32.xlu0 %v4757, 96
      %v7063 = vpop.permute.xlu0 %7062
      %v7064 = vsel %vm3217, %v7057, %v7061
      %v7065 = vsel %vm3217, %v7059, %v7063
      %v7066 = vsel %vm3217, %v7061, %v7057
      %v7067 = vsel %vm3217, %v7063, %v7059
      %v7068 = vmul.f32 %v7064, %v3225
      %v7069 = vmul.f32 %v7066, %v3229
      %v7070 = vmul.f32 %v7065, %v3225
      %v7071 = vmul.f32 %v7067, %v3229
      %v7072 = vpack.c.bf16 %v7070, %v7068
      %v7073 = vpack.c.bf16 %v7071, %v7069
      %v7076 = vunpack.c.l.b16 %v7072
      %v7077 = vunpack.c.l.b16 %v7073
      %v7078 = vunpack.c.h.b16 %v7072
      %v7079 = vunpack.c.h.b16 %v7073
      %v7080 = vpack.c.b16 %v7077, %v7076
      %v7081 = vpack.c.b16 %v7079, %v7078
      %7084 = vst [vmem:[#allocation2 + $0x260] sm:$0xff] %v7080
      %7085 = vst [vmem:[#allocation2 + $0x268] sm:$0xff] %v7081
      %7086 = vrot.lane.b32.xlu0 %v4754, 95
      %v7087 = vpop.permute.xlu0 %7086
      %7088 = vrot.lane.b32.xlu0 %v4756, 95
      %v7089 = vpop.permute.xlu0 %7088
      %7090 = vrot.lane.b32.xlu0 %v4755, 95
      %v7091 = vpop.permute.xlu0 %7090
      %7092 = vrot.lane.b32.xlu0 %v4757, 95
      %v7093 = vpop.permute.xlu0 %7092
      %v7094 = vsel %vm3256, %v7087, %v7091
      %v7095 = vsel %vm3256, %v7089, %v7093
      %v7096 = vsel %vm3256, %v7091, %v7087
      %v7097 = vsel %vm3256, %v7093, %v7089
      %v7098 = vmul.f32 %v7094, %v3264
      %v7099 = vmul.f32 %v7096, %v3268
      %v7100 = vmul.f32 %v7095, %v3264
      %v7101 = vmul.f32 %v7097, %v3268
      %v7102 = vpack.c.bf16 %v7100, %v7098
      %v7103 = vpack.c.bf16 %v7101, %v7099
      %v7106 = vunpack.c.l.b16 %v7102
      %v7107 = vunpack.c.l.b16 %v7103
      %v7108 = vunpack.c.h.b16 %v7102
      %v7109 = vunpack.c.h.b16 %v7103
      %v7110 = vpack.c.b16 %v7107, %v7106
      %v7111 = vpack.c.b16 %v7109, %v7108
      %7114 = vst [vmem:[#allocation2 + $0x270] sm:$0xff] %v7110
      %7115 = vst [vmem:[#allocation2 + $0x278] sm:$0xff] %v7111
      %7116 = vrot.lane.b32.xlu0 %v4754, 94
      %v7117 = vpop.permute.xlu0 %7116
      %7118 = vrot.lane.b32.xlu0 %v4756, 94
      %v7119 = vpop.permute.xlu0 %7118
      %7120 = vrot.lane.b32.xlu0 %v4755, 94
      %v7121 = vpop.permute.xlu0 %7120
      %7122 = vrot.lane.b32.xlu0 %v4757, 94
      %v7123 = vpop.permute.xlu0 %7122
      %v7124 = vsel %vm3295, %v7117, %v7121
      %v7125 = vsel %vm3295, %v7119, %v7123
      %v7126 = vsel %vm3295, %v7121, %v7117
      %v7127 = vsel %vm3295, %v7123, %v7119
      %v7128 = vmul.f32 %v7124, %v3303
      %v7129 = vmul.f32 %v7126, %v3307
      %v7130 = vmul.f32 %v7125, %v3303
      %v7131 = vmul.f32 %v7127, %v3307
      %v7132 = vpack.c.bf16 %v7130, %v7128
      %v7133 = vpack.c.bf16 %v7131, %v7129
      %v7136 = vunpack.c.l.b16 %v7132
      %v7137 = vunpack.c.l.b16 %v7133
      %v7138 = vunpack.c.h.b16 %v7132
      %v7139 = vunpack.c.h.b16 %v7133
      %v7140 = vpack.c.b16 %v7137, %v7136
      %v7141 = vpack.c.b16 %v7139, %v7138
      %7144 = vst [vmem:[#allocation2 + $0x280] sm:$0xff] %v7140
      %7145 = vst [vmem:[#allocation2 + $0x288] sm:$0xff] %v7141
      %7146 = vrot.lane.b32.xlu0 %v4754, 93
      %v7147 = vpop.permute.xlu0 %7146
      %7148 = vrot.lane.b32.xlu0 %v4756, 93
      %v7149 = vpop.permute.xlu0 %7148
      %7150 = vrot.lane.b32.xlu0 %v4755, 93
      %v7151 = vpop.permute.xlu0 %7150
      %7152 = vrot.lane.b32.xlu0 %v4757, 93
      %v7153 = vpop.permute.xlu0 %7152
      %v7154 = vsel %vm3334, %v7147, %v7151
      %v7155 = vsel %vm3334, %v7149, %v7153
      %v7156 = vsel %vm3334, %v7151, %v7147
      %v7157 = vsel %vm3334, %v7153, %v7149
      %v7158 = vmul.f32 %v7154, %v3342
      %v7159 = vmul.f32 %v7156, %v3346
      %v7160 = vmul.f32 %v7155, %v3342
      %v7161 = vmul.f32 %v7157, %v3346
      %v7162 = vpack.c.bf16 %v7160, %v7158
      %v7163 = vpack.c.bf16 %v7161, %v7159
      %v7166 = vunpack.c.l.b16 %v7162
      %v7167 = vunpack.c.l.b16 %v7163
      %v7168 = vunpack.c.h.b16 %v7162
      %v7169 = vunpack.c.h.b16 %v7163
      %v7170 = vpack.c.b16 %v7167, %v7166
      %v7171 = vpack.c.b16 %v7169, %v7168
      %7174 = vst [vmem:[#allocation2 + $0x290] sm:$0xff] %v7170
      %7175 = vst [vmem:[#allocation2 + $0x298] sm:$0xff] %v7171
      %7176 = vrot.lane.b32.xlu0 %v4754, 83
      %v7177 = vpop.permute.xlu0 %7176
      %7178 = vrot.lane.b32.xlu0 %v4756, 83
      %v7179 = vpop.permute.xlu0 %7178
      %7180 = vrot.lane.b32.xlu0 %v4755, 83
      %v7181 = vpop.permute.xlu0 %7180
      %7182 = vrot.lane.b32.xlu0 %v4757, 83
      %v7183 = vpop.permute.xlu0 %7182
      %v7184 = vsel %vm3373, %v7177, %v7181
      %v7185 = vsel %vm3373, %v7179, %v7183
      %v7186 = vsel %vm3373, %v7181, %v7177
      %v7187 = vsel %vm3373, %v7183, %v7179
      %v7188 = vmul.f32 %v7184, %v3381
      %v7189 = vmul.f32 %v7186, %v3385
      %v7190 = vmul.f32 %v7185, %v3381
      %v7191 = vmul.f32 %v7187, %v3385
      %v7192 = vpack.c.bf16 %v7190, %v7188
      %v7193 = vpack.c.bf16 %v7191, %v7189
      %v7196 = vunpack.c.l.b16 %v7192
      %v7197 = vunpack.c.l.b16 %v7193
      %v7198 = vunpack.c.h.b16 %v7192
      %v7199 = vunpack.c.h.b16 %v7193
      %v7200 = vpack.c.b16 %v7197, %v7196
      %v7201 = vpack.c.b16 %v7199, %v7198
      %7204 = vst [vmem:[#allocation2 + $0x2a0] sm:$0xff] %v7200
      %7205 = vst [vmem:[#allocation2 + $0x2a8] sm:$0xff] %v7201
      %7206 = vrot.lane.b32.xlu0 %v4754, 82
      %v7207 = vpop.permute.xlu0 %7206
      %7208 = vrot.lane.b32.xlu0 %v4756, 82
      %v7209 = vpop.permute.xlu0 %7208
      %7210 = vrot.lane.b32.xlu0 %v4755, 82
      %v7211 = vpop.permute.xlu0 %7210
      %7212 = vrot.lane.b32.xlu0 %v4757, 82
      %v7213 = vpop.permute.xlu0 %7212
      %v7214 = vsel %vm3412, %v7207, %v7211
      %v7215 = vsel %vm3412, %v7209, %v7213
      %v7216 = vsel %vm3412, %v7211, %v7207
      %v7217 = vsel %vm3412, %v7213, %v7209
      %v7218 = vmul.f32 %v7214, %v3420
      %v7219 = vmul.f32 %v7216, %v3424
      %v7220 = vmul.f32 %v7215, %v3420
      %v7221 = vmul.f32 %v7217, %v3424
      %v7222 = vpack.c.bf16 %v7220, %v7218
      %v7223 = vpack.c.bf16 %v7221, %v7219
      %v7226 = vunpack.c.l.b16 %v7222
      %v7227 = vunpack.c.l.b16 %v7223
      %v7228 = vunpack.c.h.b16 %v7222
      %v7229 = vunpack.c.h.b16 %v7223
      %v7230 = vpack.c.b16 %v7227, %v7226
      %v7231 = vpack.c.b16 %v7229, %v7228
      %7234 = vst [vmem:[#allocation2 + $0x2b0] sm:$0xff] %v7230
      %7235 = vst [vmem:[#allocation2 + $0x2b8] sm:$0xff] %v7231
      %7236 = vrot.lane.b32.xlu0 %v4754, 81
      %v7237 = vpop.permute.xlu0 %7236
      %7238 = vrot.lane.b32.xlu0 %v4756, 81
      %v7239 = vpop.permute.xlu0 %7238
      %7240 = vrot.lane.b32.xlu0 %v4755, 81
      %v7241 = vpop.permute.xlu0 %7240
      %7242 = vrot.lane.b32.xlu0 %v4757, 81
      %v7243 = vpop.permute.xlu0 %7242
      %v7244 = vsel %vm3451, %v7237, %v7241
      %v7245 = vsel %vm3451, %v7239, %v7243
      %v7246 = vsel %vm3451, %v7241, %v7237
      %v7247 = vsel %vm3451, %v7243, %v7239
      %v7248 = vmul.f32 %v7244, %v3459
      %v7249 = vmul.f32 %v7246, %v3463
      %v7250 = vmul.f32 %v7245, %v3459
      %v7251 = vmul.f32 %v7247, %v3463
      %v7252 = vpack.c.bf16 %v7250, %v7248
      %v7253 = vpack.c.bf16 %v7251, %v7249
      %v7256 = vunpack.c.l.b16 %v7252
      %v7257 = vunpack.c.l.b16 %v7253
      %v7258 = vunpack.c.h.b16 %v7252
      %v7259 = vunpack.c.h.b16 %v7253
      %v7260 = vpack.c.b16 %v7257, %v7256
      %v7261 = vpack.c.b16 %v7259, %v7258
      %7264 = vst [vmem:[#allocation2 + $0x2c0] sm:$0xff] %v7260
      %7265 = vst [vmem:[#allocation2 + $0x2c8] sm:$0xff] %v7261
      %7266 = vrot.lane.b32.xlu0 %v4754, 80
      %v7267 = vpop.permute.xlu0 %7266
      %7268 = vrot.lane.b32.xlu0 %v4756, 80
      %v7269 = vpop.permute.xlu0 %7268
      %7270 = vrot.lane.b32.xlu0 %v4755, 80
      %v7271 = vpop.permute.xlu0 %7270
      %7272 = vrot.lane.b32.xlu0 %v4757, 80
      %v7273 = vpop.permute.xlu0 %7272
      %v7274 = vsel %vm3490, %v7267, %v7271
      %v7275 = vsel %vm3490, %v7269, %v7273
      %v7276 = vsel %vm3490, %v7271, %v7267
      %v7277 = vsel %vm3490, %v7273, %v7269
      %v7278 = vmul.f32 %v7274, %v3498
      %v7279 = vmul.f32 %v7276, %v3502
      %v7280 = vmul.f32 %v7275, %v3498
      %v7281 = vmul.f32 %v7277, %v3502
      %v7282 = vpack.c.bf16 %v7280, %v7278
      %v7283 = vpack.c.bf16 %v7281, %v7279
      %v7286 = vunpack.c.l.b16 %v7282
      %v7287 = vunpack.c.l.b16 %v7283
      %v7288 = vunpack.c.h.b16 %v7282
      %v7289 = vunpack.c.h.b16 %v7283
      %v7290 = vpack.c.b16 %v7287, %v7286
      %v7291 = vpack.c.b16 %v7289, %v7288
      %7294 = vst [vmem:[#allocation2 + $0x2d0] sm:$0xff] %v7290
      %7295 = vst [vmem:[#allocation2 + $0x2d8] sm:$0xff] %v7291
      %7296 = vrot.lane.b32.xlu0 %v4754, 79
      %v7297 = vpop.permute.xlu0 %7296
      %7298 = vrot.lane.b32.xlu0 %v4756, 79
      %v7299 = vpop.permute.xlu0 %7298
      %7300 = vrot.lane.b32.xlu0 %v4755, 79
      %v7301 = vpop.permute.xlu0 %7300
      %7302 = vrot.lane.b32.xlu0 %v4757, 79
      %v7303 = vpop.permute.xlu0 %7302
      %v7304 = vsel %vm3529, %v7297, %v7301
      %v7305 = vsel %vm3529, %v7299, %v7303
      %v7306 = vsel %vm3529, %v7301, %v7297
      %v7307 = vsel %vm3529, %v7303, %v7299
      %v7308 = vmul.f32 %v7304, %v3537
      %v7309 = vmul.f32 %v7306, %v3541
      %v7310 = vmul.f32 %v7305, %v3537
      %v7311 = vmul.f32 %v7307, %v3541
      %v7312 = vpack.c.bf16 %v7310, %v7308
      %v7313 = vpack.c.bf16 %v7311, %v7309
      %v7316 = vunpack.c.l.b16 %v7312
      %v7317 = vunpack.c.l.b16 %v7313
      %v7318 = vunpack.c.h.b16 %v7312
      %v7319 = vunpack.c.h.b16 %v7313
      %v7320 = vpack.c.b16 %v7317, %v7316
      %v7321 = vpack.c.b16 %v7319, %v7318
      %7324 = vst [vmem:[#allocation2 + $0x2e0] sm:$0xff] %v7320
      %7325 = vst [vmem:[#allocation2 + $0x2e8] sm:$0xff] %v7321
      %7326 = vrot.lane.b32.xlu0 %v4754, 78
      %v7327 = vpop.permute.xlu0 %7326
      %7328 = vrot.lane.b32.xlu0 %v4756, 78
      %v7329 = vpop.permute.xlu0 %7328
      %7330 = vrot.lane.b32.xlu0 %v4755, 78
      %v7331 = vpop.permute.xlu0 %7330
      %7332 = vrot.lane.b32.xlu0 %v4757, 78
      %v7333 = vpop.permute.xlu0 %7332
      %v7334 = vsel %vm3568, %v7327, %v7331
      %v7335 = vsel %vm3568, %v7329, %v7333
      %v7336 = vsel %vm3568, %v7331, %v7327
      %v7337 = vsel %vm3568, %v7333, %v7329
      %v7338 = vmul.f32 %v7334, %v3576
      %v7339 = vmul.f32 %v7336, %v3580
      %v7340 = vmul.f32 %v7335, %v3576
      %v7341 = vmul.f32 %v7337, %v3580
      %v7342 = vpack.c.bf16 %v7340, %v7338
      %v7343 = vpack.c.bf16 %v7341, %v7339
      %v7346 = vunpack.c.l.b16 %v7342
      %v7347 = vunpack.c.l.b16 %v7343
      %v7348 = vunpack.c.h.b16 %v7342
      %v7349 = vunpack.c.h.b16 %v7343
      %v7350 = vpack.c.b16 %v7347, %v7346
      %v7351 = vpack.c.b16 %v7349, %v7348
      %7354 = vst [vmem:[#allocation2 + $0x2f0] sm:$0xff] %v7350
      %7355 = vst [vmem:[#allocation2 + $0x2f8] sm:$0xff] %v7351
      %7356 = vrot.lane.b32.xlu0 %v4754, 77
      %v7357 = vpop.permute.xlu0 %7356
      %7358 = vrot.lane.b32.xlu0 %v4756, 77
      %v7359 = vpop.permute.xlu0 %7358
      %7360 = vrot.lane.b32.xlu0 %v4755, 77
      %v7361 = vpop.permute.xlu0 %7360
      %7362 = vrot.lane.b32.xlu0 %v4757, 77
      %v7363 = vpop.permute.xlu0 %7362
      %v7364 = vsel %vm3607, %v7357, %v7361
      %v7365 = vsel %vm3607, %v7359, %v7363
      %v7366 = vsel %vm3607, %v7361, %v7357
      %v7367 = vsel %vm3607, %v7363, %v7359
      %v7368 = vmul.f32 %v7364, %v3615
      %v7369 = vmul.f32 %v7366, %v3619
      %v7370 = vmul.f32 %v7365, %v3615
      %v7371 = vmul.f32 %v7367, %v3619
      %v7372 = vpack.c.bf16 %v7370, %v7368
      %v7373 = vpack.c.bf16 %v7371, %v7369
      %v7376 = vunpack.c.l.b16 %v7372
      %v7377 = vunpack.c.l.b16 %v7373
      %v7378 = vunpack.c.h.b16 %v7372
      %v7379 = vunpack.c.h.b16 %v7373
      %v7380 = vpack.c.b16 %v7377, %v7376
      %v7381 = vpack.c.b16 %v7379, %v7378
      %7384 = vst [vmem:[#allocation2 + $0x300] sm:$0xff] %v7380
      %7385 = vst [vmem:[#allocation2 + $0x308] sm:$0xff] %v7381
      %v7386 = vld [vmem:[%s14] sm:$0xff]
      %v7387 = vld [vmem:[%s14 + $0x8] sm:$0xff]
      %v7388 = vld [vmem:[%s14 + $0x10] sm:$0xff]
      %v7389 = vld [vmem:[%s14 + $0x18] sm:$0xf]
      %v7390 = vld [vmem:[%s14 + $0x1c] sm:$0xff]
      %v7391 = vld [vmem:[%s14 + $0x24] sm:$0xff]
      %v7392 = vld [vmem:[%s14 + $0x2c] sm:$0xff]
      %v7393 = vld [vmem:[%s14 + $0x34] sm:$0xf]
      %v7394 = vld [vmem:[#allocation2] sm:$0xff]
      %v7395 = vld [vmem:[#allocation2 + $0x8] sm:$0xff]
      %v7396 = vld [vmem:[#allocation2 + $0x10] sm:$0xff]
      %v7397 = vld [vmem:[#allocation2 + $0x18] sm:$0xff]
      %v7398 = vld [vmem:[#allocation2 + $0x20] sm:$0xff]
      %v7399 = vld [vmem:[#allocation2 + $0x28] sm:$0xff]
      %v7400 = vld [vmem:[#allocation2 + $0x30] sm:$0xff]
      %v7401 = vld [vmem:[#allocation2 + $0x38] sm:$0xff]
      %v7402 = vld [vmem:[#allocation2 + $0x40] sm:$0xff]
      %v7403 = vld [vmem:[#allocation2 + $0x48] sm:$0xff]
      %v7404 = vld [vmem:[#allocation2 + $0x50] sm:$0xff]
      %v7405 = vld [vmem:[#allocation2 + $0x58] sm:$0xff]
      %v7406 = vld [vmem:[#allocation2 + $0x60] sm:$0xff]
      %v7407 = vld [vmem:[#allocation2 + $0x68] sm:$0xff]
      %v7408 = vld [vmem:[#allocation2 + $0x70] sm:$0xff]
      %v7409 = vld [vmem:[#allocation2 + $0x78] sm:$0xff]
      %v7410 = vld [vmem:[#allocation2 + $0x80] sm:$0xff]
      %v7411 = vld [vmem:[#allocation2 + $0x88] sm:$0xff]
      %v7412 = vld [vmem:[#allocation2 + $0x90] sm:$0xff]
      %v7413 = vld [vmem:[#allocation2 + $0x98] sm:$0xff]
      %v7414 = vld [vmem:[#allocation2 + $0xa0] sm:$0xff]
      %v7415 = vld [vmem:[#allocation2 + $0xa8] sm:$0xff]
      %v7416 = vld [vmem:[#allocation2 + $0xb0] sm:$0xff]
      %v7417 = vld [vmem:[#allocation2 + $0xb8] sm:$0xff]
      %v7418 = vld [vmem:[#allocation2 + $0xc0] sm:$0xff]
      %v7419 = vld [vmem:[#allocation2 + $0xc8] sm:$0xff]
      %v7420 = vld [vmem:[#allocation2 + $0xd0] sm:$0xff]
      %v7421 = vld [vmem:[#allocation2 + $0xd8] sm:$0xff]
      %v7422 = vld [vmem:[#allocation2 + $0xe0] sm:$0xff]
      %v7423 = vld [vmem:[#allocation2 + $0xe8] sm:$0xff]
      %v7424 = vld [vmem:[#allocation2 + $0xf0] sm:$0xff]
      %v7425 = vld [vmem:[#allocation2 + $0xf8] sm:$0xff]
      %v7426 = vld [vmem:[#allocation2 + $0x100] sm:$0xff]
      %v7427 = vld [vmem:[#allocation2 + $0x108] sm:$0xff]
      %v7428 = vld [vmem:[#allocation2 + $0x110] sm:$0xff]
      %v7429 = vld [vmem:[#allocation2 + $0x118] sm:$0xff]
      %v7430 = vld [vmem:[#allocation2 + $0x120] sm:$0xff]
      %v7431 = vld [vmem:[#allocation2 + $0x128] sm:$0xff]
      %v7432 = vld [vmem:[#allocation2 + $0x130] sm:$0xff]
      %v7433 = vld [vmem:[#allocation2 + $0x138] sm:$0xff]
      %v7434 = vld [vmem:[#allocation2 + $0x140] sm:$0xff]
      %v7435 = vld [vmem:[#allocation2 + $0x148] sm:$0xff]
      %v7436 = vld [vmem:[#allocation2 + $0x150] sm:$0xff]
      %v7437 = vld [vmem:[#allocation2 + $0x158] sm:$0xff]
      %v7438 = vld [vmem:[#allocation2 + $0x160] sm:$0xff]
      %v7439 = vld [vmem:[#allocation2 + $0x168] sm:$0xff]
      %v7440 = vld [vmem:[#allocation2 + $0x170] sm:$0xff]
      %v7441 = vld [vmem:[#allocation2 + $0x178] sm:$0xff]
      %v7442 = vld [vmem:[#allocation2 + $0x180] sm:$0xff]
      %v7443 = vld [vmem:[#allocation2 + $0x188] sm:$0xff]
      %v7444 = vld [vmem:[#allocation2 + $0x190] sm:$0xff]
      %v7445 = vld [vmem:[#allocation2 + $0x198] sm:$0xff]
      %v7446 = vld [vmem:[#allocation2 + $0x1a0] sm:$0xff]
      %v7447 = vld [vmem:[#allocation2 + $0x1a8] sm:$0xff]
      %v7448 = vld [vmem:[#allocation2 + $0x1b0] sm:$0xff]
      %v7449 = vld [vmem:[#allocation2 + $0x1b8] sm:$0xff]
      %v7450 = vld [vmem:[#allocation2 + $0x1c0] sm:$0xff]
      %v7451 = vld [vmem:[#allocation2 + $0x1c8] sm:$0xff]
      %v7452 = vld [vmem:[#allocation2 + $0x1d0] sm:$0xff]
      %v7453 = vld [vmem:[#allocation2 + $0x1d8] sm:$0xff]
      %v7454 = vld [vmem:[#allocation2 + $0x1e0] sm:$0xff]
      %v7455 = vld [vmem:[#allocation2 + $0x1e8] sm:$0xff]
      %v7456 = vld [vmem:[#allocation2 + $0x1f0] sm:$0xff]
      %v7457 = vld [vmem:[#allocation2 + $0x1f8] sm:$0xff]
      %v7458 = vld [vmem:[#allocation2 + $0x200] sm:$0xff]
      %v7459 = vld [vmem:[#allocation2 + $0x208] sm:$0xff]
      %v7460 = vld [vmem:[#allocation2 + $0x210] sm:$0xff]
      %v7461 = vld [vmem:[#allocation2 + $0x218] sm:$0xff]
      %v7462 = vld [vmem:[#allocation2 + $0x220] sm:$0xff]
      %v7463 = vld [vmem:[#allocation2 + $0x228] sm:$0xff]
      %v7464 = vld [vmem:[#allocation2 + $0x230] sm:$0xff]
      %v7465 = vld [vmem:[#allocation2 + $0x238] sm:$0xff]
      %v7466 = vld [vmem:[#allocation2 + $0x240] sm:$0xff]
      %v7467 = vld [vmem:[#allocation2 + $0x248] sm:$0xff]
      %v7468 = vld [vmem:[#allocation2 + $0x250] sm:$0xff]
      %v7469 = vld [vmem:[#allocation2 + $0x258] sm:$0xff]
      %v7470 = vld [vmem:[#allocation2 + $0x260] sm:$0xff]
      %v7471 = vld [vmem:[#allocation2 + $0x268] sm:$0xff]
      %v7472 = vld [vmem:[#allocation2 + $0x270] sm:$0xff]
      %v7473 = vld [vmem:[#allocation2 + $0x278] sm:$0xff]
      %v7474 = vld [vmem:[#allocation2 + $0x280] sm:$0xff]
      %v7475 = vld [vmem:[#allocation2 + $0x288] sm:$0xff]
      %v7476 = vld [vmem:[#allocation2 + $0x290] sm:$0xff]
      %v7477 = vld [vmem:[#allocation2 + $0x298] sm:$0xff]
      %v7478 = vld [vmem:[#allocation2 + $0x2a0] sm:$0xff]
      %v7479 = vld [vmem:[#allocation2 + $0x2a8] sm:$0xff]
      %v7480 = vld [vmem:[#allocation2 + $0x2b0] sm:$0xff]
      %v7481 = vld [vmem:[#allocation2 + $0x2b8] sm:$0xff]
      %v7482 = vld [vmem:[#allocation2 + $0x2c0] sm:$0xff]
      %v7483 = vld [vmem:[#allocation2 + $0x2c8] sm:$0xff]
      %v7484 = vld [vmem:[#allocation2 + $0x2d0] sm:$0xff]
      %v7485 = vld [vmem:[#allocation2 + $0x2d8] sm:$0xff]
      %v7486 = vld [vmem:[#allocation2 + $0x2e0] sm:$0xff]
      %v7487 = vld [vmem:[#allocation2 + $0x2e8] sm:$0xff]
      %v7488 = vld [vmem:[#allocation2 + $0x2f0] sm:$0xff]
      %v7489 = vld [vmem:[#allocation2 + $0x2f8] sm:$0xff]
      %v7490 = vld [vmem:[#allocation2 + $0x300] sm:$0xff]
      %v7491 = vld [vmem:[#allocation2 + $0x308] sm:$0xff]
      %v7492 = vld [vmem:[%s15] sm:$0xff]
      %v7493 = vld [vmem:[%s15 + $0x8] sm:$0xff]
      %7495 = vset.pattern.permute.xlu0 0
      %7496 = vperm.xlu0 %7495, %v7492
      %v7497 = vpop.permute.xlu0 %7496
      %7500 = vset.pattern.permute.xlu0 0
      %7501 = vperm.xlu0 %7500, %v7493
      %v7502 = vpop.permute.xlu0 %7501
      %v7512 = vunpack.c.l.b16 %v7386
      %v7513 = vunpack.c.h.b16 %v7386
      %v7514 = vunpack.c.l.b16 %v7387
      %v7515 = vunpack.c.h.b16 %v7387
      %v7516 = vunpack.c.l.b16 %v7388
      %v7517 = vunpack.c.h.b16 %v7388
      %v7518 = vunpack.c.l.b16 %v7389
      %v7519 = vunpack.c.l.b16 %v7390
      %v7520 = vunpack.c.h.b16 %v7390
      %v7521 = vunpack.c.l.b16 %v7391
      %v7522 = vunpack.c.h.b16 %v7391
      %v7523 = vunpack.c.l.b16 %v7392
      %v7524 = vunpack.c.h.b16 %v7392
      %v7525 = vunpack.c.l.b16 %v7393
      %v7526 = vpack.c.b16 %v7519, %v7512
      %v7527 = vpack.c.b16 %v7520, %v7513
      %v7528 = vpack.c.b16 %v7521, %v7514
      %v7529 = vpack.c.b16 %v7522, %v7515
      %v7530 = vpack.c.b16 %v7523, %v7516
      %v7531 = vpack.c.b16 %v7524, %v7517
      %v7532 = vpack.c.b16 %v7525, %v7518
      %v7637 = vunpack.c.l.b16 %v7394
      %v7638 = vunpack.c.h.b16 %v7394
      %v7639 = vunpack.c.l.b16 %v7395
      %v7640 = vunpack.c.h.b16 %v7395
      %v7641 = vunpack.c.l.b16 %v7396
      %v7642 = vunpack.c.h.b16 %v7396
      %v7643 = vunpack.c.l.b16 %v7397
      %v7644 = vunpack.c.h.b16 %v7397
      %v7645 = vunpack.c.l.b16 %v7398
      %v7646 = vunpack.c.h.b16 %v7398
      %v7647 = vunpack.c.l.b16 %v7399
      %v7648 = vunpack.c.h.b16 %v7399
      %v7649 = vunpack.c.l.b16 %v7400
      %v7650 = vunpack.c.h.b16 %v7400
      %v7651 = vunpack.c.l.b16 %v7401
      %v7652 = vunpack.c.h.b16 %v7401
      %v7653 = vunpack.c.l.b16 %v7402
      %v7654 = vunpack.c.h.b16 %v7402
      %v7655 = vunpack.c.l.b16 %v7403
      %v7656 = vunpack.c.h.b16 %v7403
      %v7657 = vunpack.c.l.b16 %v7404
      %v7658 = vunpack.c.h.b16 %v7404
      %v7659 = vunpack.c.l.b16 %v7405
      %v7660 = vunpack.c.h.b16 %v7405
      %v7661 = vunpack.c.l.b16 %v7406
      %v7662 = vunpack.c.h.b16 %v7406
      %v7663 = vunpack.c.l.b16 %v7407
      %v7664 = vunpack.c.h.b16 %v7407
      %v7665 = vunpack.c.l.b16 %v7408
      %v7666 = vunpack.c.h.b16 %v7408
      %v7667 = vunpack.c.l.b16 %v7409
      %v7668 = vunpack.c.h.b16 %v7409
      %v7669 = vunpack.c.l.b16 %v7410
      %v7670 = vunpack.c.h.b16 %v7410
      %v7671 = vunpack.c.l.b16 %v7411
      %v7672 = vunpack.c.h.b16 %v7411
      %v7673 = vunpack.c.l.b16 %v7412
      %v7674 = vunpack.c.h.b16 %v7412
      %v7675 = vunpack.c.l.b16 %v7413
      %v7676 = vunpack.c.h.b16 %v7413
      %v7677 = vunpack.c.l.b16 %v7414
      %v7678 = vunpack.c.h.b16 %v7414
      %v7679 = vunpack.c.l.b16 %v7415
      %v7680 = vunpack.c.h.b16 %v7415
      %v7681 = vunpack.c.l.b16 %v7416
      %v7682 = vunpack.c.h.b16 %v7416
      %v7683 = vunpack.c.l.b16 %v7417
      %v7684 = vunpack.c.h.b16 %v7417
      %v7685 = vunpack.c.l.b16 %v7418
      %v7686 = vunpack.c.h.b16 %v7418
      %v7687 = vunpack.c.l.b16 %v7419
      %v7688 = vunpack.c.h.b16 %v7419
      %v7689 = vunpack.c.l.b16 %v7420
      %v7690 = vunpack.c.h.b16 %v7420
      %v7691 = vunpack.c.l.b16 %v7421
      %v7692 = vunpack.c.h.b16 %v7421
      %v7693 = vunpack.c.l.b16 %v7422
      %v7694 = vunpack.c.h.b16 %v7422
      %v7695 = vunpack.c.l.b16 %v7423
      %v7696 = vunpack.c.h.b16 %v7423
      %v7697 = vunpack.c.l.b16 %v7424
      %v7698 = vunpack.c.h.b16 %v7424
      %v7699 = vunpack.c.l.b16 %v7425
      %v7700 = vunpack.c.h.b16 %v7425
      %v7701 = vunpack.c.l.b16 %v7426
      %v7702 = vunpack.c.h.b16 %v7426
      %v7703 = vunpack.c.l.b16 %v7427
      %v7704 = vunpack.c.h.b16 %v7427
      %v7705 = vunpack.c.l.b16 %v7428
      %v7706 = vunpack.c.h.b16 %v7428
      %v7707 = vunpack.c.l.b16 %v7429
      %v7708 = vunpack.c.h.b16 %v7429
      %v7709 = vunpack.c.l.b16 %v7430
      %v7710 = vunpack.c.h.b16 %v7430
      %v7711 = vunpack.c.l.b16 %v7431
      %v7712 = vunpack.c.h.b16 %v7431
      %v7713 = vunpack.c.l.b16 %v7432
      %v7714 = vunpack.c.h.b16 %v7432
      %v7715 = vunpack.c.l.b16 %v7433
      %v7716 = vunpack.c.h.b16 %v7433
      %v7717 = vunpack.c.l.b16 %v7434
      %v7718 = vunpack.c.h.b16 %v7434
      %v7719 = vunpack.c.l.b16 %v7435
      %v7720 = vunpack.c.h.b16 %v7435
      %v7721 = vunpack.c.l.b16 %v7436
      %v7722 = vunpack.c.h.b16 %v7436
      %v7723 = vunpack.c.l.b16 %v7437
      %v7724 = vunpack.c.h.b16 %v7437
      %v7725 = vunpack.c.l.b16 %v7438
      %v7726 = vunpack.c.h.b16 %v7438
      %v7727 = vunpack.c.l.b16 %v7439
      %v7728 = vunpack.c.h.b16 %v7439
      %v7729 = vunpack.c.l.b16 %v7440
      %v7730 = vunpack.c.h.b16 %v7440
      %v7731 = vunpack.c.l.b16 %v7441
      %v7732 = vunpack.c.h.b16 %v7441
      %v7733 = vunpack.c.l.b16 %v7442
      %v7734 = vunpack.c.h.b16 %v7442
      %v7735 = vunpack.c.l.b16 %v7443
      %v7736 = vunpack.c.h.b16 %v7443
      %v7737 = vunpack.c.l.b16 %v7444
      %v7738 = vunpack.c.h.b16 %v7444
      %v7739 = vunpack.c.l.b16 %v7445
      %v7740 = vunpack.c.h.b16 %v7445
      %v7741 = vunpack.c.l.b16 %v7446
      %v7742 = vunpack.c.h.b16 %v7446
      %v7743 = vunpack.c.l.b16 %v7447
      %v7744 = vunpack.c.h.b16 %v7447
      %v7745 = vunpack.c.l.b16 %v7448
      %v7746 = vunpack.c.h.b16 %v7448
      %v7747 = vunpack.c.l.b16 %v7449
      %v7748 = vunpack.c.h.b16 %v7449
      %v7749 = vunpack.c.l.b16 %v7450
      %v7750 = vunpack.c.h.b16 %v7450
      %v7751 = vunpack.c.l.b16 %v7451
      %v7752 = vunpack.c.h.b16 %v7451
      %v7753 = vunpack.c.l.b16 %v7452
      %v7754 = vunpack.c.h.b16 %v7452
      %v7755 = vunpack.c.l.b16 %v7453
      %v7756 = vunpack.c.h.b16 %v7453
      %v7757 = vunpack.c.l.b16 %v7454
      %v7758 = vunpack.c.h.b16 %v7454
      %v7759 = vunpack.c.l.b16 %v7455
      %v7760 = vunpack.c.h.b16 %v7455
      %v7761 = vunpack.c.l.b16 %v7456
      %v7762 = vunpack.c.h.b16 %v7456
      %v7763 = vunpack.c.l.b16 %v7457
      %v7764 = vunpack.c.h.b16 %v7457
      %v7765 = vunpack.c.l.b16 %v7458
      %v7766 = vunpack.c.h.b16 %v7458
      %v7767 = vunpack.c.l.b16 %v7459
      %v7768 = vunpack.c.h.b16 %v7459
      %v7769 = vunpack.c.l.b16 %v7460
      %v7770 = vunpack.c.h.b16 %v7460
      %v7771 = vunpack.c.l.b16 %v7461
      %v7772 = vunpack.c.h.b16 %v7461
      %v7773 = vunpack.c.l.b16 %v7462
      %v7774 = vunpack.c.h.b16 %v7462
      %v7775 = vunpack.c.l.b16 %v7463
      %v7776 = vunpack.c.h.b16 %v7463
      %v7777 = vunpack.c.l.b16 %v7464
      %v7778 = vunpack.c.h.b16 %v7464
      %v7779 = vunpack.c.l.b16 %v7465
      %v7780 = vunpack.c.h.b16 %v7465
      %v7781 = vunpack.c.l.b16 %v7466
      %v7782 = vunpack.c.h.b16 %v7466
      %v7783 = vunpack.c.l.b16 %v7467
      %v7784 = vunpack.c.h.b16 %v7467
      %v7785 = vunpack.c.l.b16 %v7468
      %v7786 = vunpack.c.h.b16 %v7468
      %v7787 = vunpack.c.l.b16 %v7469
      %v7788 = vunpack.c.h.b16 %v7469
      %v7789 = vunpack.c.l.b16 %v7470
      %v7790 = vunpack.c.h.b16 %v7470
      %v7791 = vunpack.c.l.b16 %v7471
      %v7792 = vunpack.c.h.b16 %v7471
      %v7793 = vunpack.c.l.b16 %v7472
      %v7794 = vunpack.c.h.b16 %v7472
      %v7795 = vunpack.c.l.b16 %v7473
      %v7796 = vunpack.c.h.b16 %v7473
      %v7797 = vunpack.c.l.b16 %v7474
      %v7798 = vunpack.c.h.b16 %v7474
      %v7799 = vunpack.c.l.b16 %v7475
      %v7800 = vunpack.c.h.b16 %v7475
      %v7801 = vunpack.c.l.b16 %v7476
      %v7802 = vunpack.c.h.b16 %v7476
      %v7803 = vunpack.c.l.b16 %v7477
      %v7804 = vunpack.c.h.b16 %v7477
      %v7805 = vunpack.c.l.b16 %v7478
      %v7806 = vunpack.c.h.b16 %v7478
      %v7807 = vunpack.c.l.b16 %v7479
      %v7808 = vunpack.c.h.b16 %v7479
      %v7809 = vunpack.c.l.b16 %v7480
      %v7810 = vunpack.c.h.b16 %v7480
      %v7811 = vunpack.c.l.b16 %v7481
      %v7812 = vunpack.c.h.b16 %v7481
      %v7813 = vunpack.c.l.b16 %v7482
      %v7814 = vunpack.c.h.b16 %v7482
      %v7815 = vunpack.c.l.b16 %v7483
      %v7816 = vunpack.c.h.b16 %v7483
      %v7817 = vunpack.c.l.b16 %v7484
      %v7818 = vunpack.c.h.b16 %v7484
      %v7819 = vunpack.c.l.b16 %v7485
      %v7820 = vunpack.c.h.b16 %v7485
      %v7821 = vunpack.c.l.b16 %v7486
      %v7822 = vunpack.c.h.b16 %v7486
      %v7823 = vunpack.c.l.b16 %v7487
      %v7824 = vunpack.c.h.b16 %v7487
      %v7825 = vunpack.c.l.b16 %v7488
      %v7826 = vunpack.c.h.b16 %v7488
      %v7827 = vunpack.c.l.b16 %v7489
      %v7828 = vunpack.c.h.b16 %v7489
      %v7829 = vunpack.c.l.b16 %v7490
      %v7830 = vunpack.c.h.b16 %v7490
      %v7831 = vunpack.c.l.b16 %v7491
      %v7832 = vunpack.c.h.b16 %v7491
      %v7833 = vpack.c.b16 %v7639, %v7637
      %v7834 = vpack.c.b16 %v7640, %v7638
      %v7835 = vpack.c.b16 %v7643, %v7641
      %v7836 = vpack.c.b16 %v7644, %v7642
      %v7837 = vpack.c.b16 %v7647, %v7645
      %v7838 = vpack.c.b16 %v7648, %v7646
      %v7839 = vpack.c.b16 %v7651, %v7649
      %v7840 = vpack.c.b16 %v7652, %v7650
      %v7841 = vpack.c.b16 %v7655, %v7653
      %v7842 = vpack.c.b16 %v7656, %v7654
      %v7843 = vpack.c.b16 %v7659, %v7657
      %v7844 = vpack.c.b16 %v7660, %v7658
      %v7845 = vpack.c.b16 %v7663, %v7661
      %v7846 = vpack.c.b16 %v7664, %v7662
      %v7847 = vpack.c.b16 %v7667, %v7665
      %v7848 = vpack.c.b16 %v7668, %v7666
      %v7849 = vpack.c.b16 %v7671, %v7669
      %v7850 = vpack.c.b16 %v7672, %v7670
      %v7851 = vpack.c.b16 %v7675, %v7673
      %v7852 = vpack.c.b16 %v7676, %v7674
      %v7853 = vpack.c.b16 %v7679, %v7677
      %v7854 = vpack.c.b16 %v7680, %v7678
      %v7855 = vpack.c.b16 %v7683, %v7681
      %v7856 = vpack.c.b16 %v7684, %v7682
      %v7857 = vpack.c.b16 %v7687, %v7685
      %v7858 = vpack.c.b16 %v7688, %v7686
      %v7859 = vpack.c.b16 %v7691, %v7689
      %v7860 = vpack.c.b16 %v7692, %v7690
      %v7861 = vpack.c.b16 %v7695, %v7693
      %v7862 = vpack.c.b16 %v7696, %v7694
      %v7863 = vpack.c.b16 %v7699, %v7697
      %v7864 = vpack.c.b16 %v7700, %v7698
      %v7865 = vpack.c.b16 %v7703, %v7701
      %v7866 = vpack.c.b16 %v7704, %v7702
      %v7867 = vpack.c.b16 %v7707, %v7705
      %v7868 = vpack.c.b16 %v7708, %v7706
      %v7869 = vpack.c.b16 %v7711, %v7709
      %v7870 = vpack.c.b16 %v7712, %v7710
      %v7871 = vpack.c.b16 %v7715, %v7713
      %v7872 = vpack.c.b16 %v7716, %v7714
      %v7873 = vpack.c.b16 %v7719, %v7717
      %v7874 = vpack.c.b16 %v7720, %v7718
      %v7875 = vpack.c.b16 %v7723, %v7721
      %v7876 = vpack.c.b16 %v7724, %v7722
      %v7877 = vpack.c.b16 %v7727, %v7725
      %v7878 = vpack.c.b16 %v7728, %v7726
      %v7879 = vpack.c.b16 %v7731, %v7729
      %v7880 = vpack.c.b16 %v7732, %v7730
      %v7881 = vpack.c.b16 %v7735, %v7733
      %v7882 = vpack.c.b16 %v7736, %v7734
      %v7883 = vpack.c.b16 %v7739, %v7737
      %v7884 = vpack.c.b16 %v7740, %v7738
      %v7885 = vpack.c.b16 %v7743, %v7741
      %v7886 = vpack.c.b16 %v7744, %v7742
      %v7887 = vpack.c.b16 %v7747, %v7745
      %v7888 = vpack.c.b16 %v7748, %v7746
      %v7889 = vpack.c.b16 %v7751, %v7749
      %v7890 = vpack.c.b16 %v7752, %v7750
      %v7891 = vpack.c.b16 %v7755, %v7753
      %v7892 = vpack.c.b16 %v7756, %v7754
      %v7893 = vpack.c.b16 %v7759, %v7757
      %v7894 = vpack.c.b16 %v7760, %v7758
      %v7895 = vpack.c.b16 %v7763, %v7761
      %v7896 = vpack.c.b16 %v7764, %v7762
      %v7897 = vpack.c.b16 %v7767, %v7765
      %v7898 = vpack.c.b16 %v7768, %v7766
      %v7899 = vpack.c.b16 %v7771, %v7769
      %v7900 = vpack.c.b16 %v7772, %v7770
      %v7901 = vpack.c.b16 %v7775, %v7773
      %v7902 = vpack.c.b16 %v7776, %v7774
      %v7903 = vpack.c.b16 %v7779, %v7777
      %v7904 = vpack.c.b16 %v7780, %v7778
      %v7905 = vpack.c.b16 %v7783, %v7781
      %v7906 = vpack.c.b16 %v7784, %v7782
      %v7907 = vpack.c.b16 %v7787, %v7785
      %v7908 = vpack.c.b16 %v7788, %v7786
      %v7909 = vpack.c.b16 %v7791, %v7789
      %v7910 = vpack.c.b16 %v7792, %v7790
      %v7911 = vpack.c.b16 %v7795, %v7793
      %v7912 = vpack.c.b16 %v7796, %v7794
      %v7913 = vpack.c.b16 %v7799, %v7797
      %v7914 = vpack.c.b16 %v7800, %v7798
      %v7915 = vpack.c.b16 %v7803, %v7801
      %v7916 = vpack.c.b16 %v7804, %v7802
      %v7917 = vpack.c.b16 %v7807, %v7805
      %v7918 = vpack.c.b16 %v7808, %v7806
      %v7919 = vpack.c.b16 %v7811, %v7809
      %v7920 = vpack.c.b16 %v7812, %v7810
      %v7921 = vpack.c.b16 %v7815, %v7813
      %v7922 = vpack.c.b16 %v7816, %v7814
      %v7923 = vpack.c.b16 %v7819, %v7817
      %v7924 = vpack.c.b16 %v7820, %v7818
      %v7925 = vpack.c.b16 %v7823, %v7821
      %v7926 = vpack.c.b16 %v7824, %v7822
      %v7927 = vpack.c.b16 %v7827, %v7825
      %v7928 = vpack.c.b16 %v7828, %v7826
      %v7929 = vpack.c.b16 %v7831, %v7829
      %v7930 = vpack.c.b16 %v7832, %v7830
      %v8030 = vsel %vm1313, %v7532, 0
      %8032 = vmatprep.subr.bf16.mxu0 %v7848
      %8033 = vmatpush1.bf16.msra.mxu0 %v7847
      %8034 = vmatprep.subr.bf16.mxu0 %v7846
      %8035 = vmatpush1.bf16.msra.mxu0 %v7845
      %8036 = vmatprep.subr.bf16.mxu0 %v7844
      %8037 = vmatpush1.bf16.msra.mxu0 %v7843
      %8038 = vmatprep.subr.bf16.mxu0 %v7842
      %8039 = vmatpush1.bf16.msra.mxu0 %v7841
      %8040 = vmatprep.subr.bf16.mxu0 %v7840
      %8041 = vmatpush1.bf16.msra.mxu0 %v7839
      %8042 = vmatprep.subr.bf16.mxu0 %v7838
      %8043 = vmatpush1.bf16.msra.mxu0 %v7837
      %8044 = vmatprep.subr.bf16.mxu0 %v7836
      %8045 = vmatpush1.bf16.msra.mxu0 %v7835
      %8046 = vmatprep.subr.bf16.mxu0 %v7834
      %8047 = vmatpush1.bf16.msra.mxu0 %v7833
      %8048 = vmatprep.subr.bf16.mxu0 %v7864
      %8049 = vmatpush2.bf16.msra.mxu0 %v7863
      %8050 = vmatprep.subr.bf16.mxu0 %v7862
      %8051 = vmatpush2.bf16.msra.mxu0 %v7861
      %8052 = vmatprep.subr.bf16.mxu0 %v7860
      %8053 = vmatpush2.bf16.msra.mxu0 %v7859
      %8054 = vmatprep.subr.bf16.mxu0 %v7858
      %8055 = vmatpush2.bf16.msra.mxu0 %v7857
      %8056 = vmatprep.subr.bf16.mxu0 %v7856
      %8057 = vmatpush2.bf16.msra.mxu0 %v7855
      %8058 = vmatprep.subr.bf16.mxu0 %v7854
      %8059 = vmatpush2.bf16.msra.mxu0 %v7853
      %8060 = vmatprep.subr.bf16.mxu0 %v7852
      %8061 = vmatpush2.bf16.msra.mxu0 %v7851
      %8062 = vmatprep.subr.bf16.mxu0 %v7850
      %8063 = vmatpush2.bf16.msra.mxu0 %v7849
      %8064 = vmatprep.mubr.bf16.mxu0 %v7527
      %8065 = vmatmul.mubr.bf16.gmra.mxu0 %v7526
      %v8066 = vpop.f32.mrf.mxu0
      %v8067 = vadd.f32 %v7497, %v8066
      %v8068 = vpop.f32.mrf.mxu0
      %v8069 = vadd.f32 %v7497, %v8068
      %v8070 = vpop.f32.mrf.mxu0
      %v8071 = vadd.f32 %v7502, %v8070
      %v8072 = vpop.f32.mrf.mxu0
      %v8073 = vadd.f32 %v7502, %v8072
      %8074 = vdwg.mxu0
      %8075 = vmatprep.subr.bf16.mxu0 %v7880
      %8076 = vmatpush1.bf16.msra.mxu0 %v7879
      %8077 = vmatprep.subr.bf16.mxu0 %v7878
      %8078 = vmatpush1.bf16.msra.mxu0 %v7877
      %8079 = vmatprep.subr.bf16.mxu0 %v7876
      %8080 = vmatpush1.bf16.msra.mxu0 %v7875
      %8081 = vmatprep.subr.bf16.mxu0 %v7874
      %8082 = vmatpush1.bf16.msra.mxu0 %v7873
      %8083 = vmatprep.subr.bf16.mxu0 %v7872
      %8084 = vmatpush1.bf16.msra.mxu0 %v7871
      %8085 = vmatprep.subr.bf16.mxu0 %v7870
      %8086 = vmatpush1.bf16.msra.mxu0 %v7869
      %8087 = vmatprep.subr.bf16.mxu0 %v7868
      %8088 = vmatpush1.bf16.msra.mxu0 %v7867
      %8089 = vmatprep.subr.bf16.mxu0 %v7866
      %8090 = vmatpush1.bf16.msra.mxu0 %v7865
      %8091 = vmatprep.subr.bf16.mxu0 %v7896
      %8092 = vmatpush2.bf16.msra.mxu0 %v7895
      %8093 = vmatprep.subr.bf16.mxu0 %v7894
      %8094 = vmatpush2.bf16.msra.mxu0 %v7893
      %8095 = vmatprep.subr.bf16.mxu0 %v7892
      %8096 = vmatpush2.bf16.msra.mxu0 %v7891
      %8097 = vmatprep.subr.bf16.mxu0 %v7890
      %8098 = vmatpush2.bf16.msra.mxu0 %v7889
      %8099 = vmatprep.subr.bf16.mxu0 %v7888
      %8100 = vmatpush2.bf16.msra.mxu0 %v7887
      %8101 = vmatprep.subr.bf16.mxu0 %v7886
      %8102 = vmatpush2.bf16.msra.mxu0 %v7885
      %8103 = vmatprep.subr.bf16.mxu0 %v7884
      %8104 = vmatpush2.bf16.msra.mxu0 %v7883
      %8105 = vmatprep.subr.bf16.mxu0 %v7882
      %8106 = vmatpush2.bf16.msra.mxu0 %v7881
      %8107 = vmatprep.mubr.bf16.mxu0 %v7529
      %8108 = vmatmul.mubr.bf16.gmra.mxu0 %v7528
      %v8109 = vpop.f32.mrf.mxu0
      %v8110 = vadd.f32 %v8067, %v8109
      %v8111 = vpop.f32.mrf.mxu0
      %v8112 = vadd.f32 %v8069, %v8111
      %v8113 = vpop.f32.mrf.mxu0
      %v8114 = vadd.f32 %v8071, %v8113
      %v8115 = vpop.f32.mrf.mxu0
      %v8116 = vadd.f32 %v8073, %v8115
      %8117 = vdwg.mxu0
      %8118 = vmatprep.subr.bf16.mxu0 %v7912
      %8119 = vmatpush1.bf16.msra.mxu0 %v7911
      %8120 = vmatprep.subr.bf16.mxu0 %v7910
      %8121 = vmatpush1.bf16.msra.mxu0 %v7909
      %8122 = vmatprep.subr.bf16.mxu0 %v7908
      %8123 = vmatpush1.bf16.msra.mxu0 %v7907
      %8124 = vmatprep.subr.bf16.mxu0 %v7906
      %8125 = vmatpush1.bf16.msra.mxu0 %v7905
      %8126 = vmatprep.subr.bf16.mxu0 %v7904
      %8127 = vmatpush1.bf16.msra.mxu0 %v7903
      %8128 = vmatprep.subr.bf16.mxu0 %v7902
      %8129 = vmatpush1.bf16.msra.mxu0 %v7901
      %8130 = vmatprep.subr.bf16.mxu0 %v7900
      %8131 = vmatpush1.bf16.msra.mxu0 %v7899
      %8132 = vmatprep.subr.bf16.mxu0 %v7898
      %8133 = vmatpush1.bf16.msra.mxu0 %v7897
      %8134 = vmatprep.subr.bf16.mxu0 %v7928
      %8135 = vmatpush2.bf16.msra.mxu0 %v7927
      %8136 = vmatprep.subr.bf16.mxu0 %v7926
      %8137 = vmatpush2.bf16.msra.mxu0 %v7925
      %8138 = vmatprep.subr.bf16.mxu0 %v7924
      %8139 = vmatpush2.bf16.msra.mxu0 %v7923
      %8140 = vmatprep.subr.bf16.mxu0 %v7922
      %8141 = vmatpush2.bf16.msra.mxu0 %v7921
      %8142 = vmatprep.subr.bf16.mxu0 %v7920
      %8143 = vmatpush2.bf16.msra.mxu0 %v7919
      %8144 = vmatprep.subr.bf16.mxu0 %v7918
      %8145 = vmatpush2.bf16.msra.mxu0 %v7917
      %8146 = vmatprep.subr.bf16.mxu0 %v7916
      %8147 = vmatpush2.bf16.msra.mxu0 %v7915
      %8148 = vmatprep.subr.bf16.mxu0 %v7914
      %8149 = vmatpush2.bf16.msra.mxu0 %v7913
      %8150 = vmatprep.mubr.bf16.mxu0 %v7531
      %8151 = vmatmul.mubr.bf16.gmra.mxu0 %v7530
      %v8152 = vpop.f32.mrf.mxu0
      %v8153 = vadd.f32 %v8110, %v8152
      %v8154 = vpop.f32.mrf.mxu0
      %v8155 = vadd.f32 %v8112, %v8154
      %v8156 = vpop.f32.mrf.mxu0
      %v8157 = vadd.f32 %v8114, %v8156
      %v8158 = vpop.f32.mrf.mxu0
      %v8159 = vadd.f32 %v8116, %v8158
      %8160 = vdwg.mxu0
      %8161 = vmatprep.subr.bf16.mxu0 0
      %8162 = vmatpush1.bf16.msra.mxu0 0
      %8163 = vmatprep.subr.bf16.mxu0 0
      %8164 = vmatpush1.bf16.msra.mxu0 0
      %8165 = vmatprep.subr.bf16.mxu0 0
      %8166 = vmatpush1.bf16.msra.mxu0 0
      %8167 = vmatprep.subr.bf16.mxu0 0
      %8168 = vmatpush1.bf16.msra.mxu0 0
      %8169 = vmatprep.subr.bf16.mxu0 0
      %8170 = vmatpush1.bf16.msra.mxu0 0
      %8171 = vmatprep.subr.bf16.mxu0 0
      %8172 = vmatpush1.bf16.msra.mxu0 0
      %8173 = vmatprep.subr.bf16.mxu0 0
      %8174 = vmatpush1.bf16.msra.mxu0 0
      %8175 = vmatprep.subr.bf16.mxu0 %v7930
      %8176 = vmatpush1.bf16.msra.mxu0 %v7929
      %8177 = vmatprep.subr.bf16.mxu0 0
      %8178 = vmatpush2.bf16.msra.mxu0 0
      %8179 = vmatprep.subr.bf16.mxu0 0
      %8180 = vmatpush2.bf16.msra.mxu0 0
      %8181 = vmatprep.subr.bf16.mxu0 0
      %8182 = vmatpush2.bf16.msra.mxu0 0
      %8183 = vmatprep.subr.bf16.mxu0 0
      %8184 = vmatpush2.bf16.msra.mxu0 0
      %8185 = vmatprep.subr.bf16.mxu0 0
      %8186 = vmatpush2.bf16.msra.mxu0 0
      %8187 = vmatprep.subr.bf16.mxu0 0
      %8188 = vmatpush2.bf16.msra.mxu0 0
      %8189 = vmatprep.subr.bf16.mxu0 0
      %8190 = vmatpush2.bf16.msra.mxu0 0
      %8191 = vmatprep.subr.bf16.mxu0 0
      %8192 = vmatpush2.bf16.msra.mxu0 0
      %8193 = vmatprep.mubr.bf16.mxu0 0
      %8194 = vmatmul.mubr.bf16.gmra.mxu0 %v8030
      %v8195 = vpop.f32.mrf.mxu0
      %v8196 = vadd.f32 %v8153, %v8195
      %v8197 = vpop.f32.mrf.mxu0
      %v8198 = vadd.f32 %v8155, %v8197
      %v8199 = vpop.f32.mrf.mxu0
      %v8200 = vadd.f32 %v8157, %v8199
      %v8201 = vpop.f32.mrf.mxu0
      %v8202 = vadd.f32 %v8159, %v8201
      %8203 = vdwg.mxu0
      %v8204 = vmax.f32 %v8196, 0.0
      %v8205 = vmax.f32 %v8198, 0.0
      %v8206 = vmax.f32 %v8200, 0.0
      %v8207 = vmax.f32 %v8202, 0.0
      %v8208 = vadd.f32 %v8204, %v4742
      %v8209 = vadd.f32 %v8205, %v4744
      %v8210 = vadd.f32 %v8206, %v4746
      %v8211 = vadd.f32 %v8207, %v4748
      %v8212 = vld [vmem:[%s16] sm:$0xff]
      %v8213 = vld [vmem:[%s16 + $0x8] sm:$0xff]
      %v8214 = vadd.f32 %v5924, %v575
      %v8215 = vadd.f32 %v5925, %v576
      %v8216 = vadd.f32 %v5926, %v577
      %v8217 = vadd.f32 %v5927, %v578
      %8219 = vset.pattern.permute.xlu0 0
      %8220 = vperm.xlu0 %8219, %v8212
      %v8221 = vpop.permute.xlu0 %8220
      %8224 = vset.pattern.permute.xlu0 0
      %8225 = vperm.xlu0 %8224, %v8213
      %v8226 = vpop.permute.xlu0 %8225
      %v8228 = vmul.f32 %v8221, %v8214
      %v8229 = vmul.f32 %v8221, %v8215
      %v8230 = vmul.f32 %v8226, %v8216
      %v8231 = vmul.f32 %v8226, %v8217
      %v8232 = vld [vmem:[%s17] sm:$0xff]
      %v8233 = vld [vmem:[%s17 + $0x8] sm:$0xff]
      %v8234 = vadd.f32 %v8208, %v575
      %v8235 = vadd.f32 %v8209, %v576
      %v8236 = vadd.f32 %v8210, %v577
      %v8237 = vadd.f32 %v8211, %v578
      %8239 = vset.pattern.permute.xlu0 0
      %8240 = vperm.xlu0 %8239, %v8232
      %v8241 = vpop.permute.xlu0 %8240
      %8244 = vset.pattern.permute.xlu0 0
      %8245 = vperm.xlu0 %8244, %v8233
      %v8246 = vpop.permute.xlu0 %8245
      %v8248 = vmul.f32 %v8241, %v8234
      %v8249 = vmul.f32 %v8241, %v8235
      %v8250 = vmul.f32 %v8246, %v8236
      %v8251 = vmul.f32 %v8246, %v8237
      %v8252 = vadd.f32 %v8228, %v8248
      %v8253 = vadd.f32 %v8229, %v8249
      %v8254 = vadd.f32 %v8230, %v8250
      %v8255 = vadd.f32 %v8231, %v8251
      %v8256 = vadd.f32 %v8252, %v8254
      %v8257 = vrot.slane %v8256, 4
      %v8258 = vadd.f32 %v8256, %v8257
      %v8259 = vrot.slane %v8258, 2
      %v8260 = vadd.f32 %v8258, %v8259
      %v8261 = vrot.slane %v8260, 1
      %v8262 = vadd.f32 %v8260, %v8261
      %v8263 = vadd.f32 %v8253, %v8255
      %v8264 = vrot.slane %v8263, 4
      %v8265 = vadd.f32 %v8263, %v8264
      %v8266 = vrot.slane %v8265, 2
      %v8267 = vadd.f32 %v8265, %v8266
      %v8268 = vrot.slane %v8267, 1
      %v8269 = vadd.f32 %v8267, %v8268
      %v8270 = vxor.u32 %v8262, 2147483648
      %v8271 = vxor.u32 %v8269, 2147483648
      %v8272 = vmul.f32 %v8270, 1.442695
      %v8273 = vpow.pop %v8272
      %v8274 = vmul.f32 %v8271, 1.442695
      %v8275 = vpow.pop %v8274
      %v8276 = vadd.f32 %v8273, 1.0
      %v8277 = vadd.f32 %v8275, 1.0
      %v8278 = vrcp.pop %v8276
      %v8279 = vmul.f32 1.0, %v8278
      %v8280 = vrcp.pop %v8277
      %v8281 = vmul.f32 1.0, %v8280
      %v8284 = vcombine.low %v8279, %v8281
      %v8286 = vunpack.c.l.s4 1966171168
      %v8287 = vunpack.c.0.s8 %v8286
      %v8288 = vlaneseq
      %v8289 = vshrl.u32 %v8288, 7
      %v8290 = vsub.s32 %v8287, %v8289
      %v8291 = vrot.slane %v8284, %v8290
      %v8293 = vunpack.c.l.s4 1966171168
      %v8294 = vunpack.c.0.s8 %v8293
      %v8295 = vlaneseq
      %v8296 = vshrl.u32 %v8295, 7
      %v8297 = vsub.s32 %v8294, %v8296
      %v8298 = vrot.slane %v8291, %v8297
      %v8300 = vlaneseq
      %vm8301 = vcmp.ge.s32.totalorder %v8300, 0
      %vm8302 = vcmp.lt.s32.totalorder %v8300, 256
      %vm8303 = vmand %vm8301, %vm8302
      %8304 = vst.msk [vmem:[%s573] sm:$0x3] %vm8303, %v8298
      %p8305 = scmp.lt.s32.totalorder %s29, 1
      %s8306 = scalar_select %p8305, %s29, 1
      %s8307 = smul.addr %s8306, 2
      %s8308 = scalar_lea.vmem %s18, %s8307
      // Predicated region
      $region93: #{ddsm_atternet.1} parent=91 // pred_check
        %p8309 = pneg %p430
      $region94: #{ddsm_atternet.1} parent=91 // pred_check_branch
        %8311 = sbr.rel (%p8309) target = $region96
      $region95: #{ddsm_atternet.1} parent=91 // pred_region
        _
      $region96: #{ddsm_atternet.1} parent=91 // pred_fallthru
        _
    $region92: #{ddsm_atternet.1} parent=5 // pred_fallthru
      _
    %p8312 = scmp.le.s32.totalorder 2, %s24
    // Predicated region
    $region97: #{ddsm_atternet.1} parent=5 // pred_check
      %p8313 = pneg %p8312
    $region98: #{ddsm_atternet.1} parent=5 // pred_check_branch
      %8315 = sbr.rel (%p8313) target = $region100
    $region99: #{ddsm_atternet.1} parent=5 // pred_region
      %s8316 = ssub.s32 %s24, 2
      // Predicated region
      $region101: #{ddsm_atternet.1} parent=99 // pred_check
        %p8317 = pneg %p436
      $region102: #{ddsm_atternet.1} parent=99 // pred_check_branch
        %8319 = sbr.rel (%p8317) target = $region104
      $region103: #{ddsm_atternet.1} parent=99 // pred_region
        %p8320 = scmp.lt.s32.totalorder %s30, 1
        %s8321 = scalar_select %p8320, %s30, 1
        %s8322 = smul.addr %s8321, 2
        %s8323 = scalar_lea.vmem %s18, %s8322
      $region104: #{ddsm_atternet.1} parent=99 // pred_fallthru
        _
    $region100: #{ddsm_atternet.1} parent=5 // pred_fallthru
      _
  $region6: #{ddsm_atternet.1} parent=0 // loop_footer
    %s28 = sadd.s32 1, %s24
  $region7: #{ddsm_atternet.1} parent=0 // loop_footer_branch
    %23 = sbr.rel target = $region3
  $region8: #{ddsm_atternet.1} parent=0 // loop_exit
    _

</llo_original>
